<compile_context>
chip_gen: v5e
topology: v5e:2x2
jax: 0.10.0
libtpu: 0.0.40
codegen_flags: <defaults>
</compile_context>

<pallas_src>
import numpy as np

import jax
import jax.numpy as jnp
from jax.experimental import pallas as pl
from jax.experimental.pallas import tpu as pltpu


_SQRT_2_OVER_PI = 0.7978845608028654


def _gelu(x):
    # tanh-approx GELU (1 EUP tanh + a few VALU ops); ~1e-3 max deviation from
    # torch.nn.GELU()'s exact erf form.
    return 0.5 * x * (1.0 + jnp.tanh(_SQRT_2_OVER_PI * (x + 0.044715 * x * x * x)))


# ----------------------------------------------------------------------------
# In-kernel building blocks.  Activation layout per image: (C, (H+2)*(W+2)),
# row-major over the zero-padded (H+2)x(W+2) image; the pad ring is kept 0.
# ----------------------------------------------------------------------------
def _widen(a, margin):
    z = jnp.zeros((a.shape[0], margin), a.dtype)
    return jnp.concatenate([z, a, z], axis=1)


def _conv3x3(a, w_all, bias, w_img, act, mask):
    """3x3 / stride-1 / pad-1 conv.  a:(Cin,Np) f32, w_all:(Cout,9*Cin) bf16."""
    _, np_in = a.shape
    wp = w_img + 2
    m = wp + 1
    aw = _widen(a, m)
    taps = []
    for dh in range(3):
        for dw in range(3):
            o = m + (dh - 1) * wp + (dw - 1)
            taps.append(aw[:, o:o + np_in])
    x = jnp.concatenate(taps, axis=0).astype(jnp.bfloat16)        # (9*Cin, Np)
    acc = jnp.dot(w_all, x, preferred_element_type=jnp.float32)   # (Cout, Np)
    return act(acc + bias) * mask                                 # zero pad ring


def _convt3x3_s2(a, wph_ref, g_ref, bias, w_img, act, mask):
    """ConvTranspose2d(k=3, s=2, p=1, output_padding=1) via 4 sub-pixel phases.

    a:(Cin,Np_in) f32.  wph_ref:(4,Cout,4*Cin) bf16 phase weights.
    g_ref:(4,Np_in,Np_out) bf16 0/1 scatter matrices interleaving each phase
    onto the (2H x 2W) output layout.  Returns (Cout, Np_out) f32.
    """
    _, np_in = a.shape
    wp = w_img + 2
    m = wp + 1
    aw = _widen(a, m)
    taps = []
    for dy in range(2):
        for dx in range(2):
            o = m + dy * wp + dx
            taps.append(aw[:, o:o + np_in])
    x4 = jnp.concatenate(taps, axis=0).astype(jnp.bfloat16)       # (4*Cin, Np_in)
    total = None
    for p in range(4):
        ph = jnp.dot(wph_ref[p], x4, preferred_element_type=jnp.float32)
        sc = jnp.dot(ph.astype(jnp.bfloat16), g_ref[p],
                     preferred_element_type=jnp.float32)
        total = sc if total is None else total + sc
    out = act(total + bias)
    if mask is not None:
        out = out * mask
    return out


def _decoder_kernel(z_ref,
                    wg1_ref, b1_ref,
                    wph1_ref, g1_ref, bct1_ref, mask2_ref,
                    wc1_ref, bc1_ref,
                    wph2_ref, g2_ref, bct2_ref, mask3_ref,
                    wc2_ref, bc2_ref,
                    wph3_ref, g3_ref, bct3_ref,
                    out_ref):
    b = pl.program_id(0)

    # -- Linear(latent -> 2c*16) + GELU, laid out as (2c, 6*6) padded 4x4 map --
    latent = wg1_ref.shape[0]
    acc = jnp.zeros(wg1_ref.shape[1:], jnp.float32)
    for k in range(latent):                       # unrolled; latent is small
        acc = acc + z_ref[b, k] * wg1_ref[k]
    a = _gelu(acc + b1_ref[...])                  # pad ring stays exactly 0

    # -- ConvT(2c->2c, s2) + GELU : 4x4 -> 8x8 --------------------------------
    a = _convt3x3_s2(a, wph1_ref, g1_ref, bct1_ref[...], 4, _gelu, mask2_ref[...])
    # -- Conv(2c->2c) + GELU : 8x8 --------------------------------------------
    a = _conv3x3(a, wc1_ref[...], bc1_ref[...], 8, _gelu, mask2_ref[...])
    # -- ConvT(2c->c, s2) + GELU : 8x8 -> 16x16 -------------------------------
    a = _convt3x3_s2(a, wph2_ref, g2_ref, bct2_ref[...], 8, _gelu, mask3_ref[...])
    # -- Conv(c->c) + GELU : 16x16 --------------------------------------------
    a = _conv3x3(a, wc2_ref[...], bc2_ref[...], 16, _gelu, mask3_ref[...])
    # -- ConvT(c->n_out, s2) + Tanh : 16x16 -> 32x32 (dense, no pad ring) -----
    y = _convt3x3_s2(a, wph3_ref, g3_ref, bct3_ref[...], 16, jnp.tanh, None)

    out_ref[...] = y.astype(out_ref.dtype)


# ----------------------------------------------------------------------------
# One-time host-side layout preparation (weights, scatter matrices, masks).
# ----------------------------------------------------------------------------
def _pad_mask(h, w):
    m = np.zeros((1, (h + 2) * (w + 2)), np.float32)
    for y in range(h):
        for x in range(w):
            m[0, (y + 1) * (w + 2) + (x + 1)] = 1.0
    return m


def _scatter_mats(h, w, pad_out):
    """0/1 matrices scattering each sub-pixel phase to its output positions."""
    wp = w + 2
    np_in = (h + 2) * (w + 2)
    ho, wo = 2 * h, 2 * w
    if pad_out:
        wpo, np_out, off = wo + 2, (ho + 2) * (wo + 2), 1
    else:
        wpo, np_out, off = wo, ho * wo, 0
    g = np.zeros((4, np_in, np_out), np.float32)
    for py in range(2):
        for px in range(2):
            ph = py * 2 + px
            for y in range(h):
                for x in range(w):
                    p = (y + 1) * wp + (x + 1)
                    q = (2 * y + py + off) * wpo + (2 * x + px + off)
                    g[ph, p, q] = 1.0
    return g


def _pack_conv(w):
    """torch Conv2d weight (Cout,Cin,3,3) -> (Cout, 9*Cin), tap order (dh,dw)."""
    cout, cin = w.shape[:2]
    return np.transpose(w, (0, 2, 3, 1)).reshape(cout, 9 * cin)


def _pack_convt(w_t):
    """torch ConvTranspose2d weight (Cin,Cout,3,3) -> (4, Cout, 4*Cin) phase
    matrices; tap order is (dy,dx) in {0,1}^2 (input offsets)."""
    cin, cout = w_t.shape[:2]
    wph = np.zeros((4, cout, 4 * cin), np.float32)
    for py in range(2):
        for px in range(2):
            ph = py * 2 + px
            for dy in range(2):
                for dx in range(2):
                    if (py == 0 and dy == 1) or (px == 0 and dx == 1):
                        continue
                    kh = 1 if py == 0 else (0 if dy == 1 else 2)
                    kw = 1 if px == 0 else (0 if dx == 1 else 2)
                    blk = dy * 2 + dx
                    wph[ph, :, blk * cin:(blk + 1) * cin] = w_t[:, :, kh, kw].T
    return wph


def _pack_linear(w_lin, b_lin, c2):
    """torch Linear weight (c2*16, latent) -> per-latent (c2, 6*6) maps on the
    padded 4x4 layout (zeros on the pad ring); matches x.reshape(B, 2c, 4, 4)."""
    out_dim, latent = w_lin.shape
    assert out_dim == c2 * 16
    wg = np.zeros((latent, c2, 36), np.float32)
    bg = np.zeros((c2, 36), np.float32)
    for ch in range(c2):
        for y in range(4):
            for x in range(4):
                j = (y + 1) * 6 + (x + 1)
                r = ch * 16 + y * 4 + x
                wg[:, ch, j] = w_lin[r, :]
                bg[ch, j] = b_lin[r]
    return wg, bg


def prepare_decoder_params(params, num_input_channels, base_channel_size,
                           latent_dim):
    """One-time layout transforms: torch-layout params -> kernel operands."""
    del num_input_channels, latent_dim  # implied by the array shapes
    c = base_channel_size
    c2 = 2 * c
    p = {k: np.asarray(v, np.float32) for k, v in params.items()}
    bf16 = jnp.bfloat16
    wg1, b1 = _pack_linear(p["lin_w"], p["lin_b"], c2)
    return {
        "wg1": jnp.asarray(wg1),
        "b1": jnp.asarray(b1),
        "wph1": jnp.asarray(_pack_convt(p["ct1_w"]), dtype=bf16),
        "g1": jnp.asarray(_scatter_mats(4, 4, True), dtype=bf16),
        "bct1": jnp.asarray(p["ct1_b"].reshape(-1, 1)),
        "mask2": jnp.asarray(_pad_mask(8, 8)),
        "wc1": jnp.asarray(_pack_conv(p["c1_w"]), dtype=bf16),
        "bc1": jnp.asarray(p["c1_b"].reshape(-1, 1)),
        "wph2": jnp.asarray(_pack_convt(p["ct2_w"]), dtype=bf16),
        "g2": jnp.asarray(_scatter_mats(8, 8, True), dtype=bf16),
        "bct2": jnp.asarray(p["ct2_b"].reshape(-1, 1)),
        "mask3": jnp.asarray(_pad_mask(16, 16)),
        "wc2": jnp.asarray(_pack_conv(p["c2_w"]), dtype=bf16),
        "bc2": jnp.asarray(p["c2_b"].reshape(-1, 1)),
        "wph3": jnp.asarray(_pack_convt(p["ct3_w"]), dtype=bf16),
        "g3": jnp.asarray(_scatter_mats(16, 16, False), dtype=bf16),
        "bct3": jnp.asarray(p["ct3_b"].reshape(-1, 1)),
    }


# ----------------------------------------------------------------------------
# pallas_call wrapper
# ----------------------------------------------------------------------------
_OPERAND_ORDER = ("wg1", "b1",
                  "wph1", "g1", "bct1", "mask2",
                  "wc1", "bc1",
                  "wph2", "g2", "bct2", "mask3",
                  "wc2", "bc2",
                  "wph3", "g3", "bct3")


def _const_spec(x):
    zeros = (0,) * x.ndim
    return pl.BlockSpec(x.shape, lambda b: zeros)   # fetched once (constant map)


def decoder_forward(prep, z):
    """z: (B, latent) f32  ->  (B, num_input_channels, 32, 32) f32 (NCHW)."""
    bsz = z.shape[0]
    c_out = prep["wph3"].shape[1]
    operands = [prep[name] for name in _OPERAND_ORDER]

    out = pl.pallas_call(
        _decoder_kernel,
        out_shape=jax.ShapeDtypeStruct((bsz, c_out, 32 * 32), jnp.float32),
        grid=(bsz,),
        in_specs=[pl.BlockSpec(memory_space=pltpu.MemorySpace.SMEM)]   # z (scalars)
                 + [_const_spec(x) for x in operands],
        out_specs=pl.BlockSpec((None, c_out, 32 * 32), lambda b: (b, 0, 0)),
        compiler_params=pltpu.CompilerParams(
            dimension_semantics=("parallel",),
            vmem_limit_bytes=32 * 1024 * 1024),
    )(z, *operands)
    return out.reshape(bsz, c_out, 32, 32)


# ----------------------------------------------------------------------------
# Deterministic synthetic parameters (stored in PyTorch layouts).
# ----------------------------------------------------------------------------
def init_decoder_params(key, num_input_channels, base_channel_size, latent_dim):
    c = base_channel_size
    ks = jax.random.split(key, 12)

    def rand(k, shape, scale=0.1):
        return (scale * jax.random.normal(k, shape)).astype(jnp.float32)

    return {
        "lin_w": rand(ks[0], (2 * 16 * c, latent_dim)),     # Linear: (out, in)
        "lin_b": rand(ks[1], (2 * 16 * c,)),
        "ct1_w": rand(ks[2], (2 * c, 2 * c, 3, 3)),         # ConvT: (in, out, kh, kw)
        "ct1_b": rand(ks[3], (2 * c,)),
        "c1_w": rand(ks[4], (2 * c, 2 * c, 3, 3)),          # Conv: (out, in, kh, kw)
        "c1_b": rand(ks[5], (2 * c,)),
        "ct2_w": rand(ks[6], (2 * c, c, 3, 3)),
        "ct2_b": rand(ks[7], (c,)),
        "c2_w": rand(ks[8], (c, c, 3, 3)),
        "c2_b": rand(ks[9], (c,)),
        "ct3_w": rand(ks[10], (c, num_input_channels, 3, 3)),
        "ct3_b": rand(ks[11], (num_input_channels,)),
    }


if __name__ == "__main__":
    num_input_channels = 3
    base_channel_size = 16
    latent_dim = 32
    batch = 2

    key = jax.random.PRNGKey(0)
    k_params, k_z = jax.random.split(key)
    params = init_decoder_params(k_params, num_input_channels,
                                 base_channel_size, latent_dim)
    prep = prepare_decoder_params(params, num_input_channels,
                                  base_channel_size, latent_dim)
    z = jax.random.normal(k_z, (batch, latent_dim), dtype=jnp.float32)

    out = jax.block_until_ready(jax.jit(decoder_forward)(prep, z))
    assert out.shape == (batch, num_input_channels, 32, 32), out.shape
    assert bool(jnp.all(jnp.isfinite(out)))
    print("KERNEL_OK")
</pallas_src>

<mosaic_0001>
module attributes {stable_mosaic.version = 11 : i64} {
  func.func @_decoder_kernel(%arg0: i32, %arg1: memref<2x32xf32, #tpu.memory_space<smem>>, %arg2: memref<32x32x36xf32, #tpu.memory_space<vmem>>, %arg3: memref<32x36xf32, #tpu.memory_space<vmem>>, %arg4: memref<4x32x128xbf16, #tpu.memory_space<vmem>>, %arg5: memref<4x36x100xbf16, #tpu.memory_space<vmem>>, %arg6: memref<32x1xf32, #tpu.memory_space<vmem>>, %arg7: memref<1x100xf32, #tpu.memory_space<vmem>>, %arg8: memref<32x288xbf16, #tpu.memory_space<vmem>>, %arg9: memref<32x1xf32, #tpu.memory_space<vmem>>, %arg10: memref<4x16x128xbf16, #tpu.memory_space<vmem>>, %arg11: memref<4x100x324xbf16, #tpu.memory_space<vmem>>, %arg12: memref<16x1xf32, #tpu.memory_space<vmem>>, %arg13: memref<1x324xf32, #tpu.memory_space<vmem>>, %arg14: memref<16x144xbf16, #tpu.memory_space<vmem>>, %arg15: memref<16x1xf32, #tpu.memory_space<vmem>>, %arg16: memref<4x3x64xbf16, #tpu.memory_space<vmem>>, %arg17: memref<4x324x1024xbf16, #tpu.memory_space<vmem>>, %arg18: memref<3x1xf32, #tpu.memory_space<vmem>>, %arg19: memref<1x3x1024xf32, #tpu.memory_space<vmem>>) attributes {dimension_semantics = [#tpu.dimension_semantics<parallel>], iteration_bounds = array<i64: 2>, scalar_prefetch = 0 : i64, scratch_operands = 0 : i64, tpu.core_type = #tpu.core_type<tc>, window_params = [{transform_indices = @transform_0, window_bounds = array<i64: 2, 32>}, {pipeline_mode = #tpu.pipeline_mode<synchronous>, transform_indices = @transform_1, window_bounds = array<i64: 32, 32, 36>}, {pipeline_mode = #tpu.pipeline_mode<synchronous>, transform_indices = @transform_2, window_bounds = array<i64: 32, 36>}, {pipeline_mode = #tpu.pipeline_mode<synchronous>, transform_indices = @transform_3, window_bounds = array<i64: 4, 32, 128>}, {pipeline_mode = #tpu.pipeline_mode<synchronous>, transform_indices = @transform_4, window_bounds = array<i64: 4, 36, 100>}, {pipeline_mode = #tpu.pipeline_mode<synchronous>, transform_indices = @transform_5, window_bounds = array<i64: 32, 1>}, {pipeline_mode = #tpu.pipeline_mode<synchronous>, transform_indices = @transform_6, window_bounds = array<i64: 1, 100>}, {pipeline_mode = #tpu.pipeline_mode<synchronous>, transform_indices = @transform_7, window_bounds = array<i64: 32, 288>}, {pipeline_mode = #tpu.pipeline_mode<synchronous>, transform_indices = @transform_8, window_bounds = array<i64: 32, 1>}, {pipeline_mode = #tpu.pipeline_mode<synchronous>, transform_indices = @transform_9, window_bounds = array<i64: 4, 16, 128>}, {pipeline_mode = #tpu.pipeline_mode<synchronous>, transform_indices = @transform_10, window_bounds = array<i64: 4, 100, 324>}, {pipeline_mode = #tpu.pipeline_mode<synchronous>, transform_indices = @transform_11, window_bounds = array<i64: 16, 1>}, {pipeline_mode = #tpu.pipeline_mode<synchronous>, transform_indices = @transform_12, window_bounds = array<i64: 1, 324>}, {pipeline_mode = #tpu.pipeline_mode<synchronous>, transform_indices = @transform_13, window_bounds = array<i64: 16, 144>}, {pipeline_mode = #tpu.pipeline_mode<synchronous>, transform_indices = @transform_14, window_bounds = array<i64: 16, 1>}, {pipeline_mode = #tpu.pipeline_mode<synchronous>, transform_indices = @transform_15, window_bounds = array<i64: 4, 3, 64>}, {pipeline_mode = #tpu.pipeline_mode<synchronous>, transform_indices = @transform_16, window_bounds = array<i64: 4, 324, 1024>}, {pipeline_mode = #tpu.pipeline_mode<synchronous>, transform_indices = @transform_17, window_bounds = array<i64: 3, 1>}, {transform_indices = @transform_18, window_bounds = array<i64: 1, 3, 1024>}]} {
    %cst = arith.constant 0.000000e+00 : f32
    %0 = vector.broadcast %cst : f32 to vector<32x36xf32>
    %1 = arith.index_cast %arg0 : i32 to index
    %c0 = arith.constant 0 : index
    %2 = memref.load %arg1[%1, %c0] : memref<2x32xf32, #tpu.memory_space<smem>>
    %c0_0 = arith.constant 0 : index
    %c0_1 = arith.constant 0 : index
    %c0_2 = arith.constant 0 : index
    %3 = vector.load %arg2[%c0_0, %c0_1, %c0_2] : memref<32x32x36xf32, #tpu.memory_space<vmem>>, vector<1x32x36xf32>
    %4 = vector.shape_cast %3 : vector<1x32x36xf32> to vector<32x36xf32>
    %5 = vector.broadcast %2 : f32 to vector<32x36xf32>
    %6 = arith.mulf %5, %4 : vector<32x36xf32>
    %7 = arith.addf %0, %6 : vector<32x36xf32>
    %8 = arith.index_cast %arg0 : i32 to index
    %c1 = arith.constant 1 : index
    %9 = memref.load %arg1[%8, %c1] : memref<2x32xf32, #tpu.memory_space<smem>>
    %c1_3 = arith.constant 1 : index
    %c0_4 = arith.constant 0 : index
    %c0_5 = arith.constant 0 : index
    %10 = vector.load %arg2[%c1_3, %c0_4, %c0_5] : memref<32x32x36xf32, #tpu.memory_space<vmem>>, vector<1x32x36xf32>
    %11 = vector.shape_cast %10 : vector<1x32x36xf32> to vector<32x36xf32>
    %12 = vector.broadcast %9 : f32 to vector<32x36xf32>
    %13 = arith.mulf %12, %11 : vector<32x36xf32>
    %14 = arith.addf %7, %13 : vector<32x36xf32>
    %15 = arith.index_cast %arg0 : i32 to index
    %c2 = arith.constant 2 : index
    %16 = memref.load %arg1[%15, %c2] : memref<2x32xf32, #tpu.memory_space<smem>>
    %c2_6 = arith.constant 2 : index
    %c0_7 = arith.constant 0 : index
    %c0_8 = arith.constant 0 : index
    %17 = vector.load %arg2[%c2_6, %c0_7, %c0_8] : memref<32x32x36xf32, #tpu.memory_space<vmem>>, vector<1x32x36xf32>
    %18 = vector.shape_cast %17 : vector<1x32x36xf32> to vector<32x36xf32>
    %19 = vector.broadcast %16 : f32 to vector<32x36xf32>
    %20 = arith.mulf %19, %18 : vector<32x36xf32>
    %21 = arith.addf %14, %20 : vector<32x36xf32>
    %22 = arith.index_cast %arg0 : i32 to index
    %c3 = arith.constant 3 : index
    %23 = memref.load %arg1[%22, %c3] : memref<2x32xf32, #tpu.memory_space<smem>>
    %c3_9 = arith.constant 3 : index
    %c0_10 = arith.constant 0 : index
    %c0_11 = arith.constant 0 : index
    %24 = vector.load %arg2[%c3_9, %c0_10, %c0_11] : memref<32x32x36xf32, #tpu.memory_space<vmem>>, vector<1x32x36xf32>
    %25 = vector.shape_cast %24 : vector<1x32x36xf32> to vector<32x36xf32>
    %26 = vector.broadcast %23 : f32 to vector<32x36xf32>
    %27 = arith.mulf %26, %25 : vector<32x36xf32>
    %28 = arith.addf %21, %27 : vector<32x36xf32>
    %29 = arith.index_cast %arg0 : i32 to index
    %c4 = arith.constant 4 : index
    %30 = memref.load %arg1[%29, %c4] : memref<2x32xf32, #tpu.memory_space<smem>>
    %c4_12 = arith.constant 4 : index
    %c0_13 = arith.constant 0 : index
    %c0_14 = arith.constant 0 : index
    %31 = vector.load %arg2[%c4_12, %c0_13, %c0_14] : memref<32x32x36xf32, #tpu.memory_space<vmem>>, vector<1x32x36xf32>
    %32 = vector.shape_cast %31 : vector<1x32x36xf32> to vector<32x36xf32>
    %33 = vector.broadcast %30 : f32 to vector<32x36xf32>
    %34 = arith.mulf %33, %32 : vector<32x36xf32>
    %35 = arith.addf %28, %34 : vector<32x36xf32>
    %36 = arith.index_cast %arg0 : i32 to index
    %c5 = arith.constant 5 : index
    %37 = memref.load %arg1[%36, %c5] : memref<2x32xf32, #tpu.memory_space<smem>>
    %c5_15 = arith.constant 5 : index
    %c0_16 = arith.constant 0 : index
    %c0_17 = arith.constant 0 : index
    %38 = vector.load %arg2[%c5_15, %c0_16, %c0_17] : memref<32x32x36xf32, #tpu.memory_space<vmem>>, vector<1x32x36xf32>
    %39 = vector.shape_cast %38 : vector<1x32x36xf32> to vector<32x36xf32>
    %40 = vector.broadcast %37 : f32 to vector<32x36xf32>
    %41 = arith.mulf %40, %39 : vector<32x36xf32>
    %42 = arith.addf %35, %41 : vector<32x36xf32>
    %43 = arith.index_cast %arg0 : i32 to index
    %c6 = arith.constant 6 : index
    %44 = memref.load %arg1[%43, %c6] : memref<2x32xf32, #tpu.memory_space<smem>>
    %c6_18 = arith.constant 6 : index
    %c0_19 = arith.constant 0 : index
    %c0_20 = arith.constant 0 : index
    %45 = vector.load %arg2[%c6_18, %c0_19, %c0_20] : memref<32x32x36xf32, #tpu.memory_space<vmem>>, vector<1x32x36xf32>
    %46 = vector.shape_cast %45 : vector<1x32x36xf32> to vector<32x36xf32>
    %47 = vector.broadcast %44 : f32 to vector<32x36xf32>
    %48 = arith.mulf %47, %46 : vector<32x36xf32>
    %49 = arith.addf %42, %48 : vector<32x36xf32>
    %50 = arith.index_cast %arg0 : i32 to index
    %c7 = arith.constant 7 : index
    %51 = memref.load %arg1[%50, %c7] : memref<2x32xf32, #tpu.memory_space<smem>>
    %c7_21 = arith.constant 7 : index
    %c0_22 = arith.constant 0 : index
    %c0_23 = arith.constant 0 : index
    %52 = vector.load %arg2[%c7_21, %c0_22, %c0_23] : memref<32x32x36xf32, #tpu.memory_space<vmem>>, vector<1x32x36xf32>
    %53 = vector.shape_cast %52 : vector<1x32x36xf32> to vector<32x36xf32>
    %54 = vector.broadcast %51 : f32 to vector<32x36xf32>
    %55 = arith.mulf %54, %53 : vector<32x36xf32>
    %56 = arith.addf %49, %55 : vector<32x36xf32>
    %57 = arith.index_cast %arg0 : i32 to index
    %c8 = arith.constant 8 : index
    %58 = memref.load %arg1[%57, %c8] : memref<2x32xf32, #tpu.memory_space<smem>>
    %c8_24 = arith.constant 8 : index
    %c0_25 = arith.constant 0 : index
    %c0_26 = arith.constant 0 : index
    %59 = vector.load %arg2[%c8_24, %c0_25, %c0_26] : memref<32x32x36xf32, #tpu.memory_space<vmem>>, vector<1x32x36xf32>
    %60 = vector.shape_cast %59 : vector<1x32x36xf32> to vector<32x36xf32>
    %61 = vector.broadcast %58 : f32 to vector<32x36xf32>
    %62 = arith.mulf %61, %60 : vector<32x36xf32>
    %63 = arith.addf %56, %62 : vector<32x36xf32>
    %64 = arith.index_cast %arg0 : i32 to index
    %c9 = arith.constant 9 : index
    %65 = memref.load %arg1[%64, %c9] : memref<2x32xf32, #tpu.memory_space<smem>>
    %c9_27 = arith.constant 9 : index
    %c0_28 = arith.constant 0 : index
    %c0_29 = arith.constant 0 : index
    %66 = vector.load %arg2[%c9_27, %c0_28, %c0_29] : memref<32x32x36xf32, #tpu.memory_space<vmem>>, vector<1x32x36xf32>
    %67 = vector.shape_cast %66 : vector<1x32x36xf32> to vector<32x36xf32>
    %68 = vector.broadcast %65 : f32 to vector<32x36xf32>
    %69 = arith.mulf %68, %67 : vector<32x36xf32>
    %70 = arith.addf %63, %69 : vector<32x36xf32>
    %71 = arith.index_cast %arg0 : i32 to index
    %c10 = arith.constant 10 : index
    %72 = memref.load %arg1[%71, %c10] : memref<2x32xf32, #tpu.memory_space<smem>>
    %c10_30 = arith.constant 10 : index
    %c0_31 = arith.constant 0 : index
    %c0_32 = arith.constant 0 : index
    %73 = vector.load %arg2[%c10_30, %c0_31, %c0_32] : memref<32x32x36xf32, #tpu.memory_space<vmem>>, vector<1x32x36xf32>
    %74 = vector.shape_cast %73 : vector<1x32x36xf32> to vector<32x36xf32>
    %75 = vector.broadcast %72 : f32 to vector<32x36xf32>
    %76 = arith.mulf %75, %74 : vector<32x36xf32>
    %77 = arith.addf %70, %76 : vector<32x36xf32>
    %78 = arith.index_cast %arg0 : i32 to index
    %c11 = arith.constant 11 : index
    %79 = memref.load %arg1[%78, %c11] : memref<2x32xf32, #tpu.memory_space<smem>>
    %c11_33 = arith.constant 11 : index
    %c0_34 = arith.constant 0 : index
    %c0_35 = arith.constant 0 : index
    %80 = vector.load %arg2[%c11_33, %c0_34, %c0_35] : memref<32x32x36xf32, #tpu.memory_space<vmem>>, vector<1x32x36xf32>
    %81 = vector.shape_cast %80 : vector<1x32x36xf32> to vector<32x36xf32>
    %82 = vector.broadcast %79 : f32 to vector<32x36xf32>
    %83 = arith.mulf %82, %81 : vector<32x36xf32>
    %84 = arith.addf %77, %83 : vector<32x36xf32>
    %85 = arith.index_cast %arg0 : i32 to index
    %c12 = arith.constant 12 : index
    %86 = memref.load %arg1[%85, %c12] : memref<2x32xf32, #tpu.memory_space<smem>>
    %c12_36 = arith.constant 12 : index
    %c0_37 = arith.constant 0 : index
    %c0_38 = arith.constant 0 : index
    %87 = vector.load %arg2[%c12_36, %c0_37, %c0_38] : memref<32x32x36xf32, #tpu.memory_space<vmem>>, vector<1x32x36xf32>
    %88 = vector.shape_cast %87 : vector<1x32x36xf32> to vector<32x36xf32>
    %89 = vector.broadcast %86 : f32 to vector<32x36xf32>
    %90 = arith.mulf %89, %88 : vector<32x36xf32>
    %91 = arith.addf %84, %90 : vector<32x36xf32>
    %92 = arith.index_cast %arg0 : i32 to index
    %c13 = arith.constant 13 : index
    %93 = memref.load %arg1[%92, %c13] : memref<2x32xf32, #tpu.memory_space<smem>>
    %c13_39 = arith.constant 13 : index
    %c0_40 = arith.constant 0 : index
    %c0_41 = arith.constant 0 : index
    %94 = vector.load %arg2[%c13_39, %c0_40, %c0_41] : memref<32x32x36xf32, #tpu.memory_space<vmem>>, vector<1x32x36xf32>
    %95 = vector.shape_cast %94 : vector<1x32x36xf32> to vector<32x36xf32>
    %96 = vector.broadcast %93 : f32 to vector<32x36xf32>
    %97 = arith.mulf %96, %95 : vector<32x36xf32>
    %98 = arith.addf %91, %97 : vector<32x36xf32>
    %99 = arith.index_cast %arg0 : i32 to index
    %c14 = arith.constant 14 : index
    %100 = memref.load %arg1[%99, %c14] : memref<2x32xf32, #tpu.memory_space<smem>>
    %c14_42 = arith.constant 14 : index
    %c0_43 = arith.constant 0 : index
    %c0_44 = arith.constant 0 : index
    %101 = vector.load %arg2[%c14_42, %c0_43, %c0_44] : memref<32x32x36xf32, #tpu.memory_space<vmem>>, vector<1x32x36xf32>
    %102 = vector.shape_cast %101 : vector<1x32x36xf32> to vector<32x36xf32>
    %103 = vector.broadcast %100 : f32 to vector<32x36xf32>
    %104 = arith.mulf %103, %102 : vector<32x36xf32>
    %105 = arith.addf %98, %104 : vector<32x36xf32>
    %106 = arith.index_cast %arg0 : i32 to index
    %c15 = arith.constant 15 : index
    %107 = memref.load %arg1[%106, %c15] : memref<2x32xf32, #tpu.memory_space<smem>>
    %c15_45 = arith.constant 15 : index
    %c0_46 = arith.constant 0 : index
    %c0_47 = arith.constant 0 : index
    %108 = vector.load %arg2[%c15_45, %c0_46, %c0_47] : memref<32x32x36xf32, #tpu.memory_space<vmem>>, vector<1x32x36xf32>
    %109 = vector.shape_cast %108 : vector<1x32x36xf32> to vector<32x36xf32>
    %110 = vector.broadcast %107 : f32 to vector<32x36xf32>
    %111 = arith.mulf %110, %109 : vector<32x36xf32>
    %112 = arith.addf %105, %111 : vector<32x36xf32>
    %113 = arith.index_cast %arg0 : i32 to index
    %c16 = arith.constant 16 : index
    %114 = memref.load %arg1[%113, %c16] : memref<2x32xf32, #tpu.memory_space<smem>>
    %c16_48 = arith.constant 16 : index
    %c0_49 = arith.constant 0 : index
    %c0_50 = arith.constant 0 : index
    %115 = vector.load %arg2[%c16_48, %c0_49, %c0_50] : memref<32x32x36xf32, #tpu.memory_space<vmem>>, vector<1x32x36xf32>
    %116 = vector.shape_cast %115 : vector<1x32x36xf32> to vector<32x36xf32>
    %117 = vector.broadcast %114 : f32 to vector<32x36xf32>
    %118 = arith.mulf %117, %116 : vector<32x36xf32>
    %119 = arith.addf %112, %118 : vector<32x36xf32>
    %120 = arith.index_cast %arg0 : i32 to index
    %c17 = arith.constant 17 : index
    %121 = memref.load %arg1[%120, %c17] : memref<2x32xf32, #tpu.memory_space<smem>>
    %c17_51 = arith.constant 17 : index
    %c0_52 = arith.constant 0 : index
    %c0_53 = arith.constant 0 : index
    %122 = vector.load %arg2[%c17_51, %c0_52, %c0_53] : memref<32x32x36xf32, #tpu.memory_space<vmem>>, vector<1x32x36xf32>
    %123 = vector.shape_cast %122 : vector<1x32x36xf32> to vector<32x36xf32>
    %124 = vector.broadcast %121 : f32 to vector<32x36xf32>
    %125 = arith.mulf %124, %123 : vector<32x36xf32>
    %126 = arith.addf %119, %125 : vector<32x36xf32>
    %127 = arith.index_cast %arg0 : i32 to index
    %c18 = arith.constant 18 : index
    %128 = memref.load %arg1[%127, %c18] : memref<2x32xf32, #tpu.memory_space<smem>>
    %c18_54 = arith.constant 18 : index
    %c0_55 = arith.constant 0 : index
    %c0_56 = arith.constant 0 : index
    %129 = vector.load %arg2[%c18_54, %c0_55, %c0_56] : memref<32x32x36xf32, #tpu.memory_space<vmem>>, vector<1x32x36xf32>
    %130 = vector.shape_cast %129 : vector<1x32x36xf32> to vector<32x36xf32>
    %131 = vector.broadcast %128 : f32 to vector<32x36xf32>
    %132 = arith.mulf %131, %130 : vector<32x36xf32>
    %133 = arith.addf %126, %132 : vector<32x36xf32>
    %134 = arith.index_cast %arg0 : i32 to index
    %c19 = arith.constant 19 : index
    %135 = memref.load %arg1[%134, %c19] : memref<2x32xf32, #tpu.memory_space<smem>>
    %c19_57 = arith.constant 19 : index
    %c0_58 = arith.constant 0 : index
    %c0_59 = arith.constant 0 : index
    %136 = vector.load %arg2[%c19_57, %c0_58, %c0_59] : memref<32x32x36xf32, #tpu.memory_space<vmem>>, vector<1x32x36xf32>
    %137 = vector.shape_cast %136 : vector<1x32x36xf32> to vector<32x36xf32>
    %138 = vector.broadcast %135 : f32 to vector<32x36xf32>
    %139 = arith.mulf %138, %137 : vector<32x36xf32>
    %140 = arith.addf %133, %139 : vector<32x36xf32>
    %141 = arith.index_cast %arg0 : i32 to index
    %c20 = arith.constant 20 : index
    %142 = memref.load %arg1[%141, %c20] : memref<2x32xf32, #tpu.memory_space<smem>>
    %c20_60 = arith.constant 20 : index
    %c0_61 = arith.constant 0 : index
    %c0_62 = arith.constant 0 : index
    %143 = vector.load %arg2[%c20_60, %c0_61, %c0_62] : memref<32x32x36xf32, #tpu.memory_space<vmem>>, vector<1x32x36xf32>
    %144 = vector.shape_cast %143 : vector<1x32x36xf32> to vector<32x36xf32>
    %145 = vector.broadcast %142 : f32 to vector<32x36xf32>
    %146 = arith.mulf %145, %144 : vector<32x36xf32>
    %147 = arith.addf %140, %146 : vector<32x36xf32>
    %148 = arith.index_cast %arg0 : i32 to index
    %c21 = arith.constant 21 : index
    %149 = memref.load %arg1[%148, %c21] : memref<2x32xf32, #tpu.memory_space<smem>>
    %c21_63 = arith.constant 21 : index
    %c0_64 = arith.constant 0 : index
    %c0_65 = arith.constant 0 : index
    %150 = vector.load %arg2[%c21_63, %c0_64, %c0_65] : memref<32x32x36xf32, #tpu.memory_space<vmem>>, vector<1x32x36xf32>
    %151 = vector.shape_cast %150 : vector<1x32x36xf32> to vector<32x36xf32>
    %152 = vector.broadcast %149 : f32 to vector<32x36xf32>
    %153 = arith.mulf %152, %151 : vector<32x36xf32>
    %154 = arith.addf %147, %153 : vector<32x36xf32>
    %155 = arith.index_cast %arg0 : i32 to index
    %c22 = arith.constant 22 : index
    %156 = memref.load %arg1[%155, %c22] : memref<2x32xf32, #tpu.memory_space<smem>>
    %c22_66 = arith.constant 22 : index
    %c0_67 = arith.constant 0 : index
    %c0_68 = arith.constant 0 : index
    %157 = vector.load %arg2[%c22_66, %c0_67, %c0_68] : memref<32x32x36xf32, #tpu.memory_space<vmem>>, vector<1x32x36xf32>
    %158 = vector.shape_cast %157 : vector<1x32x36xf32> to vector<32x36xf32>
    %159 = vector.broadcast %156 : f32 to vector<32x36xf32>
    %160 = arith.mulf %159, %158 : vector<32x36xf32>
    %161 = arith.addf %154, %160 : vector<32x36xf32>
    %162 = arith.index_cast %arg0 : i32 to index
    %c23 = arith.constant 23 : index
    %163 = memref.load %arg1[%162, %c23] : memref<2x32xf32, #tpu.memory_space<smem>>
    %c23_69 = arith.constant 23 : index
    %c0_70 = arith.constant 0 : index
    %c0_71 = arith.constant 0 : index
    %164 = vector.load %arg2[%c23_69, %c0_70, %c0_71] : memref<32x32x36xf32, #tpu.memory_space<vmem>>, vector<1x32x36xf32>
    %165 = vector.shape_cast %164 : vector<1x32x36xf32> to vector<32x36xf32>
    %166 = vector.broadcast %163 : f32 to vector<32x36xf32>
    %167 = arith.mulf %166, %165 : vector<32x36xf32>
    %168 = arith.addf %161, %167 : vector<32x36xf32>
    %169 = arith.index_cast %arg0 : i32 to index
    %c24 = arith.constant 24 : index
    %170 = memref.load %arg1[%169, %c24] : memref<2x32xf32, #tpu.memory_space<smem>>
    %c24_72 = arith.constant 24 : index
    %c0_73 = arith.constant 0 : index
    %c0_74 = arith.constant 0 : index
    %171 = vector.load %arg2[%c24_72, %c0_73, %c0_74] : memref<32x32x36xf32, #tpu.memory_space<vmem>>, vector<1x32x36xf32>
    %172 = vector.shape_cast %171 : vector<1x32x36xf32> to vector<32x36xf32>
    %173 = vector.broadcast %170 : f32 to vector<32x36xf32>
    %174 = arith.mulf %173, %172 : vector<32x36xf32>
    %175 = arith.addf %168, %174 : vector<32x36xf32>
    %176 = arith.index_cast %arg0 : i32 to index
    %c25 = arith.constant 25 : index
    %177 = memref.load %arg1[%176, %c25] : memref<2x32xf32, #tpu.memory_space<smem>>
    %c25_75 = arith.constant 25 : index
    %c0_76 = arith.constant 0 : index
    %c0_77 = arith.constant 0 : index
    %178 = vector.load %arg2[%c25_75, %c0_76, %c0_77] : memref<32x32x36xf32, #tpu.memory_space<vmem>>, vector<1x32x36xf32>
    %179 = vector.shape_cast %178 : vector<1x32x36xf32> to vector<32x36xf32>
    %180 = vector.broadcast %177 : f32 to vector<32x36xf32>
    %181 = arith.mulf %180, %179 : vector<32x36xf32>
    %182 = arith.addf %175, %181 : vector<32x36xf32>
    %183 = arith.index_cast %arg0 : i32 to index
    %c26 = arith.constant 26 : index
    %184 = memref.load %arg1[%183, %c26] : memref<2x32xf32, #tpu.memory_space<smem>>
    %c26_78 = arith.constant 26 : index
    %c0_79 = arith.constant 0 : index
    %c0_80 = arith.constant 0 : index
    %185 = vector.load %arg2[%c26_78, %c0_79, %c0_80] : memref<32x32x36xf32, #tpu.memory_space<vmem>>, vector<1x32x36xf32>
    %186 = vector.shape_cast %185 : vector<1x32x36xf32> to vector<32x36xf32>
    %187 = vector.broadcast %184 : f32 to vector<32x36xf32>
    %188 = arith.mulf %187, %186 : vector<32x36xf32>
    %189 = arith.addf %182, %188 : vector<32x36xf32>
    %190 = arith.index_cast %arg0 : i32 to index
    %c27 = arith.constant 27 : index
    %191 = memref.load %arg1[%190, %c27] : memref<2x32xf32, #tpu.memory_space<smem>>
    %c27_81 = arith.constant 27 : index
    %c0_82 = arith.constant 0 : index
    %c0_83 = arith.constant 0 : index
    %192 = vector.load %arg2[%c27_81, %c0_82, %c0_83] : memref<32x32x36xf32, #tpu.memory_space<vmem>>, vector<1x32x36xf32>
    %193 = vector.shape_cast %192 : vector<1x32x36xf32> to vector<32x36xf32>
    %194 = vector.broadcast %191 : f32 to vector<32x36xf32>
    %195 = arith.mulf %194, %193 : vector<32x36xf32>
    %196 = arith.addf %189, %195 : vector<32x36xf32>
    %197 = arith.index_cast %arg0 : i32 to index
    %c28 = arith.constant 28 : index
    %198 = memref.load %arg1[%197, %c28] : memref<2x32xf32, #tpu.memory_space<smem>>
    %c28_84 = arith.constant 28 : index
    %c0_85 = arith.constant 0 : index
    %c0_86 = arith.constant 0 : index
    %199 = vector.load %arg2[%c28_84, %c0_85, %c0_86] : memref<32x32x36xf32, #tpu.memory_space<vmem>>, vector<1x32x36xf32>
    %200 = vector.shape_cast %199 : vector<1x32x36xf32> to vector<32x36xf32>
    %201 = vector.broadcast %198 : f32 to vector<32x36xf32>
    %202 = arith.mulf %201, %200 : vector<32x36xf32>
    %203 = arith.addf %196, %202 : vector<32x36xf32>
    %204 = arith.index_cast %arg0 : i32 to index
    %c29 = arith.constant 29 : index
    %205 = memref.load %arg1[%204, %c29] : memref<2x32xf32, #tpu.memory_space<smem>>
    %c29_87 = arith.constant 29 : index
    %c0_88 = arith.constant 0 : index
    %c0_89 = arith.constant 0 : index
    %206 = vector.load %arg2[%c29_87, %c0_88, %c0_89] : memref<32x32x36xf32, #tpu.memory_space<vmem>>, vector<1x32x36xf32>
    %207 = vector.shape_cast %206 : vector<1x32x36xf32> to vector<32x36xf32>
    %208 = vector.broadcast %205 : f32 to vector<32x36xf32>
    %209 = arith.mulf %208, %207 : vector<32x36xf32>
    %210 = arith.addf %203, %209 : vector<32x36xf32>
    %211 = arith.index_cast %arg0 : i32 to index
    %c30 = arith.constant 30 : index
    %212 = memref.load %arg1[%211, %c30] : memref<2x32xf32, #tpu.memory_space<smem>>
    %c30_90 = arith.constant 30 : index
    %c0_91 = arith.constant 0 : index
    %c0_92 = arith.constant 0 : index
    %213 = vector.load %arg2[%c30_90, %c0_91, %c0_92] : memref<32x32x36xf32, #tpu.memory_space<vmem>>, vector<1x32x36xf32>
    %214 = vector.shape_cast %213 : vector<1x32x36xf32> to vector<32x36xf32>
    %215 = vector.broadcast %212 : f32 to vector<32x36xf32>
    %216 = arith.mulf %215, %214 : vector<32x36xf32>
    %217 = arith.addf %210, %216 : vector<32x36xf32>
    %218 = arith.index_cast %arg0 : i32 to index
    %c31 = arith.constant 31 : index
    %219 = memref.load %arg1[%218, %c31] : memref<2x32xf32, #tpu.memory_space<smem>>
    %c31_93 = arith.constant 31 : index
    %c0_94 = arith.constant 0 : index
    %c0_95 = arith.constant 0 : index
    %220 = vector.load %arg2[%c31_93, %c0_94, %c0_95] : memref<32x32x36xf32, #tpu.memory_space<vmem>>, vector<1x32x36xf32>
    %221 = vector.shape_cast %220 : vector<1x32x36xf32> to vector<32x36xf32>
    %222 = vector.broadcast %219 : f32 to vector<32x36xf32>
    %223 = arith.mulf %222, %221 : vector<32x36xf32>
    %224 = arith.addf %217, %223 : vector<32x36xf32>
    %c0_96 = arith.constant 0 : index
    %c0_97 = arith.constant 0 : index
    %225 = vector.load %arg3[%c0_96, %c0_97] : memref<32x36xf32, #tpu.memory_space<vmem>>, vector<32x36xf32>
    %226 = arith.addf %224, %225 : vector<32x36xf32>
    %cst_98 = arith.constant 5.000000e-01 : f32
    %227 = vector.broadcast %cst_98 : f32 to vector<32x36xf32>
    %228 = arith.mulf %227, %226 : vector<32x36xf32>
    %cst_99 = arith.constant 4.471500e-02 : f32
    %229 = vector.broadcast %cst_99 : f32 to vector<32x36xf32>
    %230 = arith.mulf %229, %226 : vector<32x36xf32>
    %231 = arith.mulf %230, %226 : vector<32x36xf32>
    %232 = arith.mulf %231, %226 : vector<32x36xf32>
    %233 = arith.addf %226, %232 : vector<32x36xf32>
    %cst_100 = arith.constant 0.797884583 : f32
    %234 = vector.broadcast %cst_100 : f32 to vector<32x36xf32>
    %235 = arith.mulf %234, %233 : vector<32x36xf32>
    %236 = math.tanh %235 : vector<32x36xf32>
    %cst_101 = arith.constant 1.000000e+00 : f32
    %237 = vector.broadcast %cst_101 : f32 to vector<32x36xf32>
    %238 = arith.addf %237, %236 : vector<32x36xf32>
    %239 = arith.mulf %228, %238 : vector<32x36xf32>
    %c0_102 = arith.constant 0 : index
    %c0_103 = arith.constant 0 : index
    %240 = vector.load %arg6[%c0_102, %c0_103] : memref<32x1xf32, #tpu.memory_space<vmem>>, vector<32x1xf32>
    %c0_104 = arith.constant 0 : index
    %c0_105 = arith.constant 0 : index
    %241 = vector.load %arg7[%c0_104, %c0_105] : memref<1x100xf32, #tpu.memory_space<vmem>>, vector<1x100xf32>
    %cst_106 = arith.constant 0.000000e+00 : f32
    %242 = vector.broadcast %cst_106 : f32 to vector<32x7xf32>
    %243 = tpu.concatenate %242, %239, %242 in 1 : vector<32x7xf32>, vector<32x36xf32>, vector<32x7xf32> -> vector<32x50xf32>
    %244 = vector.extract_strided_slice %243 {offsets = [0, 7], sizes = [32, 36], strides = [1, 1]} : vector<32x50xf32> to vector<32x36xf32>
    %245 = vector.extract_strided_slice %243 {offsets = [0, 8], sizes = [32, 36], strides = [1, 1]} : vector<32x50xf32> to vector<32x36xf32>
    %246 = vector.extract_strided_slice %243 {offsets = [0, 13], sizes = [32, 36], strides = [1, 1]} : vector<32x50xf32> to vector<32x36xf32>
    %247 = vector.extract_strided_slice %243 {offsets = [0, 14], sizes = [32, 36], strides = [1, 1]} : vector<32x50xf32> to vector<32x36xf32>
    %248 = tpu.concatenate %244, %245, %246, %247 in 0 : vector<32x36xf32>, vector<32x36xf32>, vector<32x36xf32>, vector<32x36xf32> -> vector<128x36xf32>
    %249 = arith.truncf %248 : vector<128x36xf32> to vector<128x36xbf16>
    %c0_107 = arith.constant 0 : index
    %c0_108 = arith.constant 0 : index
    %c0_109 = arith.constant 0 : index
    %250 = vector.load %arg4[%c0_107, %c0_108, %c0_109] : memref<4x32x128xbf16, #tpu.memory_space<vmem>>, vector<1x32x128xbf16>
    %251 = vector.shape_cast %250 : vector<1x32x128xbf16> to vector<32x128xbf16>
    %cst_110 = arith.constant dense<0.000000e+00> : vector<32x36xf32>
    %252 = tpu.matmul %251, %249, %cst_110 {dimension_numbers = #tpu.dot_dimension_numbers<[1], [0], [0], [1], [0, 0, 1, 1], [], []>} : vector<32x128xbf16>, vector<128x36xbf16>, vector<32x36xf32> -> vector<32x36xf32>
    %253 = arith.truncf %252 : vector<32x36xf32> to vector<32x36xbf16>
    %c0_111 = arith.constant 0 : index
    %c0_112 = arith.constant 0 : index
    %c0_113 = arith.constant 0 : index
    %254 = vector.load %arg5[%c0_111, %c0_112, %c0_113] : memref<4x36x100xbf16, #tpu.memory_space<vmem>>, vector<1x36x100xbf16>
    %255 = vector.shape_cast %254 : vector<1x36x100xbf16> to vector<36x100xbf16>
    %cst_114 = arith.constant dense<0.000000e+00> : vector<32x100xf32>
    %256 = tpu.matmul %253, %255, %cst_114 {dimension_numbers = #tpu.dot_dimension_numbers<[1], [0], [0], [1], [0, 0, 1, 1], [], []>} : vector<32x36xbf16>, vector<36x100xbf16>, vector<32x100xf32> -> vector<32x100xf32>
    %c1_115 = arith.constant 1 : index
    %c0_116 = arith.constant 0 : index
    %c0_117 = arith.constant 0 : index
    %257 = vector.load %arg4[%c1_115, %c0_116, %c0_117] : memref<4x32x128xbf16, #tpu.memory_space<vmem>>, vector<1x32x128xbf16>
    %258 = vector.shape_cast %257 : vector<1x32x128xbf16> to vector<32x128xbf16>
    %cst_118 = arith.constant dense<0.000000e+00> : vector<32x36xf32>
    %259 = tpu.matmul %258, %249, %cst_118 {dimension_numbers = #tpu.dot_dimension_numbers<[1], [0], [0], [1], [0, 0, 1, 1], [], []>} : vector<32x128xbf16>, vector<128x36xbf16>, vector<32x36xf32> -> vector<32x36xf32>
    %260 = arith.truncf %259 : vector<32x36xf32> to vector<32x36xbf16>
    %c1_119 = arith.constant 1 : index
    %c0_120 = arith.constant 0 : index
    %c0_121 = arith.constant 0 : index
    %261 = vector.load %arg5[%c1_119, %c0_120, %c0_121] : memref<4x36x100xbf16, #tpu.memory_space<vmem>>, vector<1x36x100xbf16>
    %262 = vector.shape_cast %261 : vector<1x36x100xbf16> to vector<36x100xbf16>
    %cst_122 = arith.constant dense<0.000000e+00> : vector<32x100xf32>
    %263 = tpu.matmul %260, %262, %cst_122 {dimension_numbers = #tpu.dot_dimension_numbers<[1], [0], [0], [1], [0, 0, 1, 1], [], []>} : vector<32x36xbf16>, vector<36x100xbf16>, vector<32x100xf32> -> vector<32x100xf32>
    %264 = arith.addf %256, %263 : vector<32x100xf32>
    %c2_123 = arith.constant 2 : index
    %c0_124 = arith.constant 0 : index
    %c0_125 = arith.constant 0 : index
    %265 = vector.load %arg4[%c2_123, %c0_124, %c0_125] : memref<4x32x128xbf16, #tpu.memory_space<vmem>>, vector<1x32x128xbf16>
    %266 = vector.shape_cast %265 : vector<1x32x128xbf16> to vector<32x128xbf16>
    %cst_126 = arith.constant dense<0.000000e+00> : vector<32x36xf32>
    %267 = tpu.matmul %266, %249, %cst_126 {dimension_numbers = #tpu.dot_dimension_numbers<[1], [0], [0], [1], [0, 0, 1, 1], [], []>} : vector<32x128xbf16>, vector<128x36xbf16>, vector<32x36xf32> -> vector<32x36xf32>
    %268 = arith.truncf %267 : vector<32x36xf32> to vector<32x36xbf16>
    %c2_127 = arith.constant 2 : index
    %c0_128 = arith.constant 0 : index
    %c0_129 = arith.constant 0 : index
    %269 = vector.load %arg5[%c2_127, %c0_128, %c0_129] : memref<4x36x100xbf16, #tpu.memory_space<vmem>>, vector<1x36x100xbf16>
    %270 = vector.shape_cast %269 : vector<1x36x100xbf16> to vector<36x100xbf16>
    %cst_130 = arith.constant dense<0.000000e+00> : vector<32x100xf32>
    %271 = tpu.matmul %268, %270, %cst_130 {dimension_numbers = #tpu.dot_dimension_numbers<[1], [0], [0], [1], [0, 0, 1, 1], [], []>} : vector<32x36xbf16>, vector<36x100xbf16>, vector<32x100xf32> -> vector<32x100xf32>
    %272 = arith.addf %264, %271 : vector<32x100xf32>
    %c3_131 = arith.constant 3 : index
    %c0_132 = arith.constant 0 : index
    %c0_133 = arith.constant 0 : index
    %273 = vector.load %arg4[%c3_131, %c0_132, %c0_133] : memref<4x32x128xbf16, #tpu.memory_space<vmem>>, vector<1x32x128xbf16>
    %274 = vector.shape_cast %273 : vector<1x32x128xbf16> to vector<32x128xbf16>
    %cst_134 = arith.constant dense<0.000000e+00> : vector<32x36xf32>
    %275 = tpu.matmul %274, %249, %cst_134 {dimension_numbers = #tpu.dot_dimension_numbers<[1], [0], [0], [1], [0, 0, 1, 1], [], []>} : vector<32x128xbf16>, vector<128x36xbf16>, vector<32x36xf32> -> vector<32x36xf32>
    %276 = arith.truncf %275 : vector<32x36xf32> to vector<32x36xbf16>
    %c3_135 = arith.constant 3 : index
    %c0_136 = arith.constant 0 : index
    %c0_137 = arith.constant 0 : index
    %277 = vector.load %arg5[%c3_135, %c0_136, %c0_137] : memref<4x36x100xbf16, #tpu.memory_space<vmem>>, vector<1x36x100xbf16>
    %278 = vector.shape_cast %277 : vector<1x36x100xbf16> to vector<36x100xbf16>
    %cst_138 = arith.constant dense<0.000000e+00> : vector<32x100xf32>
    %279 = tpu.matmul %276, %278, %cst_138 {dimension_numbers = #tpu.dot_dimension_numbers<[1], [0], [0], [1], [0, 0, 1, 1], [], []>} : vector<32x36xbf16>, vector<36x100xbf16>, vector<32x100xf32> -> vector<32x100xf32>
    %280 = arith.addf %272, %279 : vector<32x100xf32>
    %281 = vector.broadcast %240 : vector<32x1xf32> to vector<32x100xf32>
    %282 = arith.addf %280, %281 : vector<32x100xf32>
    %cst_139 = arith.constant 5.000000e-01 : f32
    %283 = vector.broadcast %cst_139 : f32 to vector<32x100xf32>
    %284 = arith.mulf %283, %282 : vector<32x100xf32>
    %cst_140 = arith.constant 4.471500e-02 : f32
    %285 = vector.broadcast %cst_140 : f32 to vector<32x100xf32>
    %286 = arith.mulf %285, %282 : vector<32x100xf32>
    %287 = arith.mulf %286, %282 : vector<32x100xf32>
    %288 = arith.mulf %287, %282 : vector<32x100xf32>
    %289 = arith.addf %282, %288 : vector<32x100xf32>
    %cst_141 = arith.constant 0.797884583 : f32
    %290 = vector.broadcast %cst_141 : f32 to vector<32x100xf32>
    %291 = arith.mulf %290, %289 : vector<32x100xf32>
    %292 = math.tanh %291 : vector<32x100xf32>
    %cst_142 = arith.constant 1.000000e+00 : f32
    %293 = vector.broadcast %cst_142 : f32 to vector<32x100xf32>
    %294 = arith.addf %293, %292 : vector<32x100xf32>
    %295 = arith.mulf %284, %294 : vector<32x100xf32>
    %296 = vector.broadcast %241 : vector<1x100xf32> to vector<32x100xf32>
    %297 = arith.mulf %295, %296 : vector<32x100xf32>
    %c0_143 = arith.constant 0 : index
    %c0_144 = arith.constant 0 : index
    %298 = vector.load %arg8[%c0_143, %c0_144] : memref<32x288xbf16, #tpu.memory_space<vmem>>, vector<32x288xbf16>
    %c0_145 = arith.constant 0 : index
    %c0_146 = arith.constant 0 : index
    %299 = vector.load %arg9[%c0_145, %c0_146] : memref<32x1xf32, #tpu.memory_space<vmem>>, vector<32x1xf32>
    %c0_147 = arith.constant 0 : index
    %c0_148 = arith.constant 0 : index
    %300 = vector.load %arg7[%c0_147, %c0_148] : memref<1x100xf32, #tpu.memory_space<vmem>>, vector<1x100xf32>
    %cst_149 = arith.constant 0.000000e+00 : f32
    %301 = vector.broadcast %cst_149 : f32 to vector<32x11xf32>
    %302 = tpu.concatenate %301, %297, %301 in 1 : vector<32x11xf32>, vector<32x100xf32>, vector<32x11xf32> -> vector<32x122xf32>
    %303 = vector.extract_strided_slice %302 {offsets = [0, 0], sizes = [32, 100], strides = [1, 1]} : vector<32x122xf32> to vector<32x100xf32>
    %304 = vector.extract_strided_slice %302 {offsets = [0, 1], sizes = [32, 100], strides = [1, 1]} : vector<32x122xf32> to vector<32x100xf32>
    %305 = vector.extract_strided_slice %302 {offsets = [0, 2], sizes = [32, 100], strides = [1, 1]} : vector<32x122xf32> to vector<32x100xf32>
    %306 = vector.extract_strided_slice %302 {offsets = [0, 10], sizes = [32, 100], strides = [1, 1]} : vector<32x122xf32> to vector<32x100xf32>
    %307 = vector.extract_strided_slice %302 {offsets = [0, 11], sizes = [32, 100], strides = [1, 1]} : vector<32x122xf32> to vector<32x100xf32>
    %308 = vector.extract_strided_slice %302 {offsets = [0, 12], sizes = [32, 100], strides = [1, 1]} : vector<32x122xf32> to vector<32x100xf32>
    %309 = vector.extract_strided_slice %302 {offsets = [0, 20], sizes = [32, 100], strides = [1, 1]} : vector<32x122xf32> to vector<32x100xf32>
    %310 = vector.extract_strided_slice %302 {offsets = [0, 21], sizes = [32, 100], strides = [1, 1]} : vector<32x122xf32> to vector<32x100xf32>
    %311 = vector.extract_strided_slice %302 {offsets = [0, 22], sizes = [32, 100], strides = [1, 1]} : vector<32x122xf32> to vector<32x100xf32>
    %312 = tpu.concatenate %303, %304, %305, %306, %307, %308, %309, %310, %311 in 0 : vector<32x100xf32>, vector<32x100xf32>, vector<32x100xf32>, vector<32x100xf32>, vector<32x100xf32>, vector<32x100xf32>, vector<32x100xf32>, vector<32x100xf32>, vector<32x100xf32> -> vector<288x100xf32>
    %313 = arith.truncf %312 : vector<288x100xf32> to vector<288x100xbf16>
    %cst_150 = arith.constant dense<0.000000e+00> : vector<32x100xf32>
    %314 = tpu.matmul %298, %313, %cst_150 {dimension_numbers = #tpu.dot_dimension_numbers<[1], [0], [0], [1], [0, 0, 1, 1], [], []>} : vector<32x288xbf16>, vector<288x100xbf16>, vector<32x100xf32> -> vector<32x100xf32>
    %315 = vector.broadcast %299 : vector<32x1xf32> to vector<32x100xf32>
    %316 = arith.addf %314, %315 : vector<32x100xf32>
    %cst_151 = arith.constant 5.000000e-01 : f32
    %317 = vector.broadcast %cst_151 : f32 to vector<32x100xf32>
    %318 = arith.mulf %317, %316 : vector<32x100xf32>
    %cst_152 = arith.constant 4.471500e-02 : f32
    %319 = vector.broadcast %cst_152 : f32 to vector<32x100xf32>
    %320 = arith.mulf %319, %316 : vector<32x100xf32>
    %321 = arith.mulf %320, %316 : vector<32x100xf32>
    %322 = arith.mulf %321, %316 : vector<32x100xf32>
    %323 = arith.addf %316, %322 : vector<32x100xf32>
    %cst_153 = arith.constant 0.797884583 : f32
    %324 = vector.broadcast %cst_153 : f32 to vector<32x100xf32>
    %325 = arith.mulf %324, %323 : vector<32x100xf32>
    %326 = math.tanh %325 : vector<32x100xf32>
    %cst_154 = arith.constant 1.000000e+00 : f32
    %327 = vector.broadcast %cst_154 : f32 to vector<32x100xf32>
    %328 = arith.addf %327, %326 : vector<32x100xf32>
    %329 = arith.mulf %318, %328 : vector<32x100xf32>
    %330 = vector.broadcast %300 : vector<1x100xf32> to vector<32x100xf32>
    %331 = arith.mulf %329, %330 : vector<32x100xf32>
    %c0_155 = arith.constant 0 : index
    %c0_156 = arith.constant 0 : index
    %332 = vector.load %arg12[%c0_155, %c0_156] : memref<16x1xf32, #tpu.memory_space<vmem>>, vector<16x1xf32>
    %c0_157 = arith.constant 0 : index
    %c0_158 = arith.constant 0 : index
    %333 = vector.load %arg13[%c0_157, %c0_158] : memref<1x324xf32, #tpu.memory_space<vmem>>, vector<1x324xf32>
    %cst_159 = arith.constant 0.000000e+00 : f32
    %334 = vector.broadcast %cst_159 : f32 to vector<32x11xf32>
    %335 = tpu.concatenate %334, %331, %334 in 1 : vector<32x11xf32>, vector<32x100xf32>, vector<32x11xf32> -> vector<32x122xf32>
    %336 = vector.extract_strided_slice %335 {offsets = [0, 11], sizes = [32, 100], strides = [1, 1]} : vector<32x122xf32> to vector<32x100xf32>
    %337 = vector.extract_strided_slice %335 {offsets = [0, 12], sizes = [32, 100], strides = [1, 1]} : vector<32x122xf32> to vector<32x100xf32>
    %338 = vector.extract_strided_slice %335 {offsets = [0, 21], sizes = [32, 100], strides = [1, 1]} : vector<32x122xf32> to vector<32x100xf32>
    %339 = vector.extract_strided_slice %335 {offsets = [0, 22], sizes = [32, 100], strides = [1, 1]} : vector<32x122xf32> to vector<32x100xf32>
    %340 = tpu.concatenate %336, %337, %338, %339 in 0 : vector<32x100xf32>, vector<32x100xf32>, vector<32x100xf32>, vector<32x100xf32> -> vector<128x100xf32>
    %341 = arith.truncf %340 : vector<128x100xf32> to vector<128x100xbf16>
    %c0_160 = arith.constant 0 : index
    %c0_161 = arith.constant 0 : index
    %c0_162 = arith.constant 0 : index
    %342 = vector.load %arg10[%c0_160, %c0_161, %c0_162] : memref<4x16x128xbf16, #tpu.memory_space<vmem>>, vector<1x16x128xbf16>
    %343 = vector.shape_cast %342 : vector<1x16x128xbf16> to vector<16x128xbf16>
    %cst_163 = arith.constant dense<0.000000e+00> : vector<16x100xf32>
    %344 = tpu.matmul %343, %341, %cst_163 {dimension_numbers = #tpu.dot_dimension_numbers<[1], [0], [0], [1], [0, 0, 1, 1], [], []>} : vector<16x128xbf16>, vector<128x100xbf16>, vector<16x100xf32> -> vector<16x100xf32>
    %345 = arith.truncf %344 : vector<16x100xf32> to vector<16x100xbf16>
    %c0_164 = arith.constant 0 : index
    %c0_165 = arith.constant 0 : index
    %c0_166 = arith.constant 0 : index
    %346 = vector.load %arg11[%c0_164, %c0_165, %c0_166] : memref<4x100x324xbf16, #tpu.memory_space<vmem>>, vector<1x100x324xbf16>
    %347 = vector.shape_cast %346 : vector<1x100x324xbf16> to vector<100x324xbf16>
    %cst_167 = arith.constant dense<0.000000e+00> : vector<16x324xf32>
    %348 = tpu.matmul %345, %347, %cst_167 {dimension_numbers = #tpu.dot_dimension_numbers<[1], [0], [0], [1], [0, 0, 1, 1], [], []>} : vector<16x100xbf16>, vector<100x324xbf16>, vector<16x324xf32> -> vector<16x324xf32>
    %c1_168 = arith.constant 1 : index
    %c0_169 = arith.constant 0 : index
    %c0_170 = arith.constant 0 : index
    %349 = vector.load %arg10[%c1_168, %c0_169, %c0_170] : memref<4x16x128xbf16, #tpu.memory_space<vmem>>, vector<1x16x128xbf16>
    %350 = vector.shape_cast %349 : vector<1x16x128xbf16> to vector<16x128xbf16>
    %cst_171 = arith.constant dense<0.000000e+00> : vector<16x100xf32>
    %351 = tpu.matmul %350, %341, %cst_171 {dimension_numbers = #tpu.dot_dimension_numbers<[1], [0], [0], [1], [0, 0, 1, 1], [], []>} : vector<16x128xbf16>, vector<128x100xbf16>, vector<16x100xf32> -> vector<16x100xf32>
    %352 = arith.truncf %351 : vector<16x100xf32> to vector<16x100xbf16>
    %c1_172 = arith.constant 1 : index
    %c0_173 = arith.constant 0 : index
    %c0_174 = arith.constant 0 : index
    %353 = vector.load %arg11[%c1_172, %c0_173, %c0_174] : memref<4x100x324xbf16, #tpu.memory_space<vmem>>, vector<1x100x324xbf16>
    %354 = vector.shape_cast %353 : vector<1x100x324xbf16> to vector<100x324xbf16>
    %cst_175 = arith.constant dense<0.000000e+00> : vector<16x324xf32>
    %355 = tpu.matmul %352, %354, %cst_175 {dimension_numbers = #tpu.dot_dimension_numbers<[1], [0], [0], [1], [0, 0, 1, 1], [], []>} : vector<16x100xbf16>, vector<100x324xbf16>, vector<16x324xf32> -> vector<16x324xf32>
    %356 = arith.addf %348, %355 : vector<16x324xf32>
    %c2_176 = arith.constant 2 : index
    %c0_177 = arith.constant 0 : index
    %c0_178 = arith.constant 0 : index
    %357 = vector.load %arg10[%c2_176, %c0_177, %c0_178] : memref<4x16x128xbf16, #tpu.memory_space<vmem>>, vector<1x16x128xbf16>
    %358 = vector.shape_cast %357 : vector<1x16x128xbf16> to vector<16x128xbf16>
    %cst_179 = arith.constant dense<0.000000e+00> : vector<16x100xf32>
    %359 = tpu.matmul %358, %341, %cst_179 {dimension_numbers = #tpu.dot_dimension_numbers<[1], [0], [0], [1], [0, 0, 1, 1], [], []>} : vector<16x128xbf16>, vector<128x100xbf16>, vector<16x100xf32> -> vector<16x100xf32>
    %360 = arith.truncf %359 : vector<16x100xf32> to vector<16x100xbf16>
    %c2_180 = arith.constant 2 : index
    %c0_181 = arith.constant 0 : index
    %c0_182 = arith.constant 0 : index
    %361 = vector.load %arg11[%c2_180, %c0_181, %c0_182] : memref<4x100x324xbf16, #tpu.memory_space<vmem>>, vector<1x100x324xbf16>
    %362 = vector.shape_cast %361 : vector<1x100x324xbf16> to vector<100x324xbf16>
    %cst_183 = arith.constant dense<0.000000e+00> : vector<16x324xf32>
    %363 = tpu.matmul %360, %362, %cst_183 {dimension_numbers = #tpu.dot_dimension_numbers<[1], [0], [0], [1], [0, 0, 1, 1], [], []>} : vector<16x100xbf16>, vector<100x324xbf16>, vector<16x324xf32> -> vector<16x324xf32>
    %364 = arith.addf %356, %363 : vector<16x324xf32>
    %c3_184 = arith.constant 3 : index
    %c0_185 = arith.constant 0 : index
    %c0_186 = arith.constant 0 : index
    %365 = vector.load %arg10[%c3_184, %c0_185, %c0_186] : memref<4x16x128xbf16, #tpu.memory_space<vmem>>, vector<1x16x128xbf16>
    %366 = vector.shape_cast %365 : vector<1x16x128xbf16> to vector<16x128xbf16>
    %cst_187 = arith.constant dense<0.000000e+00> : vector<16x100xf32>
    %367 = tpu.matmul %366, %341, %cst_187 {dimension_numbers = #tpu.dot_dimension_numbers<[1], [0], [0], [1], [0, 0, 1, 1], [], []>} : vector<16x128xbf16>, vector<128x100xbf16>, vector<16x100xf32> -> vector<16x100xf32>
    %368 = arith.truncf %367 : vector<16x100xf32> to vector<16x100xbf16>
    %c3_188 = arith.constant 3 : index
    %c0_189 = arith.constant 0 : index
    %c0_190 = arith.constant 0 : index
    %369 = vector.load %arg11[%c3_188, %c0_189, %c0_190] : memref<4x100x324xbf16, #tpu.memory_space<vmem>>, vector<1x100x324xbf16>
    %370 = vector.shape_cast %369 : vector<1x100x324xbf16> to vector<100x324xbf16>
    %cst_191 = arith.constant dense<0.000000e+00> : vector<16x324xf32>
    %371 = tpu.matmul %368, %370, %cst_191 {dimension_numbers = #tpu.dot_dimension_numbers<[1], [0], [0], [1], [0, 0, 1, 1], [], []>} : vector<16x100xbf16>, vector<100x324xbf16>, vector<16x324xf32> -> vector<16x324xf32>
    %372 = arith.addf %364, %371 : vector<16x324xf32>
    %373 = vector.broadcast %332 : vector<16x1xf32> to vector<16x324xf32>
    %374 = arith.addf %372, %373 : vector<16x324xf32>
    %cst_192 = arith.constant 5.000000e-01 : f32
    %375 = vector.broadcast %cst_192 : f32 to vector<16x324xf32>
    %376 = arith.mulf %375, %374 : vector<16x324xf32>
    %cst_193 = arith.constant 4.471500e-02 : f32
    %377 = vector.broadcast %cst_193 : f32 to vector<16x324xf32>
    %378 = arith.mulf %377, %374 : vector<16x324xf32>
    %379 = arith.mulf %378, %374 : vector<16x324xf32>
    %380 = arith.mulf %379, %374 : vector<16x324xf32>
    %381 = arith.addf %374, %380 : vector<16x324xf32>
    %cst_194 = arith.constant 0.797884583 : f32
    %382 = vector.broadcast %cst_194 : f32 to vector<16x324xf32>
    %383 = arith.mulf %382, %381 : vector<16x324xf32>
    %384 = math.tanh %383 : vector<16x324xf32>
    %cst_195 = arith.constant 1.000000e+00 : f32
    %385 = vector.broadcast %cst_195 : f32 to vector<16x324xf32>
    %386 = arith.addf %385, %384 : vector<16x324xf32>
    %387 = arith.mulf %376, %386 : vector<16x324xf32>
    %388 = vector.broadcast %333 : vector<1x324xf32> to vector<16x324xf32>
    %389 = arith.mulf %387, %388 : vector<16x324xf32>
    %c0_196 = arith.constant 0 : index
    %c0_197 = arith.constant 0 : index
    %390 = vector.load %arg14[%c0_196, %c0_197] : memref<16x144xbf16, #tpu.memory_space<vmem>>, vector<16x144xbf16>
    %c0_198 = arith.constant 0 : index
    %c0_199 = arith.constant 0 : index
    %391 = vector.load %arg15[%c0_198, %c0_199] : memref<16x1xf32, #tpu.memory_space<vmem>>, vector<16x1xf32>
    %c0_200 = arith.constant 0 : index
    %c0_201 = arith.constant 0 : index
    %392 = vector.load %arg13[%c0_200, %c0_201] : memref<1x324xf32, #tpu.memory_space<vmem>>, vector<1x324xf32>
    %cst_202 = arith.constant 0.000000e+00 : f32
    %393 = vector.broadcast %cst_202 : f32 to vector<16x19xf32>
    %394 = tpu.concatenate %393, %389, %393 in 1 : vector<16x19xf32>, vector<16x324xf32>, vector<16x19xf32> -> vector<16x362xf32>
    %395 = vector.extract_strided_slice %394 {offsets = [0, 0], sizes = [16, 324], strides = [1, 1]} : vector<16x362xf32> to vector<16x324xf32>
    %396 = vector.extract_strided_slice %394 {offsets = [0, 1], sizes = [16, 324], strides = [1, 1]} : vector<16x362xf32> to vector<16x324xf32>
    %397 = vector.extract_strided_slice %394 {offsets = [0, 2], sizes = [16, 324], strides = [1, 1]} : vector<16x362xf32> to vector<16x324xf32>
    %398 = vector.extract_strided_slice %394 {offsets = [0, 18], sizes = [16, 324], strides = [1, 1]} : vector<16x362xf32> to vector<16x324xf32>
    %399 = vector.extract_strided_slice %394 {offsets = [0, 19], sizes = [16, 324], strides = [1, 1]} : vector<16x362xf32> to vector<16x324xf32>
    %400 = vector.extract_strided_slice %394 {offsets = [0, 20], sizes = [16, 324], strides = [1, 1]} : vector<16x362xf32> to vector<16x324xf32>
    %401 = vector.extract_strided_slice %394 {offsets = [0, 36], sizes = [16, 324], strides = [1, 1]} : vector<16x362xf32> to vector<16x324xf32>
    %402 = vector.extract_strided_slice %394 {offsets = [0, 37], sizes = [16, 324], strides = [1, 1]} : vector<16x362xf32> to vector<16x324xf32>
    %403 = vector.extract_strided_slice %394 {offsets = [0, 38], sizes = [16, 324], strides = [1, 1]} : vector<16x362xf32> to vector<16x324xf32>
    %404 = tpu.concatenate %395, %396, %397, %398, %399, %400, %401, %402, %403 in 0 : vector<16x324xf32>, vector<16x324xf32>, vector<16x324xf32>, vector<16x324xf32>, vector<16x324xf32>, vector<16x324xf32>, vector<16x324xf32>, vector<16x324xf32>, vector<16x324xf32> -> vector<144x324xf32>
    %405 = arith.truncf %404 : vector<144x324xf32> to vector<144x324xbf16>
    %cst_203 = arith.constant dense<0.000000e+00> : vector<16x324xf32>
    %406 = tpu.matmul %390, %405, %cst_203 {dimension_numbers = #tpu.dot_dimension_numbers<[1], [0], [0], [1], [0, 0, 1, 1], [], []>} : vector<16x144xbf16>, vector<144x324xbf16>, vector<16x324xf32> -> vector<16x324xf32>
    %407 = vector.broadcast %391 : vector<16x1xf32> to vector<16x324xf32>
    %408 = arith.addf %406, %407 : vector<16x324xf32>
    %cst_204 = arith.constant 5.000000e-01 : f32
    %409 = vector.broadcast %cst_204 : f32 to vector<16x324xf32>
    %410 = arith.mulf %409, %408 : vector<16x324xf32>
    %cst_205 = arith.constant 4.471500e-02 : f32
    %411 = vector.broadcast %cst_205 : f32 to vector<16x324xf32>
    %412 = arith.mulf %411, %408 : vector<16x324xf32>
    %413 = arith.mulf %412, %408 : vector<16x324xf32>
    %414 = arith.mulf %413, %408 : vector<16x324xf32>
    %415 = arith.addf %408, %414 : vector<16x324xf32>
    %cst_206 = arith.constant 0.797884583 : f32
    %416 = vector.broadcast %cst_206 : f32 to vector<16x324xf32>
    %417 = arith.mulf %416, %415 : vector<16x324xf32>
    %418 = math.tanh %417 : vector<16x324xf32>
    %cst_207 = arith.constant 1.000000e+00 : f32
    %419 = vector.broadcast %cst_207 : f32 to vector<16x324xf32>
    %420 = arith.addf %419, %418 : vector<16x324xf32>
    %421 = arith.mulf %410, %420 : vector<16x324xf32>
    %422 = vector.broadcast %392 : vector<1x324xf32> to vector<16x324xf32>
    %423 = arith.mulf %421, %422 : vector<16x324xf32>
    %c0_208 = arith.constant 0 : index
    %c0_209 = arith.constant 0 : index
    %424 = vector.load %arg18[%c0_208, %c0_209] : memref<3x1xf32, #tpu.memory_space<vmem>>, vector<3x1xf32>
    %cst_210 = arith.constant 0.000000e+00 : f32
    %425 = vector.broadcast %cst_210 : f32 to vector<16x19xf32>
    %426 = tpu.concatenate %425, %423, %425 in 1 : vector<16x19xf32>, vector<16x324xf32>, vector<16x19xf32> -> vector<16x362xf32>
    %427 = vector.extract_strided_slice %426 {offsets = [0, 19], sizes = [16, 324], strides = [1, 1]} : vector<16x362xf32> to vector<16x324xf32>
    %428 = vector.extract_strided_slice %426 {offsets = [0, 20], sizes = [16, 324], strides = [1, 1]} : vector<16x362xf32> to vector<16x324xf32>
    %429 = vector.extract_strided_slice %426 {offsets = [0, 37], sizes = [16, 324], strides = [1, 1]} : vector<16x362xf32> to vector<16x324xf32>
    %430 = vector.extract_strided_slice %426 {offsets = [0, 38], sizes = [16, 324], strides = [1, 1]} : vector<16x362xf32> to vector<16x324xf32>
    %431 = tpu.concatenate %427, %428, %429, %430 in 0 : vector<16x324xf32>, vector<16x324xf32>, vector<16x324xf32>, vector<16x324xf32> -> vector<64x324xf32>
    %432 = arith.truncf %431 : vector<64x324xf32> to vector<64x324xbf16>
    %c0_211 = arith.constant 0 : index
    %c0_212 = arith.constant 0 : index
    %c0_213 = arith.constant 0 : index
    %433 = vector.load %arg16[%c0_211, %c0_212, %c0_213] : memref<4x3x64xbf16, #tpu.memory_space<vmem>>, vector<1x3x64xbf16>
    %434 = vector.shape_cast %433 : vector<1x3x64xbf16> to vector<3x64xbf16>
    %cst_214 = arith.constant dense<0.000000e+00> : vector<3x324xf32>
    %435 = tpu.matmul %434, %432, %cst_214 {dimension_numbers = #tpu.dot_dimension_numbers<[1], [0], [0], [1], [0, 0, 1, 1], [], []>} : vector<3x64xbf16>, vector<64x324xbf16>, vector<3x324xf32> -> vector<3x324xf32>
    %436 = arith.truncf %435 : vector<3x324xf32> to vector<3x324xbf16>
    %c0_215 = arith.constant 0 : index
    %c0_216 = arith.constant 0 : index
    %c0_217 = arith.constant 0 : index
    %437 = vector.load %arg17[%c0_215, %c0_216, %c0_217] : memref<4x324x1024xbf16, #tpu.memory_space<vmem>>, vector<1x324x1024xbf16>
    %438 = vector.shape_cast %437 : vector<1x324x1024xbf16> to vector<324x1024xbf16>
    %cst_218 = arith.constant dense<0.000000e+00> : vector<3x1024xf32>
    %439 = tpu.matmul %436, %438, %cst_218 {dimension_numbers = #tpu.dot_dimension_numbers<[1], [0], [0], [1], [0, 0, 1, 1], [], []>} : vector<3x324xbf16>, vector<324x1024xbf16>, vector<3x1024xf32> -> vector<3x1024xf32>
    %c1_219 = arith.constant 1 : index
    %c0_220 = arith.constant 0 : index
    %c0_221 = arith.constant 0 : index
    %440 = vector.load %arg16[%c1_219, %c0_220, %c0_221] : memref<4x3x64xbf16, #tpu.memory_space<vmem>>, vector<1x3x64xbf16>
    %441 = vector.shape_cast %440 : vector<1x3x64xbf16> to vector<3x64xbf16>
    %cst_222 = arith.constant dense<0.000000e+00> : vector<3x324xf32>
    %442 = tpu.matmul %441, %432, %cst_222 {dimension_numbers = #tpu.dot_dimension_numbers<[1], [0], [0], [1], [0, 0, 1, 1], [], []>} : vector<3x64xbf16>, vector<64x324xbf16>, vector<3x324xf32> -> vector<3x324xf32>
    %443 = arith.truncf %442 : vector<3x324xf32> to vector<3x324xbf16>
    %c1_223 = arith.constant 1 : index
    %c0_224 = arith.constant 0 : index
    %c0_225 = arith.constant 0 : index
    %444 = vector.load %arg17[%c1_223, %c0_224, %c0_225] : memref<4x324x1024xbf16, #tpu.memory_space<vmem>>, vector<1x324x1024xbf16>
    %445 = vector.shape_cast %444 : vector<1x324x1024xbf16> to vector<324x1024xbf16>
    %cst_226 = arith.constant dense<0.000000e+00> : vector<3x1024xf32>
    %446 = tpu.matmul %443, %445, %cst_226 {dimension_numbers = #tpu.dot_dimension_numbers<[1], [0], [0], [1], [0, 0, 1, 1], [], []>} : vector<3x324xbf16>, vector<324x1024xbf16>, vector<3x1024xf32> -> vector<3x1024xf32>
    %447 = arith.addf %439, %446 : vector<3x1024xf32>
    %c2_227 = arith.constant 2 : index
    %c0_228 = arith.constant 0 : index
    %c0_229 = arith.constant 0 : index
    %448 = vector.load %arg16[%c2_227, %c0_228, %c0_229] : memref<4x3x64xbf16, #tpu.memory_space<vmem>>, vector<1x3x64xbf16>
    %449 = vector.shape_cast %448 : vector<1x3x64xbf16> to vector<3x64xbf16>
    %cst_230 = arith.constant dense<0.000000e+00> : vector<3x324xf32>
    %450 = tpu.matmul %449, %432, %cst_230 {dimension_numbers = #tpu.dot_dimension_numbers<[1], [0], [0], [1], [0, 0, 1, 1], [], []>} : vector<3x64xbf16>, vector<64x324xbf16>, vector<3x324xf32> -> vector<3x324xf32>
    %451 = arith.truncf %450 : vector<3x324xf32> to vector<3x324xbf16>
    %c2_231 = arith.constant 2 : index
    %c0_232 = arith.constant 0 : index
    %c0_233 = arith.constant 0 : index
    %452 = vector.load %arg17[%c2_231, %c0_232, %c0_233] : memref<4x324x1024xbf16, #tpu.memory_space<vmem>>, vector<1x324x1024xbf16>
    %453 = vector.shape_cast %452 : vector<1x324x1024xbf16> to vector<324x1024xbf16>
    %cst_234 = arith.constant dense<0.000000e+00> : vector<3x1024xf32>
    %454 = tpu.matmul %451, %453, %cst_234 {dimension_numbers = #tpu.dot_dimension_numbers<[1], [0], [0], [1], [0, 0, 1, 1], [], []>} : vector<3x324xbf16>, vector<324x1024xbf16>, vector<3x1024xf32> -> vector<3x1024xf32>
    %455 = arith.addf %447, %454 : vector<3x1024xf32>
    %c3_235 = arith.constant 3 : index
    %c0_236 = arith.constant 0 : index
    %c0_237 = arith.constant 0 : index
    %456 = vector.load %arg16[%c3_235, %c0_236, %c0_237] : memref<4x3x64xbf16, #tpu.memory_space<vmem>>, vector<1x3x64xbf16>
    %457 = vector.shape_cast %456 : vector<1x3x64xbf16> to vector<3x64xbf16>
    %cst_238 = arith.constant dense<0.000000e+00> : vector<3x324xf32>
    %458 = tpu.matmul %457, %432, %cst_238 {dimension_numbers = #tpu.dot_dimension_numbers<[1], [0], [0], [1], [0, 0, 1, 1], [], []>} : vector<3x64xbf16>, vector<64x324xbf16>, vector<3x324xf32> -> vector<3x324xf32>
    %459 = arith.truncf %458 : vector<3x324xf32> to vector<3x324xbf16>
    %c3_239 = arith.constant 3 : index
    %c0_240 = arith.constant 0 : index
    %c0_241 = arith.constant 0 : index
    %460 = vector.load %arg17[%c3_239, %c0_240, %c0_241] : memref<4x324x1024xbf16, #tpu.memory_space<vmem>>, vector<1x324x1024xbf16>
    %461 = vector.shape_cast %460 : vector<1x324x1024xbf16> to vector<324x1024xbf16>
    %cst_242 = arith.constant dense<0.000000e+00> : vector<3x1024xf32>
    %462 = tpu.matmul %459, %461, %cst_242 {dimension_numbers = #tpu.dot_dimension_numbers<[1], [0], [0], [1], [0, 0, 1, 1], [], []>} : vector<3x324xbf16>, vector<324x1024xbf16>, vector<3x1024xf32> -> vector<3x1024xf32>
    %463 = arith.addf %455, %462 : vector<3x1024xf32>
    %464 = vector.broadcast %424 : vector<3x1xf32> to vector<3x1024xf32>
    %465 = arith.addf %463, %464 : vector<3x1024xf32>
    %466 = math.tanh %465 : vector<3x1024xf32>
    %c0_243 = arith.constant 0 : index
    %c0_244 = arith.constant 0 : index
    %c0_245 = arith.constant 0 : index
    %467 = vector.load %arg19[%c0_243, %c0_244, %c0_245] : memref<1x3x1024xf32, #tpu.memory_space<vmem>>, vector<1x3x1024xf32>
    %468 = vector.shape_cast %467 : vector<1x3x1024xf32> to vector<3x1024xf32>
    %469 = vector.shape_cast %466 : vector<3x1024xf32> to vector<1x3x1024xf32>
    tpu.vector_store %arg19[%c0_243, %c0_244, %c0_245], %469 {strides = array<i32>} : memref<1x3x1024xf32, #tpu.memory_space<vmem>>, vector<1x3x1024xf32>,
    return
  }
  func.func @transform_0(%arg0: i32) -> (i32, i32) {
    %c0_i32 = arith.constant 0 : i32
    %c0_i32_0 = arith.constant 0 : i32
    %c0_i32_1 = arith.constant 0 : i32
    return %c0_i32, %c0_i32_0 : i32, i32
  }
  func.func @transform_1(%arg0: i32) -> (i32, i32, i32) {
    %c0_i32 = arith.constant 0 : i32
    %c0_i32_0 = arith.constant 0 : i32
    %c0_i32_1 = arith.constant 0 : i32
    %c0_i32_2 = arith.constant 0 : i32
    return %c0_i32, %c0_i32_0, %c0_i32_1 : i32, i32, i32
  }
  func.func @transform_2(%arg0: i32) -> (i32, i32) {
    %c0_i32 = arith.constant 0 : i32
    %c0_i32_0 = arith.constant 0 : i32
    %c0_i32_1 = arith.constant 0 : i32
    return %c0_i32, %c0_i32_0 : i32, i32
  }
  func.func @transform_3(%arg0: i32) -> (i32, i32, i32) {
    %c0_i32 = arith.constant 0 : i32
    %c0_i32_0 = arith.constant 0 : i32
    %c0_i32_1 = arith.constant 0 : i32
    %c0_i32_2 = arith.constant 0 : i32
    return %c0_i32, %c0_i32_0, %c0_i32_1 : i32, i32, i32
  }
  func.func @transform_4(%arg0: i32) -> (i32, i32, i32) {
    %c0_i32 = arith.constant 0 : i32
    %c0_i32_0 = arith.constant 0 : i32
    %c0_i32_1 = arith.constant 0 : i32
    %c0_i32_2 = arith.constant 0 : i32
    return %c0_i32, %c0_i32_0, %c0_i32_1 : i32, i32, i32
  }
  func.func @transform_5(%arg0: i32) -> (i32, i32) {
    %c0_i32 = arith.constant 0 : i32
    %c0_i32_0 = arith.constant 0 : i32
    %c0_i32_1 = arith.constant 0 : i32
    return %c0_i32, %c0_i32_0 : i32, i32
  }
  func.func @transform_6(%arg0: i32) -> (i32, i32) {
    %c0_i32 = arith.constant 0 : i32
    %c0_i32_0 = arith.constant 0 : i32
    %c0_i32_1 = arith.constant 0 : i32
    return %c0_i32, %c0_i32_0 : i32, i32
  }
  func.func @transform_7(%arg0: i32) -> (i32, i32) {
    %c0_i32 = arith.constant 0 : i32
    %c0_i32_0 = arith.constant 0 : i32
    %c0_i32_1 = arith.constant 0 : i32
    return %c0_i32, %c0_i32_0 : i32, i32
  }
  func.func @transform_8(%arg0: i32) -> (i32, i32) {
    %c0_i32 = arith.constant 0 : i32
    %c0_i32_0 = arith.constant 0 : i32
    %c0_i32_1 = arith.constant 0 : i32
    return %c0_i32, %c0_i32_0 : i32, i32
  }
  func.func @transform_9(%arg0: i32) -> (i32, i32, i32) {
    %c0_i32 = arith.constant 0 : i32
    %c0_i32_0 = arith.constant 0 : i32
    %c0_i32_1 = arith.constant 0 : i32
    %c0_i32_2 = arith.constant 0 : i32
    return %c0_i32, %c0_i32_0, %c0_i32_1 : i32, i32, i32
  }
  func.func @transform_10(%arg0: i32) -> (i32, i32, i32) {
    %c0_i32 = arith.constant 0 : i32
    %c0_i32_0 = arith.constant 0 : i32
    %c0_i32_1 = arith.constant 0 : i32
    %c0_i32_2 = arith.constant 0 : i32
    return %c0_i32, %c0_i32_0, %c0_i32_1 : i32, i32, i32
  }
  func.func @transform_11(%arg0: i32) -> (i32, i32) {
    %c0_i32 = arith.constant 0 : i32
    %c0_i32_0 = arith.constant 0 : i32
    %c0_i32_1 = arith.constant 0 : i32
    return %c0_i32, %c0_i32_0 : i32, i32
  }
  func.func @transform_12(%arg0: i32) -> (i32, i32) {
    %c0_i32 = arith.constant 0 : i32
    %c0_i32_0 = arith.constant 0 : i32
    %c0_i32_1 = arith.constant 0 : i32
    return %c0_i32, %c0_i32_0 : i32, i32
  }
  func.func @transform_13(%arg0: i32) -> (i32, i32) {
    %c0_i32 = arith.constant 0 : i32
    %c0_i32_0 = arith.constant 0 : i32
    %c0_i32_1 = arith.constant 0 : i32
    return %c0_i32, %c0_i32_0 : i32, i32
  }
  func.func @transform_14(%arg0: i32) -> (i32, i32) {
    %c0_i32 = arith.constant 0 : i32
    %c0_i32_0 = arith.constant 0 : i32
    %c0_i32_1 = arith.constant 0 : i32
    return %c0_i32, %c0_i32_0 : i32, i32
  }
  func.func @transform_15(%arg0: i32) -> (i32, i32, i32) {
    %c0_i32 = arith.constant 0 : i32
    %c0_i32_0 = arith.constant 0 : i32
    %c0_i32_1 = arith.constant 0 : i32
    %c0_i32_2 = arith.constant 0 : i32
    return %c0_i32, %c0_i32_0, %c0_i32_1 : i32, i32, i32
  }
  func.func @transform_16(%arg0: i32) -> (i32, i32, i32) {
    %c0_i32 = arith.constant 0 : i32
    %c0_i32_0 = arith.constant 0 : i32
    %c0_i32_1 = arith.constant 0 : i32
    %c0_i32_2 = arith.constant 0 : i32
    return %c0_i32, %c0_i32_0, %c0_i32_1 : i32, i32, i32
  }
  func.func @transform_17(%arg0: i32) -> (i32, i32) {
    %c0_i32 = arith.constant 0 : i32
    %c0_i32_0 = arith.constant 0 : i32
    %c0_i32_1 = arith.constant 0 : i32
    return %c0_i32, %c0_i32_0 : i32, i32
  }
  func.func @transform_18(%arg0: i32) -> (i32, i32, i32) {
    %c0_i32 = arith.constant 0 : i32
    %c0_i32_0 = arith.constant 0 : i32
    %c0_i32_1 = arith.constant 0 : i32
    return %arg0, %c0_i32, %c0_i32_0 : i32, i32, i32
  }
}

</mosaic_0001>

<llo_original>
// kernel: decoder_forward.1
$region0: #{decoder_forward.1}
  #allocation0 [shape = 'u32[]', space=smem, size = 0x4, offset = 0x4, fixed_abs, tag = 'smem constant byte address 0x4 - core index']
  #allocation1 [shape = 'u32[72,128]{1,0:T(1,128)}', space=vmem, size = 0x9000, scoped, tag = 'internal scratch']
  %s0 = inlined_call_operand.vmem [shape: f32[2,32], index: 0, kind: input, shape index: {}]
  %s1 = inlined_call_operand.vmem [shape: f32[32,32,36], index: 1, kind: input, shape index: {}]
  %s2 = inlined_call_operand.vmem [shape: f32[32,36], index: 2, kind: input, shape index: {}]
  %s3 = inlined_call_operand.vmem [shape: bf16[4,32,128], index: 3, kind: input, shape index: {}]
  %s4 = inlined_call_operand.vmem [shape: bf16[4,36,100], index: 4, kind: input, shape index: {}]
  %s5 = inlined_call_operand.vmem [shape: f32[32,1], index: 5, kind: input, shape index: {}]
  %s6 = inlined_call_operand.vmem [shape: f32[1,100], index: 6, kind: input, shape index: {}]
  %s7 = inlined_call_operand.vmem [shape: bf16[32,288], index: 7, kind: input, shape index: {}]
  %s8 = inlined_call_operand.vmem [shape: f32[32,1], index: 8, kind: input, shape index: {}]
  %s9 = inlined_call_operand.vmem [shape: bf16[4,16,128], index: 9, kind: input, shape index: {}]
  %s10 = inlined_call_operand.vmem [shape: bf16[4,100,324], index: 10, kind: input, shape index: {}]
  %s11 = inlined_call_operand.vmem [shape: f32[16,1], index: 11, kind: input, shape index: {}]
  %s12 = inlined_call_operand.vmem [shape: f32[1,324], index: 12, kind: input, shape index: {}]
  %s13 = inlined_call_operand.vmem [shape: bf16[16,144], index: 13, kind: input, shape index: {}]
  %s14 = inlined_call_operand.vmem [shape: f32[16,1], index: 14, kind: input, shape index: {}]
  %s15 = inlined_call_operand.vmem [shape: bf16[4,3,64], index: 15, kind: input, shape index: {}]
  %s16 = inlined_call_operand.vmem [shape: bf16[4,324,1024], index: 16, kind: input, shape index: {}]
  %s17 = inlined_call_operand.vmem [shape: f32[3,1], index: 17, kind: input, shape index: {}]
  %s18 = inlined_call_operand.vmem [shape: f32[2,3,1024], index: 18, kind: output, shape index: {}]
  %s19 = sld [smem:[#allocation0]]
  $region109: #{decoder_forward.1} parent=0
    _
  %s21 = ssub.s32 1, %s19
  %s22 = scalar_select 0, %s21, %s19
  $region1: #{decoder_forward.1} parent=0
    #allocation2 [shape = 'u8[1024]{0}', space=smem, size = 0x400, scoped, tag = 'input window, operand 0, single buffered']
    #allocation3 [shape = 's32[2]{0}', space=sflag, size = 0x8, scoped, tag = 'scoped memory for decoder_forward.1']
    %23 = vsyncpa [#allocation3], 0
    loop: start=0, step=1, limit=4
    $region2: #{decoder_forward.1} parent=1 // loop_pre_header
      _
    $region3: #{decoder_forward.1} parent=1 // loop_header
      %s25 = sphi 0, %s29
      %p26 = scmp.ge.s32.totalorder %s25, 4
      %s33 = sphi 0, %s33
      %s35 = sphi 0, %s33
      %s36 = sphi 0, %s35
      %s50 = sphi 0, %s36
      %s54 = sphi 0, %s54
      %s56 = sphi 0, %s54
      %s57 = sphi 0, %s56
      %s71 = sphi 0, %s57
      %s75 = sphi 0, %s75
      %s77 = sphi 0, %s75
      %s78 = sphi 0, %s77
      %s92 = sphi 0, %s78
      %s96 = sphi 0, %s96
      %s98 = sphi 0, %s96
      %s99 = sphi 0, %s98
      %s113 = sphi 0, %s99
      %s117 = sphi 0, %s117
      %s119 = sphi 0, %s117
      %s120 = sphi 0, %s119
      %s134 = sphi 0, %s120
      %s138 = sphi 0, %s138
      %s140 = sphi 0, %s138
      %s141 = sphi 0, %s140
      %s155 = sphi 0, %s141
      %s159 = sphi 0, %s159
      %s161 = sphi 0, %s159
      %s162 = sphi 0, %s161
      %s176 = sphi 0, %s162
      %s180 = sphi 0, %s180
      %s182 = sphi 0, %s180
      %s183 = sphi 0, %s182
      %s197 = sphi 0, %s183
      %s201 = sphi 0, %s201
      %s203 = sphi 0, %s201
      %s204 = sphi 0, %s203
      %s218 = sphi 0, %s204
      %s222 = sphi 0, %s222
      %s224 = sphi 0, %s222
      %s225 = sphi 0, %s224
      %s239 = sphi 0, %s225
      %s243 = sphi 0, %s243
      %s245 = sphi 0, %s243
      %s246 = sphi 0, %s245
      %s260 = sphi 0, %s246
      %s264 = sphi 0, %s264
      %s266 = sphi 0, %s264
      %s267 = sphi 0, %s266
      %s281 = sphi 0, %s267
      %s285 = sphi 0, %s285
      %s287 = sphi 0, %s285
      %s288 = sphi 0, %s287
      %s302 = sphi 0, %s288
      %s306 = sphi 0, %s306
      %s308 = sphi 0, %s306
      %s309 = sphi 0, %s308
      %s323 = sphi 0, %s309
      %s327 = sphi 0, %s327
      %s329 = sphi 0, %s327
      %s330 = sphi 0, %s329
      %s344 = sphi 0, %s330
      %s348 = sphi 0, %s348
      %s350 = sphi 0, %s348
      %s351 = sphi 0, %s350
      %s365 = sphi 0, %s351
      %s369 = sphi 0, %s369
      %s371 = sphi 0, %s369
      %s372 = sphi 0, %s371
      %s386 = sphi 0, %s372
      %s390 = sphi 0, %s390
      %s392 = sphi 0, %s390
      %s393 = sphi 0, %s392
      %s407 = sphi 0, %s393
      %s413 = sphi 0, %s415
      %s416 = sphi 0, %s413
      %s417 = sphi 0, %s416
      %s433 = sphi 0, %s417
    $region4: #{decoder_forward.1} parent=1 // loop_header_branch
      %28 = sbr.rel (%p26) target = $region8
    $region5: #{decoder_forward.1} parent=1 // loop_body
      %s30 = ssub.s32 %s25, 1
      %s31 = ssub.s32 %s25, 2
      %s32 = sadd.s32 %s25, 1
      %s34 = sadd.s32 %s33, 1
      %p37 = scmp.eq.s32.totalorder %s25, 1
      %p38 = scmp.ne.s32.totalorder %s33, %s35
      %p39 = scmp.eq.s32.totalorder %s25, 0
      %p40 = por %p38, %p39
      %p41 = scmp.ne.s32.totalorder %s33, %s35
      %p42 = scmp.eq.s32.totalorder %s30, 1
      %p43 = por %p41, %p42
      %p44 = scmp.ne.s32.totalorder %s35, %s36
      %p45 = scmp.eq.s32.totalorder %s30, 0
      %p46 = por %p44, %p45
      %p47 = scmp.ne.s32.totalorder %s35, %s36
      %p48 = scmp.eq.s32.totalorder %s31, 1
      %p49 = por %p47, %p48
      %p51 = scmp.ne.s32.totalorder %s36, %s50
      %p52 = scmp.eq.s32.totalorder %s31, 0
      %p53 = por %p51, %p52
      %s55 = sadd.s32 %s54, 1
      %p58 = scmp.eq.s32.totalorder %s25, 1
      %p59 = scmp.ne.s32.totalorder %s54, %s56
      %p60 = scmp.eq.s32.totalorder %s25, 0
      %p61 = por %p59, %p60
      %p62 = scmp.ne.s32.totalorder %s54, %s56
      %p63 = scmp.eq.s32.totalorder %s30, 1
      %p64 = por %p62, %p63
      %p65 = scmp.ne.s32.totalorder %s56, %s57
      %p66 = scmp.eq.s32.totalorder %s30, 0
      %p67 = por %p65, %p66
      %p68 = scmp.ne.s32.totalorder %s56, %s57
      %p69 = scmp.eq.s32.totalorder %s31, 1
      %p70 = por %p68, %p69
      %p72 = scmp.ne.s32.totalorder %s57, %s71
      %p73 = scmp.eq.s32.totalorder %s31, 0
      %p74 = por %p72, %p73
      %s76 = sadd.s32 %s75, 1
      %p79 = scmp.eq.s32.totalorder %s25, 1
      %p80 = scmp.ne.s32.totalorder %s75, %s77
      %p81 = scmp.eq.s32.totalorder %s25, 0
      %p82 = por %p80, %p81
      %p83 = scmp.ne.s32.totalorder %s75, %s77
      %p84 = scmp.eq.s32.totalorder %s30, 1
      %p85 = por %p83, %p84
      %p86 = scmp.ne.s32.totalorder %s77, %s78
      %p87 = scmp.eq.s32.totalorder %s30, 0
      %p88 = por %p86, %p87
      %p89 = scmp.ne.s32.totalorder %s77, %s78
      %p90 = scmp.eq.s32.totalorder %s31, 1
      %p91 = por %p89, %p90
      %p93 = scmp.ne.s32.totalorder %s78, %s92
      %p94 = scmp.eq.s32.totalorder %s31, 0
      %p95 = por %p93, %p94
      %s97 = sadd.s32 %s96, 1
      %p100 = scmp.eq.s32.totalorder %s25, 1
      %p101 = scmp.ne.s32.totalorder %s96, %s98
      %p102 = scmp.eq.s32.totalorder %s25, 0
      %p103 = por %p101, %p102
      %p104 = scmp.ne.s32.totalorder %s96, %s98
      %p105 = scmp.eq.s32.totalorder %s30, 1
      %p106 = por %p104, %p105
      %p107 = scmp.ne.s32.totalorder %s98, %s99
      %p108 = scmp.eq.s32.totalorder %s30, 0
      %p109 = por %p107, %p108
      %p110 = scmp.ne.s32.totalorder %s98, %s99
      %p111 = scmp.eq.s32.totalorder %s31, 1
      %p112 = por %p110, %p111
      %p114 = scmp.ne.s32.totalorder %s99, %s113
      %p115 = scmp.eq.s32.totalorder %s31, 0
      %p116 = por %p114, %p115
      %s118 = sadd.s32 %s117, 1
      %p121 = scmp.eq.s32.totalorder %s25, 1
      %p122 = scmp.ne.s32.totalorder %s117, %s119
      %p123 = scmp.eq.s32.totalorder %s25, 0
      %p124 = por %p122, %p123
      %p125 = scmp.ne.s32.totalorder %s117, %s119
      %p126 = scmp.eq.s32.totalorder %s30, 1
      %p127 = por %p125, %p126
      %p128 = scmp.ne.s32.totalorder %s119, %s120
      %p129 = scmp.eq.s32.totalorder %s30, 0
      %p130 = por %p128, %p129
      %p131 = scmp.ne.s32.totalorder %s119, %s120
      %p132 = scmp.eq.s32.totalorder %s31, 1
      %p133 = por %p131, %p132
      %p135 = scmp.ne.s32.totalorder %s120, %s134
      %p136 = scmp.eq.s32.totalorder %s31, 0
      %p137 = por %p135, %p136
      %s139 = sadd.s32 %s138, 1
      %p142 = scmp.eq.s32.totalorder %s25, 1
      %p143 = scmp.ne.s32.totalorder %s138, %s140
      %p144 = scmp.eq.s32.totalorder %s25, 0
      %p145 = por %p143, %p144
      %p146 = scmp.ne.s32.totalorder %s138, %s140
      %p147 = scmp.eq.s32.totalorder %s30, 1
      %p148 = por %p146, %p147
      %p149 = scmp.ne.s32.totalorder %s140, %s141
      %p150 = scmp.eq.s32.totalorder %s30, 0
      %p151 = por %p149, %p150
      %p152 = scmp.ne.s32.totalorder %s140, %s141
      %p153 = scmp.eq.s32.totalorder %s31, 1
      %p154 = por %p152, %p153
      %p156 = scmp.ne.s32.totalorder %s141, %s155
      %p157 = scmp.eq.s32.totalorder %s31, 0
      %p158 = por %p156, %p157
      %s160 = sadd.s32 %s159, 1
      %p163 = scmp.eq.s32.totalorder %s25, 1
      %p164 = scmp.ne.s32.totalorder %s159, %s161
      %p165 = scmp.eq.s32.totalorder %s25, 0
      %p166 = por %p164, %p165
      %p167 = scmp.ne.s32.totalorder %s159, %s161
      %p168 = scmp.eq.s32.totalorder %s30, 1
      %p169 = por %p167, %p168
      %p170 = scmp.ne.s32.totalorder %s161, %s162
      %p171 = scmp.eq.s32.totalorder %s30, 0
      %p172 = por %p170, %p171
      %p173 = scmp.ne.s32.totalorder %s161, %s162
      %p174 = scmp.eq.s32.totalorder %s31, 1
      %p175 = por %p173, %p174
      %p177 = scmp.ne.s32.totalorder %s162, %s176
      %p178 = scmp.eq.s32.totalorder %s31, 0
      %p179 = por %p177, %p178
      %s181 = sadd.s32 %s180, 1
      %p184 = scmp.eq.s32.totalorder %s25, 1
      %p185 = scmp.ne.s32.totalorder %s180, %s182
      %p186 = scmp.eq.s32.totalorder %s25, 0
      %p187 = por %p185, %p186
      %p188 = scmp.ne.s32.totalorder %s180, %s182
      %p189 = scmp.eq.s32.totalorder %s30, 1
      %p190 = por %p188, %p189
      %p191 = scmp.ne.s32.totalorder %s182, %s183
      %p192 = scmp.eq.s32.totalorder %s30, 0
      %p193 = por %p191, %p192
      %p194 = scmp.ne.s32.totalorder %s182, %s183
      %p195 = scmp.eq.s32.totalorder %s31, 1
      %p196 = por %p194, %p195
      %p198 = scmp.ne.s32.totalorder %s183, %s197
      %p199 = scmp.eq.s32.totalorder %s31, 0
      %p200 = por %p198, %p199
      %s202 = sadd.s32 %s201, 1
      %p205 = scmp.eq.s32.totalorder %s25, 1
      %p206 = scmp.ne.s32.totalorder %s201, %s203
      %p207 = scmp.eq.s32.totalorder %s25, 0
      %p208 = por %p206, %p207
      %p209 = scmp.ne.s32.totalorder %s201, %s203
      %p210 = scmp.eq.s32.totalorder %s30, 1
      %p211 = por %p209, %p210
      %p212 = scmp.ne.s32.totalorder %s203, %s204
      %p213 = scmp.eq.s32.totalorder %s30, 0
      %p214 = por %p212, %p213
      %p215 = scmp.ne.s32.totalorder %s203, %s204
      %p216 = scmp.eq.s32.totalorder %s31, 1
      %p217 = por %p215, %p216
      %p219 = scmp.ne.s32.totalorder %s204, %s218
      %p220 = scmp.eq.s32.totalorder %s31, 0
      %p221 = por %p219, %p220
      %s223 = sadd.s32 %s222, 1
      %p226 = scmp.eq.s32.totalorder %s25, 1
      %p227 = scmp.ne.s32.totalorder %s222, %s224
      %p228 = scmp.eq.s32.totalorder %s25, 0
      %p229 = por %p227, %p228
      %p230 = scmp.ne.s32.totalorder %s222, %s224
      %p231 = scmp.eq.s32.totalorder %s30, 1
      %p232 = por %p230, %p231
      %p233 = scmp.ne.s32.totalorder %s224, %s225
      %p234 = scmp.eq.s32.totalorder %s30, 0
      %p235 = por %p233, %p234
      %p236 = scmp.ne.s32.totalorder %s224, %s225
      %p237 = scmp.eq.s32.totalorder %s31, 1
      %p238 = por %p236, %p237
      %p240 = scmp.ne.s32.totalorder %s225, %s239
      %p241 = scmp.eq.s32.totalorder %s31, 0
      %p242 = por %p240, %p241
      %s244 = sadd.s32 %s243, 1
      %p247 = scmp.eq.s32.totalorder %s25, 1
      %p248 = scmp.ne.s32.totalorder %s243, %s245
      %p249 = scmp.eq.s32.totalorder %s25, 0
      %p250 = por %p248, %p249
      %p251 = scmp.ne.s32.totalorder %s243, %s245
      %p252 = scmp.eq.s32.totalorder %s30, 1
      %p253 = por %p251, %p252
      %p254 = scmp.ne.s32.totalorder %s245, %s246
      %p255 = scmp.eq.s32.totalorder %s30, 0
      %p256 = por %p254, %p255
      %p257 = scmp.ne.s32.totalorder %s245, %s246
      %p258 = scmp.eq.s32.totalorder %s31, 1
      %p259 = por %p257, %p258
      %p261 = scmp.ne.s32.totalorder %s246, %s260
      %p262 = scmp.eq.s32.totalorder %s31, 0
      %p263 = por %p261, %p262
      %s265 = sadd.s32 %s264, 1
      %p268 = scmp.eq.s32.totalorder %s25, 1
      %p269 = scmp.ne.s32.totalorder %s264, %s266
      %p270 = scmp.eq.s32.totalorder %s25, 0
      %p271 = por %p269, %p270
      %p272 = scmp.ne.s32.totalorder %s264, %s266
      %p273 = scmp.eq.s32.totalorder %s30, 1
      %p274 = por %p272, %p273
      %p275 = scmp.ne.s32.totalorder %s266, %s267
      %p276 = scmp.eq.s32.totalorder %s30, 0
      %p277 = por %p275, %p276
      %p278 = scmp.ne.s32.totalorder %s266, %s267
      %p279 = scmp.eq.s32.totalorder %s31, 1
      %p280 = por %p278, %p279
      %p282 = scmp.ne.s32.totalorder %s267, %s281
      %p283 = scmp.eq.s32.totalorder %s31, 0
      %p284 = por %p282, %p283
      %s286 = sadd.s32 %s285, 1
      %p289 = scmp.eq.s32.totalorder %s25, 1
      %p290 = scmp.ne.s32.totalorder %s285, %s287
      %p291 = scmp.eq.s32.totalorder %s25, 0
      %p292 = por %p290, %p291
      %p293 = scmp.ne.s32.totalorder %s285, %s287
      %p294 = scmp.eq.s32.totalorder %s30, 1
      %p295 = por %p293, %p294
      %p296 = scmp.ne.s32.totalorder %s287, %s288
      %p297 = scmp.eq.s32.totalorder %s30, 0
      %p298 = por %p296, %p297
      %p299 = scmp.ne.s32.totalorder %s287, %s288
      %p300 = scmp.eq.s32.totalorder %s31, 1
      %p301 = por %p299, %p300
      %p303 = scmp.ne.s32.totalorder %s288, %s302
      %p304 = scmp.eq.s32.totalorder %s31, 0
      %p305 = por %p303, %p304
      %s307 = sadd.s32 %s306, 1
      %p310 = scmp.eq.s32.totalorder %s25, 1
      %p311 = scmp.ne.s32.totalorder %s306, %s308
      %p312 = scmp.eq.s32.totalorder %s25, 0
      %p313 = por %p311, %p312
      %p314 = scmp.ne.s32.totalorder %s306, %s308
      %p315 = scmp.eq.s32.totalorder %s30, 1
      %p316 = por %p314, %p315
      %p317 = scmp.ne.s32.totalorder %s308, %s309
      %p318 = scmp.eq.s32.totalorder %s30, 0
      %p319 = por %p317, %p318
      %p320 = scmp.ne.s32.totalorder %s308, %s309
      %p321 = scmp.eq.s32.totalorder %s31, 1
      %p322 = por %p320, %p321
      %p324 = scmp.ne.s32.totalorder %s309, %s323
      %p325 = scmp.eq.s32.totalorder %s31, 0
      %p326 = por %p324, %p325
      %s328 = sadd.s32 %s327, 1
      %p331 = scmp.eq.s32.totalorder %s25, 1
      %p332 = scmp.ne.s32.totalorder %s327, %s329
      %p333 = scmp.eq.s32.totalorder %s25, 0
      %p334 = por %p332, %p333
      %p335 = scmp.ne.s32.totalorder %s327, %s329
      %p336 = scmp.eq.s32.totalorder %s30, 1
      %p337 = por %p335, %p336
      %p338 = scmp.ne.s32.totalorder %s329, %s330
      %p339 = scmp.eq.s32.totalorder %s30, 0
      %p340 = por %p338, %p339
      %p341 = scmp.ne.s32.totalorder %s329, %s330
      %p342 = scmp.eq.s32.totalorder %s31, 1
      %p343 = por %p341, %p342
      %p345 = scmp.ne.s32.totalorder %s330, %s344
      %p346 = scmp.eq.s32.totalorder %s31, 0
      %p347 = por %p345, %p346
      %s349 = sadd.s32 %s348, 1
      %p352 = scmp.eq.s32.totalorder %s25, 1
      %p353 = scmp.ne.s32.totalorder %s348, %s350
      %p354 = scmp.eq.s32.totalorder %s25, 0
      %p355 = por %p353, %p354
      %p356 = scmp.ne.s32.totalorder %s348, %s350
      %p357 = scmp.eq.s32.totalorder %s30, 1
      %p358 = por %p356, %p357
      %p359 = scmp.ne.s32.totalorder %s350, %s351
      %p360 = scmp.eq.s32.totalorder %s30, 0
      %p361 = por %p359, %p360
      %p362 = scmp.ne.s32.totalorder %s350, %s351
      %p363 = scmp.eq.s32.totalorder %s31, 1
      %p364 = por %p362, %p363
      %p366 = scmp.ne.s32.totalorder %s351, %s365
      %p367 = scmp.eq.s32.totalorder %s31, 0
      %p368 = por %p366, %p367
      %s370 = sadd.s32 %s369, 1
      %p373 = scmp.eq.s32.totalorder %s25, 1
      %p374 = scmp.ne.s32.totalorder %s369, %s371
      %p375 = scmp.eq.s32.totalorder %s25, 0
      %p376 = por %p374, %p375
      %p377 = scmp.ne.s32.totalorder %s369, %s371
      %p378 = scmp.eq.s32.totalorder %s30, 1
      %p379 = por %p377, %p378
      %p380 = scmp.ne.s32.totalorder %s371, %s372
      %p381 = scmp.eq.s32.totalorder %s30, 0
      %p382 = por %p380, %p381
      %p383 = scmp.ne.s32.totalorder %s371, %s372
      %p384 = scmp.eq.s32.totalorder %s31, 1
      %p385 = por %p383, %p384
      %p387 = scmp.ne.s32.totalorder %s372, %s386
      %p388 = scmp.eq.s32.totalorder %s31, 0
      %p389 = por %p387, %p388
      %s391 = sadd.s32 %s390, 1
      %p394 = scmp.eq.s32.totalorder %s25, 1
      %p395 = scmp.ne.s32.totalorder %s390, %s392
      %p396 = scmp.eq.s32.totalorder %s25, 0
      %p397 = por %p395, %p396
      %p398 = scmp.ne.s32.totalorder %s390, %s392
      %p399 = scmp.eq.s32.totalorder %s30, 1
      %p400 = por %p398, %p399
      %p401 = scmp.ne.s32.totalorder %s392, %s393
      %p402 = scmp.eq.s32.totalorder %s30, 0
      %p403 = por %p401, %p402
      %p404 = scmp.ne.s32.totalorder %s392, %s393
      %p405 = scmp.eq.s32.totalorder %s31, 1
      %p406 = por %p404, %p405
      %p408 = scmp.ne.s32.totalorder %s393, %s407
      %p409 = scmp.eq.s32.totalorder %s31, 0
      %p410 = por %p408, %p409
      %s411 = ssub.s32 %s25, %s32
      %p412 = scmp.eq.s32.totalorder %s411, 0
      %s414 = sadd.s32 %s413, 1
      %s415 = scalar_select %p412, %s413, %s414
      %p418 = pneg %p412
      %p419 = scmp.eq.s32.totalorder %s25, 1
      %p420 = por %p418, %p419
      %p421 = scmp.ne.s32.totalorder %s413, %s416
      %p422 = scmp.eq.s32.totalorder %s25, 0
      %p423 = por %p421, %p422
      %p424 = scmp.ne.s32.totalorder %s413, %s416
      %p425 = scmp.eq.s32.totalorder %s30, 1
      %p426 = por %p424, %p425
      %p427 = scmp.ne.s32.totalorder %s416, %s417
      %p428 = scmp.eq.s32.totalorder %s30, 0
      %p429 = por %p427, %p428
      %p430 = scmp.ne.s32.totalorder %s416, %s417
      %p431 = scmp.eq.s32.totalorder %s31, 1
      %p432 = por %p430, %p431
      %p434 = scmp.ne.s32.totalorder %s417, %s433
      %p435 = scmp.eq.s32.totalorder %s31, 0
      %p436 = por %p434, %p435
      %p437 = scmp.le.s32.totalorder 1, %s25
      %p438 = scmp.lt.s32.totalorder %s25, 3
      %p439 = pnand %p437, %p438
      %p440 = pneg %p439
      // Predicated region
      $region9: #{decoder_forward.1} parent=5 // pred_check
        _
      $region10: #{decoder_forward.1} parent=5 // pred_check_branch
        %442 = sbr.rel (%p439) target = $region12
      $region11: #{decoder_forward.1} parent=5 // pred_region
        %s443 = ssub.s32 %s25, 1
        // Predicated region
        $region13: #{decoder_forward.1} parent=11 // pred_check
          %p444 = pneg %p46
        $region14: #{decoder_forward.1} parent=11 // pred_check_branch
          %446 = sbr.rel (%p444) target = $region16
        $region15: #{decoder_forward.1} parent=11 // pred_region
          %448 = vsyncadd [#allocation3], 0
          %s450 = sshll.u32 %s0, 4
          %s451 = int_to_ptr.vmem [resolvable:$true] %s450
          %453 = dma.vmem_to_smem %s451, 32, [#allocation2], [#allocation3]
        $region16: #{decoder_forward.1} parent=11 // pred_fallthru
          _
        // Predicated region
        $region17: #{decoder_forward.1} parent=11 // pred_check
          %p454 = pneg %p67
        $region18: #{decoder_forward.1} parent=11 // pred_check_branch
          %456 = sbr.rel (%p454) target = $region20
        $region19: #{decoder_forward.1} parent=11 // pred_region
          _
        $region20: #{decoder_forward.1} parent=11 // pred_fallthru
          _
        // Predicated region
        $region21: #{decoder_forward.1} parent=11 // pred_check
          %p457 = pneg %p88
        $region22: #{decoder_forward.1} parent=11 // pred_check_branch
          %459 = sbr.rel (%p457) target = $region24
        $region23: #{decoder_forward.1} parent=11 // pred_region
          _
        $region24: #{decoder_forward.1} parent=11 // pred_fallthru
          _
        // Predicated region
        $region25: #{decoder_forward.1} parent=11 // pred_check
          %p460 = pneg %p109
        $region26: #{decoder_forward.1} parent=11 // pred_check_branch
          %462 = sbr.rel (%p460) target = $region28
        $region27: #{decoder_forward.1} parent=11 // pred_region
          _
        $region28: #{decoder_forward.1} parent=11 // pred_fallthru
          _
        // Predicated region
        $region29: #{decoder_forward.1} parent=11 // pred_check
          %p463 = pneg %p130
        $region30: #{decoder_forward.1} parent=11 // pred_check_branch
          %465 = sbr.rel (%p463) target = $region32
        $region31: #{decoder_forward.1} parent=11 // pred_region
          _
        $region32: #{decoder_forward.1} parent=11 // pred_fallthru
          _
        // Predicated region
        $region33: #{decoder_forward.1} parent=11 // pred_check
          %p466 = pneg %p151
        $region34: #{decoder_forward.1} parent=11 // pred_check_branch
          %468 = sbr.rel (%p466) target = $region36
        $region35: #{decoder_forward.1} parent=11 // pred_region
          _
        $region36: #{decoder_forward.1} parent=11 // pred_fallthru
          _
        // Predicated region
        $region37: #{decoder_forward.1} parent=11 // pred_check
          %p469 = pneg %p172
        $region38: #{decoder_forward.1} parent=11 // pred_check_branch
          %471 = sbr.rel (%p469) target = $region40
        $region39: #{decoder_forward.1} parent=11 // pred_region
          _
        $region40: #{decoder_forward.1} parent=11 // pred_fallthru
          _
        // Predicated region
        $region41: #{decoder_forward.1} parent=11 // pred_check
          %p472 = pneg %p193
        $region42: #{decoder_forward.1} parent=11 // pred_check_branch
          %474 = sbr.rel (%p472) target = $region44
        $region43: #{decoder_forward.1} parent=11 // pred_region
          _
        $region44: #{decoder_forward.1} parent=11 // pred_fallthru
          _
        // Predicated region
        $region45: #{decoder_forward.1} parent=11 // pred_check
          %p475 = pneg %p214
        $region46: #{decoder_forward.1} parent=11 // pred_check_branch
          %477 = sbr.rel (%p475) target = $region48
        $region47: #{decoder_forward.1} parent=11 // pred_region
          _
        $region48: #{decoder_forward.1} parent=11 // pred_fallthru
          _
        // Predicated region
        $region49: #{decoder_forward.1} parent=11 // pred_check
          %p478 = pneg %p235
        $region50: #{decoder_forward.1} parent=11 // pred_check_branch
          %480 = sbr.rel (%p478) target = $region52
        $region51: #{decoder_forward.1} parent=11 // pred_region
          _
        $region52: #{decoder_forward.1} parent=11 // pred_fallthru
          _
        // Predicated region
        $region53: #{decoder_forward.1} parent=11 // pred_check
          %p481 = pneg %p256
        $region54: #{decoder_forward.1} parent=11 // pred_check_branch
          %483 = sbr.rel (%p481) target = $region56
        $region55: #{decoder_forward.1} parent=11 // pred_region
          _
        $region56: #{decoder_forward.1} parent=11 // pred_fallthru
          _
        // Predicated region
        $region57: #{decoder_forward.1} parent=11 // pred_check
          %p484 = pneg %p277
        $region58: #{decoder_forward.1} parent=11 // pred_check_branch
          %486 = sbr.rel (%p484) target = $region60
        $region59: #{decoder_forward.1} parent=11 // pred_region
          _
        $region60: #{decoder_forward.1} parent=11 // pred_fallthru
          _
        // Predicated region
        $region61: #{decoder_forward.1} parent=11 // pred_check
          %p487 = pneg %p298
        $region62: #{decoder_forward.1} parent=11 // pred_check_branch
          %489 = sbr.rel (%p487) target = $region64
        $region63: #{decoder_forward.1} parent=11 // pred_region
          _
        $region64: #{decoder_forward.1} parent=11 // pred_fallthru
          _
        // Predicated region
        $region65: #{decoder_forward.1} parent=11 // pred_check
          %p490 = pneg %p319
        $region66: #{decoder_forward.1} parent=11 // pred_check_branch
          %492 = sbr.rel (%p490) target = $region68
        $region67: #{decoder_forward.1} parent=11 // pred_region
          _
        $region68: #{decoder_forward.1} parent=11 // pred_fallthru
          _
        // Predicated region
        $region69: #{decoder_forward.1} parent=11 // pred_check
          %p493 = pneg %p340
        $region70: #{decoder_forward.1} parent=11 // pred_check_branch
          %495 = sbr.rel (%p493) target = $region72
        $region71: #{decoder_forward.1} parent=11 // pred_region
          _
        $region72: #{decoder_forward.1} parent=11 // pred_fallthru
          _
        // Predicated region
        $region73: #{decoder_forward.1} parent=11 // pred_check
          %p496 = pneg %p361
        $region74: #{decoder_forward.1} parent=11 // pred_check_branch
          %498 = sbr.rel (%p496) target = $region76
        $region75: #{decoder_forward.1} parent=11 // pred_region
          _
        $region76: #{decoder_forward.1} parent=11 // pred_fallthru
          _
        // Predicated region
        $region77: #{decoder_forward.1} parent=11 // pred_check
          %p499 = pneg %p382
        $region78: #{decoder_forward.1} parent=11 // pred_check_branch
          %501 = sbr.rel (%p499) target = $region80
        $region79: #{decoder_forward.1} parent=11 // pred_region
          _
        $region80: #{decoder_forward.1} parent=11 // pred_fallthru
          _
        // Predicated region
        $region81: #{decoder_forward.1} parent=11 // pred_check
          %p502 = pneg %p403
        $region82: #{decoder_forward.1} parent=11 // pred_check_branch
          %504 = sbr.rel (%p502) target = $region84
        $region83: #{decoder_forward.1} parent=11 // pred_region
          _
        $region84: #{decoder_forward.1} parent=11 // pred_fallthru
          _
      $region12: #{decoder_forward.1} parent=5 // pred_fallthru
        _
      %p505 = scmp.lt.s32.totalorder %s25, 2
      // Predicated region
      $region85: #{decoder_forward.1} parent=5 // pred_check
        %p506 = pneg %p505
      $region86: #{decoder_forward.1} parent=5 // pred_check_branch
        %508 = sbr.rel (%p506) target = $region88
      $region87: #{decoder_forward.1} parent=5 // pred_region
        _
      $region88: #{decoder_forward.1} parent=5 // pred_fallthru
        _
      %p509 = scmp.le.s32.totalorder 1, %s25
      %p510 = scmp.lt.s32.totalorder %s25, 3
      %p511 = pnand %p509, %p510
      %p512 = pneg %p511
      // Predicated region
      $region89: #{decoder_forward.1} parent=5 // pred_check
        _
      $region90: #{decoder_forward.1} parent=5 // pred_check_branch
        %514 = sbr.rel (%p511) target = $region92
      $region91: #{decoder_forward.1} parent=5 // pred_region
        %s515 = ssub.s32 %s25, 1
        // Predicated region
        $region93: #{decoder_forward.1} parent=91 // pred_check
          %p516 = pneg %p46
        $region94: #{decoder_forward.1} parent=91 // pred_check_branch
          %518 = sbr.rel (%p516) target = $region96
        $region95: #{decoder_forward.1} parent=91 // pred_region
          %520 = dma.done [#allocation3], 32
        $region96: #{decoder_forward.1} parent=91 // pred_fallthru
          _
        %521 = sfence
        %p522 = pneg %p46
        %p523 = pneg %p43
        %p524 = pneg %p67
        %p525 = pneg %p64
        %p526 = pneg %p88
        %p527 = pneg %p85
        %p528 = pneg %p109
        %p529 = pneg %p106
        %p530 = pneg %p130
        %p531 = pneg %p127
        %p532 = pneg %p151
        %p533 = pneg %p148
        %p534 = pneg %p172
        %p535 = pneg %p169
        %p536 = pneg %p193
        %p537 = pneg %p190
        %p538 = pneg %p214
        %p539 = pneg %p211
        %p540 = pneg %p235
        %p541 = pneg %p232
        %p542 = pneg %p256
        %p543 = pneg %p253
        %p544 = pneg %p277
        %p545 = pneg %p274
        %p546 = pneg %p298
        %p547 = pneg %p295
        %p548 = pneg %p319
        %p549 = pneg %p316
        %p550 = pneg %p340
        %p551 = pneg %p337
        %p552 = pneg %p361
        %p553 = pneg %p358
        %p554 = pneg %p382
        %p555 = pneg %p379
        %p556 = pneg %p403
        %p557 = pneg %p400
        %p558 = pneg %p429
        %p559 = pneg %p426
        %p560 = scmp.lt.s32.totalorder %s30, 1
        %s561 = scalar_select %p560, %s30, 1
        %s562 = smul.addr %s561, 8
        %s563 = smul.addr %s562, 4
        %s564 = scalar_lea.vmem %s18, %s563
        %p565 = scmp.lt.s32.totalorder %s30, 1
        %s566 = scalar_select %p565, %s30, 1
        %s567 = smul.addr %s566, 8
        %s568 = smul.addr %s567, 4
        %s569 = scalar_lea.vmem %s18, %s568
        %s571 = smul.u32 %s30, 128
        %s572 = sld [smem:[#allocation2 + %s571]]
        %v573 = vld [vmem:[%s1] sm:$0xff]
        %v574 = vld [vmem:[%s1 + $0x8] sm:$0xff]
        %v575 = vld [vmem:[%s1 + $0x10] sm:$0xff]
        %v576 = vld [vmem:[%s1 + $0x18] sm:$0xff]
        %v577 = vstv %s572
        %v578 = vmul.f32 %v577, %v573
        %v579 = vmul.f32 %v577, %v574
        %v580 = vmul.f32 %v577, %v575
        %v581 = vmul.f32 %v577, %v576
        %v582 = vadd.f32 %v578, 0.0
        %v583 = vadd.f32 %v579, 0.0
        %v584 = vadd.f32 %v580, 0.0
        %v585 = vadd.f32 %v581, 0.0
        %s586 = sadd.s32 %s571, 1
        %s587 = sld [smem:[#allocation2 + %s586]]
        %s588 = scalar_lea.vmem %s1, 32
        %v589 = vld [vmem:[%s588] sm:$0xff]
        %v590 = vld [vmem:[%s588 + $0x8] sm:$0xff]
        %v591 = vld [vmem:[%s588 + $0x10] sm:$0xff]
        %v592 = vld [vmem:[%s588 + $0x18] sm:$0xff]
        %v593 = vstv %s587
        %v594 = vmul.f32 %v593, %v589
        %v595 = vmul.f32 %v593, %v590
        %v596 = vmul.f32 %v593, %v591
        %v597 = vmul.f32 %v593, %v592
        %v598 = vadd.f32 %v582, %v594
        %v599 = vadd.f32 %v583, %v595
        %v600 = vadd.f32 %v584, %v596
        %v601 = vadd.f32 %v585, %v597
        %s602 = sadd.s32 %s571, 2
        %s603 = sld [smem:[#allocation2 + %s602]]
        %s604 = scalar_lea.vmem %s1, 64
        %v605 = vld [vmem:[%s604] sm:$0xff]
        %v606 = vld [vmem:[%s604 + $0x8] sm:$0xff]
        %v607 = vld [vmem:[%s604 + $0x10] sm:$0xff]
        %v608 = vld [vmem:[%s604 + $0x18] sm:$0xff]
        %v609 = vstv %s603
        %v610 = vmul.f32 %v609, %v605
        %v611 = vmul.f32 %v609, %v606
        %v612 = vmul.f32 %v609, %v607
        %v613 = vmul.f32 %v609, %v608
        %v614 = vadd.f32 %v598, %v610
        %v615 = vadd.f32 %v599, %v611
        %v616 = vadd.f32 %v600, %v612
        %v617 = vadd.f32 %v601, %v613
        %s618 = sadd.s32 %s571, 3
        %s619 = sld [smem:[#allocation2 + %s618]]
        %s620 = scalar_lea.vmem %s1, 96
        %v621 = vld [vmem:[%s620] sm:$0xff]
        %v622 = vld [vmem:[%s620 + $0x8] sm:$0xff]
        %v623 = vld [vmem:[%s620 + $0x10] sm:$0xff]
        %v624 = vld [vmem:[%s620 + $0x18] sm:$0xff]
        %v625 = vstv %s619
        %v626 = vmul.f32 %v625, %v621
        %v627 = vmul.f32 %v625, %v622
        %v628 = vmul.f32 %v625, %v623
        %v629 = vmul.f32 %v625, %v624
        %v630 = vadd.f32 %v614, %v626
        %v631 = vadd.f32 %v615, %v627
        %v632 = vadd.f32 %v616, %v628
        %v633 = vadd.f32 %v617, %v629
        %s634 = sadd.s32 %s571, 4
        %s635 = sld [smem:[#allocation2 + %s634]]
        %s636 = scalar_lea.vmem %s1, 128
        %v637 = vld [vmem:[%s636] sm:$0xff]
        %v638 = vld [vmem:[%s636 + $0x8] sm:$0xff]
        %v639 = vld [vmem:[%s636 + $0x10] sm:$0xff]
        %v640 = vld [vmem:[%s636 + $0x18] sm:$0xff]
        %v641 = vstv %s635
        %v642 = vmul.f32 %v641, %v637
        %v643 = vmul.f32 %v641, %v638
        %v644 = vmul.f32 %v641, %v639
        %v645 = vmul.f32 %v641, %v640
        %v646 = vadd.f32 %v630, %v642
        %v647 = vadd.f32 %v631, %v643
        %v648 = vadd.f32 %v632, %v644
        %v649 = vadd.f32 %v633, %v645
        %s650 = sadd.s32 %s571, 5
        %s651 = sld [smem:[#allocation2 + %s650]]
        %s652 = scalar_lea.vmem %s1, 160
        %v653 = vld [vmem:[%s652] sm:$0xff]
        %v654 = vld [vmem:[%s652 + $0x8] sm:$0xff]
        %v655 = vld [vmem:[%s652 + $0x10] sm:$0xff]
        %v656 = vld [vmem:[%s652 + $0x18] sm:$0xff]
        %v657 = vstv %s651
        %v658 = vmul.f32 %v657, %v653
        %v659 = vmul.f32 %v657, %v654
        %v660 = vmul.f32 %v657, %v655
        %v661 = vmul.f32 %v657, %v656
        %v662 = vadd.f32 %v646, %v658
        %v663 = vadd.f32 %v647, %v659
        %v664 = vadd.f32 %v648, %v660
        %v665 = vadd.f32 %v649, %v661
        %s666 = sadd.s32 %s571, 6
        %s667 = sld [smem:[#allocation2 + %s666]]
        %s668 = scalar_lea.vmem %s1, 192
        %v669 = vld [vmem:[%s668] sm:$0xff]
        %v670 = vld [vmem:[%s668 + $0x8] sm:$0xff]
        %v671 = vld [vmem:[%s668 + $0x10] sm:$0xff]
        %v672 = vld [vmem:[%s668 + $0x18] sm:$0xff]
        %v673 = vstv %s667
        %v674 = vmul.f32 %v673, %v669
        %v675 = vmul.f32 %v673, %v670
        %v676 = vmul.f32 %v673, %v671
        %v677 = vmul.f32 %v673, %v672
        %v678 = vadd.f32 %v662, %v674
        %v679 = vadd.f32 %v663, %v675
        %v680 = vadd.f32 %v664, %v676
        %v681 = vadd.f32 %v665, %v677
        %s682 = sadd.s32 %s571, 7
        %s683 = sld [smem:[#allocation2 + %s682]]
        %s684 = scalar_lea.vmem %s1, 224
        %v685 = vld [vmem:[%s684] sm:$0xff]
        %v686 = vld [vmem:[%s684 + $0x8] sm:$0xff]
        %v687 = vld [vmem:[%s684 + $0x10] sm:$0xff]
        %v688 = vld [vmem:[%s684 + $0x18] sm:$0xff]
        %v689 = vstv %s683
        %v690 = vmul.f32 %v689, %v685
        %v691 = vmul.f32 %v689, %v686
        %v692 = vmul.f32 %v689, %v687
        %v693 = vmul.f32 %v689, %v688
        %v694 = vadd.f32 %v678, %v690
        %v695 = vadd.f32 %v679, %v691
        %v696 = vadd.f32 %v680, %v692
        %v697 = vadd.f32 %v681, %v693
        %s698 = sadd.s32 %s571, 8
        %s699 = sld [smem:[#allocation2 + %s698]]
        %s700 = scalar_lea.vmem %s1, 256
        %v701 = vld [vmem:[%s700] sm:$0xff]
        %v702 = vld [vmem:[%s700 + $0x8] sm:$0xff]
        %v703 = vld [vmem:[%s700 + $0x10] sm:$0xff]
        %v704 = vld [vmem:[%s700 + $0x18] sm:$0xff]
        %v705 = vstv %s699
        %v706 = vmul.f32 %v705, %v701
        %v707 = vmul.f32 %v705, %v702
        %v708 = vmul.f32 %v705, %v703
        %v709 = vmul.f32 %v705, %v704
        %v710 = vadd.f32 %v694, %v706
        %v711 = vadd.f32 %v695, %v707
        %v712 = vadd.f32 %v696, %v708
        %v713 = vadd.f32 %v697, %v709
        %s714 = sadd.s32 %s571, 9
        %s715 = sld [smem:[#allocation2 + %s714]]
        %s716 = scalar_lea.vmem %s1, 288
        %v717 = vld [vmem:[%s716] sm:$0xff]
        %v718 = vld [vmem:[%s716 + $0x8] sm:$0xff]
        %v719 = vld [vmem:[%s716 + $0x10] sm:$0xff]
        %v720 = vld [vmem:[%s716 + $0x18] sm:$0xff]
        %v721 = vstv %s715
        %v722 = vmul.f32 %v721, %v717
        %v723 = vmul.f32 %v721, %v718
        %v724 = vmul.f32 %v721, %v719
        %v725 = vmul.f32 %v721, %v720
        %v726 = vadd.f32 %v710, %v722
        %v727 = vadd.f32 %v711, %v723
        %v728 = vadd.f32 %v712, %v724
        %v729 = vadd.f32 %v713, %v725
        %s730 = sadd.s32 %s571, 10
        %s731 = sld [smem:[#allocation2 + %s730]]
        %s732 = scalar_lea.vmem %s1, 320
        %v733 = vld [vmem:[%s732] sm:$0xff]
        %v734 = vld [vmem:[%s732 + $0x8] sm:$0xff]
        %v735 = vld [vmem:[%s732 + $0x10] sm:$0xff]
        %v736 = vld [vmem:[%s732 + $0x18] sm:$0xff]
        %v737 = vstv %s731
        %v738 = vmul.f32 %v737, %v733
        %v739 = vmul.f32 %v737, %v734
        %v740 = vmul.f32 %v737, %v735
        %v741 = vmul.f32 %v737, %v736
        %v742 = vadd.f32 %v726, %v738
        %v743 = vadd.f32 %v727, %v739
        %v744 = vadd.f32 %v728, %v740
        %v745 = vadd.f32 %v729, %v741
        %s746 = sadd.s32 %s571, 11
        %s747 = sld [smem:[#allocation2 + %s746]]
        %s748 = scalar_lea.vmem %s1, 352
        %v749 = vld [vmem:[%s748] sm:$0xff]
        %v750 = vld [vmem:[%s748 + $0x8] sm:$0xff]
        %v751 = vld [vmem:[%s748 + $0x10] sm:$0xff]
        %v752 = vld [vmem:[%s748 + $0x18] sm:$0xff]
        %v753 = vstv %s747
        %v754 = vmul.f32 %v753, %v749
        %v755 = vmul.f32 %v753, %v750
        %v756 = vmul.f32 %v753, %v751
        %v757 = vmul.f32 %v753, %v752
        %v758 = vadd.f32 %v742, %v754
        %v759 = vadd.f32 %v743, %v755
        %v760 = vadd.f32 %v744, %v756
        %v761 = vadd.f32 %v745, %v757
        %s762 = sadd.s32 %s571, 12
        %s763 = sld [smem:[#allocation2 + %s762]]
        %s764 = scalar_lea.vmem %s1, 384
        %v765 = vld [vmem:[%s764] sm:$0xff]
        %v766 = vld [vmem:[%s764 + $0x8] sm:$0xff]
        %v767 = vld [vmem:[%s764 + $0x10] sm:$0xff]
        %v768 = vld [vmem:[%s764 + $0x18] sm:$0xff]
        %v769 = vstv %s763
        %v770 = vmul.f32 %v769, %v765
        %v771 = vmul.f32 %v769, %v766
        %v772 = vmul.f32 %v769, %v767
        %v773 = vmul.f32 %v769, %v768
        %v774 = vadd.f32 %v758, %v770
        %v775 = vadd.f32 %v759, %v771
        %v776 = vadd.f32 %v760, %v772
        %v777 = vadd.f32 %v761, %v773
        %s778 = sadd.s32 %s571, 13
        %s779 = sld [smem:[#allocation2 + %s778]]
        %s780 = scalar_lea.vmem %s1, 416
        %v781 = vld [vmem:[%s780] sm:$0xff]
        %v782 = vld [vmem:[%s780 + $0x8] sm:$0xff]
        %v783 = vld [vmem:[%s780 + $0x10] sm:$0xff]
        %v784 = vld [vmem:[%s780 + $0x18] sm:$0xff]
        %v785 = vstv %s779
        %v786 = vmul.f32 %v785, %v781
        %v787 = vmul.f32 %v785, %v782
        %v788 = vmul.f32 %v785, %v783
        %v789 = vmul.f32 %v785, %v784
        %v790 = vadd.f32 %v774, %v786
        %v791 = vadd.f32 %v775, %v787
        %v792 = vadd.f32 %v776, %v788
        %v793 = vadd.f32 %v777, %v789
        %s794 = sadd.s32 %s571, 14
        %s795 = sld [smem:[#allocation2 + %s794]]
        %s796 = scalar_lea.vmem %s1, 448
        %v797 = vld [vmem:[%s796] sm:$0xff]
        %v798 = vld [vmem:[%s796 + $0x8] sm:$0xff]
        %v799 = vld [vmem:[%s796 + $0x10] sm:$0xff]
        %v800 = vld [vmem:[%s796 + $0x18] sm:$0xff]
        %v801 = vstv %s795
        %v802 = vmul.f32 %v801, %v797
        %v803 = vmul.f32 %v801, %v798
        %v804 = vmul.f32 %v801, %v799
        %v805 = vmul.f32 %v801, %v800
        %v806 = vadd.f32 %v790, %v802
        %v807 = vadd.f32 %v791, %v803
        %v808 = vadd.f32 %v792, %v804
        %v809 = vadd.f32 %v793, %v805
        %s810 = sadd.s32 %s571, 15
        %s811 = sld [smem:[#allocation2 + %s810]]
        %s812 = scalar_lea.vmem %s1, 480
        %v813 = vld [vmem:[%s812] sm:$0xff]
        %v814 = vld [vmem:[%s812 + $0x8] sm:$0xff]
        %v815 = vld [vmem:[%s812 + $0x10] sm:$0xff]
        %v816 = vld [vmem:[%s812 + $0x18] sm:$0xff]
        %v817 = vstv %s811
        %v818 = vmul.f32 %v817, %v813
        %v819 = vmul.f32 %v817, %v814
        %v820 = vmul.f32 %v817, %v815
        %v821 = vmul.f32 %v817, %v816
        %v822 = vadd.f32 %v806, %v818
        %v823 = vadd.f32 %v807, %v819
        %v824 = vadd.f32 %v808, %v820
        %v825 = vadd.f32 %v809, %v821
        %s826 = sadd.s32 %s571, 16
        %s827 = sld [smem:[#allocation2 + %s826]]
        %s828 = scalar_lea.vmem %s1, 512
        %v829 = vld [vmem:[%s828] sm:$0xff]
        %v830 = vld [vmem:[%s828 + $0x8] sm:$0xff]
        %v831 = vld [vmem:[%s828 + $0x10] sm:$0xff]
        %v832 = vld [vmem:[%s828 + $0x18] sm:$0xff]
        %v833 = vstv %s827
        %v834 = vmul.f32 %v833, %v829
        %v835 = vmul.f32 %v833, %v830
        %v836 = vmul.f32 %v833, %v831
        %v837 = vmul.f32 %v833, %v832
        %v838 = vadd.f32 %v822, %v834
        %v839 = vadd.f32 %v823, %v835
        %v840 = vadd.f32 %v824, %v836
        %v841 = vadd.f32 %v825, %v837
        %s842 = sadd.s32 %s571, 17
        %s843 = sld [smem:[#allocation2 + %s842]]
        %s844 = scalar_lea.vmem %s1, 544
        %v845 = vld [vmem:[%s844] sm:$0xff]
        %v846 = vld [vmem:[%s844 + $0x8] sm:$0xff]
        %v847 = vld [vmem:[%s844 + $0x10] sm:$0xff]
        %v848 = vld [vmem:[%s844 + $0x18] sm:$0xff]
        %v849 = vstv %s843
        %v850 = vmul.f32 %v849, %v845
        %v851 = vmul.f32 %v849, %v846
        %v852 = vmul.f32 %v849, %v847
        %v853 = vmul.f32 %v849, %v848
        %v854 = vadd.f32 %v838, %v850
        %v855 = vadd.f32 %v839, %v851
        %v856 = vadd.f32 %v840, %v852
        %v857 = vadd.f32 %v841, %v853
        %s858 = sadd.s32 %s571, 18
        %s859 = sld [smem:[#allocation2 + %s858]]
        %s860 = scalar_lea.vmem %s1, 576
        %v861 = vld [vmem:[%s860] sm:$0xff]
        %v862 = vld [vmem:[%s860 + $0x8] sm:$0xff]
        %v863 = vld [vmem:[%s860 + $0x10] sm:$0xff]
        %v864 = vld [vmem:[%s860 + $0x18] sm:$0xff]
        %v865 = vstv %s859
        %v866 = vmul.f32 %v865, %v861
        %v867 = vmul.f32 %v865, %v862
        %v868 = vmul.f32 %v865, %v863
        %v869 = vmul.f32 %v865, %v864
        %v870 = vadd.f32 %v854, %v866
        %v871 = vadd.f32 %v855, %v867
        %v872 = vadd.f32 %v856, %v868
        %v873 = vadd.f32 %v857, %v869
        %s874 = sadd.s32 %s571, 19
        %s875 = sld [smem:[#allocation2 + %s874]]
        %s876 = scalar_lea.vmem %s1, 608
        %v877 = vld [vmem:[%s876] sm:$0xff]
        %v878 = vld [vmem:[%s876 + $0x8] sm:$0xff]
        %v879 = vld [vmem:[%s876 + $0x10] sm:$0xff]
        %v880 = vld [vmem:[%s876 + $0x18] sm:$0xff]
        %v881 = vstv %s875
        %v882 = vmul.f32 %v881, %v877
        %v883 = vmul.f32 %v881, %v878
        %v884 = vmul.f32 %v881, %v879
        %v885 = vmul.f32 %v881, %v880
        %v886 = vadd.f32 %v870, %v882
        %v887 = vadd.f32 %v871, %v883
        %v888 = vadd.f32 %v872, %v884
        %v889 = vadd.f32 %v873, %v885
        %s890 = sadd.s32 %s571, 20
        %s891 = sld [smem:[#allocation2 + %s890]]
        %s892 = scalar_lea.vmem %s1, 640
        %v893 = vld [vmem:[%s892] sm:$0xff]
        %v894 = vld [vmem:[%s892 + $0x8] sm:$0xff]
        %v895 = vld [vmem:[%s892 + $0x10] sm:$0xff]
        %v896 = vld [vmem:[%s892 + $0x18] sm:$0xff]
        %v897 = vstv %s891
        %v898 = vmul.f32 %v897, %v893
        %v899 = vmul.f32 %v897, %v894
        %v900 = vmul.f32 %v897, %v895
        %v901 = vmul.f32 %v897, %v896
        %v902 = vadd.f32 %v886, %v898
        %v903 = vadd.f32 %v887, %v899
        %v904 = vadd.f32 %v888, %v900
        %v905 = vadd.f32 %v889, %v901
        %s906 = sadd.s32 %s571, 21
        %s907 = sld [smem:[#allocation2 + %s906]]
        %s908 = scalar_lea.vmem %s1, 672
        %v909 = vld [vmem:[%s908] sm:$0xff]
        %v910 = vld [vmem:[%s908 + $0x8] sm:$0xff]
        %v911 = vld [vmem:[%s908 + $0x10] sm:$0xff]
        %v912 = vld [vmem:[%s908 + $0x18] sm:$0xff]
        %v913 = vstv %s907
        %v914 = vmul.f32 %v913, %v909
        %v915 = vmul.f32 %v913, %v910
        %v916 = vmul.f32 %v913, %v911
        %v917 = vmul.f32 %v913, %v912
        %v918 = vadd.f32 %v902, %v914
        %v919 = vadd.f32 %v903, %v915
        %v920 = vadd.f32 %v904, %v916
        %v921 = vadd.f32 %v905, %v917
        %s922 = sadd.s32 %s571, 22
        %s923 = sld [smem:[#allocation2 + %s922]]
        %s924 = scalar_lea.vmem %s1, 704
        %v925 = vld [vmem:[%s924] sm:$0xff]
        %v926 = vld [vmem:[%s924 + $0x8] sm:$0xff]
        %v927 = vld [vmem:[%s924 + $0x10] sm:$0xff]
        %v928 = vld [vmem:[%s924 + $0x18] sm:$0xff]
        %v929 = vstv %s923
        %v930 = vmul.f32 %v929, %v925
        %v931 = vmul.f32 %v929, %v926
        %v932 = vmul.f32 %v929, %v927
        %v933 = vmul.f32 %v929, %v928
        %v934 = vadd.f32 %v918, %v930
        %v935 = vadd.f32 %v919, %v931
        %v936 = vadd.f32 %v920, %v932
        %v937 = vadd.f32 %v921, %v933
        %s938 = sadd.s32 %s571, 23
        %s939 = sld [smem:[#allocation2 + %s938]]
        %s940 = scalar_lea.vmem %s1, 736
        %v941 = vld [vmem:[%s940] sm:$0xff]
        %v942 = vld [vmem:[%s940 + $0x8] sm:$0xff]
        %v943 = vld [vmem:[%s940 + $0x10] sm:$0xff]
        %v944 = vld [vmem:[%s940 + $0x18] sm:$0xff]
        %v945 = vstv %s939
        %v946 = vmul.f32 %v945, %v941
        %v947 = vmul.f32 %v945, %v942
        %v948 = vmul.f32 %v945, %v943
        %v949 = vmul.f32 %v945, %v944
        %v950 = vadd.f32 %v934, %v946
        %v951 = vadd.f32 %v935, %v947
        %v952 = vadd.f32 %v936, %v948
        %v953 = vadd.f32 %v937, %v949
        %s954 = sadd.s32 %s571, 24
        %s955 = sld [smem:[#allocation2 + %s954]]
        %s956 = scalar_lea.vmem %s1, 768
        %v957 = vld [vmem:[%s956] sm:$0xff]
        %v958 = vld [vmem:[%s956 + $0x8] sm:$0xff]
        %v959 = vld [vmem:[%s956 + $0x10] sm:$0xff]
        %v960 = vld [vmem:[%s956 + $0x18] sm:$0xff]
        %v961 = vstv %s955
        %v962 = vmul.f32 %v961, %v957
        %v963 = vmul.f32 %v961, %v958
        %v964 = vmul.f32 %v961, %v959
        %v965 = vmul.f32 %v961, %v960
        %v966 = vadd.f32 %v950, %v962
        %v967 = vadd.f32 %v951, %v963
        %v968 = vadd.f32 %v952, %v964
        %v969 = vadd.f32 %v953, %v965
        %s970 = sadd.s32 %s571, 25
        %s971 = sld [smem:[#allocation2 + %s970]]
        %s972 = scalar_lea.vmem %s1, 800
        %v973 = vld [vmem:[%s972] sm:$0xff]
        %v974 = vld [vmem:[%s972 + $0x8] sm:$0xff]
        %v975 = vld [vmem:[%s972 + $0x10] sm:$0xff]
        %v976 = vld [vmem:[%s972 + $0x18] sm:$0xff]
        %v977 = vstv %s971
        %v978 = vmul.f32 %v977, %v973
        %v979 = vmul.f32 %v977, %v974
        %v980 = vmul.f32 %v977, %v975
        %v981 = vmul.f32 %v977, %v976
        %v982 = vadd.f32 %v966, %v978
        %v983 = vadd.f32 %v967, %v979
        %v984 = vadd.f32 %v968, %v980
        %v985 = vadd.f32 %v969, %v981
        %s986 = sadd.s32 %s571, 26
        %s987 = sld [smem:[#allocation2 + %s986]]
        %s988 = scalar_lea.vmem %s1, 832
        %v989 = vld [vmem:[%s988] sm:$0xff]
        %v990 = vld [vmem:[%s988 + $0x8] sm:$0xff]
        %v991 = vld [vmem:[%s988 + $0x10] sm:$0xff]
        %v992 = vld [vmem:[%s988 + $0x18] sm:$0xff]
        %v993 = vstv %s987
        %v994 = vmul.f32 %v993, %v989
        %v995 = vmul.f32 %v993, %v990
        %v996 = vmul.f32 %v993, %v991
        %v997 = vmul.f32 %v993, %v992
        %v998 = vadd.f32 %v982, %v994
        %v999 = vadd.f32 %v983, %v995
        %v1000 = vadd.f32 %v984, %v996
        %v1001 = vadd.f32 %v985, %v997
        %s1002 = sadd.s32 %s571, 27
        %s1003 = sld [smem:[#allocation2 + %s1002]]
        %s1004 = scalar_lea.vmem %s1, 864
        %v1005 = vld [vmem:[%s1004] sm:$0xff]
        %v1006 = vld [vmem:[%s1004 + $0x8] sm:$0xff]
        %v1007 = vld [vmem:[%s1004 + $0x10] sm:$0xff]
        %v1008 = vld [vmem:[%s1004 + $0x18] sm:$0xff]
        %v1009 = vstv %s1003
        %v1010 = vmul.f32 %v1009, %v1005
        %v1011 = vmul.f32 %v1009, %v1006
        %v1012 = vmul.f32 %v1009, %v1007
        %v1013 = vmul.f32 %v1009, %v1008
        %v1014 = vadd.f32 %v998, %v1010
        %v1015 = vadd.f32 %v999, %v1011
        %v1016 = vadd.f32 %v1000, %v1012
        %v1017 = vadd.f32 %v1001, %v1013
        %s1018 = sadd.s32 %s571, 28
        %s1019 = sld [smem:[#allocation2 + %s1018]]
        %s1020 = scalar_lea.vmem %s1, 896
        %v1021 = vld [vmem:[%s1020] sm:$0xff]
        %v1022 = vld [vmem:[%s1020 + $0x8] sm:$0xff]
        %v1023 = vld [vmem:[%s1020 + $0x10] sm:$0xff]
        %v1024 = vld [vmem:[%s1020 + $0x18] sm:$0xff]
        %v1025 = vstv %s1019
        %v1026 = vmul.f32 %v1025, %v1021
        %v1027 = vmul.f32 %v1025, %v1022
        %v1028 = vmul.f32 %v1025, %v1023
        %v1029 = vmul.f32 %v1025, %v1024
        %v1030 = vadd.f32 %v1014, %v1026
        %v1031 = vadd.f32 %v1015, %v1027
        %v1032 = vadd.f32 %v1016, %v1028
        %v1033 = vadd.f32 %v1017, %v1029
        %s1034 = sadd.s32 %s571, 29
        %s1035 = sld [smem:[#allocation2 + %s1034]]
        %s1036 = scalar_lea.vmem %s1, 928
        %v1037 = vld [vmem:[%s1036] sm:$0xff]
        %v1038 = vld [vmem:[%s1036 + $0x8] sm:$0xff]
        %v1039 = vld [vmem:[%s1036 + $0x10] sm:$0xff]
        %v1040 = vld [vmem:[%s1036 + $0x18] sm:$0xff]
        %v1041 = vstv %s1035
        %v1042 = vmul.f32 %v1041, %v1037
        %v1043 = vmul.f32 %v1041, %v1038
        %v1044 = vmul.f32 %v1041, %v1039
        %v1045 = vmul.f32 %v1041, %v1040
        %v1046 = vadd.f32 %v1030, %v1042
        %v1047 = vadd.f32 %v1031, %v1043
        %v1048 = vadd.f32 %v1032, %v1044
        %v1049 = vadd.f32 %v1033, %v1045
        %s1050 = sadd.s32 %s571, 30
        %s1051 = sld [smem:[#allocation2 + %s1050]]
        %s1052 = scalar_lea.vmem %s1, 960
        %v1053 = vld [vmem:[%s1052] sm:$0xff]
        %v1054 = vld [vmem:[%s1052 + $0x8] sm:$0xff]
        %v1055 = vld [vmem:[%s1052 + $0x10] sm:$0xff]
        %v1056 = vld [vmem:[%s1052 + $0x18] sm:$0xff]
        %v1057 = vstv %s1051
        %v1058 = vmul.f32 %v1057, %v1053
        %v1059 = vmul.f32 %v1057, %v1054
        %v1060 = vmul.f32 %v1057, %v1055
        %v1061 = vmul.f32 %v1057, %v1056
        %v1062 = vadd.f32 %v1046, %v1058
        %v1063 = vadd.f32 %v1047, %v1059
        %v1064 = vadd.f32 %v1048, %v1060
        %v1065 = vadd.f32 %v1049, %v1061
        %s1066 = sadd.s32 %s571, 31
        %s1067 = sld [smem:[#allocation2 + %s1066]]
        %s1068 = scalar_lea.vmem %s1, 992
        %v1069 = vld [vmem:[%s1068] sm:$0xff]
        %v1070 = vld [vmem:[%s1068 + $0x8] sm:$0xff]
        %v1071 = vld [vmem:[%s1068 + $0x10] sm:$0xff]
        %v1072 = vld [vmem:[%s1068 + $0x18] sm:$0xff]
        %v1073 = vstv %s1067
        %v1074 = vmul.f32 %v1073, %v1069
        %v1075 = vmul.f32 %v1073, %v1070
        %v1076 = vmul.f32 %v1073, %v1071
        %v1077 = vmul.f32 %v1073, %v1072
        %v1078 = vadd.f32 %v1062, %v1074
        %v1079 = vadd.f32 %v1063, %v1075
        %v1080 = vadd.f32 %v1064, %v1076
        %v1081 = vadd.f32 %v1065, %v1077
        %v1082 = vld [vmem:[%s2] sm:$0xff]
        %v1083 = vld [vmem:[%s2 + $0x8] sm:$0xff]
        %v1084 = vld [vmem:[%s2 + $0x10] sm:$0xff]
        %v1085 = vld [vmem:[%s2 + $0x18] sm:$0xff]
        %v1086 = vadd.f32 %v1078, %v1082
        %v1087 = vadd.f32 %v1079, %v1083
        %v1088 = vadd.f32 %v1080, %v1084
        %v1089 = vadd.f32 %v1081, %v1085
        %v1090 = vmul.f32 %v1086, 0.5
        %v1091 = vmul.f32 %v1087, 0.5
        %v1092 = vmul.f32 %v1088, 0.5
        %v1093 = vmul.f32 %v1089, 0.5
        %v1094 = vmul.f32 %v1086, 0.044715
        %v1095 = vmul.f32 %v1087, 0.044715
        %v1096 = vmul.f32 %v1088, 0.044715
        %v1097 = vmul.f32 %v1089, 0.044715
        %v1098 = vmul.f32 %v1094, %v1086
        %v1099 = vmul.f32 %v1095, %v1087
        %v1100 = vmul.f32 %v1096, %v1088
        %v1101 = vmul.f32 %v1097, %v1089
        %v1102 = vmul.f32 %v1098, %v1086
        %v1103 = vmul.f32 %v1099, %v1087
        %v1104 = vmul.f32 %v1100, %v1088
        %v1105 = vmul.f32 %v1101, %v1089
        %v1106 = vadd.f32 %v1086, %v1102
        %v1107 = vadd.f32 %v1087, %v1103
        %v1108 = vadd.f32 %v1088, %v1104
        %v1109 = vadd.f32 %v1089, %v1105
        %v1110 = vmul.f32 %v1106, 0.7978846
        %v1111 = vmul.f32 %v1107, 0.7978846
        %v1112 = vmul.f32 %v1108, 0.7978846
        %v1113 = vmul.f32 %v1109, 0.7978846
        %v1114 = vtanh.pop %v1110
        %v1115 = vtanh.pop %v1111
        %v1116 = vtanh.pop %v1112
        %v1117 = vtanh.pop %v1113
        %v1118 = vadd.f32 %v1114, 1.0
        %v1119 = vadd.f32 %v1115, 1.0
        %v1120 = vadd.f32 %v1116, 1.0
        %v1121 = vadd.f32 %v1117, 1.0
        %v1122 = vmul.f32 %v1090, %v1118
        %v1123 = vmul.f32 %v1091, %v1119
        %v1124 = vmul.f32 %v1092, %v1120
        %v1125 = vmul.f32 %v1093, %v1121
        %v1126 = vld [vmem:[%s5] sm:$0xff]
        %v1127 = vld [vmem:[%s5 + $0x8] sm:$0xff]
        %v1128 = vld [vmem:[%s5 + $0x10] sm:$0xff]
        %v1129 = vld [vmem:[%s5 + $0x18] sm:$0xff]
        %v1130 = vld [vmem:[%s6] sm:$0x1]
        %1135 = vrot.lane.b32.xlu0 %v1122, 7
        %v1136 = vpop.permute.xlu0 %1135
        %1137 = vrot.lane.b32.xlu0 %v1123, 7
        %v1138 = vpop.permute.xlu0 %1137
        %1139 = vrot.lane.b32.xlu0 %v1124, 7
        %v1140 = vpop.permute.xlu0 %1139
        %1141 = vrot.lane.b32.xlu0 %v1125, 7
        %v1142 = vpop.permute.xlu0 %1141
        %vm1147 = vcmask 56320
        %v1148 = vsel %vm1147, 0.0, %v1136
        %v1149 = vsel %vm1147, 0.0, %v1138
        %v1150 = vsel %vm1147, 0.0, %v1140
        %v1151 = vsel %vm1147, 0.0, %v1142
        %vm1152 = vcmask 351232
        %v1153 = vsel %vm1152, %v1148, 0.0
        %v1154 = vsel %vm1152, %v1149, 0.0
        %v1155 = vsel %vm1152, %v1150, 0.0
        %v1156 = vsel %vm1152, %v1151, 0.0
        %1161 = vrot.lane.b32.xlu0 %v1153, 127
        %v1162 = vpop.permute.xlu0 %1161
        %1163 = vrot.lane.b32.xlu0 %v1154, 127
        %v1164 = vpop.permute.xlu0 %1163
        %1165 = vrot.lane.b32.xlu0 %v1155, 127
        %v1166 = vpop.permute.xlu0 %1165
        %1167 = vrot.lane.b32.xlu0 %v1156, 127
        %v1168 = vpop.permute.xlu0 %1167
        %1173 = vrot.lane.b32.xlu0 %v1153, 122
        %v1174 = vpop.permute.xlu0 %1173
        %1175 = vrot.lane.b32.xlu0 %v1154, 122
        %v1176 = vpop.permute.xlu0 %1175
        %1177 = vrot.lane.b32.xlu0 %v1155, 122
        %v1178 = vpop.permute.xlu0 %1177
        %1179 = vrot.lane.b32.xlu0 %v1156, 122
        %v1180 = vpop.permute.xlu0 %1179
        %1185 = vrot.lane.b32.xlu0 %v1153, 121
        %v1186 = vpop.permute.xlu0 %1185
        %1187 = vrot.lane.b32.xlu0 %v1154, 121
        %v1188 = vpop.permute.xlu0 %1187
        %1189 = vrot.lane.b32.xlu0 %v1155, 121
        %v1190 = vpop.permute.xlu0 %1189
        %1191 = vrot.lane.b32.xlu0 %v1156, 121
        %v1192 = vpop.permute.xlu0 %1191
        %v1197 = vpack.c.bf16 %v1154, %v1153
        %v1198 = vpack.c.bf16 %v1156, %v1155
        %v1199 = vpack.c.bf16 %v1164, %v1162
        %v1200 = vpack.c.bf16 %v1168, %v1166
        %v1201 = vpack.c.bf16 %v1176, %v1174
        %v1202 = vpack.c.bf16 %v1180, %v1178
        %v1203 = vpack.c.bf16 %v1188, %v1186
        %v1204 = vpack.c.bf16 %v1192, %v1190
        %v1205 = vld [vmem:[%s3] sm:$0xf]
        %v1206 = vld [vmem:[%s3 + $0x4] sm:$0xf]
        %v1207 = vld [vmem:[%s3 + $0x8] sm:$0xf]
        %v1208 = vld [vmem:[%s3 + $0xc] sm:$0xf]
        %v1213 = vunpack.c.l.b16 %v1205
        %v1214 = vunpack.c.l.b16 %v1206
        %v1215 = vunpack.c.l.b16 %v1207
        %v1216 = vunpack.c.l.b16 %v1208
        %v1217 = vpack.c.b16 %v1214, %v1213
        %v1218 = vpack.c.b16 %v1216, %v1215
        %1229 = vrot.lane.b32.xlu0 %v1197, 121
        %v1230 = vpop.permute.xlu0 %1229
        %1231 = vrot.lane.b32.xlu0 %v1198, 121
        %v1232 = vpop.permute.xlu0 %1231
        %1233 = vrot.lane.b32.xlu0 %v1199, 121
        %v1234 = vpop.permute.xlu0 %1233
        %1235 = vrot.lane.b32.xlu0 %v1200, 121
        %v1236 = vpop.permute.xlu0 %1235
        %1237 = vrot.lane.b32.xlu0 %v1201, 121
        %v1238 = vpop.permute.xlu0 %1237
        %1239 = vrot.lane.b32.xlu0 %v1202, 121
        %v1240 = vpop.permute.xlu0 %1239
        %1241 = vrot.lane.b32.xlu0 %v1203, 121
        %v1242 = vpop.permute.xlu0 %1241
        %1243 = vrot.lane.b32.xlu0 %v1204, 121
        %v1244 = vpop.permute.xlu0 %1243
        %1253 = vmatpush.bf16.msra.mxu0 %v1244
        %1254 = vmatpush.bf16.msra.mxu0 %v1242
        %1255 = vmatpush.bf16.msra.mxu0 %v1240
        %1256 = vmatpush.bf16.msra.mxu0 %v1238
        %1257 = vmatpush.bf16.msra.mxu0 %v1236
        %1258 = vmatpush.bf16.msra.mxu0 %v1234
        %1259 = vmatpush.bf16.msra.mxu0 %v1232
        %1260 = vmatpush.bf16.msra.mxu0 %v1230
        %1261 = vmatmul.bf16.gmra.mxu0 %v1217
        %v1262 = vpop.f32.mrf.mxu0
        %v1263 = vadd.f32 0.0, %v1262
        %v1264 = vpop.f32.mrf.mxu0
        %v1265 = vadd.f32 0.0, %v1264
        %1266 = vmatmul.bf16.gmra.mxu0 %v1218
        %v1267 = vpop.f32.mrf.mxu0
        %v1268 = vadd.f32 0.0, %v1267
        %v1269 = vpop.f32.mrf.mxu0
        %v1270 = vadd.f32 0.0, %v1269
        %1271 = vdwg.mxu0
        %v1272 = vpack.c.bf16 %v1265, %v1263
        %v1273 = vpack.c.bf16 %v1270, %v1268
        %v1274 = vld [vmem:[%s4] sm:$0xf]
        %v1275 = vld [vmem:[%s4 + $0x4] sm:$0xf]
        %v1276 = vld [vmem:[%s4 + $0x8] sm:$0xf]
        %v1277 = vld [vmem:[%s4 + $0xc] sm:$0xf]
        %v1278 = vld [vmem:[%s4 + $0x10] sm:$0x3]
        %s1279 = scalar_lea.vmem %s3, 16
        %v1280 = vld [vmem:[%s1279] sm:$0xf]
        %v1281 = vld [vmem:[%s1279 + $0x4] sm:$0xf]
        %v1282 = vld [vmem:[%s1279 + $0x8] sm:$0xf]
        %v1283 = vld [vmem:[%s1279 + $0xc] sm:$0xf]
        %v1288 = vunpack.c.l.b16 %v1280
        %v1289 = vunpack.c.l.b16 %v1281
        %v1290 = vunpack.c.l.b16 %v1282
        %v1291 = vunpack.c.l.b16 %v1283
        %v1292 = vpack.c.b16 %v1289, %v1288
        %v1293 = vpack.c.b16 %v1291, %v1290
        %1296 = vmatpush.bf16.msra.mxu0 %v1244
        %1297 = vmatpush.bf16.msra.mxu0 %v1242
        %1298 = vmatpush.bf16.msra.mxu0 %v1240
        %1299 = vmatpush.bf16.msra.mxu0 %v1238
        %1300 = vmatpush.bf16.msra.mxu0 %v1236
        %1301 = vmatpush.bf16.msra.mxu0 %v1234
        %1302 = vmatpush.bf16.msra.mxu0 %v1232
        %1303 = vmatpush.bf16.msra.mxu0 %v1230
        %1304 = vmatmul.bf16.gmra.mxu0 %v1292
        %v1305 = vpop.f32.mrf.mxu0
        %v1306 = vadd.f32 0.0, %v1305
        %v1307 = vpop.f32.mrf.mxu0
        %v1308 = vadd.f32 0.0, %v1307
        %1309 = vmatmul.bf16.gmra.mxu0 %v1293
        %v1310 = vpop.f32.mrf.mxu0
        %v1311 = vadd.f32 0.0, %v1310
        %v1312 = vpop.f32.mrf.mxu0
        %v1313 = vadd.f32 0.0, %v1312
        %1314 = vdwg.mxu0
        %v1315 = vpack.c.bf16 %v1308, %v1306
        %v1316 = vpack.c.bf16 %v1313, %v1311
        %s1317 = scalar_lea.vmem %s4, 20
        %v1318 = vld [vmem:[%s1317] sm:$0xf]
        %v1319 = vld [vmem:[%s1317 + $0x4] sm:$0xf]
        %v1320 = vld [vmem:[%s1317 + $0x8] sm:$0xf]
        %v1321 = vld [vmem:[%s1317 + $0xc] sm:$0xf]
        %v1322 = vld [vmem:[%s1317 + $0x10] sm:$0x3]
        %v1328 = vunpack.c.l.b16 %v1318
        %v1329 = vunpack.c.l.b16 %v1319
        %v1330 = vunpack.c.l.b16 %v1320
        %v1331 = vunpack.c.l.b16 %v1321
        %v1332 = vunpack.c.l.b16 %v1322
        %v1333 = vpack.c.b16 %v1329, %v1328
        %v1334 = vpack.c.b16 %v1331, %v1330
        %v1335 = vpack.c.b16 %v1332, %v1332
        %vm1338 = vcmask 293888
        %v1340 = vsel %vm1338, %v1315, 0
        %v1343 = vsel %vm1338, %v1316, 0
        %vm1345 = vcmask 1041408
        %v1347 = vsel %vm1345, %v1335, 0
        %1349 = vmatpush.bf16.msra.mxu0 0
        %1350 = vmatpush.bf16.msra.mxu0 0
        %1351 = vmatpush.bf16.msra.mxu0 0
        %1352 = vmatpush.bf16.msra.mxu0 0
        %1353 = vmatpush.bf16.msra.mxu0 0
        %1354 = vmatpush.bf16.msra.mxu0 %v1347
        %1355 = vmatpush.bf16.msra.mxu0 %v1334
        %1356 = vmatpush.bf16.msra.mxu0 %v1333
        %1357 = vmatmul.bf16.gmra.mxu0 %v1340
        %v1358 = vpop.f32.mrf.mxu0
        %v1359 = vadd.f32 0.0, %v1358
        %v1360 = vpop.f32.mrf.mxu0
        %v1361 = vadd.f32 0.0, %v1360
        %1362 = vmatmul.bf16.gmra.mxu0 %v1343
        %v1363 = vpop.f32.mrf.mxu0
        %v1364 = vadd.f32 0.0, %v1363
        %v1365 = vpop.f32.mrf.mxu0
        %v1366 = vadd.f32 0.0, %v1365
        %1367 = vdwg.mxu0
        %v1373 = vunpack.c.l.b16 %v1274
        %v1374 = vunpack.c.l.b16 %v1275
        %v1375 = vunpack.c.l.b16 %v1276
        %v1376 = vunpack.c.l.b16 %v1277
        %v1377 = vunpack.c.l.b16 %v1278
        %v1378 = vpack.c.b16 %v1374, %v1373
        %v1379 = vpack.c.b16 %v1376, %v1375
        %v1380 = vpack.c.b16 %v1377, %v1377
        %v1384 = vsel %vm1338, %v1272, 0
        %v1387 = vsel %vm1338, %v1273, 0
        %v1390 = vsel %vm1345, %v1380, 0
        %1392 = vmatpush.bf16.msra.mxu0 0
        %1393 = vmatpush.bf16.msra.mxu0 0
        %1394 = vmatpush.bf16.msra.mxu0 0
        %1395 = vmatpush.bf16.msra.mxu0 0
        %1396 = vmatpush.bf16.msra.mxu0 0
        %1397 = vmatpush.bf16.msra.mxu0 %v1390
        %1398 = vmatpush.bf16.msra.mxu0 %v1379
        %1399 = vmatpush.bf16.msra.mxu0 %v1378
        %1400 = vmatmul.bf16.gmra.mxu0 %v1384
        %v1401 = vpop.f32.mrf.mxu0
        %v1402 = vadd.f32 %v1359, %v1401
        %v1403 = vpop.f32.mrf.mxu0
        %v1404 = vadd.f32 %v1361, %v1403
        %1405 = vmatmul.bf16.gmra.mxu0 %v1387
        %v1406 = vpop.f32.mrf.mxu0
        %v1407 = vadd.f32 %v1364, %v1406
        %v1408 = vpop.f32.mrf.mxu0
        %v1409 = vadd.f32 %v1366, %v1408
        %1410 = vdwg.mxu0
        %s1411 = scalar_lea.vmem %s3, 32
        %v1412 = vld [vmem:[%s1411] sm:$0xf]
        %v1413 = vld [vmem:[%s1411 + $0x4] sm:$0xf]
        %v1414 = vld [vmem:[%s1411 + $0x8] sm:$0xf]
        %v1415 = vld [vmem:[%s1411 + $0xc] sm:$0xf]
        %v1420 = vunpack.c.l.b16 %v1412
        %v1421 = vunpack.c.l.b16 %v1413
        %v1422 = vunpack.c.l.b16 %v1414
        %v1423 = vunpack.c.l.b16 %v1415
        %v1424 = vpack.c.b16 %v1421, %v1420
        %v1425 = vpack.c.b16 %v1423, %v1422
        %1428 = vmatpush.bf16.msra.mxu0 %v1244
        %1429 = vmatpush.bf16.msra.mxu0 %v1242
        %1430 = vmatpush.bf16.msra.mxu0 %v1240
        %1431 = vmatpush.bf16.msra.mxu0 %v1238
        %1432 = vmatpush.bf16.msra.mxu0 %v1236
        %1433 = vmatpush.bf16.msra.mxu0 %v1234
        %1434 = vmatpush.bf16.msra.mxu0 %v1232
        %1435 = vmatpush.bf16.msra.mxu0 %v1230
        %1436 = vmatmul.bf16.gmra.mxu0 %v1424
        %v1437 = vpop.f32.mrf.mxu0
        %v1438 = vadd.f32 0.0, %v1437
        %v1439 = vpop.f32.mrf.mxu0
        %v1440 = vadd.f32 0.0, %v1439
        %1441 = vmatmul.bf16.gmra.mxu0 %v1425
        %v1442 = vpop.f32.mrf.mxu0
        %v1443 = vadd.f32 0.0, %v1442
        %v1444 = vpop.f32.mrf.mxu0
        %v1445 = vadd.f32 0.0, %v1444
        %1446 = vdwg.mxu0
        %v1447 = vpack.c.bf16 %v1440, %v1438
        %v1448 = vpack.c.bf16 %v1445, %v1443
        %s1449 = scalar_lea.vmem %s4, 40
        %v1450 = vld [vmem:[%s1449] sm:$0xf]
        %v1451 = vld [vmem:[%s1449 + $0x4] sm:$0xf]
        %v1452 = vld [vmem:[%s1449 + $0x8] sm:$0xf]
        %v1453 = vld [vmem:[%s1449 + $0xc] sm:$0xf]
        %v1454 = vld [vmem:[%s1449 + $0x10] sm:$0x3]
        %v1460 = vunpack.c.l.b16 %v1450
        %v1461 = vunpack.c.l.b16 %v1451
        %v1462 = vunpack.c.l.b16 %v1452
        %v1463 = vunpack.c.l.b16 %v1453
        %v1464 = vunpack.c.l.b16 %v1454
        %v1465 = vpack.c.b16 %v1461, %v1460
        %v1466 = vpack.c.b16 %v1463, %v1462
        %v1467 = vpack.c.b16 %v1464, %v1464
        %v1471 = vsel %vm1338, %v1447, 0
        %v1474 = vsel %vm1338, %v1448, 0
        %v1477 = vsel %vm1345, %v1467, 0
        %1479 = vmatpush.bf16.msra.mxu0 0
        %1480 = vmatpush.bf16.msra.mxu0 0
        %1481 = vmatpush.bf16.msra.mxu0 0
        %1482 = vmatpush.bf16.msra.mxu0 0
        %1483 = vmatpush.bf16.msra.mxu0 0
        %1484 = vmatpush.bf16.msra.mxu0 %v1477
        %1485 = vmatpush.bf16.msra.mxu0 %v1466
        %1486 = vmatpush.bf16.msra.mxu0 %v1465
        %1487 = vmatmul.bf16.gmra.mxu0 %v1471
        %v1488 = vpop.f32.mrf.mxu0
        %v1489 = vadd.f32 0.0, %v1488
        %v1490 = vpop.f32.mrf.mxu0
        %v1491 = vadd.f32 0.0, %v1490
        %1492 = vmatmul.bf16.gmra.mxu0 %v1474
        %v1493 = vpop.f32.mrf.mxu0
        %v1494 = vadd.f32 0.0, %v1493
        %v1495 = vpop.f32.mrf.mxu0
        %v1496 = vadd.f32 0.0, %v1495
        %1497 = vdwg.mxu0
        %v1498 = vadd.f32 %v1402, %v1489
        %v1499 = vadd.f32 %v1404, %v1491
        %v1500 = vadd.f32 %v1407, %v1494
        %v1501 = vadd.f32 %v1409, %v1496
        %s1502 = scalar_lea.vmem %s3, 48
        %v1503 = vld [vmem:[%s1502] sm:$0xf]
        %v1504 = vld [vmem:[%s1502 + $0x4] sm:$0xf]
        %v1505 = vld [vmem:[%s1502 + $0x8] sm:$0xf]
        %v1506 = vld [vmem:[%s1502 + $0xc] sm:$0xf]
        %v1511 = vunpack.c.l.b16 %v1503
        %v1512 = vunpack.c.l.b16 %v1504
        %v1513 = vunpack.c.l.b16 %v1505
        %v1514 = vunpack.c.l.b16 %v1506
        %v1515 = vpack.c.b16 %v1512, %v1511
        %v1516 = vpack.c.b16 %v1514, %v1513
        %1519 = vmatpush.bf16.msra.mxu0 %v1244
        %1520 = vmatpush.bf16.msra.mxu0 %v1242
        %1521 = vmatpush.bf16.msra.mxu0 %v1240
        %1522 = vmatpush.bf16.msra.mxu0 %v1238
        %1523 = vmatpush.bf16.msra.mxu0 %v1236
        %1524 = vmatpush.bf16.msra.mxu0 %v1234
        %1525 = vmatpush.bf16.msra.mxu0 %v1232
        %1526 = vmatpush.bf16.msra.mxu0 %v1230
        %1527 = vmatmul.bf16.gmra.mxu0 %v1515
        %v1528 = vpop.f32.mrf.mxu0
        %v1529 = vadd.f32 0.0, %v1528
        %v1530 = vpop.f32.mrf.mxu0
        %v1531 = vadd.f32 0.0, %v1530
        %1532 = vmatmul.bf16.gmra.mxu0 %v1516
        %v1533 = vpop.f32.mrf.mxu0
        %v1534 = vadd.f32 0.0, %v1533
        %v1535 = vpop.f32.mrf.mxu0
        %v1536 = vadd.f32 0.0, %v1535
        %1537 = vdwg.mxu0
        %v1538 = vpack.c.bf16 %v1531, %v1529
        %v1539 = vpack.c.bf16 %v1536, %v1534
        %s1540 = scalar_lea.vmem %s4, 60
        %v1541 = vld [vmem:[%s1540] sm:$0xf]
        %v1542 = vld [vmem:[%s1540 + $0x4] sm:$0xf]
        %v1543 = vld [vmem:[%s1540 + $0x8] sm:$0xf]
        %v1544 = vld [vmem:[%s1540 + $0xc] sm:$0xf]
        %v1545 = vld [vmem:[%s1540 + $0x10] sm:$0x3]
        %v1551 = vunpack.c.l.b16 %v1541
        %v1552 = vunpack.c.l.b16 %v1542
        %v1553 = vunpack.c.l.b16 %v1543
        %v1554 = vunpack.c.l.b16 %v1544
        %v1555 = vunpack.c.l.b16 %v1545
        %v1556 = vpack.c.b16 %v1552, %v1551
        %v1557 = vpack.c.b16 %v1554, %v1553
        %v1558 = vpack.c.b16 %v1555, %v1555
        %v1562 = vsel %vm1338, %v1538, 0
        %v1565 = vsel %vm1338, %v1539, 0
        %v1568 = vsel %vm1345, %v1558, 0
        %1570 = vmatpush.bf16.msra.mxu0 0
        %1571 = vmatpush.bf16.msra.mxu0 0
        %1572 = vmatpush.bf16.msra.mxu0 0
        %1573 = vmatpush.bf16.msra.mxu0 0
        %1574 = vmatpush.bf16.msra.mxu0 0
        %1575 = vmatpush.bf16.msra.mxu0 %v1568
        %1576 = vmatpush.bf16.msra.mxu0 %v1557
        %1577 = vmatpush.bf16.msra.mxu0 %v1556
        %1578 = vmatmul.bf16.gmra.mxu0 %v1562
        %v1579 = vpop.f32.mrf.mxu0
        %v1580 = vadd.f32 0.0, %v1579
        %v1581 = vpop.f32.mrf.mxu0
        %v1582 = vadd.f32 0.0, %v1581
        %1583 = vmatmul.bf16.gmra.mxu0 %v1565
        %v1584 = vpop.f32.mrf.mxu0
        %v1585 = vadd.f32 0.0, %v1584
        %v1586 = vpop.f32.mrf.mxu0
        %v1587 = vadd.f32 0.0, %v1586
        %1588 = vdwg.mxu0
        %v1589 = vadd.f32 %v1498, %v1580
        %v1590 = vadd.f32 %v1499, %v1582
        %v1591 = vadd.f32 %v1500, %v1585
        %v1592 = vadd.f32 %v1501, %v1587
        %1594 = vset.pattern.permute.xlu0 0
        %1595 = vperm.xlu0 %1594, %v1126
        %v1596 = vpop.permute.xlu0 %1595
        %1599 = vset.pattern.permute.xlu0 0
        %1600 = vperm.xlu0 %1599, %v1127
        %v1601 = vpop.permute.xlu0 %1600
        %1604 = vset.pattern.permute.xlu0 0
        %1605 = vperm.xlu0 %1604, %v1128
        %v1606 = vpop.permute.xlu0 %1605
        %1609 = vset.pattern.permute.xlu0 0
        %1610 = vperm.xlu0 %1609, %v1129
        %v1611 = vpop.permute.xlu0 %1610
        %v1613 = vadd.f32 %v1589, %v1596
        %v1614 = vadd.f32 %v1590, %v1601
        %v1615 = vadd.f32 %v1591, %v1606
        %v1616 = vadd.f32 %v1592, %v1611
        %v1617 = vmul.f32 %v1613, 0.5
        %v1618 = vmul.f32 %v1614, 0.5
        %v1619 = vmul.f32 %v1615, 0.5
        %v1620 = vmul.f32 %v1616, 0.5
        %v1621 = vmul.f32 %v1613, 0.044715
        %v1622 = vmul.f32 %v1614, 0.044715
        %v1623 = vmul.f32 %v1615, 0.044715
        %v1624 = vmul.f32 %v1616, 0.044715
        %v1625 = vmul.f32 %v1621, %v1613
        %v1626 = vmul.f32 %v1622, %v1614
        %v1627 = vmul.f32 %v1623, %v1615
        %v1628 = vmul.f32 %v1624, %v1616
        %v1629 = vmul.f32 %v1625, %v1613
        %v1630 = vmul.f32 %v1626, %v1614
        %v1631 = vmul.f32 %v1627, %v1615
        %v1632 = vmul.f32 %v1628, %v1616
        %v1633 = vadd.f32 %v1613, %v1629
        %v1634 = vadd.f32 %v1614, %v1630
        %v1635 = vadd.f32 %v1615, %v1631
        %v1636 = vadd.f32 %v1616, %v1632
        %v1637 = vmul.f32 %v1633, 0.7978846
        %v1638 = vmul.f32 %v1634, 0.7978846
        %v1639 = vmul.f32 %v1635, 0.7978846
        %v1640 = vmul.f32 %v1636, 0.7978846
        %v1641 = vtanh.pop %v1637
        %v1642 = vtanh.pop %v1638
        %v1643 = vtanh.pop %v1639
        %v1644 = vtanh.pop %v1640
        %v1645 = vadd.f32 %v1641, 1.0
        %v1646 = vadd.f32 %v1642, 1.0
        %v1647 = vadd.f32 %v1643, 1.0
        %v1648 = vadd.f32 %v1644, 1.0
        %v1649 = vmul.f32 %v1617, %v1645
        %v1650 = vmul.f32 %v1618, %v1646
        %v1651 = vmul.f32 %v1619, %v1647
        %v1652 = vmul.f32 %v1620, %v1648
        %v1654 = vperm.slane %v1130, 0
        %v1656 = vmul.f32 %v1649, %v1654
        %v1657 = vmul.f32 %v1650, %v1654
        %v1658 = vmul.f32 %v1651, %v1654
        %v1659 = vmul.f32 %v1652, %v1654
        %v1660 = vld [vmem:[%s7] sm:$0xff]
        %v1661 = vld [vmem:[%s7 + $0x8] sm:$0xf]
        %v1662 = vld [vmem:[%s7 + $0xc] sm:$0xff]
        %v1663 = vld [vmem:[%s7 + $0x14] sm:$0xf]
        %v1664 = vld [vmem:[%s7 + $0x18] sm:$0xff]
        %v1665 = vld [vmem:[%s7 + $0x20] sm:$0xf]
        %v1666 = vld [vmem:[%s7 + $0x24] sm:$0xff]
        %v1667 = vld [vmem:[%s7 + $0x2c] sm:$0xf]
        %v1668 = vld [vmem:[%s8] sm:$0xff]
        %v1669 = vld [vmem:[%s8 + $0x8] sm:$0xff]
        %v1670 = vld [vmem:[%s8 + $0x10] sm:$0xff]
        %v1671 = vld [vmem:[%s8 + $0x18] sm:$0xff]
        %1676 = vrot.lane.b32.xlu0 %v1656, 11
        %v1677 = vpop.permute.xlu0 %1676
        %1678 = vrot.lane.b32.xlu0 %v1657, 11
        %v1679 = vpop.permute.xlu0 %1678
        %1680 = vrot.lane.b32.xlu0 %v1658, 11
        %v1681 = vpop.permute.xlu0 %1680
        %1682 = vrot.lane.b32.xlu0 %v1659, 11
        %v1683 = vpop.permute.xlu0 %1682
        %vm1688 = vcmask 89088
        %v1689 = vsel %vm1688, 0.0, %v1677
        %v1690 = vsel %vm1688, 0.0, %v1679
        %v1691 = vsel %vm1688, 0.0, %v1681
        %v1692 = vsel %vm1688, 0.0, %v1683
        %vm1693 = vcmask 908288
        %v1694 = vsel %vm1693, %v1689, 0.0
        %v1695 = vsel %vm1693, %v1690, 0.0
        %v1696 = vsel %vm1693, %v1691, 0.0
        %v1697 = vsel %vm1693, %v1692, 0.0
        %1702 = vrot.lane.b32.xlu0 %v1694, 127
        %v1703 = vpop.permute.xlu0 %1702
        %1704 = vrot.lane.b32.xlu0 %v1695, 127
        %v1705 = vpop.permute.xlu0 %1704
        %1706 = vrot.lane.b32.xlu0 %v1696, 127
        %v1707 = vpop.permute.xlu0 %1706
        %1708 = vrot.lane.b32.xlu0 %v1697, 127
        %v1709 = vpop.permute.xlu0 %1708
        %1714 = vrot.lane.b32.xlu0 %v1694, 126
        %v1715 = vpop.permute.xlu0 %1714
        %1716 = vrot.lane.b32.xlu0 %v1695, 126
        %v1717 = vpop.permute.xlu0 %1716
        %1718 = vrot.lane.b32.xlu0 %v1696, 126
        %v1719 = vpop.permute.xlu0 %1718
        %1720 = vrot.lane.b32.xlu0 %v1697, 126
        %v1721 = vpop.permute.xlu0 %1720
        %1726 = vrot.lane.b32.xlu0 %v1694, 118
        %v1727 = vpop.permute.xlu0 %1726
        %1728 = vrot.lane.b32.xlu0 %v1695, 118
        %v1729 = vpop.permute.xlu0 %1728
        %1730 = vrot.lane.b32.xlu0 %v1696, 118
        %v1731 = vpop.permute.xlu0 %1730
        %1732 = vrot.lane.b32.xlu0 %v1697, 118
        %v1733 = vpop.permute.xlu0 %1732
        %1738 = vrot.lane.b32.xlu0 %v1694, 117
        %v1739 = vpop.permute.xlu0 %1738
        %1740 = vrot.lane.b32.xlu0 %v1695, 117
        %v1741 = vpop.permute.xlu0 %1740
        %1742 = vrot.lane.b32.xlu0 %v1696, 117
        %v1743 = vpop.permute.xlu0 %1742
        %1744 = vrot.lane.b32.xlu0 %v1697, 117
        %v1745 = vpop.permute.xlu0 %1744
        %1750 = vrot.lane.b32.xlu0 %v1694, 116
        %v1751 = vpop.permute.xlu0 %1750
        %1752 = vrot.lane.b32.xlu0 %v1695, 116
        %v1753 = vpop.permute.xlu0 %1752
        %1754 = vrot.lane.b32.xlu0 %v1696, 116
        %v1755 = vpop.permute.xlu0 %1754
        %1756 = vrot.lane.b32.xlu0 %v1697, 116
        %v1757 = vpop.permute.xlu0 %1756
        %1762 = vrot.lane.b32.xlu0 %v1694, 108
        %v1763 = vpop.permute.xlu0 %1762
        %1764 = vrot.lane.b32.xlu0 %v1695, 108
        %v1765 = vpop.permute.xlu0 %1764
        %1766 = vrot.lane.b32.xlu0 %v1696, 108
        %v1767 = vpop.permute.xlu0 %1766
        %1768 = vrot.lane.b32.xlu0 %v1697, 108
        %v1769 = vpop.permute.xlu0 %1768
        %1774 = vrot.lane.b32.xlu0 %v1694, 107
        %v1775 = vpop.permute.xlu0 %1774
        %1776 = vrot.lane.b32.xlu0 %v1695, 107
        %v1777 = vpop.permute.xlu0 %1776
        %1778 = vrot.lane.b32.xlu0 %v1696, 107
        %v1779 = vpop.permute.xlu0 %1778
        %1780 = vrot.lane.b32.xlu0 %v1697, 107
        %v1781 = vpop.permute.xlu0 %1780
        %1786 = vrot.lane.b32.xlu0 %v1694, 106
        %v1787 = vpop.permute.xlu0 %1786
        %1788 = vrot.lane.b32.xlu0 %v1695, 106
        %v1789 = vpop.permute.xlu0 %1788
        %1790 = vrot.lane.b32.xlu0 %v1696, 106
        %v1791 = vpop.permute.xlu0 %1790
        %1792 = vrot.lane.b32.xlu0 %v1697, 106
        %v1793 = vpop.permute.xlu0 %1792
        %v1798 = vpack.c.bf16 %v1695, %v1694
        %v1799 = vpack.c.bf16 %v1697, %v1696
        %v1800 = vpack.c.bf16 %v1705, %v1703
        %v1801 = vpack.c.bf16 %v1709, %v1707
        %v1802 = vpack.c.bf16 %v1717, %v1715
        %v1803 = vpack.c.bf16 %v1721, %v1719
        %v1804 = vpack.c.bf16 %v1729, %v1727
        %v1805 = vpack.c.bf16 %v1733, %v1731
        %v1806 = vpack.c.bf16 %v1741, %v1739
        %v1807 = vpack.c.bf16 %v1745, %v1743
        %v1808 = vpack.c.bf16 %v1753, %v1751
        %v1809 = vpack.c.bf16 %v1757, %v1755
        %v1810 = vpack.c.bf16 %v1765, %v1763
        %v1811 = vpack.c.bf16 %v1769, %v1767
        %v1812 = vpack.c.bf16 %v1777, %v1775
        %v1813 = vpack.c.bf16 %v1781, %v1779
        %v1814 = vpack.c.bf16 %v1789, %v1787
        %v1815 = vpack.c.bf16 %v1793, %v1791
        %1817 = vset.pattern.permute.xlu0 0
        %1818 = vperm.xlu0 %1817, %v1668
        %v1819 = vpop.permute.xlu0 %1818
        %1822 = vset.pattern.permute.xlu0 0
        %1823 = vperm.xlu0 %1822, %v1669
        %v1824 = vpop.permute.xlu0 %1823
        %1827 = vset.pattern.permute.xlu0 0
        %1828 = vperm.xlu0 %1827, %v1670
        %v1829 = vpop.permute.xlu0 %1828
        %1832 = vset.pattern.permute.xlu0 0
        %1833 = vperm.xlu0 %1832, %v1671
        %v1834 = vpop.permute.xlu0 %1833
        %v1844 = vunpack.c.l.b16 %v1660
        %v1845 = vunpack.c.h.b16 %v1660
        %v1846 = vunpack.c.l.b16 %v1661
        %v1847 = vunpack.c.l.b16 %v1662
        %v1848 = vunpack.c.h.b16 %v1662
        %v1849 = vunpack.c.l.b16 %v1663
        %v1850 = vunpack.c.l.b16 %v1664
        %v1851 = vunpack.c.h.b16 %v1664
        %v1852 = vunpack.c.l.b16 %v1665
        %v1853 = vunpack.c.l.b16 %v1666
        %v1854 = vunpack.c.h.b16 %v1666
        %v1855 = vunpack.c.l.b16 %v1667
        %v1856 = vpack.c.b16 %v1847, %v1844
        %v1857 = vpack.c.b16 %v1848, %v1845
        %v1858 = vpack.c.b16 %v1849, %v1846
        %v1859 = vpack.c.b16 %v1853, %v1850
        %v1860 = vpack.c.b16 %v1854, %v1851
        %v1861 = vpack.c.b16 %v1855, %v1852
        %vm1866 = vcmask 261120
        %v1868 = vsel %vm1866, %v1858, 0
        %v1871 = vsel %vm1866, %v1861, 0
        %1873 = vmatpush.bf16.msra.mxu0 %v1805
        %1874 = vmatpush.bf16.msra.mxu0 %v1804
        %1875 = vmatpush.bf16.msra.mxu0 %v1803
        %1876 = vmatpush.bf16.msra.mxu0 %v1802
        %1877 = vmatpush.bf16.msra.mxu0 %v1801
        %1878 = vmatpush.bf16.msra.mxu0 %v1800
        %1879 = vmatpush.bf16.msra.mxu0 %v1799
        %1880 = vmatpush.bf16.msra.mxu0 %v1798
        %1881 = vmatmul.bf16.gmra.mxu0 %v1856
        %v1882 = vpop.f32.mrf.mxu0
        %v1883 = vadd.f32 %v1819, %v1882
        %v1884 = vpop.f32.mrf.mxu0
        %v1885 = vadd.f32 %v1824, %v1884
        %1886 = vmatmul.bf16.gmra.mxu0 %v1859
        %v1887 = vpop.f32.mrf.mxu0
        %v1888 = vadd.f32 %v1829, %v1887
        %v1889 = vpop.f32.mrf.mxu0
        %v1890 = vadd.f32 %v1834, %v1889
        %1891 = vdwg.mxu0
        %1892 = vmatpush.bf16.msra.mxu0 %v1813
        %1893 = vmatpush.bf16.msra.mxu0 %v1812
        %1894 = vmatpush.bf16.msra.mxu0 %v1811
        %1895 = vmatpush.bf16.msra.mxu0 %v1810
        %1896 = vmatpush.bf16.msra.mxu0 %v1809
        %1897 = vmatpush.bf16.msra.mxu0 %v1808
        %1898 = vmatpush.bf16.msra.mxu0 %v1807
        %1899 = vmatpush.bf16.msra.mxu0 %v1806
        %1900 = vmatmul.bf16.gmra.mxu0 %v1857
        %v1901 = vpop.f32.mrf.mxu0
        %v1902 = vadd.f32 %v1883, %v1901
        %v1903 = vpop.f32.mrf.mxu0
        %v1904 = vadd.f32 %v1885, %v1903
        %1905 = vmatmul.bf16.gmra.mxu0 %v1860
        %v1906 = vpop.f32.mrf.mxu0
        %v1907 = vadd.f32 %v1888, %v1906
        %v1908 = vpop.f32.mrf.mxu0
        %v1909 = vadd.f32 %v1890, %v1908
        %1910 = vdwg.mxu0
        %1911 = vmatpush.bf16.msra.mxu0 0
        %1912 = vmatpush.bf16.msra.mxu0 0
        %1913 = vmatpush.bf16.msra.mxu0 0
        %1914 = vmatpush.bf16.msra.mxu0 0
        %1915 = vmatpush.bf16.msra.mxu0 0
        %1916 = vmatpush.bf16.msra.mxu0 0
        %1917 = vmatpush.bf16.msra.mxu0 %v1815
        %1918 = vmatpush.bf16.msra.mxu0 %v1814
        %1919 = vmatmul.bf16.gmra.mxu0 %v1868
        %v1920 = vpop.f32.mrf.mxu0
        %v1921 = vadd.f32 %v1902, %v1920
        %v1922 = vpop.f32.mrf.mxu0
        %v1923 = vadd.f32 %v1904, %v1922
        %1924 = vmatmul.bf16.gmra.mxu0 %v1871
        %v1925 = vpop.f32.mrf.mxu0
        %v1926 = vadd.f32 %v1907, %v1925
        %v1927 = vpop.f32.mrf.mxu0
        %v1928 = vadd.f32 %v1909, %v1927
        %1929 = vdwg.mxu0
        %v1930 = vmul.f32 %v1921, 0.5
        %v1931 = vmul.f32 %v1923, 0.5
        %v1932 = vmul.f32 %v1926, 0.5
        %v1933 = vmul.f32 %v1928, 0.5
        %v1934 = vmul.f32 %v1921, 0.044715
        %v1935 = vmul.f32 %v1923, 0.044715
        %v1936 = vmul.f32 %v1926, 0.044715
        %v1937 = vmul.f32 %v1928, 0.044715
        %v1938 = vmul.f32 %v1934, %v1921
        %v1939 = vmul.f32 %v1935, %v1923
        %v1940 = vmul.f32 %v1936, %v1926
        %v1941 = vmul.f32 %v1937, %v1928
        %v1942 = vmul.f32 %v1938, %v1921
        %v1943 = vmul.f32 %v1939, %v1923
        %v1944 = vmul.f32 %v1940, %v1926
        %v1945 = vmul.f32 %v1941, %v1928
        %v1946 = vadd.f32 %v1921, %v1942
        %v1947 = vadd.f32 %v1923, %v1943
        %v1948 = vadd.f32 %v1926, %v1944
        %v1949 = vadd.f32 %v1928, %v1945
        %v1950 = vmul.f32 %v1946, 0.7978846
        %v1951 = vmul.f32 %v1947, 0.7978846
        %v1952 = vmul.f32 %v1948, 0.7978846
        %v1953 = vmul.f32 %v1949, 0.7978846
        %v1954 = vtanh.pop %v1950
        %v1955 = vtanh.pop %v1951
        %v1956 = vtanh.pop %v1952
        %v1957 = vtanh.pop %v1953
        %v1958 = vadd.f32 %v1954, 1.0
        %v1959 = vadd.f32 %v1955, 1.0
        %v1960 = vadd.f32 %v1956, 1.0
        %v1961 = vadd.f32 %v1957, 1.0
        %v1962 = vmul.f32 %v1930, %v1958
        %v1963 = vmul.f32 %v1931, %v1959
        %v1964 = vmul.f32 %v1932, %v1960
        %v1965 = vmul.f32 %v1933, %v1961
        %v1966 = vmul.f32 %v1962, %v1654
        %v1967 = vmul.f32 %v1963, %v1654
        %v1968 = vmul.f32 %v1964, %v1654
        %v1969 = vmul.f32 %v1965, %v1654
        %v1970 = vld [vmem:[%s11] sm:$0xff]
        %v1971 = vld [vmem:[%s11 + $0x8] sm:$0xff]
        %v1972 = vld [vmem:[%s12] sm:$0x7]
        %1977 = vrot.lane.b32.xlu0 %v1966, 11
        %v1978 = vpop.permute.xlu0 %1977
        %1979 = vrot.lane.b32.xlu0 %v1967, 11
        %v1980 = vpop.permute.xlu0 %1979
        %1981 = vrot.lane.b32.xlu0 %v1968, 11
        %v1982 = vpop.permute.xlu0 %1981
        %1983 = vrot.lane.b32.xlu0 %v1969, 11
        %v1984 = vpop.permute.xlu0 %1983
        %v1989 = vsel %vm1688, 0.0, %v1978
        %v1990 = vsel %vm1688, 0.0, %v1980
        %v1991 = vsel %vm1688, 0.0, %v1982
        %v1992 = vsel %vm1688, 0.0, %v1984
        %v1993 = vsel %vm1693, %v1989, 0.0
        %v1994 = vsel %vm1693, %v1990, 0.0
        %v1995 = vsel %vm1693, %v1991, 0.0
        %v1996 = vsel %vm1693, %v1992, 0.0
        %2001 = vrot.lane.b32.xlu0 %v1993, 127
        %v2002 = vpop.permute.xlu0 %2001
        %2003 = vrot.lane.b32.xlu0 %v1994, 127
        %v2004 = vpop.permute.xlu0 %2003
        %2005 = vrot.lane.b32.xlu0 %v1995, 127
        %v2006 = vpop.permute.xlu0 %2005
        %2007 = vrot.lane.b32.xlu0 %v1996, 127
        %v2008 = vpop.permute.xlu0 %2007
        %2013 = vrot.lane.b32.xlu0 %v1993, 118
        %v2014 = vpop.permute.xlu0 %2013
        %2015 = vrot.lane.b32.xlu0 %v1994, 118
        %v2016 = vpop.permute.xlu0 %2015
        %2017 = vrot.lane.b32.xlu0 %v1995, 118
        %v2018 = vpop.permute.xlu0 %2017
        %2019 = vrot.lane.b32.xlu0 %v1996, 118
        %v2020 = vpop.permute.xlu0 %2019
        %2025 = vrot.lane.b32.xlu0 %v1993, 117
        %v2026 = vpop.permute.xlu0 %2025
        %2027 = vrot.lane.b32.xlu0 %v1994, 117
        %v2028 = vpop.permute.xlu0 %2027
        %2029 = vrot.lane.b32.xlu0 %v1995, 117
        %v2030 = vpop.permute.xlu0 %2029
        %2031 = vrot.lane.b32.xlu0 %v1996, 117
        %v2032 = vpop.permute.xlu0 %2031
        %v2037 = vpack.c.bf16 %v1994, %v1993
        %v2038 = vpack.c.bf16 %v1996, %v1995
        %v2039 = vpack.c.bf16 %v2004, %v2002
        %v2040 = vpack.c.bf16 %v2008, %v2006
        %v2041 = vpack.c.bf16 %v2016, %v2014
        %v2042 = vpack.c.bf16 %v2020, %v2018
        %v2043 = vpack.c.bf16 %v2028, %v2026
        %v2044 = vpack.c.bf16 %v2032, %v2030
        %v2045 = vld [vmem:[%s9] sm:$0xf]
        %v2046 = vld [vmem:[%s9 + $0x4] sm:$0xf]
        %v2049 = vunpack.c.l.b16 %v2045
        %v2050 = vunpack.c.l.b16 %v2046
        %v2051 = vpack.c.b16 %v2050, %v2049
        %2061 = vrot.lane.b32.xlu0 %v2037, 117
        %v2062 = vpop.permute.xlu0 %2061
        %2063 = vrot.lane.b32.xlu0 %v2038, 117
        %v2064 = vpop.permute.xlu0 %2063
        %2065 = vrot.lane.b32.xlu0 %v2039, 117
        %v2066 = vpop.permute.xlu0 %2065
        %2067 = vrot.lane.b32.xlu0 %v2040, 117
        %v2068 = vpop.permute.xlu0 %2067
        %2069 = vrot.lane.b32.xlu0 %v2041, 117
        %v2070 = vpop.permute.xlu0 %2069
        %2071 = vrot.lane.b32.xlu0 %v2042, 117
        %v2072 = vpop.permute.xlu0 %2071
        %2073 = vrot.lane.b32.xlu0 %v2043, 117
        %v2074 = vpop.permute.xlu0 %2073
        %2075 = vrot.lane.b32.xlu0 %v2044, 117
        %v2076 = vpop.permute.xlu0 %2075
        %2085 = vmatpush.bf16.msra.mxu0 %v2076
        %2086 = vmatpush.bf16.msra.mxu0 %v2074
        %2087 = vmatpush.bf16.msra.mxu0 %v2072
        %2088 = vmatpush.bf16.msra.mxu0 %v2070
        %2089 = vmatpush.bf16.msra.mxu0 %v2068
        %2090 = vmatpush.bf16.msra.mxu0 %v2066
        %2091 = vmatpush.bf16.msra.mxu0 %v2064
        %2092 = vmatpush.bf16.msra.mxu0 %v2062
        %2093 = vmatmul.bf16.gmra.mxu0 %v2051
        %v2094 = vpop.f32.mrf.mxu0
        %v2095 = vadd.f32 0.0, %v2094
        %v2096 = vpop.f32.mrf.mxu0
        %v2097 = vadd.f32 0.0, %v2096
        %2098 = vdwg.mxu0
        %v2099 = vpack.c.bf16 %v2097, %v2095
        %v2100 = vld [vmem:[%s10] sm:$0xff]
        %v2101 = vld [vmem:[%s10 + $0x8] sm:$0xf]
        %v2102 = vld [vmem:[%s10 + $0xc] sm:$0xff]
        %v2103 = vld [vmem:[%s10 + $0x14] sm:$0xf]
        %v2104 = vld [vmem:[%s10 + $0x18] sm:$0xff]
        %v2105 = vld [vmem:[%s10 + $0x20] sm:$0xf]
        %v2106 = vld [vmem:[%s10 + $0x24] sm:$0xff]
        %v2107 = vld [vmem:[%s10 + $0x2c] sm:$0xf]
        %v2108 = vld [vmem:[%s10 + $0x30] sm:$0xff]
        %v2109 = vld [vmem:[%s10 + $0x38] sm:$0xf]
        %v2110 = vld [vmem:[%s10 + $0x3c] sm:$0xff]
        %v2111 = vld [vmem:[%s10 + $0x44] sm:$0xf]
        %v2112 = vld [vmem:[%s10 + $0x48] sm:$0xff]
        %v2113 = vld [vmem:[%s10 + $0x50] sm:$0xf]
        %v2114 = vld [vmem:[%s10 + $0x54] sm:$0xff]
        %v2115 = vld [vmem:[%s10 + $0x5c] sm:$0xf]
        %v2116 = vld [vmem:[%s10 + $0x60] sm:$0xff]
        %v2117 = vld [vmem:[%s10 + $0x68] sm:$0xf]
        %v2118 = vld [vmem:[%s10 + $0x6c] sm:$0xff]
        %v2119 = vld [vmem:[%s10 + $0x74] sm:$0xf]
        %v2120 = vld [vmem:[%s10 + $0x78] sm:$0xff]
        %v2121 = vld [vmem:[%s10 + $0x80] sm:$0xf]
        %v2122 = vld [vmem:[%s10 + $0x84] sm:$0xff]
        %v2123 = vld [vmem:[%s10 + $0x8c] sm:$0xf]
        %v2124 = vld [vmem:[%s10 + $0x90] sm:$0x33]
        %v2125 = vld [vmem:[%s10 + $0x98] sm:$0x3]
        %s2126 = scalar_lea.vmem %s9, 8
        %v2127 = vld [vmem:[%s2126] sm:$0xf]
        %v2128 = vld [vmem:[%s2126 + $0x4] sm:$0xf]
        %v2131 = vunpack.c.l.b16 %v2127
        %v2132 = vunpack.c.l.b16 %v2128
        %v2133 = vpack.c.b16 %v2132, %v2131
        %2135 = vmatpush.bf16.msra.mxu0 %v2076
        %2136 = vmatpush.bf16.msra.mxu0 %v2074
        %2137 = vmatpush.bf16.msra.mxu0 %v2072
        %2138 = vmatpush.bf16.msra.mxu0 %v2070
        %2139 = vmatpush.bf16.msra.mxu0 %v2068
        %2140 = vmatpush.bf16.msra.mxu0 %v2066
        %2141 = vmatpush.bf16.msra.mxu0 %v2064
        %2142 = vmatpush.bf16.msra.mxu0 %v2062
        %2143 = vmatmul.bf16.gmra.mxu0 %v2133
        %v2144 = vpop.f32.mrf.mxu0
        %v2145 = vadd.f32 0.0, %v2144
        %v2146 = vpop.f32.mrf.mxu0
        %v2147 = vadd.f32 0.0, %v2146
        %2148 = vdwg.mxu0
        %v2149 = vpack.c.bf16 %v2147, %v2145
        %s2150 = scalar_lea.vmem %s10, 156
        %v2151 = vld [vmem:[%s2150] sm:$0xff]
        %v2152 = vld [vmem:[%s2150 + $0x8] sm:$0xf]
        %v2153 = vld [vmem:[%s2150 + $0xc] sm:$0xff]
        %v2154 = vld [vmem:[%s2150 + $0x14] sm:$0xf]
        %v2155 = vld [vmem:[%s2150 + $0x18] sm:$0xff]
        %v2156 = vld [vmem:[%s2150 + $0x20] sm:$0xf]
        %v2157 = vld [vmem:[%s2150 + $0x24] sm:$0xff]
        %v2158 = vld [vmem:[%s2150 + $0x2c] sm:$0xf]
        %v2159 = vld [vmem:[%s2150 + $0x30] sm:$0xff]
        %v2160 = vld [vmem:[%s2150 + $0x38] sm:$0xf]
        %v2161 = vld [vmem:[%s2150 + $0x3c] sm:$0xff]
        %v2162 = vld [vmem:[%s2150 + $0x44] sm:$0xf]
        %v2163 = vld [vmem:[%s2150 + $0x48] sm:$0xff]
        %v2164 = vld [vmem:[%s2150 + $0x50] sm:$0xf]
        %v2165 = vld [vmem:[%s2150 + $0x54] sm:$0xff]
        %v2166 = vld [vmem:[%s2150 + $0x5c] sm:$0xf]
        %v2167 = vld [vmem:[%s2150 + $0x60] sm:$0xff]
        %v2168 = vld [vmem:[%s2150 + $0x68] sm:$0xf]
        %v2169 = vld [vmem:[%s2150 + $0x6c] sm:$0xff]
        %v2170 = vld [vmem:[%s2150 + $0x74] sm:$0xf]
        %v2171 = vld [vmem:[%s2150 + $0x78] sm:$0xff]
        %v2172 = vld [vmem:[%s2150 + $0x80] sm:$0xf]
        %v2173 = vld [vmem:[%s2150 + $0x84] sm:$0xff]
        %v2174 = vld [vmem:[%s2150 + $0x8c] sm:$0xf]
        %v2175 = vld [vmem:[%s2150 + $0x90] sm:$0x33]
        %v2176 = vld [vmem:[%s2150 + $0x98] sm:$0x3]
        %v2203 = vunpack.c.l.b16 %v2151
        %v2204 = vunpack.c.h.b16 %v2151
        %v2205 = vunpack.c.l.b16 %v2152
        %v2206 = vunpack.c.l.b16 %v2153
        %v2207 = vunpack.c.h.b16 %v2153
        %v2208 = vunpack.c.l.b16 %v2154
        %v2209 = vunpack.c.l.b16 %v2155
        %v2210 = vunpack.c.h.b16 %v2155
        %v2211 = vunpack.c.l.b16 %v2156
        %v2212 = vunpack.c.l.b16 %v2157
        %v2213 = vunpack.c.h.b16 %v2157
        %v2214 = vunpack.c.l.b16 %v2158
        %v2215 = vunpack.c.l.b16 %v2159
        %v2216 = vunpack.c.h.b16 %v2159
        %v2217 = vunpack.c.l.b16 %v2160
        %v2218 = vunpack.c.l.b16 %v2161
        %v2219 = vunpack.c.h.b16 %v2161
        %v2220 = vunpack.c.l.b16 %v2162
        %v2221 = vunpack.c.l.b16 %v2163
        %v2222 = vunpack.c.h.b16 %v2163
        %v2223 = vunpack.c.l.b16 %v2164
        %v2224 = vunpack.c.l.b16 %v2165
        %v2225 = vunpack.c.h.b16 %v2165
        %v2226 = vunpack.c.l.b16 %v2166
        %v2227 = vunpack.c.l.b16 %v2167
        %v2228 = vunpack.c.h.b16 %v2167
        %v2229 = vunpack.c.l.b16 %v2168
        %v2230 = vunpack.c.l.b16 %v2169
        %v2231 = vunpack.c.h.b16 %v2169
        %v2232 = vunpack.c.l.b16 %v2170
        %v2233 = vunpack.c.l.b16 %v2171
        %v2234 = vunpack.c.h.b16 %v2171
        %v2235 = vunpack.c.l.b16 %v2172
        %v2236 = vunpack.c.l.b16 %v2173
        %v2237 = vunpack.c.h.b16 %v2173
        %v2238 = vunpack.c.l.b16 %v2174
        %v2239 = vunpack.c.l.b16 %v2175
        %v2240 = vunpack.c.h.b16 %v2175
        %v2241 = vunpack.c.l.b16 %v2176
        %v2242 = vpack.c.b16 %v2206, %v2203
        %v2243 = vpack.c.b16 %v2207, %v2204
        %v2244 = vpack.c.b16 %v2208, %v2205
        %v2245 = vpack.c.b16 %v2212, %v2209
        %v2246 = vpack.c.b16 %v2213, %v2210
        %v2247 = vpack.c.b16 %v2214, %v2211
        %v2248 = vpack.c.b16 %v2218, %v2215
        %v2249 = vpack.c.b16 %v2219, %v2216
        %v2250 = vpack.c.b16 %v2220, %v2217
        %v2251 = vpack.c.b16 %v2224, %v2221
        %v2252 = vpack.c.b16 %v2225, %v2222
        %v2253 = vpack.c.b16 %v2226, %v2223
        %v2254 = vpack.c.b16 %v2230, %v2227
        %v2255 = vpack.c.b16 %v2231, %v2228
        %v2256 = vpack.c.b16 %v2232, %v2229
        %v2257 = vpack.c.b16 %v2236, %v2233
        %v2258 = vpack.c.b16 %v2237, %v2234
        %v2259 = vpack.c.b16 %v2238, %v2235
        %v2260 = vpack.c.b16 %v2239, %v2239
        %v2261 = vpack.c.b16 %v2240, %v2240
        %v2262 = vpack.c.b16 %v2241, %v2241
        %vm2281 = vcmask 818176
        %v2283 = vsel %vm2281, %v2149, 0
        %v2286 = vsel %vm1345, %v2260, 0
        %v2289 = vsel %vm1345, %v2261, 0
        %v2292 = vsel %vm1345, %v2262, 0
        %2294 = vmatpush.bf16.msra.mxu0 0
        %2295 = vmatpush.bf16.msra.mxu0 %v2286
        %2296 = vmatpush.bf16.msra.mxu0 %v2257
        %2297 = vmatpush.bf16.msra.mxu0 %v2254
        %2298 = vmatpush.bf16.msra.mxu0 %v2251
        %2299 = vmatpush.bf16.msra.mxu0 %v2248
        %2300 = vmatpush.bf16.msra.mxu0 %v2245
        %2301 = vmatpush.bf16.msra.mxu0 %v2242
        %2302 = vmatmul.bf16.gmra.mxu0 %v2283
        %v2303 = vpop.f32.mrf.mxu0
        %v2304 = vadd.f32 0.0, %v2303
        %v2305 = vpop.f32.mrf.mxu0
        %v2306 = vadd.f32 0.0, %v2305
        %2307 = vdwg.mxu0
        %2308 = vmatpush.bf16.msra.mxu0 0
        %2309 = vmatpush.bf16.msra.mxu0 %v2289
        %2310 = vmatpush.bf16.msra.mxu0 %v2258
        %2311 = vmatpush.bf16.msra.mxu0 %v2255
        %2312 = vmatpush.bf16.msra.mxu0 %v2252
        %2313 = vmatpush.bf16.msra.mxu0 %v2249
        %2314 = vmatpush.bf16.msra.mxu0 %v2246
        %2315 = vmatpush.bf16.msra.mxu0 %v2243
        %2316 = vmatmul.bf16.gmra.mxu0 %v2283
        %v2317 = vpop.f32.mrf.mxu0
        %v2318 = vadd.f32 0.0, %v2317
        %v2319 = vpop.f32.mrf.mxu0
        %v2320 = vadd.f32 0.0, %v2319
        %2321 = vdwg.mxu0
        %2322 = vmatpush.bf16.msra.mxu0 0
        %2323 = vmatpush.bf16.msra.mxu0 %v2292
        %2324 = vmatpush.bf16.msra.mxu0 %v2259
        %2325 = vmatpush.bf16.msra.mxu0 %v2256
        %2326 = vmatpush.bf16.msra.mxu0 %v2253
        %2327 = vmatpush.bf16.msra.mxu0 %v2250
        %2328 = vmatpush.bf16.msra.mxu0 %v2247
        %2329 = vmatpush.bf16.msra.mxu0 %v2244
        %2330 = vmatmul.bf16.gmra.mxu0 %v2283
        %v2331 = vpop.f32.mrf.mxu0
        %v2332 = vadd.f32 0.0, %v2331
        %v2333 = vpop.f32.mrf.mxu0
        %v2334 = vadd.f32 0.0, %v2333
        %2335 = vdwg.mxu0
        %v2362 = vunpack.c.l.b16 %v2100
        %v2363 = vunpack.c.h.b16 %v2100
        %v2364 = vunpack.c.l.b16 %v2101
        %v2365 = vunpack.c.l.b16 %v2102
        %v2366 = vunpack.c.h.b16 %v2102
        %v2367 = vunpack.c.l.b16 %v2103
        %v2368 = vunpack.c.l.b16 %v2104
        %v2369 = vunpack.c.h.b16 %v2104
        %v2370 = vunpack.c.l.b16 %v2105
        %v2371 = vunpack.c.l.b16 %v2106
        %v2372 = vunpack.c.h.b16 %v2106
        %v2373 = vunpack.c.l.b16 %v2107
        %v2374 = vunpack.c.l.b16 %v2108
        %v2375 = vunpack.c.h.b16 %v2108
        %v2376 = vunpack.c.l.b16 %v2109
        %v2377 = vunpack.c.l.b16 %v2110
        %v2378 = vunpack.c.h.b16 %v2110
        %v2379 = vunpack.c.l.b16 %v2111
        %v2380 = vunpack.c.l.b16 %v2112
        %v2381 = vunpack.c.h.b16 %v2112
        %v2382 = vunpack.c.l.b16 %v2113
        %v2383 = vunpack.c.l.b16 %v2114
        %v2384 = vunpack.c.h.b16 %v2114
        %v2385 = vunpack.c.l.b16 %v2115
        %v2386 = vunpack.c.l.b16 %v2116
        %v2387 = vunpack.c.h.b16 %v2116
        %v2388 = vunpack.c.l.b16 %v2117
        %v2389 = vunpack.c.l.b16 %v2118
        %v2390 = vunpack.c.h.b16 %v2118
        %v2391 = vunpack.c.l.b16 %v2119
        %v2392 = vunpack.c.l.b16 %v2120
        %v2393 = vunpack.c.h.b16 %v2120
        %v2394 = vunpack.c.l.b16 %v2121
        %v2395 = vunpack.c.l.b16 %v2122
        %v2396 = vunpack.c.h.b16 %v2122
        %v2397 = vunpack.c.l.b16 %v2123
        %v2398 = vunpack.c.l.b16 %v2124
        %v2399 = vunpack.c.h.b16 %v2124
        %v2400 = vunpack.c.l.b16 %v2125
        %v2401 = vpack.c.b16 %v2365, %v2362
        %v2402 = vpack.c.b16 %v2366, %v2363
        %v2403 = vpack.c.b16 %v2367, %v2364
        %v2404 = vpack.c.b16 %v2371, %v2368
        %v2405 = vpack.c.b16 %v2372, %v2369
        %v2406 = vpack.c.b16 %v2373, %v2370
        %v2407 = vpack.c.b16 %v2377, %v2374
        %v2408 = vpack.c.b16 %v2378, %v2375
        %v2409 = vpack.c.b16 %v2379, %v2376
        %v2410 = vpack.c.b16 %v2383, %v2380
        %v2411 = vpack.c.b16 %v2384, %v2381
        %v2412 = vpack.c.b16 %v2385, %v2382
        %v2413 = vpack.c.b16 %v2389, %v2386
        %v2414 = vpack.c.b16 %v2390, %v2387
        %v2415 = vpack.c.b16 %v2391, %v2388
        %v2416 = vpack.c.b16 %v2395, %v2392
        %v2417 = vpack.c.b16 %v2396, %v2393
        %v2418 = vpack.c.b16 %v2397, %v2394
        %v2419 = vpack.c.b16 %v2398, %v2398
        %v2420 = vpack.c.b16 %v2399, %v2399
        %v2421 = vpack.c.b16 %v2400, %v2400
        %v2441 = vsel %vm2281, %v2099, 0
        %v2444 = vsel %vm1345, %v2419, 0
        %v2447 = vsel %vm1345, %v2420, 0
        %v2450 = vsel %vm1345, %v2421, 0
        %2452 = vmatpush.bf16.msra.mxu0 0
        %2453 = vmatpush.bf16.msra.mxu0 %v2444
        %2454 = vmatpush.bf16.msra.mxu0 %v2416
        %2455 = vmatpush.bf16.msra.mxu0 %v2413
        %2456 = vmatpush.bf16.msra.mxu0 %v2410
        %2457 = vmatpush.bf16.msra.mxu0 %v2407
        %2458 = vmatpush.bf16.msra.mxu0 %v2404
        %2459 = vmatpush.bf16.msra.mxu0 %v2401
        %2460 = vmatmul.bf16.gmra.mxu0 %v2441
        %v2461 = vpop.f32.mrf.mxu0
        %v2462 = vadd.f32 %v2304, %v2461
        %v2463 = vpop.f32.mrf.mxu0
        %v2464 = vadd.f32 %v2306, %v2463
        %2465 = vdwg.mxu0
        %2466 = vmatpush.bf16.msra.mxu0 0
        %2467 = vmatpush.bf16.msra.mxu0 %v2447
        %2468 = vmatpush.bf16.msra.mxu0 %v2417
        %2469 = vmatpush.bf16.msra.mxu0 %v2414
        %2470 = vmatpush.bf16.msra.mxu0 %v2411
        %2471 = vmatpush.bf16.msra.mxu0 %v2408
        %2472 = vmatpush.bf16.msra.mxu0 %v2405
        %2473 = vmatpush.bf16.msra.mxu0 %v2402
        %2474 = vmatmul.bf16.gmra.mxu0 %v2441
        %v2475 = vpop.f32.mrf.mxu0
        %v2476 = vadd.f32 %v2318, %v2475
        %v2477 = vpop.f32.mrf.mxu0
        %v2478 = vadd.f32 %v2320, %v2477
        %2479 = vdwg.mxu0
        %2480 = vmatpush.bf16.msra.mxu0 0
        %2481 = vmatpush.bf16.msra.mxu0 %v2450
        %2482 = vmatpush.bf16.msra.mxu0 %v2418
        %2483 = vmatpush.bf16.msra.mxu0 %v2415
        %2484 = vmatpush.bf16.msra.mxu0 %v2412
        %2485 = vmatpush.bf16.msra.mxu0 %v2409
        %2486 = vmatpush.bf16.msra.mxu0 %v2406
        %2487 = vmatpush.bf16.msra.mxu0 %v2403
        %2488 = vmatmul.bf16.gmra.mxu0 %v2441
        %v2489 = vpop.f32.mrf.mxu0
        %v2490 = vadd.f32 %v2332, %v2489
        %v2491 = vpop.f32.mrf.mxu0
        %v2492 = vadd.f32 %v2334, %v2491
        %2493 = vdwg.mxu0
        %s2494 = scalar_lea.vmem %s9, 16
        %v2495 = vld [vmem:[%s2494] sm:$0xf]
        %v2496 = vld [vmem:[%s2494 + $0x4] sm:$0xf]
        %v2499 = vunpack.c.l.b16 %v2495
        %v2500 = vunpack.c.l.b16 %v2496
        %v2501 = vpack.c.b16 %v2500, %v2499
        %2503 = vmatpush.bf16.msra.mxu0 %v2076
        %2504 = vmatpush.bf16.msra.mxu0 %v2074
        %2505 = vmatpush.bf16.msra.mxu0 %v2072
        %2506 = vmatpush.bf16.msra.mxu0 %v2070
        %2507 = vmatpush.bf16.msra.mxu0 %v2068
        %2508 = vmatpush.bf16.msra.mxu0 %v2066
        %2509 = vmatpush.bf16.msra.mxu0 %v2064
        %2510 = vmatpush.bf16.msra.mxu0 %v2062
        %2511 = vmatmul.bf16.gmra.mxu0 %v2501
        %v2512 = vpop.f32.mrf.mxu0
        %v2513 = vadd.f32 0.0, %v2512
        %v2514 = vpop.f32.mrf.mxu0
        %v2515 = vadd.f32 0.0, %v2514
        %2516 = vdwg.mxu0
        %v2517 = vpack.c.bf16 %v2515, %v2513
        %s2518 = scalar_lea.vmem %s10, 312
        %v2519 = vld [vmem:[%s2518] sm:$0xff]
        %v2520 = vld [vmem:[%s2518 + $0x8] sm:$0xf]
        %v2521 = vld [vmem:[%s2518 + $0xc] sm:$0xff]
        %v2522 = vld [vmem:[%s2518 + $0x14] sm:$0xf]
        %v2523 = vld [vmem:[%s2518 + $0x18] sm:$0xff]
        %v2524 = vld [vmem:[%s2518 + $0x20] sm:$0xf]
        %v2525 = vld [vmem:[%s2518 + $0x24] sm:$0xff]
        %v2526 = vld [vmem:[%s2518 + $0x2c] sm:$0xf]
        %v2527 = vld [vmem:[%s2518 + $0x30] sm:$0xff]
        %v2528 = vld [vmem:[%s2518 + $0x38] sm:$0xf]
        %v2529 = vld [vmem:[%s2518 + $0x3c] sm:$0xff]
        %v2530 = vld [vmem:[%s2518 + $0x44] sm:$0xf]
        %v2531 = vld [vmem:[%s2518 + $0x48] sm:$0xff]
        %v2532 = vld [vmem:[%s2518 + $0x50] sm:$0xf]
        %v2533 = vld [vmem:[%s2518 + $0x54] sm:$0xff]
        %v2534 = vld [vmem:[%s2518 + $0x5c] sm:$0xf]
        %v2535 = vld [vmem:[%s2518 + $0x60] sm:$0xff]
        %v2536 = vld [vmem:[%s2518 + $0x68] sm:$0xf]
        %v2537 = vld [vmem:[%s2518 + $0x6c] sm:$0xff]
        %v2538 = vld [vmem:[%s2518 + $0x74] sm:$0xf]
        %v2539 = vld [vmem:[%s2518 + $0x78] sm:$0xff]
        %v2540 = vld [vmem:[%s2518 + $0x80] sm:$0xf]
        %v2541 = vld [vmem:[%s2518 + $0x84] sm:$0xff]
        %v2542 = vld [vmem:[%s2518 + $0x8c] sm:$0xf]
        %v2543 = vld [vmem:[%s2518 + $0x90] sm:$0x33]
        %v2544 = vld [vmem:[%s2518 + $0x98] sm:$0x3]
        %v2571 = vunpack.c.l.b16 %v2519
        %v2572 = vunpack.c.h.b16 %v2519
        %v2573 = vunpack.c.l.b16 %v2520
        %v2574 = vunpack.c.l.b16 %v2521
        %v2575 = vunpack.c.h.b16 %v2521
        %v2576 = vunpack.c.l.b16 %v2522
        %v2577 = vunpack.c.l.b16 %v2523
        %v2578 = vunpack.c.h.b16 %v2523
        %v2579 = vunpack.c.l.b16 %v2524
        %v2580 = vunpack.c.l.b16 %v2525
        %v2581 = vunpack.c.h.b16 %v2525
        %v2582 = vunpack.c.l.b16 %v2526
        %v2583 = vunpack.c.l.b16 %v2527
        %v2584 = vunpack.c.h.b16 %v2527
        %v2585 = vunpack.c.l.b16 %v2528
        %v2586 = vunpack.c.l.b16 %v2529
        %v2587 = vunpack.c.h.b16 %v2529
        %v2588 = vunpack.c.l.b16 %v2530
        %v2589 = vunpack.c.l.b16 %v2531
        %v2590 = vunpack.c.h.b16 %v2531
        %v2591 = vunpack.c.l.b16 %v2532
        %v2592 = vunpack.c.l.b16 %v2533
        %v2593 = vunpack.c.h.b16 %v2533
        %v2594 = vunpack.c.l.b16 %v2534
        %v2595 = vunpack.c.l.b16 %v2535
        %v2596 = vunpack.c.h.b16 %v2535
        %v2597 = vunpack.c.l.b16 %v2536
        %v2598 = vunpack.c.l.b16 %v2537
        %v2599 = vunpack.c.h.b16 %v2537
        %v2600 = vunpack.c.l.b16 %v2538
        %v2601 = vunpack.c.l.b16 %v2539
        %v2602 = vunpack.c.h.b16 %v2539
        %v2603 = vunpack.c.l.b16 %v2540
        %v2604 = vunpack.c.l.b16 %v2541
        %v2605 = vunpack.c.h.b16 %v2541
        %v2606 = vunpack.c.l.b16 %v2542
        %v2607 = vunpack.c.l.b16 %v2543
        %v2608 = vunpack.c.h.b16 %v2543
        %v2609 = vunpack.c.l.b16 %v2544
        %v2610 = vpack.c.b16 %v2574, %v2571
        %v2611 = vpack.c.b16 %v2575, %v2572
        %v2612 = vpack.c.b16 %v2576, %v2573
        %v2613 = vpack.c.b16 %v2580, %v2577
        %v2614 = vpack.c.b16 %v2581, %v2578
        %v2615 = vpack.c.b16 %v2582, %v2579
        %v2616 = vpack.c.b16 %v2586, %v2583
        %v2617 = vpack.c.b16 %v2587, %v2584
        %v2618 = vpack.c.b16 %v2588, %v2585
        %v2619 = vpack.c.b16 %v2592, %v2589
        %v2620 = vpack.c.b16 %v2593, %v2590
        %v2621 = vpack.c.b16 %v2594, %v2591
        %v2622 = vpack.c.b16 %v2598, %v2595
        %v2623 = vpack.c.b16 %v2599, %v2596
        %v2624 = vpack.c.b16 %v2600, %v2597
        %v2625 = vpack.c.b16 %v2604, %v2601
        %v2626 = vpack.c.b16 %v2605, %v2602
        %v2627 = vpack.c.b16 %v2606, %v2603
        %v2628 = vpack.c.b16 %v2607, %v2607
        %v2629 = vpack.c.b16 %v2608, %v2608
        %v2630 = vpack.c.b16 %v2609, %v2609
        %v2650 = vsel %vm2281, %v2517, 0
        %v2653 = vsel %vm1345, %v2628, 0
        %v2656 = vsel %vm1345, %v2629, 0
        %v2659 = vsel %vm1345, %v2630, 0
        %2661 = vmatpush.bf16.msra.mxu0 0
        %2662 = vmatpush.bf16.msra.mxu0 %v2653
        %2663 = vmatpush.bf16.msra.mxu0 %v2625
        %2664 = vmatpush.bf16.msra.mxu0 %v2622
        %2665 = vmatpush.bf16.msra.mxu0 %v2619
        %2666 = vmatpush.bf16.msra.mxu0 %v2616
        %2667 = vmatpush.bf16.msra.mxu0 %v2613
        %2668 = vmatpush.bf16.msra.mxu0 %v2610
        %2669 = vmatmul.bf16.gmra.mxu0 %v2650
        %v2670 = vpop.f32.mrf.mxu0
        %v2671 = vadd.f32 0.0, %v2670
        %v2672 = vpop.f32.mrf.mxu0
        %v2673 = vadd.f32 0.0, %v2672
        %2674 = vdwg.mxu0
        %2675 = vmatpush.bf16.msra.mxu0 0
        %2676 = vmatpush.bf16.msra.mxu0 %v2656
        %2677 = vmatpush.bf16.msra.mxu0 %v2626
        %2678 = vmatpush.bf16.msra.mxu0 %v2623
        %2679 = vmatpush.bf16.msra.mxu0 %v2620
        %2680 = vmatpush.bf16.msra.mxu0 %v2617
        %2681 = vmatpush.bf16.msra.mxu0 %v2614
        %2682 = vmatpush.bf16.msra.mxu0 %v2611
        %2683 = vmatmul.bf16.gmra.mxu0 %v2650
        %v2684 = vpop.f32.mrf.mxu0
        %v2685 = vadd.f32 0.0, %v2684
        %v2686 = vpop.f32.mrf.mxu0
        %v2687 = vadd.f32 0.0, %v2686
        %2688 = vdwg.mxu0
        %2689 = vmatpush.bf16.msra.mxu0 0
        %2690 = vmatpush.bf16.msra.mxu0 %v2659
        %2691 = vmatpush.bf16.msra.mxu0 %v2627
        %2692 = vmatpush.bf16.msra.mxu0 %v2624
        %2693 = vmatpush.bf16.msra.mxu0 %v2621
        %2694 = vmatpush.bf16.msra.mxu0 %v2618
        %2695 = vmatpush.bf16.msra.mxu0 %v2615
        %2696 = vmatpush.bf16.msra.mxu0 %v2612
        %2697 = vmatmul.bf16.gmra.mxu0 %v2650
        %v2698 = vpop.f32.mrf.mxu0
        %v2699 = vadd.f32 0.0, %v2698
        %v2700 = vpop.f32.mrf.mxu0
        %v2701 = vadd.f32 0.0, %v2700
        %2702 = vdwg.mxu0
        %v2703 = vadd.f32 %v2462, %v2671
        %v2704 = vadd.f32 %v2476, %v2685
        %v2705 = vadd.f32 %v2490, %v2699
        %v2706 = vadd.f32 %v2464, %v2673
        %v2707 = vadd.f32 %v2478, %v2687
        %v2708 = vadd.f32 %v2492, %v2701
        %s2709 = scalar_lea.vmem %s9, 24
        %v2710 = vld [vmem:[%s2709] sm:$0xf]
        %v2711 = vld [vmem:[%s2709 + $0x4] sm:$0xf]
        %v2714 = vunpack.c.l.b16 %v2710
        %v2715 = vunpack.c.l.b16 %v2711
        %v2716 = vpack.c.b16 %v2715, %v2714
        %2718 = vmatpush.bf16.msra.mxu0 %v2076
        %2719 = vmatpush.bf16.msra.mxu0 %v2074
        %2720 = vmatpush.bf16.msra.mxu0 %v2072
        %2721 = vmatpush.bf16.msra.mxu0 %v2070
        %2722 = vmatpush.bf16.msra.mxu0 %v2068
        %2723 = vmatpush.bf16.msra.mxu0 %v2066
        %2724 = vmatpush.bf16.msra.mxu0 %v2064
        %2725 = vmatpush.bf16.msra.mxu0 %v2062
        %2726 = vmatmul.bf16.gmra.mxu0 %v2716
        %v2727 = vpop.f32.mrf.mxu0
        %v2728 = vadd.f32 0.0, %v2727
        %v2729 = vpop.f32.mrf.mxu0
        %v2730 = vadd.f32 0.0, %v2729
        %2731 = vdwg.mxu0
        %v2732 = vpack.c.bf16 %v2730, %v2728
        %s2733 = scalar_lea.vmem %s10, 468
        %v2734 = vld [vmem:[%s2733] sm:$0xff]
        %v2735 = vld [vmem:[%s2733 + $0x8] sm:$0xf]
        %v2736 = vld [vmem:[%s2733 + $0xc] sm:$0xff]
        %v2737 = vld [vmem:[%s2733 + $0x14] sm:$0xf]
        %v2738 = vld [vmem:[%s2733 + $0x18] sm:$0xff]
        %v2739 = vld [vmem:[%s2733 + $0x20] sm:$0xf]
        %v2740 = vld [vmem:[%s2733 + $0x24] sm:$0xff]
        %v2741 = vld [vmem:[%s2733 + $0x2c] sm:$0xf]
        %v2742 = vld [vmem:[%s2733 + $0x30] sm:$0xff]
        %v2743 = vld [vmem:[%s2733 + $0x38] sm:$0xf]
        %v2744 = vld [vmem:[%s2733 + $0x3c] sm:$0xff]
        %v2745 = vld [vmem:[%s2733 + $0x44] sm:$0xf]
        %v2746 = vld [vmem:[%s2733 + $0x48] sm:$0xff]
        %v2747 = vld [vmem:[%s2733 + $0x50] sm:$0xf]
        %v2748 = vld [vmem:[%s2733 + $0x54] sm:$0xff]
        %v2749 = vld [vmem:[%s2733 + $0x5c] sm:$0xf]
        %v2750 = vld [vmem:[%s2733 + $0x60] sm:$0xff]
        %v2751 = vld [vmem:[%s2733 + $0x68] sm:$0xf]
        %v2752 = vld [vmem:[%s2733 + $0x6c] sm:$0xff]
        %v2753 = vld [vmem:[%s2733 + $0x74] sm:$0xf]
        %v2754 = vld [vmem:[%s2733 + $0x78] sm:$0xff]
        %v2755 = vld [vmem:[%s2733 + $0x80] sm:$0xf]
        %v2756 = vld [vmem:[%s2733 + $0x84] sm:$0xff]
        %v2757 = vld [vmem:[%s2733 + $0x8c] sm:$0xf]
        %v2758 = vld [vmem:[%s2733 + $0x90] sm:$0x33]
        %v2759 = vld [vmem:[%s2733 + $0x98] sm:$0x3]
        %v2786 = vunpack.c.l.b16 %v2734
        %v2787 = vunpack.c.h.b16 %v2734
        %v2788 = vunpack.c.l.b16 %v2735
        %v2789 = vunpack.c.l.b16 %v2736
        %v2790 = vunpack.c.h.b16 %v2736
        %v2791 = vunpack.c.l.b16 %v2737
        %v2792 = vunpack.c.l.b16 %v2738
        %v2793 = vunpack.c.h.b16 %v2738
        %v2794 = vunpack.c.l.b16 %v2739
        %v2795 = vunpack.c.l.b16 %v2740
        %v2796 = vunpack.c.h.b16 %v2740
        %v2797 = vunpack.c.l.b16 %v2741
        %v2798 = vunpack.c.l.b16 %v2742
        %v2799 = vunpack.c.h.b16 %v2742
        %v2800 = vunpack.c.l.b16 %v2743
        %v2801 = vunpack.c.l.b16 %v2744
        %v2802 = vunpack.c.h.b16 %v2744
        %v2803 = vunpack.c.l.b16 %v2745
        %v2804 = vunpack.c.l.b16 %v2746
        %v2805 = vunpack.c.h.b16 %v2746
        %v2806 = vunpack.c.l.b16 %v2747
        %v2807 = vunpack.c.l.b16 %v2748
        %v2808 = vunpack.c.h.b16 %v2748
        %v2809 = vunpack.c.l.b16 %v2749
        %v2810 = vunpack.c.l.b16 %v2750
        %v2811 = vunpack.c.h.b16 %v2750
        %v2812 = vunpack.c.l.b16 %v2751
        %v2813 = vunpack.c.l.b16 %v2752
        %v2814 = vunpack.c.h.b16 %v2752
        %v2815 = vunpack.c.l.b16 %v2753
        %v2816 = vunpack.c.l.b16 %v2754
        %v2817 = vunpack.c.h.b16 %v2754
        %v2818 = vunpack.c.l.b16 %v2755
        %v2819 = vunpack.c.l.b16 %v2756
        %v2820 = vunpack.c.h.b16 %v2756
        %v2821 = vunpack.c.l.b16 %v2757
        %v2822 = vunpack.c.l.b16 %v2758
        %v2823 = vunpack.c.h.b16 %v2758
        %v2824 = vunpack.c.l.b16 %v2759
        %v2825 = vpack.c.b16 %v2789, %v2786
        %v2826 = vpack.c.b16 %v2790, %v2787
        %v2827 = vpack.c.b16 %v2791, %v2788
        %v2828 = vpack.c.b16 %v2795, %v2792
        %v2829 = vpack.c.b16 %v2796, %v2793
        %v2830 = vpack.c.b16 %v2797, %v2794
        %v2831 = vpack.c.b16 %v2801, %v2798
        %v2832 = vpack.c.b16 %v2802, %v2799
        %v2833 = vpack.c.b16 %v2803, %v2800
        %v2834 = vpack.c.b16 %v2807, %v2804
        %v2835 = vpack.c.b16 %v2808, %v2805
        %v2836 = vpack.c.b16 %v2809, %v2806
        %v2837 = vpack.c.b16 %v2813, %v2810
        %v2838 = vpack.c.b16 %v2814, %v2811
        %v2839 = vpack.c.b16 %v2815, %v2812
        %v2840 = vpack.c.b16 %v2819, %v2816
        %v2841 = vpack.c.b16 %v2820, %v2817
        %v2842 = vpack.c.b16 %v2821, %v2818
        %v2843 = vpack.c.b16 %v2822, %v2822
        %v2844 = vpack.c.b16 %v2823, %v2823
        %v2845 = vpack.c.b16 %v2824, %v2824
        %v2865 = vsel %vm2281, %v2732, 0
        %v2868 = vsel %vm1345, %v2843, 0
        %v2871 = vsel %vm1345, %v2844, 0
        %v2874 = vsel %vm1345, %v2845, 0
        %2876 = vmatpush.bf16.msra.mxu0 0
        %2877 = vmatpush.bf16.msra.mxu0 %v2868
        %2878 = vmatpush.bf16.msra.mxu0 %v2840
        %2879 = vmatpush.bf16.msra.mxu0 %v2837
        %2880 = vmatpush.bf16.msra.mxu0 %v2834
        %2881 = vmatpush.bf16.msra.mxu0 %v2831
        %2882 = vmatpush.bf16.msra.mxu0 %v2828
        %2883 = vmatpush.bf16.msra.mxu0 %v2825
        %2884 = vmatmul.bf16.gmra.mxu0 %v2865
        %v2885 = vpop.f32.mrf.mxu0
        %v2886 = vadd.f32 0.0, %v2885
        %v2887 = vpop.f32.mrf.mxu0
        %v2888 = vadd.f32 0.0, %v2887
        %2889 = vdwg.mxu0
        %2890 = vmatpush.bf16.msra.mxu0 0
        %2891 = vmatpush.bf16.msra.mxu0 %v2871
        %2892 = vmatpush.bf16.msra.mxu0 %v2841
        %2893 = vmatpush.bf16.msra.mxu0 %v2838
        %2894 = vmatpush.bf16.msra.mxu0 %v2835
        %2895 = vmatpush.bf16.msra.mxu0 %v2832
        %2896 = vmatpush.bf16.msra.mxu0 %v2829
        %2897 = vmatpush.bf16.msra.mxu0 %v2826
        %2898 = vmatmul.bf16.gmra.mxu0 %v2865
        %v2899 = vpop.f32.mrf.mxu0
        %v2900 = vadd.f32 0.0, %v2899
        %v2901 = vpop.f32.mrf.mxu0
        %v2902 = vadd.f32 0.0, %v2901
        %2903 = vdwg.mxu0
        %2904 = vmatpush.bf16.msra.mxu0 0
        %2905 = vmatpush.bf16.msra.mxu0 %v2874
        %2906 = vmatpush.bf16.msra.mxu0 %v2842
        %2907 = vmatpush.bf16.msra.mxu0 %v2839
        %2908 = vmatpush.bf16.msra.mxu0 %v2836
        %2909 = vmatpush.bf16.msra.mxu0 %v2833
        %2910 = vmatpush.bf16.msra.mxu0 %v2830
        %2911 = vmatpush.bf16.msra.mxu0 %v2827
        %2912 = vmatmul.bf16.gmra.mxu0 %v2865
        %v2913 = vpop.f32.mrf.mxu0
        %v2914 = vadd.f32 0.0, %v2913
        %v2915 = vpop.f32.mrf.mxu0
        %v2916 = vadd.f32 0.0, %v2915
        %2917 = vdwg.mxu0
        %v2918 = vadd.f32 %v2703, %v2886
        %v2919 = vadd.f32 %v2704, %v2900
        %v2920 = vadd.f32 %v2705, %v2914
        %v2921 = vadd.f32 %v2706, %v2888
        %v2922 = vadd.f32 %v2707, %v2902
        %v2923 = vadd.f32 %v2708, %v2916
        %2925 = vset.pattern.permute.xlu0 0
        %2926 = vperm.xlu0 %2925, %v1970
        %v2927 = vpop.permute.xlu0 %2926
        %2930 = vset.pattern.permute.xlu0 0
        %2931 = vperm.xlu0 %2930, %v1971
        %v2932 = vpop.permute.xlu0 %2931
        %v2934 = vadd.f32 %v2918, %v2927
        %v2935 = vadd.f32 %v2919, %v2927
        %v2936 = vadd.f32 %v2920, %v2927
        %v2937 = vadd.f32 %v2921, %v2932
        %v2938 = vadd.f32 %v2922, %v2932
        %v2939 = vadd.f32 %v2923, %v2932
        %v2940 = vmul.f32 %v2934, 0.5
        %v2941 = vmul.f32 %v2935, 0.5
        %v2942 = vmul.f32 %v2936, 0.5
        %v2943 = vmul.f32 %v2937, 0.5
        %v2944 = vmul.f32 %v2938, 0.5
        %v2945 = vmul.f32 %v2939, 0.5
        %v2946 = vmul.f32 %v2934, 0.044715
        %v2947 = vmul.f32 %v2935, 0.044715
        %v2948 = vmul.f32 %v2936, 0.044715
        %v2949 = vmul.f32 %v2937, 0.044715
        %v2950 = vmul.f32 %v2938, 0.044715
        %v2951 = vmul.f32 %v2939, 0.044715
        %v2952 = vmul.f32 %v2946, %v2934
        %v2953 = vmul.f32 %v2947, %v2935
        %v2954 = vmul.f32 %v2948, %v2936
        %v2955 = vmul.f32 %v2949, %v2937
        %v2956 = vmul.f32 %v2950, %v2938
        %v2957 = vmul.f32 %v2951, %v2939
        %v2958 = vmul.f32 %v2952, %v2934
        %v2959 = vmul.f32 %v2953, %v2935
        %v2960 = vmul.f32 %v2954, %v2936
        %v2961 = vmul.f32 %v2955, %v2937
        %v2962 = vmul.f32 %v2956, %v2938
        %v2963 = vmul.f32 %v2957, %v2939
        %v2964 = vadd.f32 %v2934, %v2958
        %v2965 = vadd.f32 %v2935, %v2959
        %v2966 = vadd.f32 %v2936, %v2960
        %v2967 = vadd.f32 %v2937, %v2961
        %v2968 = vadd.f32 %v2938, %v2962
        %v2969 = vadd.f32 %v2939, %v2963
        %v2970 = vmul.f32 %v2964, 0.7978846
        %v2971 = vmul.f32 %v2965, 0.7978846
        %v2972 = vmul.f32 %v2966, 0.7978846
        %v2973 = vmul.f32 %v2967, 0.7978846
        %v2974 = vmul.f32 %v2968, 0.7978846
        %v2975 = vmul.f32 %v2969, 0.7978846
        %v2976 = vtanh.pop %v2970
        %v2977 = vtanh.pop %v2971
        %v2978 = vtanh.pop %v2972
        %v2979 = vtanh.pop %v2973
        %v2980 = vtanh.pop %v2974
        %v2981 = vtanh.pop %v2975
        %v2982 = vadd.f32 %v2976, 1.0
        %v2983 = vadd.f32 %v2977, 1.0
        %v2984 = vadd.f32 %v2978, 1.0
        %v2985 = vadd.f32 %v2979, 1.0
        %v2986 = vadd.f32 %v2980, 1.0
        %v2987 = vadd.f32 %v2981, 1.0
        %v2988 = vmul.f32 %v2940, %v2982
        %v2989 = vmul.f32 %v2941, %v2983
        %v2990 = vmul.f32 %v2942, %v2984
        %v2991 = vmul.f32 %v2943, %v2985
        %v2992 = vmul.f32 %v2944, %v2986
        %v2993 = vmul.f32 %v2945, %v2987
        %v2995 = vperm.slane %v1972, 0
        %v2996 = vperm.slane %v1972, 1
        %v2997 = vperm.slane %v1972, 2
        %v3001 = vmul.f32 %v2988, %v2995
        %v3002 = vmul.f32 %v2989, %v2996
        %v3003 = vmul.f32 %v2990, %v2997
        %v3004 = vmul.f32 %v2991, %v2995
        %v3005 = vmul.f32 %v2992, %v2996
        %v3006 = vmul.f32 %v2993, %v2997
        %v3007 = vld [vmem:[%s13] sm:$0xff]
        %v3008 = vld [vmem:[%s13 + $0x8] sm:$0xff]
        %v3009 = vld [vmem:[%s14] sm:$0xff]
        %v3010 = vld [vmem:[%s14 + $0x8] sm:$0xff]
        %3017 = vrot.lane.b32.xlu0 %v3001, 19
        %v3018 = vpop.permute.xlu0 %3017
        %3019 = vrot.lane.b32.xlu0 %v3002, 19
        %v3020 = vpop.permute.xlu0 %3019
        %3021 = vrot.lane.b32.xlu0 %v3003, 19
        %v3022 = vpop.permute.xlu0 %3021
        %3023 = vrot.lane.b32.xlu0 %v3004, 19
        %v3024 = vpop.permute.xlu0 %3023
        %3025 = vrot.lane.b32.xlu0 %v3005, 19
        %v3026 = vpop.permute.xlu0 %3025
        %3027 = vrot.lane.b32.xlu0 %v3006, 19
        %v3028 = vpop.permute.xlu0 %3027
        %vm3029 = vcmask 154624
        %v3030 = vsel %vm3029, %v3018, %v3020
        %v3031 = vsel %vm3029, %v3020, %v3022
        %v3032 = vsel %vm3029, %v3024, %v3026
        %v3033 = vsel %vm3029, %v3026, %v3028
        %v3040 = vsel %vm3029, 0.0, %v3018
        %v3041 = vsel %vm3029, 0.0, %v3024
        %vm3042 = vcmask 711680
        %v3043 = vsel %vm3042, %v3031, 0.0
        %v3044 = vsel %vm3042, %v3033, 0.0
        %3049 = vrot.lane.b32.xlu0 %v3040, 127
        %v3050 = vpop.permute.xlu0 %3049
        %3051 = vrot.lane.b32.xlu0 %v3030, 127
        %v3052 = vpop.permute.xlu0 %3051
        %3053 = vrot.lane.b32.xlu0 %v3043, 127
        %v3054 = vpop.permute.xlu0 %3053
        %3055 = vrot.lane.b32.xlu0 %v3041, 127
        %v3056 = vpop.permute.xlu0 %3055
        %3057 = vrot.lane.b32.xlu0 %v3032, 127
        %v3058 = vpop.permute.xlu0 %3057
        %3059 = vrot.lane.b32.xlu0 %v3044, 127
        %v3060 = vpop.permute.xlu0 %3059
        %vm3061 = vcmask 1039360
        %v3062 = vsel %vm3061, %v3050, %v3052
        %v3063 = vsel %vm3061, %v3052, %v3054
        %v3064 = vsel %vm3061, %v3056, %v3058
        %v3065 = vsel %vm3061, %v3058, %v3060
        %3072 = vrot.lane.b32.xlu0 %v3040, 126
        %v3073 = vpop.permute.xlu0 %3072
        %3074 = vrot.lane.b32.xlu0 %v3030, 126
        %v3075 = vpop.permute.xlu0 %3074
        %3076 = vrot.lane.b32.xlu0 %v3043, 126
        %v3077 = vpop.permute.xlu0 %3076
        %3078 = vrot.lane.b32.xlu0 %v3041, 126
        %v3079 = vpop.permute.xlu0 %3078
        %3080 = vrot.lane.b32.xlu0 %v3032, 126
        %v3081 = vpop.permute.xlu0 %3080
        %3082 = vrot.lane.b32.xlu0 %v3044, 126
        %v3083 = vpop.permute.xlu0 %3082
        %vm3084 = vcmask 1031168
        %v3085 = vsel %vm3084, %v3073, %v3075
        %v3086 = vsel %vm3084, %v3075, %v3077
        %v3087 = vsel %vm3084, %v3079, %v3081
        %v3088 = vsel %vm3084, %v3081, %v3083
        %3095 = vrot.lane.b32.xlu0 %v3040, 110
        %v3096 = vpop.permute.xlu0 %3095
        %3097 = vrot.lane.b32.xlu0 %v3030, 110
        %v3098 = vpop.permute.xlu0 %3097
        %3099 = vrot.lane.b32.xlu0 %v3043, 110
        %v3100 = vpop.permute.xlu0 %3099
        %3101 = vrot.lane.b32.xlu0 %v3041, 110
        %v3102 = vpop.permute.xlu0 %3101
        %3103 = vrot.lane.b32.xlu0 %v3032, 110
        %v3104 = vpop.permute.xlu0 %3103
        %3105 = vrot.lane.b32.xlu0 %v3044, 110
        %v3106 = vpop.permute.xlu0 %3105
        %vm3107 = vcmask 900096
        %v3108 = vsel %vm3107, %v3096, %v3098
        %v3109 = vsel %vm3107, %v3098, %v3100
        %v3110 = vsel %vm3107, %v3102, %v3104
        %v3111 = vsel %vm3107, %v3104, %v3106
        %3118 = vrot.lane.b32.xlu0 %v3040, 109
        %v3119 = vpop.permute.xlu0 %3118
        %3120 = vrot.lane.b32.xlu0 %v3030, 109
        %v3121 = vpop.permute.xlu0 %3120
        %3122 = vrot.lane.b32.xlu0 %v3043, 109
        %v3123 = vpop.permute.xlu0 %3122
        %3124 = vrot.lane.b32.xlu0 %v3041, 109
        %v3125 = vpop.permute.xlu0 %3124
        %3126 = vrot.lane.b32.xlu0 %v3032, 109
        %v3127 = vpop.permute.xlu0 %3126
        %3128 = vrot.lane.b32.xlu0 %v3044, 109
        %v3129 = vpop.permute.xlu0 %3128
        %vm3130 = vcmask 891904
        %v3131 = vsel %vm3130, %v3119, %v3121
        %v3132 = vsel %vm3130, %v3121, %v3123
        %v3133 = vsel %vm3130, %v3125, %v3127
        %v3134 = vsel %vm3130, %v3127, %v3129
        %3141 = vrot.lane.b32.xlu0 %v3040, 108
        %v3142 = vpop.permute.xlu0 %3141
        %3143 = vrot.lane.b32.xlu0 %v3030, 108
        %v3144 = vpop.permute.xlu0 %3143
        %3145 = vrot.lane.b32.xlu0 %v3043, 108
        %v3146 = vpop.permute.xlu0 %3145
        %3147 = vrot.lane.b32.xlu0 %v3041, 108
        %v3148 = vpop.permute.xlu0 %3147
        %3149 = vrot.lane.b32.xlu0 %v3032, 108
        %v3150 = vpop.permute.xlu0 %3149
        %3151 = vrot.lane.b32.xlu0 %v3044, 108
        %v3152 = vpop.permute.xlu0 %3151
        %vm3153 = vcmask 883712
        %v3154 = vsel %vm3153, %v3142, %v3144
        %v3155 = vsel %vm3153, %v3144, %v3146
        %v3156 = vsel %vm3153, %v3148, %v3150
        %v3157 = vsel %vm3153, %v3150, %v3152
        %3164 = vrot.lane.b32.xlu0 %v3040, 92
        %v3165 = vpop.permute.xlu0 %3164
        %3166 = vrot.lane.b32.xlu0 %v3030, 92
        %v3167 = vpop.permute.xlu0 %3166
        %3168 = vrot.lane.b32.xlu0 %v3043, 92
        %v3169 = vpop.permute.xlu0 %3168
        %3170 = vrot.lane.b32.xlu0 %v3041, 92
        %v3171 = vpop.permute.xlu0 %3170
        %3172 = vrot.lane.b32.xlu0 %v3032, 92
        %v3173 = vpop.permute.xlu0 %3172
        %3174 = vrot.lane.b32.xlu0 %v3044, 92
        %v3175 = vpop.permute.xlu0 %3174
        %vm3176 = vcmask 752640
        %v3177 = vsel %vm3176, %v3165, %v3167
        %v3178 = vsel %vm3176, %v3167, %v3169
        %v3179 = vsel %vm3176, %v3171, %v3173
        %v3180 = vsel %vm3176, %v3173, %v3175
        %3187 = vrot.lane.b32.xlu0 %v3040, 91
        %v3188 = vpop.permute.xlu0 %3187
        %3189 = vrot.lane.b32.xlu0 %v3030, 91
        %v3190 = vpop.permute.xlu0 %3189
        %3191 = vrot.lane.b32.xlu0 %v3043, 91
        %v3192 = vpop.permute.xlu0 %3191
        %3193 = vrot.lane.b32.xlu0 %v3041, 91
        %v3194 = vpop.permute.xlu0 %3193
        %3195 = vrot.lane.b32.xlu0 %v3032, 91
        %v3196 = vpop.permute.xlu0 %3195
        %3197 = vrot.lane.b32.xlu0 %v3044, 91
        %v3198 = vpop.permute.xlu0 %3197
        %vm3199 = vcmask 744448
        %v3200 = vsel %vm3199, %v3188, %v3190
        %v3201 = vsel %vm3199, %v3190, %v3192
        %v3202 = vsel %vm3199, %v3194, %v3196
        %v3203 = vsel %vm3199, %v3196, %v3198
        %3210 = vrot.lane.b32.xlu0 %v3040, 90
        %v3211 = vpop.permute.xlu0 %3210
        %3212 = vrot.lane.b32.xlu0 %v3030, 90
        %v3213 = vpop.permute.xlu0 %3212
        %3214 = vrot.lane.b32.xlu0 %v3043, 90
        %v3215 = vpop.permute.xlu0 %3214
        %3216 = vrot.lane.b32.xlu0 %v3041, 90
        %v3217 = vpop.permute.xlu0 %3216
        %3218 = vrot.lane.b32.xlu0 %v3032, 90
        %v3219 = vpop.permute.xlu0 %3218
        %3220 = vrot.lane.b32.xlu0 %v3044, 90
        %v3221 = vpop.permute.xlu0 %3220
        %vm3222 = vcmask 736256
        %v3223 = vsel %vm3222, %v3211, %v3213
        %v3224 = vsel %vm3222, %v3213, %v3215
        %v3225 = vsel %vm3222, %v3217, %v3219
        %v3226 = vsel %vm3222, %v3219, %v3221
        %v3233 = vpack.c.bf16 %v3041, %v3040
        %v3234 = vpack.c.bf16 %v3032, %v3030
        %v3235 = vpack.c.bf16 %v3044, %v3043
        %v3236 = vpack.c.bf16 %v3064, %v3062
        %v3237 = vpack.c.bf16 %v3065, %v3063
        %v3238 = vpack.c.bf16 %v3060, %v3054
        %v3239 = vpack.c.bf16 %v3087, %v3085
        %v3240 = vpack.c.bf16 %v3088, %v3086
        %v3241 = vpack.c.bf16 %v3083, %v3077
        %v3242 = vpack.c.bf16 %v3110, %v3108
        %v3243 = vpack.c.bf16 %v3111, %v3109
        %v3244 = vpack.c.bf16 %v3106, %v3100
        %v3245 = vpack.c.bf16 %v3133, %v3131
        %v3246 = vpack.c.bf16 %v3134, %v3132
        %v3247 = vpack.c.bf16 %v3129, %v3123
        %v3248 = vpack.c.bf16 %v3156, %v3154
        %v3249 = vpack.c.bf16 %v3157, %v3155
        %v3250 = vpack.c.bf16 %v3152, %v3146
        %v3251 = vpack.c.bf16 %v3179, %v3177
        %v3252 = vpack.c.bf16 %v3180, %v3178
        %v3253 = vpack.c.bf16 %v3175, %v3169
        %v3254 = vpack.c.bf16 %v3202, %v3200
        %v3255 = vpack.c.bf16 %v3203, %v3201
        %v3256 = vpack.c.bf16 %v3198, %v3192
        %v3257 = vpack.c.bf16 %v3225, %v3223
        %v3258 = vpack.c.bf16 %v3226, %v3224
        %v3259 = vpack.c.bf16 %v3221, %v3215
        %3261 = vset.pattern.permute.xlu0 0
        %3262 = vperm.xlu0 %3261, %v3009
        %v3263 = vpop.permute.xlu0 %3262
        %3266 = vset.pattern.permute.xlu0 0
        %3267 = vperm.xlu0 %3266, %v3010
        %v3268 = vpop.permute.xlu0 %3267
        %v3272 = vunpack.c.l.b16 %v3007
        %v3273 = vunpack.c.h.b16 %v3007
        %v3274 = vunpack.c.l.b16 %v3008
        %v3275 = vunpack.c.h.b16 %v3008
        %v3276 = vpack.c.b16 %v3274, %v3272
        %v3277 = vpack.c.b16 %v3275, %v3273
        %vm3279 = vcmask 130048
        %v3281 = vsel %vm3279, %v3277, 0
        %3283 = vmatpush.bf16.msra.mxu0 %v3254
        %3284 = vmatpush.bf16.msra.mxu0 %v3251
        %3285 = vmatpush.bf16.msra.mxu0 %v3248
        %3286 = vmatpush.bf16.msra.mxu0 %v3245
        %3287 = vmatpush.bf16.msra.mxu0 %v3242
        %3288 = vmatpush.bf16.msra.mxu0 %v3239
        %3289 = vmatpush.bf16.msra.mxu0 %v3236
        %3290 = vmatpush.bf16.msra.mxu0 %v3233
        %3291 = vmatmul.bf16.gmra.mxu0 %v3276
        %v3292 = vpop.f32.mrf.mxu0
        %v3293 = vadd.f32 %v3263, %v3292
        %v3294 = vpop.f32.mrf.mxu0
        %v3295 = vadd.f32 %v3268, %v3294
        %3296 = vdwg.mxu0
        %3297 = vmatpush.bf16.msra.mxu0 0
        %3298 = vmatpush.bf16.msra.mxu0 0
        %3299 = vmatpush.bf16.msra.mxu0 0
        %3300 = vmatpush.bf16.msra.mxu0 0
        %3301 = vmatpush.bf16.msra.mxu0 0
        %3302 = vmatpush.bf16.msra.mxu0 0
        %3303 = vmatpush.bf16.msra.mxu0 0
        %3304 = vmatpush.bf16.msra.mxu0 %v3257
        %3305 = vmatmul.bf16.gmra.mxu0 %v3281
        %v3306 = vpop.f32.mrf.mxu0
        %v3307 = vadd.f32 %v3293, %v3306
        %v3308 = vpop.f32.mrf.mxu0
        %v3309 = vadd.f32 %v3295, %v3308
        %3310 = vdwg.mxu0
        %3311 = vmatpush.bf16.msra.mxu0 %v3255
        %3312 = vmatpush.bf16.msra.mxu0 %v3252
        %3313 = vmatpush.bf16.msra.mxu0 %v3249
        %3314 = vmatpush.bf16.msra.mxu0 %v3246
        %3315 = vmatpush.bf16.msra.mxu0 %v3243
        %3316 = vmatpush.bf16.msra.mxu0 %v3240
        %3317 = vmatpush.bf16.msra.mxu0 %v3237
        %3318 = vmatpush.bf16.msra.mxu0 %v3234
        %3319 = vmatmul.bf16.gmra.mxu0 %v3276
        %v3320 = vpop.f32.mrf.mxu0
        %v3321 = vadd.f32 %v3263, %v3320
        %v3322 = vpop.f32.mrf.mxu0
        %v3323 = vadd.f32 %v3268, %v3322
        %3324 = vdwg.mxu0
        %3325 = vmatpush.bf16.msra.mxu0 0
        %3326 = vmatpush.bf16.msra.mxu0 0
        %3327 = vmatpush.bf16.msra.mxu0 0
        %3328 = vmatpush.bf16.msra.mxu0 0
        %3329 = vmatpush.bf16.msra.mxu0 0
        %3330 = vmatpush.bf16.msra.mxu0 0
        %3331 = vmatpush.bf16.msra.mxu0 0
        %3332 = vmatpush.bf16.msra.mxu0 %v3258
        %3333 = vmatmul.bf16.gmra.mxu0 %v3281
        %v3334 = vpop.f32.mrf.mxu0
        %v3335 = vadd.f32 %v3321, %v3334
        %v3336 = vpop.f32.mrf.mxu0
        %v3337 = vadd.f32 %v3323, %v3336
        %3338 = vdwg.mxu0
        %3339 = vmatpush.bf16.msra.mxu0 %v3256
        %3340 = vmatpush.bf16.msra.mxu0 %v3253
        %3341 = vmatpush.bf16.msra.mxu0 %v3250
        %3342 = vmatpush.bf16.msra.mxu0 %v3247
        %3343 = vmatpush.bf16.msra.mxu0 %v3244
        %3344 = vmatpush.bf16.msra.mxu0 %v3241
        %3345 = vmatpush.bf16.msra.mxu0 %v3238
        %3346 = vmatpush.bf16.msra.mxu0 %v3235
        %3347 = vmatmul.bf16.gmra.mxu0 %v3276
        %v3348 = vpop.f32.mrf.mxu0
        %v3349 = vadd.f32 %v3263, %v3348
        %v3350 = vpop.f32.mrf.mxu0
        %v3351 = vadd.f32 %v3268, %v3350
        %3352 = vdwg.mxu0
        %3353 = vmatpush.bf16.msra.mxu0 0
        %3354 = vmatpush.bf16.msra.mxu0 0
        %3355 = vmatpush.bf16.msra.mxu0 0
        %3356 = vmatpush.bf16.msra.mxu0 0
        %3357 = vmatpush.bf16.msra.mxu0 0
        %3358 = vmatpush.bf16.msra.mxu0 0
        %3359 = vmatpush.bf16.msra.mxu0 0
        %3360 = vmatpush.bf16.msra.mxu0 %v3259
        %3361 = vmatmul.bf16.gmra.mxu0 %v3281
        %v3362 = vpop.f32.mrf.mxu0
        %v3363 = vadd.f32 %v3349, %v3362
        %v3364 = vpop.f32.mrf.mxu0
        %v3365 = vadd.f32 %v3351, %v3364
        %3366 = vdwg.mxu0
        %v3367 = vmul.f32 %v3307, 0.5
        %v3368 = vmul.f32 %v3335, 0.5
        %v3369 = vmul.f32 %v3363, 0.5
        %v3370 = vmul.f32 %v3309, 0.5
        %v3371 = vmul.f32 %v3337, 0.5
        %v3372 = vmul.f32 %v3365, 0.5
        %v3373 = vmul.f32 %v3307, 0.044715
        %v3374 = vmul.f32 %v3335, 0.044715
        %v3375 = vmul.f32 %v3363, 0.044715
        %v3376 = vmul.f32 %v3309, 0.044715
        %v3377 = vmul.f32 %v3337, 0.044715
        %v3378 = vmul.f32 %v3365, 0.044715
        %v3379 = vmul.f32 %v3373, %v3307
        %v3380 = vmul.f32 %v3374, %v3335
        %v3381 = vmul.f32 %v3375, %v3363
        %v3382 = vmul.f32 %v3376, %v3309
        %v3383 = vmul.f32 %v3377, %v3337
        %v3384 = vmul.f32 %v3378, %v3365
        %v3385 = vmul.f32 %v3379, %v3307
        %v3386 = vmul.f32 %v3380, %v3335
        %v3387 = vmul.f32 %v3381, %v3363
        %v3388 = vmul.f32 %v3382, %v3309
        %v3389 = vmul.f32 %v3383, %v3337
        %v3390 = vmul.f32 %v3384, %v3365
        %v3391 = vadd.f32 %v3307, %v3385
        %v3392 = vadd.f32 %v3335, %v3386
        %v3393 = vadd.f32 %v3363, %v3387
        %v3394 = vadd.f32 %v3309, %v3388
        %v3395 = vadd.f32 %v3337, %v3389
        %v3396 = vadd.f32 %v3365, %v3390
        %v3397 = vmul.f32 %v3391, 0.7978846
        %v3398 = vmul.f32 %v3392, 0.7978846
        %v3399 = vmul.f32 %v3393, 0.7978846
        %v3400 = vmul.f32 %v3394, 0.7978846
        %v3401 = vmul.f32 %v3395, 0.7978846
        %v3402 = vmul.f32 %v3396, 0.7978846
        %v3403 = vtanh.pop %v3397
        %v3404 = vtanh.pop %v3398
        %v3405 = vtanh.pop %v3399
        %v3406 = vtanh.pop %v3400
        %v3407 = vtanh.pop %v3401
        %v3408 = vtanh.pop %v3402
        %v3409 = vadd.f32 %v3403, 1.0
        %v3410 = vadd.f32 %v3404, 1.0
        %v3411 = vadd.f32 %v3405, 1.0
        %v3412 = vadd.f32 %v3406, 1.0
        %v3413 = vadd.f32 %v3407, 1.0
        %v3414 = vadd.f32 %v3408, 1.0
        %v3415 = vmul.f32 %v3367, %v3409
        %v3416 = vmul.f32 %v3368, %v3410
        %v3417 = vmul.f32 %v3369, %v3411
        %v3418 = vmul.f32 %v3370, %v3412
        %v3419 = vmul.f32 %v3371, %v3413
        %v3420 = vmul.f32 %v3372, %v3414
        %v3421 = vmul.f32 %v3415, %v2995
        %v3422 = vmul.f32 %v3416, %v2996
        %v3423 = vmul.f32 %v3417, %v2997
        %v3424 = vmul.f32 %v3418, %v2995
        %v3425 = vmul.f32 %v3419, %v2996
        %v3426 = vmul.f32 %v3420, %v2997
        %v3427 = vld [vmem:[%s17] sm:$0x7]
        %3434 = vrot.lane.b32.xlu0 %v3421, 19
        %v3435 = vpop.permute.xlu0 %3434
        %3436 = vrot.lane.b32.xlu0 %v3422, 19
        %v3437 = vpop.permute.xlu0 %3436
        %3438 = vrot.lane.b32.xlu0 %v3423, 19
        %v3439 = vpop.permute.xlu0 %3438
        %3440 = vrot.lane.b32.xlu0 %v3424, 19
        %v3441 = vpop.permute.xlu0 %3440
        %3442 = vrot.lane.b32.xlu0 %v3425, 19
        %v3443 = vpop.permute.xlu0 %3442
        %3444 = vrot.lane.b32.xlu0 %v3426, 19
        %v3445 = vpop.permute.xlu0 %3444
        %v3446 = vsel %vm3029, %v3435, %v3437
        %v3447 = vsel %vm3029, %v3437, %v3439
        %v3448 = vsel %vm3029, %v3441, %v3443
        %v3449 = vsel %vm3029, %v3443, %v3445
        %v3456 = vsel %vm3029, 0.0, %v3435
        %v3457 = vsel %vm3029, 0.0, %v3441
        %v3458 = vsel %vm3042, %v3447, 0.0
        %v3459 = vsel %vm3042, %v3449, 0.0
        %3464 = vrot.lane.b32.xlu0 %v3456, 127
        %v3465 = vpop.permute.xlu0 %3464
        %3466 = vrot.lane.b32.xlu0 %v3446, 127
        %v3467 = vpop.permute.xlu0 %3466
        %3468 = vrot.lane.b32.xlu0 %v3458, 127
        %v3469 = vpop.permute.xlu0 %3468
        %3470 = vrot.lane.b32.xlu0 %v3457, 127
        %v3471 = vpop.permute.xlu0 %3470
        %3472 = vrot.lane.b32.xlu0 %v3448, 127
        %v3473 = vpop.permute.xlu0 %3472
        %3474 = vrot.lane.b32.xlu0 %v3459, 127
        %v3475 = vpop.permute.xlu0 %3474
        %v3476 = vsel %vm3061, %v3465, %v3467
        %v3477 = vsel %vm3061, %v3467, %v3469
        %v3478 = vsel %vm3061, %v3471, %v3473
        %v3479 = vsel %vm3061, %v3473, %v3475
        %3486 = vrot.lane.b32.xlu0 %v3456, 110
        %v3487 = vpop.permute.xlu0 %3486
        %3488 = vrot.lane.b32.xlu0 %v3446, 110
        %v3489 = vpop.permute.xlu0 %3488
        %3490 = vrot.lane.b32.xlu0 %v3458, 110
        %v3491 = vpop.permute.xlu0 %3490
        %3492 = vrot.lane.b32.xlu0 %v3457, 110
        %v3493 = vpop.permute.xlu0 %3492
        %3494 = vrot.lane.b32.xlu0 %v3448, 110
        %v3495 = vpop.permute.xlu0 %3494
        %3496 = vrot.lane.b32.xlu0 %v3459, 110
        %v3497 = vpop.permute.xlu0 %3496
        %v3498 = vsel %vm3107, %v3487, %v3489
        %v3499 = vsel %vm3107, %v3489, %v3491
        %v3500 = vsel %vm3107, %v3493, %v3495
        %v3501 = vsel %vm3107, %v3495, %v3497
        %3508 = vrot.lane.b32.xlu0 %v3456, 109
        %v3509 = vpop.permute.xlu0 %3508
        %3510 = vrot.lane.b32.xlu0 %v3446, 109
        %v3511 = vpop.permute.xlu0 %3510
        %3512 = vrot.lane.b32.xlu0 %v3458, 109
        %v3513 = vpop.permute.xlu0 %3512
        %3514 = vrot.lane.b32.xlu0 %v3457, 109
        %v3515 = vpop.permute.xlu0 %3514
        %3516 = vrot.lane.b32.xlu0 %v3448, 109
        %v3517 = vpop.permute.xlu0 %3516
        %3518 = vrot.lane.b32.xlu0 %v3459, 109
        %v3519 = vpop.permute.xlu0 %3518
        %v3520 = vsel %vm3130, %v3509, %v3511
        %v3521 = vsel %vm3130, %v3511, %v3513
        %v3522 = vsel %vm3130, %v3515, %v3517
        %v3523 = vsel %vm3130, %v3517, %v3519
        %v3530 = vpack.c.bf16 %v3457, %v3456
        %v3531 = vpack.c.bf16 %v3448, %v3446
        %v3532 = vpack.c.bf16 %v3459, %v3458
        %v3533 = vpack.c.bf16 %v3478, %v3476
        %v3534 = vpack.c.bf16 %v3479, %v3477
        %v3535 = vpack.c.bf16 %v3475, %v3469
        %v3536 = vpack.c.bf16 %v3500, %v3498
        %v3537 = vpack.c.bf16 %v3501, %v3499
        %v3538 = vpack.c.bf16 %v3497, %v3491
        %v3539 = vpack.c.bf16 %v3522, %v3520
        %v3540 = vpack.c.bf16 %v3523, %v3521
        %v3541 = vpack.c.bf16 %v3519, %v3513
        %v3542 = vld [vmem:[%s15] sm:$0x3]
        %3555 = vrot.lane.b32.xlu0 %v3530, 109
        %v3556 = vpop.permute.xlu0 %3555
        %3557 = vrot.lane.b32.xlu0 %v3531, 109
        %v3558 = vpop.permute.xlu0 %3557
        %3559 = vrot.lane.b32.xlu0 %v3532, 109
        %v3560 = vpop.permute.xlu0 %3559
        %3561 = vrot.lane.b32.xlu0 %v3533, 109
        %v3562 = vpop.permute.xlu0 %3561
        %3563 = vrot.lane.b32.xlu0 %v3534, 109
        %v3564 = vpop.permute.xlu0 %3563
        %3565 = vrot.lane.b32.xlu0 %v3535, 109
        %v3566 = vpop.permute.xlu0 %3565
        %3567 = vrot.lane.b32.xlu0 %v3536, 109
        %v3568 = vpop.permute.xlu0 %3567
        %3569 = vrot.lane.b32.xlu0 %v3537, 109
        %v3570 = vpop.permute.xlu0 %3569
        %3571 = vrot.lane.b32.xlu0 %v3538, 109
        %v3572 = vpop.permute.xlu0 %3571
        %3573 = vrot.lane.b32.xlu0 %v3539, 109
        %v3574 = vpop.permute.xlu0 %3573
        %3575 = vrot.lane.b32.xlu0 %v3540, 109
        %v3576 = vpop.permute.xlu0 %3575
        %3577 = vrot.lane.b32.xlu0 %v3541, 109
        %v3578 = vpop.permute.xlu0 %3577
        %vm3579 = vcmask 891904
        %v3580 = vsel %vm3579, %v3556, %v3558
        %v3581 = vsel %vm3579, %v3558, %v3560
        %v3582 = vsel %vm3579, %v3562, %v3564
        %v3583 = vsel %vm3579, %v3564, %v3566
        %v3584 = vsel %vm3579, %v3568, %v3570
        %v3585 = vsel %vm3579, %v3570, %v3572
        %v3586 = vsel %vm3579, %v3574, %v3576
        %v3587 = vsel %vm3579, %v3576, %v3578
        %vm3600 = vcmask 523264
        %v3602 = vsel %vm3600, %v3542, 0
        %3604 = vmatpush.bf16.msra.mxu0 0
        %3605 = vmatpush.bf16.msra.mxu0 0
        %3606 = vmatpush.bf16.msra.mxu0 0
        %3607 = vmatpush.bf16.msra.mxu0 0
        %3608 = vmatpush.bf16.msra.mxu0 %v3586
        %3609 = vmatpush.bf16.msra.mxu0 %v3584
        %3610 = vmatpush.bf16.msra.mxu0 %v3582
        %3611 = vmatpush.bf16.msra.mxu0 %v3580
        %3612 = vmatmul.bf16.gmra.mxu0 %v3602
        %v3613 = vpop.f32.mrf.mxu0
        %v3614 = vadd.f32 0.0, %v3613
        %v3615 = vpop.f32.mrf.mxu0
        %3616 = vdwg.mxu0
        %3617 = vmatpush.bf16.msra.mxu0 0
        %3618 = vmatpush.bf16.msra.mxu0 0
        %3619 = vmatpush.bf16.msra.mxu0 0
        %3620 = vmatpush.bf16.msra.mxu0 0
        %3621 = vmatpush.bf16.msra.mxu0 %v3587
        %3622 = vmatpush.bf16.msra.mxu0 %v3585
        %3623 = vmatpush.bf16.msra.mxu0 %v3583
        %3624 = vmatpush.bf16.msra.mxu0 %v3581
        %3625 = vmatmul.bf16.gmra.mxu0 %v3602
        %v3626 = vpop.f32.mrf.mxu0
        %v3627 = vadd.f32 0.0, %v3626
        %v3628 = vpop.f32.mrf.mxu0
        %3629 = vdwg.mxu0
        %3630 = vmatpush.bf16.msra.mxu0 0
        %3631 = vmatpush.bf16.msra.mxu0 0
        %3632 = vmatpush.bf16.msra.mxu0 0
        %3633 = vmatpush.bf16.msra.mxu0 0
        %3634 = vmatpush.bf16.msra.mxu0 %v3578
        %3635 = vmatpush.bf16.msra.mxu0 %v3572
        %3636 = vmatpush.bf16.msra.mxu0 %v3566
        %3637 = vmatpush.bf16.msra.mxu0 %v3560
        %3638 = vmatmul.bf16.gmra.mxu0 %v3602
        %v3639 = vpop.f32.mrf.mxu0
        %v3640 = vadd.f32 0.0, %v3639
        %v3641 = vpop.f32.mrf.mxu0
        %3642 = vdwg.mxu0
        %v3643 = vpack.c.bf16 %v3614, %v3614
        %v3644 = vpack.c.bf16 %v3627, %v3627
        %v3645 = vpack.c.bf16 %v3640, %v3640
        %v3646 = vld [vmem:[%s16] sm:$0xff]
        %v3647 = vld [vmem:[%s16 + $0x8] sm:$0xff]
        %v3648 = vld [vmem:[%s16 + $0x10] sm:$0xff]
        %v3649 = vld [vmem:[%s16 + $0x18] sm:$0xff]
        %v3650 = vld [vmem:[%s16 + $0x20] sm:$0xff]
        %v3651 = vld [vmem:[%s16 + $0x28] sm:$0xff]
        %v3652 = vld [vmem:[%s16 + $0x30] sm:$0xff]
        %v3653 = vld [vmem:[%s16 + $0x38] sm:$0xff]
        %v3654 = vld [vmem:[%s16 + $0x40] sm:$0xff]
        %v3655 = vld [vmem:[%s16 + $0x48] sm:$0xff]
        %v3656 = vld [vmem:[%s16 + $0x50] sm:$0xff]
        %v3657 = vld [vmem:[%s16 + $0x58] sm:$0xff]
        %v3658 = vld [vmem:[%s16 + $0x60] sm:$0xff]
        %v3659 = vld [vmem:[%s16 + $0x68] sm:$0xff]
        %v3660 = vld [vmem:[%s16 + $0x70] sm:$0xff]
        %v3661 = vld [vmem:[%s16 + $0x78] sm:$0xff]
        %v3662 = vld [vmem:[%s16 + $0x80] sm:$0xff]
        %v3663 = vld [vmem:[%s16 + $0x88] sm:$0xff]
        %v3664 = vld [vmem:[%s16 + $0x90] sm:$0xff]
        %v3665 = vld [vmem:[%s16 + $0x98] sm:$0xff]
        %v3666 = vld [vmem:[%s16 + $0xa0] sm:$0xff]
        %v3667 = vld [vmem:[%s16 + $0xa8] sm:$0xff]
        %v3668 = vld [vmem:[%s16 + $0xb0] sm:$0xff]
        %v3669 = vld [vmem:[%s16 + $0xb8] sm:$0xff]
        %v3670 = vld [vmem:[%s16 + $0xc0] sm:$0xff]
        %v3671 = vld [vmem:[%s16 + $0xc8] sm:$0xff]
        %v3672 = vld [vmem:[%s16 + $0xd0] sm:$0xff]
        %v3673 = vld [vmem:[%s16 + $0xd8] sm:$0xff]
        %v3674 = vld [vmem:[%s16 + $0xe0] sm:$0xff]
        %v3675 = vld [vmem:[%s16 + $0xe8] sm:$0xff]
        %v3676 = vld [vmem:[%s16 + $0xf0] sm:$0xff]
        %v3677 = vld [vmem:[%s16 + $0xf8] sm:$0xff]
        %v3678 = vld [vmem:[%s16 + $0x100] sm:$0xff]
        %v3679 = vld [vmem:[%s16 + $0x108] sm:$0xff]
        %v3680 = vld [vmem:[%s16 + $0x110] sm:$0xff]
        %v3681 = vld [vmem:[%s16 + $0x118] sm:$0xff]
        %v3682 = vld [vmem:[%s16 + $0x120] sm:$0xff]
        %v3683 = vld [vmem:[%s16 + $0x128] sm:$0xff]
        %v3684 = vld [vmem:[%s16 + $0x130] sm:$0xff]
        %v3685 = vld [vmem:[%s16 + $0x138] sm:$0xff]
        %v3686 = vld [vmem:[%s16 + $0x140] sm:$0xff]
        %v3687 = vld [vmem:[%s16 + $0x148] sm:$0xff]
        %v3688 = vld [vmem:[%s16 + $0x150] sm:$0xff]
        %v3689 = vld [vmem:[%s16 + $0x158] sm:$0xff]
        %v3690 = vld [vmem:[%s16 + $0x160] sm:$0xff]
        %v3691 = vld [vmem:[%s16 + $0x168] sm:$0xff]
        %v3692 = vld [vmem:[%s16 + $0x170] sm:$0xff]
        %v3693 = vld [vmem:[%s16 + $0x178] sm:$0xff]
        %v3694 = vld [vmem:[%s16 + $0x180] sm:$0xff]
        %v3695 = vld [vmem:[%s16 + $0x188] sm:$0xff]
        %v3696 = vld [vmem:[%s16 + $0x190] sm:$0xff]
        %v3697 = vld [vmem:[%s16 + $0x198] sm:$0xff]
        %v3698 = vld [vmem:[%s16 + $0x1a0] sm:$0xff]
        %v3699 = vld [vmem:[%s16 + $0x1a8] sm:$0xff]
        %v3700 = vld [vmem:[%s16 + $0x1b0] sm:$0xff]
        %v3701 = vld [vmem:[%s16 + $0x1b8] sm:$0xff]
        %v3702 = vld [vmem:[%s16 + $0x1c0] sm:$0xff]
        %v3703 = vld [vmem:[%s16 + $0x1c8] sm:$0xff]
        %v3704 = vld [vmem:[%s16 + $0x1d0] sm:$0xff]
        %v3705 = vld [vmem:[%s16 + $0x1d8] sm:$0xff]
        %v3706 = vld [vmem:[%s16 + $0x1e0] sm:$0xff]
        %v3707 = vld [vmem:[%s16 + $0x1e8] sm:$0xff]
        %v3708 = vld [vmem:[%s16 + $0x1f0] sm:$0xff]
        %v3709 = vld [vmem:[%s16 + $0x1f8] sm:$0xff]
        %v3710 = vld [vmem:[%s16 + $0x200] sm:$0xff]
        %v3711 = vld [vmem:[%s16 + $0x208] sm:$0xff]
        %v3712 = vld [vmem:[%s16 + $0x210] sm:$0xff]
        %v3713 = vld [vmem:[%s16 + $0x218] sm:$0xff]
        %v3714 = vld [vmem:[%s16 + $0x220] sm:$0xff]
        %v3715 = vld [vmem:[%s16 + $0x228] sm:$0xff]
        %v3716 = vld [vmem:[%s16 + $0x230] sm:$0xff]
        %v3717 = vld [vmem:[%s16 + $0x238] sm:$0xff]
        %v3718 = vld [vmem:[%s16 + $0x240] sm:$0xff]
        %v3719 = vld [vmem:[%s16 + $0x248] sm:$0xff]
        %v3720 = vld [vmem:[%s16 + $0x250] sm:$0xff]
        %v3721 = vld [vmem:[%s16 + $0x258] sm:$0xff]
        %v3722 = vld [vmem:[%s16 + $0x260] sm:$0xff]
        %v3723 = vld [vmem:[%s16 + $0x268] sm:$0xff]
        %v3724 = vld [vmem:[%s16 + $0x270] sm:$0xff]
        %v3725 = vld [vmem:[%s16 + $0x278] sm:$0xff]
        %v3726 = vld [vmem:[%s16 + $0x280] sm:$0xff]
        %v3727 = vld [vmem:[%s16 + $0x288] sm:$0xff]
        %v3728 = vld [vmem:[%s16 + $0x290] sm:$0xff]
        %v3729 = vld [vmem:[%s16 + $0x298] sm:$0xff]
        %v3730 = vld [vmem:[%s16 + $0x2a0] sm:$0xff]
        %v3731 = vld [vmem:[%s16 + $0x2a8] sm:$0xff]
        %v3732 = vld [vmem:[%s16 + $0x2b0] sm:$0xff]
        %v3733 = vld [vmem:[%s16 + $0x2b8] sm:$0xff]
        %v3734 = vld [vmem:[%s16 + $0x2c0] sm:$0xff]
        %v3735 = vld [vmem:[%s16 + $0x2c8] sm:$0xff]
        %v3736 = vld [vmem:[%s16 + $0x2d0] sm:$0xff]
        %v3737 = vld [vmem:[%s16 + $0x2d8] sm:$0xff]
        %v3738 = vld [vmem:[%s16 + $0x2e0] sm:$0xff]
        %v3739 = vld [vmem:[%s16 + $0x2e8] sm:$0xff]
        %v3740 = vld [vmem:[%s16 + $0x2f0] sm:$0xff]
        %v3741 = vld [vmem:[%s16 + $0x2f8] sm:$0xff]
        %v3742 = vld [vmem:[%s16 + $0x300] sm:$0xff]
        %v3743 = vld [vmem:[%s16 + $0x308] sm:$0xff]
        %v3744 = vld [vmem:[%s16 + $0x310] sm:$0xff]
        %v3745 = vld [vmem:[%s16 + $0x318] sm:$0xff]
        %v3746 = vld [vmem:[%s16 + $0x320] sm:$0xff]
        %v3747 = vld [vmem:[%s16 + $0x328] sm:$0xff]
        %v3748 = vld [vmem:[%s16 + $0x330] sm:$0xff]
        %v3749 = vld [vmem:[%s16 + $0x338] sm:$0xff]
        %v3750 = vld [vmem:[%s16 + $0x340] sm:$0xff]
        %v3751 = vld [vmem:[%s16 + $0x348] sm:$0xff]
        %v3752 = vld [vmem:[%s16 + $0x350] sm:$0xff]
        %v3753 = vld [vmem:[%s16 + $0x358] sm:$0xff]
        %v3754 = vld [vmem:[%s16 + $0x360] sm:$0xff]
        %v3755 = vld [vmem:[%s16 + $0x368] sm:$0xff]
        %v3756 = vld [vmem:[%s16 + $0x370] sm:$0xff]
        %v3757 = vld [vmem:[%s16 + $0x378] sm:$0xff]
        %v3758 = vld [vmem:[%s16 + $0x380] sm:$0xff]
        %v3759 = vld [vmem:[%s16 + $0x388] sm:$0xff]
        %v3760 = vld [vmem:[%s16 + $0x390] sm:$0xff]
        %v3761 = vld [vmem:[%s16 + $0x398] sm:$0xff]
        %v3762 = vld [vmem:[%s16 + $0x3a0] sm:$0xff]
        %v3763 = vld [vmem:[%s16 + $0x3a8] sm:$0xff]
        %v3764 = vld [vmem:[%s16 + $0x3b0] sm:$0xff]
        %v3765 = vld [vmem:[%s16 + $0x3b8] sm:$0xff]
        %v3766 = vld [vmem:[%s16 + $0x3c0] sm:$0xff]
        %v3767 = vld [vmem:[%s16 + $0x3c8] sm:$0xff]
        %v3768 = vld [vmem:[%s16 + $0x3d0] sm:$0xff]
        %v3769 = vld [vmem:[%s16 + $0x3d8] sm:$0xff]
        %v3770 = vld [vmem:[%s16 + $0x3e0] sm:$0xff]
        %v3771 = vld [vmem:[%s16 + $0x3e8] sm:$0xff]
        %v3772 = vld [vmem:[%s16 + $0x3f0] sm:$0xff]
        %v3773 = vld [vmem:[%s16 + $0x3f8] sm:$0xff]
        %v3774 = vld [vmem:[%s16 + $0x400] sm:$0xff]
        %v3775 = vld [vmem:[%s16 + $0x408] sm:$0xff]
        %v3776 = vld [vmem:[%s16 + $0x410] sm:$0xff]
        %v3777 = vld [vmem:[%s16 + $0x418] sm:$0xff]
        %v3778 = vld [vmem:[%s16 + $0x420] sm:$0xff]
        %v3779 = vld [vmem:[%s16 + $0x428] sm:$0xff]
        %v3780 = vld [vmem:[%s16 + $0x430] sm:$0xff]
        %v3781 = vld [vmem:[%s16 + $0x438] sm:$0xff]
        %v3782 = vld [vmem:[%s16 + $0x440] sm:$0xff]
        %v3783 = vld [vmem:[%s16 + $0x448] sm:$0xff]
        %v3784 = vld [vmem:[%s16 + $0x450] sm:$0xff]
        %v3785 = vld [vmem:[%s16 + $0x458] sm:$0xff]
        %v3786 = vld [vmem:[%s16 + $0x460] sm:$0xff]
        %v3787 = vld [vmem:[%s16 + $0x468] sm:$0xff]
        %v3788 = vld [vmem:[%s16 + $0x470] sm:$0xff]
        %v3789 = vld [vmem:[%s16 + $0x478] sm:$0xff]
        %v3790 = vld [vmem:[%s16 + $0x480] sm:$0xff]
        %v3791 = vld [vmem:[%s16 + $0x488] sm:$0xff]
        %v3792 = vld [vmem:[%s16 + $0x490] sm:$0xff]
        %v3793 = vld [vmem:[%s16 + $0x498] sm:$0xff]
        %v3794 = vld [vmem:[%s16 + $0x4a0] sm:$0xff]
        %v3795 = vld [vmem:[%s16 + $0x4a8] sm:$0xff]
        %v3796 = vld [vmem:[%s16 + $0x4b0] sm:$0xff]
        %v3797 = vld [vmem:[%s16 + $0x4b8] sm:$0xff]
        %v3798 = vld [vmem:[%s16 + $0x4c0] sm:$0xff]
        %v3799 = vld [vmem:[%s16 + $0x4c8] sm:$0xff]
        %v3800 = vld [vmem:[%s16 + $0x4d0] sm:$0xff]
        %v3801 = vld [vmem:[%s16 + $0x4d8] sm:$0xff]
        %v3802 = vld [vmem:[%s16 + $0x4e0] sm:$0xff]
        %v3803 = vld [vmem:[%s16 + $0x4e8] sm:$0xff]
        %v3804 = vld [vmem:[%s16 + $0x4f0] sm:$0xff]
        %v3805 = vld [vmem:[%s16 + $0x4f8] sm:$0xff]
        %v3806 = vld [vmem:[%s16 + $0x500] sm:$0x33]
        %v3807 = vld [vmem:[%s16 + $0x508] sm:$0x33]
        %v3808 = vld [vmem:[%s16 + $0x510] sm:$0x33]
        %v3809 = vld [vmem:[%s16 + $0x518] sm:$0x33]
        %s3810 = scalar_lea.vmem %s15, 2
        %v3811 = vld [vmem:[%s3810] sm:$0x3]
        %v3813 = vsel %vm3600, %v3811, 0
        %3815 = vmatpush.bf16.msra.mxu0 0
        %3816 = vmatpush.bf16.msra.mxu0 0
        %3817 = vmatpush.bf16.msra.mxu0 0
        %3818 = vmatpush.bf16.msra.mxu0 0
        %3819 = vmatpush.bf16.msra.mxu0 %v3586
        %3820 = vmatpush.bf16.msra.mxu0 %v3584
        %3821 = vmatpush.bf16.msra.mxu0 %v3582
        %3822 = vmatpush.bf16.msra.mxu0 %v3580
        %3823 = vmatmul.bf16.gmra.mxu0 %v3813
        %v3824 = vpop.f32.mrf.mxu0
        %v3825 = vadd.f32 0.0, %v3824
        %v3826 = vpop.f32.mrf.mxu0
        %3827 = vdwg.mxu0
        %3828 = vmatpush.bf16.msra.mxu0 0
        %3829 = vmatpush.bf16.msra.mxu0 0
        %3830 = vmatpush.bf16.msra.mxu0 0
        %3831 = vmatpush.bf16.msra.mxu0 0
        %3832 = vmatpush.bf16.msra.mxu0 %v3587
        %3833 = vmatpush.bf16.msra.mxu0 %v3585
        %3834 = vmatpush.bf16.msra.mxu0 %v3583
        %3835 = vmatpush.bf16.msra.mxu0 %v3581
        %3836 = vmatmul.bf16.gmra.mxu0 %v3813
        %v3837 = vpop.f32.mrf.mxu0
        %v3838 = vadd.f32 0.0, %v3837
        %v3839 = vpop.f32.mrf.mxu0
        %3840 = vdwg.mxu0
        %3841 = vmatpush.bf16.msra.mxu0 0
        %3842 = vmatpush.bf16.msra.mxu0 0
        %3843 = vmatpush.bf16.msra.mxu0 0
        %3844 = vmatpush.bf16.msra.mxu0 0
        %3845 = vmatpush.bf16.msra.mxu0 %v3578
        %3846 = vmatpush.bf16.msra.mxu0 %v3572
        %3847 = vmatpush.bf16.msra.mxu0 %v3566
        %3848 = vmatpush.bf16.msra.mxu0 %v3560
        %3849 = vmatmul.bf16.gmra.mxu0 %v3813
        %v3850 = vpop.f32.mrf.mxu0
        %v3851 = vadd.f32 0.0, %v3850
        %v3852 = vpop.f32.mrf.mxu0
        %3853 = vdwg.mxu0
        %v3854 = vpack.c.bf16 %v3825, %v3825
        %v3855 = vpack.c.bf16 %v3838, %v3838
        %v3856 = vpack.c.bf16 %v3851, %v3851
        %s3857 = scalar_lea.vmem %s16, 1312
        %v3858 = vld [vmem:[%s3857] sm:$0xff]
        %v3859 = vld [vmem:[%s3857 + $0x8] sm:$0xff]
        %v3860 = vld [vmem:[%s3857 + $0x10] sm:$0xff]
        %v3861 = vld [vmem:[%s3857 + $0x18] sm:$0xff]
        %v3862 = vld [vmem:[%s3857 + $0x20] sm:$0xff]
        %v3863 = vld [vmem:[%s3857 + $0x28] sm:$0xff]
        %v3864 = vld [vmem:[%s3857 + $0x30] sm:$0xff]
        %v3865 = vld [vmem:[%s3857 + $0x38] sm:$0xff]
        %v3866 = vld [vmem:[%s3857 + $0x40] sm:$0xff]
        %v3867 = vld [vmem:[%s3857 + $0x48] sm:$0xff]
        %v3868 = vld [vmem:[%s3857 + $0x50] sm:$0xff]
        %v3869 = vld [vmem:[%s3857 + $0x58] sm:$0xff]
        %v3870 = vld [vmem:[%s3857 + $0x60] sm:$0xff]
        %v3871 = vld [vmem:[%s3857 + $0x68] sm:$0xff]
        %v3872 = vld [vmem:[%s3857 + $0x70] sm:$0xff]
        %v3873 = vld [vmem:[%s3857 + $0x78] sm:$0xff]
        %v3874 = vld [vmem:[%s3857 + $0x80] sm:$0xff]
        %v3875 = vld [vmem:[%s3857 + $0x88] sm:$0xff]
        %v3876 = vld [vmem:[%s3857 + $0x90] sm:$0xff]
        %v3877 = vld [vmem:[%s3857 + $0x98] sm:$0xff]
        %v3878 = vld [vmem:[%s3857 + $0xa0] sm:$0xff]
        %v3879 = vld [vmem:[%s3857 + $0xa8] sm:$0xff]
        %v3880 = vld [vmem:[%s3857 + $0xb0] sm:$0xff]
        %v3881 = vld [vmem:[%s3857 + $0xb8] sm:$0xff]
        %v3882 = vld [vmem:[%s3857 + $0xc0] sm:$0xff]
        %v3883 = vld [vmem:[%s3857 + $0xc8] sm:$0xff]
        %v3884 = vld [vmem:[%s3857 + $0xd0] sm:$0xff]
        %v3885 = vld [vmem:[%s3857 + $0xd8] sm:$0xff]
        %v3886 = vld [vmem:[%s3857 + $0xe0] sm:$0xff]
        %v3887 = vld [vmem:[%s3857 + $0xe8] sm:$0xff]
        %v3888 = vld [vmem:[%s3857 + $0xf0] sm:$0xff]
        %v3889 = vld [vmem:[%s3857 + $0xf8] sm:$0xff]
        %v3890 = vld [vmem:[%s3857 + $0x100] sm:$0xff]
        %v3891 = vld [vmem:[%s3857 + $0x108] sm:$0xff]
        %v3892 = vld [vmem:[%s3857 + $0x110] sm:$0xff]
        %v3893 = vld [vmem:[%s3857 + $0x118] sm:$0xff]
        %v3894 = vld [vmem:[%s3857 + $0x120] sm:$0xff]
        %v3895 = vld [vmem:[%s3857 + $0x128] sm:$0xff]
        %v3896 = vld [vmem:[%s3857 + $0x130] sm:$0xff]
        %v3897 = vld [vmem:[%s3857 + $0x138] sm:$0xff]
        %v3898 = vld [vmem:[%s3857 + $0x140] sm:$0xff]
        %v3899 = vld [vmem:[%s3857 + $0x148] sm:$0xff]
        %v3900 = vld [vmem:[%s3857 + $0x150] sm:$0xff]
        %v3901 = vld [vmem:[%s3857 + $0x158] sm:$0xff]
        %v3902 = vld [vmem:[%s3857 + $0x160] sm:$0xff]
        %v3903 = vld [vmem:[%s3857 + $0x168] sm:$0xff]
        %v3904 = vld [vmem:[%s3857 + $0x170] sm:$0xff]
        %v3905 = vld [vmem:[%s3857 + $0x178] sm:$0xff]
        %v3906 = vld [vmem:[%s3857 + $0x180] sm:$0xff]
        %v3907 = vld [vmem:[%s3857 + $0x188] sm:$0xff]
        %v3908 = vld [vmem:[%s3857 + $0x190] sm:$0xff]
        %v3909 = vld [vmem:[%s3857 + $0x198] sm:$0xff]
        %v3910 = vld [vmem:[%s3857 + $0x1a0] sm:$0xff]
        %v3911 = vld [vmem:[%s3857 + $0x1a8] sm:$0xff]
        %v3912 = vld [vmem:[%s3857 + $0x1b0] sm:$0xff]
        %v3913 = vld [vmem:[%s3857 + $0x1b8] sm:$0xff]
        %v3914 = vld [vmem:[%s3857 + $0x1c0] sm:$0xff]
        %v3915 = vld [vmem:[%s3857 + $0x1c8] sm:$0xff]
        %v3916 = vld [vmem:[%s3857 + $0x1d0] sm:$0xff]
        %v3917 = vld [vmem:[%s3857 + $0x1d8] sm:$0xff]
        %v3918 = vld [vmem:[%s3857 + $0x1e0] sm:$0xff]
        %v3919 = vld [vmem:[%s3857 + $0x1e8] sm:$0xff]
        %v3920 = vld [vmem:[%s3857 + $0x1f0] sm:$0xff]
        %v3921 = vld [vmem:[%s3857 + $0x1f8] sm:$0xff]
        %v3922 = vld [vmem:[%s3857 + $0x200] sm:$0xff]
        %v3923 = vld [vmem:[%s3857 + $0x208] sm:$0xff]
        %v3924 = vld [vmem:[%s3857 + $0x210] sm:$0xff]
        %v3925 = vld [vmem:[%s3857 + $0x218] sm:$0xff]
        %v3926 = vld [vmem:[%s3857 + $0x220] sm:$0xff]
        %v3927 = vld [vmem:[%s3857 + $0x228] sm:$0xff]
        %v3928 = vld [vmem:[%s3857 + $0x230] sm:$0xff]
        %v3929 = vld [vmem:[%s3857 + $0x238] sm:$0xff]
        %v3930 = vld [vmem:[%s3857 + $0x240] sm:$0xff]
        %v3931 = vld [vmem:[%s3857 + $0x248] sm:$0xff]
        %v3932 = vld [vmem:[%s3857 + $0x250] sm:$0xff]
        %v3933 = vld [vmem:[%s3857 + $0x258] sm:$0xff]
        %v3934 = vld [vmem:[%s3857 + $0x260] sm:$0xff]
        %v3935 = vld [vmem:[%s3857 + $0x268] sm:$0xff]
        %v3936 = vld [vmem:[%s3857 + $0x270] sm:$0xff]
        %v3937 = vld [vmem:[%s3857 + $0x278] sm:$0xff]
        %v3938 = vld [vmem:[%s3857 + $0x280] sm:$0xff]
        %v3939 = vld [vmem:[%s3857 + $0x288] sm:$0xff]
        %v3940 = vld [vmem:[%s3857 + $0x290] sm:$0xff]
        %v3941 = vld [vmem:[%s3857 + $0x298] sm:$0xff]
        %v3942 = vld [vmem:[%s3857 + $0x2a0] sm:$0xff]
        %v3943 = vld [vmem:[%s3857 + $0x2a8] sm:$0xff]
        %v3944 = vld [vmem:[%s3857 + $0x2b0] sm:$0xff]
        %v3945 = vld [vmem:[%s3857 + $0x2b8] sm:$0xff]
        %v3946 = vld [vmem:[%s3857 + $0x2c0] sm:$0xff]
        %v3947 = vld [vmem:[%s3857 + $0x2c8] sm:$0xff]
        %v3948 = vld [vmem:[%s3857 + $0x2d0] sm:$0xff]
        %v3949 = vld [vmem:[%s3857 + $0x2d8] sm:$0xff]
        %v3950 = vld [vmem:[%s3857 + $0x2e0] sm:$0xff]
        %v3951 = vld [vmem:[%s3857 + $0x2e8] sm:$0xff]
        %v3952 = vld [vmem:[%s3857 + $0x2f0] sm:$0xff]
        %v3953 = vld [vmem:[%s3857 + $0x2f8] sm:$0xff]
        %v3954 = vld [vmem:[%s3857 + $0x300] sm:$0xff]
        %v3955 = vld [vmem:[%s3857 + $0x308] sm:$0xff]
        %v3956 = vld [vmem:[%s3857 + $0x310] sm:$0xff]
        %v3957 = vld [vmem:[%s3857 + $0x318] sm:$0xff]
        %v3958 = vld [vmem:[%s3857 + $0x320] sm:$0xff]
        %v3959 = vld [vmem:[%s3857 + $0x328] sm:$0xff]
        %v3960 = vld [vmem:[%s3857 + $0x330] sm:$0xff]
        %v3961 = vld [vmem:[%s3857 + $0x338] sm:$0xff]
        %v3962 = vld [vmem:[%s3857 + $0x340] sm:$0xff]
        %v3963 = vld [vmem:[%s3857 + $0x348] sm:$0xff]
        %v3964 = vld [vmem:[%s3857 + $0x350] sm:$0xff]
        %v3965 = vld [vmem:[%s3857 + $0x358] sm:$0xff]
        %v3966 = vld [vmem:[%s3857 + $0x360] sm:$0xff]
        %v3967 = vld [vmem:[%s3857 + $0x368] sm:$0xff]
        %v3968 = vld [vmem:[%s3857 + $0x370] sm:$0xff]
        %v3969 = vld [vmem:[%s3857 + $0x378] sm:$0xff]
        %v3970 = vld [vmem:[%s3857 + $0x380] sm:$0xff]
        %v3971 = vld [vmem:[%s3857 + $0x388] sm:$0xff]
        %v3972 = vld [vmem:[%s3857 + $0x390] sm:$0xff]
        %v3973 = vld [vmem:[%s3857 + $0x398] sm:$0xff]
        %v3974 = vld [vmem:[%s3857 + $0x3a0] sm:$0xff]
        %v3975 = vld [vmem:[%s3857 + $0x3a8] sm:$0xff]
        %v3976 = vld [vmem:[%s3857 + $0x3b0] sm:$0xff]
        %v3977 = vld [vmem:[%s3857 + $0x3b8] sm:$0xff]
        %v3978 = vld [vmem:[%s3857 + $0x3c0] sm:$0xff]
        %v3979 = vld [vmem:[%s3857 + $0x3c8] sm:$0xff]
        %v3980 = vld [vmem:[%s3857 + $0x3d0] sm:$0xff]
        %v3981 = vld [vmem:[%s3857 + $0x3d8] sm:$0xff]
        %v3982 = vld [vmem:[%s3857 + $0x3e0] sm:$0xff]
        %v3983 = vld [vmem:[%s3857 + $0x3e8] sm:$0xff]
        %v3984 = vld [vmem:[%s3857 + $0x3f0] sm:$0xff]
        %v3985 = vld [vmem:[%s3857 + $0x3f8] sm:$0xff]
        %v3986 = vld [vmem:[%s3857 + $0x400] sm:$0xff]
        %v3987 = vld [vmem:[%s3857 + $0x408] sm:$0xff]
        %v3988 = vld [vmem:[%s3857 + $0x410] sm:$0xff]
        %v3989 = vld [vmem:[%s3857 + $0x418] sm:$0xff]
        %v3990 = vld [vmem:[%s3857 + $0x420] sm:$0xff]
        %v3991 = vld [vmem:[%s3857 + $0x428] sm:$0xff]
        %v3992 = vld [vmem:[%s3857 + $0x430] sm:$0xff]
        %v3993 = vld [vmem:[%s3857 + $0x438] sm:$0xff]
        %v3994 = vld [vmem:[%s3857 + $0x440] sm:$0xff]
        %v3995 = vld [vmem:[%s3857 + $0x448] sm:$0xff]
        %v3996 = vld [vmem:[%s3857 + $0x450] sm:$0xff]
        %v3997 = vld [vmem:[%s3857 + $0x458] sm:$0xff]
        %v3998 = vld [vmem:[%s3857 + $0x460] sm:$0xff]
        %v3999 = vld [vmem:[%s3857 + $0x468] sm:$0xff]
        %v4000 = vld [vmem:[%s3857 + $0x470] sm:$0xff]
        %v4001 = vld [vmem:[%s3857 + $0x478] sm:$0xff]
        %v4002 = vld [vmem:[%s3857 + $0x480] sm:$0xff]
        %v4003 = vld [vmem:[%s3857 + $0x488] sm:$0xff]
        %v4004 = vld [vmem:[%s3857 + $0x490] sm:$0xff]
        %v4005 = vld [vmem:[%s3857 + $0x498] sm:$0xff]
        %v4006 = vld [vmem:[%s3857 + $0x4a0] sm:$0xff]
        %v4007 = vld [vmem:[%s3857 + $0x4a8] sm:$0xff]
        %v4008 = vld [vmem:[%s3857 + $0x4b0] sm:$0xff]
        %v4009 = vld [vmem:[%s3857 + $0x4b8] sm:$0xff]
        %v4010 = vld [vmem:[%s3857 + $0x4c0] sm:$0xff]
        %v4011 = vld [vmem:[%s3857 + $0x4c8] sm:$0xff]
        %v4012 = vld [vmem:[%s3857 + $0x4d0] sm:$0xff]
        %v4013 = vld [vmem:[%s3857 + $0x4d8] sm:$0xff]
        %v4014 = vld [vmem:[%s3857 + $0x4e0] sm:$0xff]
        %v4015 = vld [vmem:[%s3857 + $0x4e8] sm:$0xff]
        %v4016 = vld [vmem:[%s3857 + $0x4f0] sm:$0xff]
        %v4017 = vld [vmem:[%s3857 + $0x4f8] sm:$0xff]
        %v4018 = vld [vmem:[%s3857 + $0x500] sm:$0x33]
        %v4019 = vld [vmem:[%s3857 + $0x508] sm:$0x33]
        %v4020 = vld [vmem:[%s3857 + $0x510] sm:$0x33]
        %v4021 = vld [vmem:[%s3857 + $0x518] sm:$0x33]
        %v4186 = vunpack.c.l.b16 %v3858
        %v4187 = vunpack.c.h.b16 %v3858
        %v4188 = vunpack.c.l.b16 %v3859
        %v4189 = vunpack.c.h.b16 %v3859
        %v4190 = vunpack.c.l.b16 %v3860
        %v4191 = vunpack.c.h.b16 %v3860
        %v4192 = vunpack.c.l.b16 %v3861
        %v4193 = vunpack.c.h.b16 %v3861
        %v4194 = vunpack.c.l.b16 %v3862
        %v4195 = vunpack.c.h.b16 %v3862
        %v4196 = vunpack.c.l.b16 %v3863
        %v4197 = vunpack.c.h.b16 %v3863
        %v4198 = vunpack.c.l.b16 %v3864
        %v4199 = vunpack.c.h.b16 %v3864
        %v4200 = vunpack.c.l.b16 %v3865
        %v4201 = vunpack.c.h.b16 %v3865
        %v4202 = vunpack.c.l.b16 %v3866
        %v4203 = vunpack.c.h.b16 %v3866
        %v4204 = vunpack.c.l.b16 %v3867
        %v4205 = vunpack.c.h.b16 %v3867
        %v4206 = vunpack.c.l.b16 %v3868
        %v4207 = vunpack.c.h.b16 %v3868
        %v4208 = vunpack.c.l.b16 %v3869
        %v4209 = vunpack.c.h.b16 %v3869
        %v4210 = vunpack.c.l.b16 %v3870
        %v4211 = vunpack.c.h.b16 %v3870
        %v4212 = vunpack.c.l.b16 %v3871
        %v4213 = vunpack.c.h.b16 %v3871
        %v4214 = vunpack.c.l.b16 %v3872
        %v4215 = vunpack.c.h.b16 %v3872
        %v4216 = vunpack.c.l.b16 %v3873
        %v4217 = vunpack.c.h.b16 %v3873
        %v4218 = vunpack.c.l.b16 %v3874
        %v4219 = vunpack.c.h.b16 %v3874
        %v4220 = vunpack.c.l.b16 %v3875
        %v4221 = vunpack.c.h.b16 %v3875
        %v4222 = vunpack.c.l.b16 %v3876
        %v4223 = vunpack.c.h.b16 %v3876
        %v4224 = vunpack.c.l.b16 %v3877
        %v4225 = vunpack.c.h.b16 %v3877
        %v4226 = vunpack.c.l.b16 %v3878
        %v4227 = vunpack.c.h.b16 %v3878
        %v4228 = vunpack.c.l.b16 %v3879
        %v4229 = vunpack.c.h.b16 %v3879
        %v4230 = vunpack.c.l.b16 %v3880
        %v4231 = vunpack.c.h.b16 %v3880
        %v4232 = vunpack.c.l.b16 %v3881
        %v4233 = vunpack.c.h.b16 %v3881
        %v4234 = vunpack.c.l.b16 %v3882
        %v4235 = vunpack.c.h.b16 %v3882
        %v4236 = vunpack.c.l.b16 %v3883
        %v4237 = vunpack.c.h.b16 %v3883
        %v4238 = vunpack.c.l.b16 %v3884
        %v4239 = vunpack.c.h.b16 %v3884
        %v4240 = vunpack.c.l.b16 %v3885
        %v4241 = vunpack.c.h.b16 %v3885
        %v4242 = vunpack.c.l.b16 %v3886
        %v4243 = vunpack.c.h.b16 %v3886
        %v4244 = vunpack.c.l.b16 %v3887
        %v4245 = vunpack.c.h.b16 %v3887
        %v4246 = vunpack.c.l.b16 %v3888
        %v4247 = vunpack.c.h.b16 %v3888
        %v4248 = vunpack.c.l.b16 %v3889
        %v4249 = vunpack.c.h.b16 %v3889
        %v4250 = vunpack.c.l.b16 %v3890
        %v4251 = vunpack.c.h.b16 %v3890
        %v4252 = vunpack.c.l.b16 %v3891
        %v4253 = vunpack.c.h.b16 %v3891
        %v4254 = vunpack.c.l.b16 %v3892
        %v4255 = vunpack.c.h.b16 %v3892
        %v4256 = vunpack.c.l.b16 %v3893
        %v4257 = vunpack.c.h.b16 %v3893
        %v4258 = vunpack.c.l.b16 %v3894
        %v4259 = vunpack.c.h.b16 %v3894
        %v4260 = vunpack.c.l.b16 %v3895
        %v4261 = vunpack.c.h.b16 %v3895
        %v4262 = vunpack.c.l.b16 %v3896
        %v4263 = vunpack.c.h.b16 %v3896
        %v4264 = vunpack.c.l.b16 %v3897
        %v4265 = vunpack.c.h.b16 %v3897
        %v4266 = vunpack.c.l.b16 %v3898
        %v4267 = vunpack.c.h.b16 %v3898
        %v4268 = vunpack.c.l.b16 %v3899
        %v4269 = vunpack.c.h.b16 %v3899
        %v4270 = vunpack.c.l.b16 %v3900
        %v4271 = vunpack.c.h.b16 %v3900
        %v4272 = vunpack.c.l.b16 %v3901
        %v4273 = vunpack.c.h.b16 %v3901
        %v4274 = vunpack.c.l.b16 %v3902
        %v4275 = vunpack.c.h.b16 %v3902
        %v4276 = vunpack.c.l.b16 %v3903
        %v4277 = vunpack.c.h.b16 %v3903
        %v4278 = vunpack.c.l.b16 %v3904
        %v4279 = vunpack.c.h.b16 %v3904
        %v4280 = vunpack.c.l.b16 %v3905
        %v4281 = vunpack.c.h.b16 %v3905
        %v4282 = vunpack.c.l.b16 %v3906
        %v4283 = vunpack.c.h.b16 %v3906
        %v4284 = vunpack.c.l.b16 %v3907
        %v4285 = vunpack.c.h.b16 %v3907
        %v4286 = vunpack.c.l.b16 %v3908
        %v4287 = vunpack.c.h.b16 %v3908
        %v4288 = vunpack.c.l.b16 %v3909
        %v4289 = vunpack.c.h.b16 %v3909
        %v4290 = vunpack.c.l.b16 %v3910
        %v4291 = vunpack.c.h.b16 %v3910
        %v4292 = vunpack.c.l.b16 %v3911
        %v4293 = vunpack.c.h.b16 %v3911
        %v4294 = vunpack.c.l.b16 %v3912
        %v4295 = vunpack.c.h.b16 %v3912
        %v4296 = vunpack.c.l.b16 %v3913
        %v4297 = vunpack.c.h.b16 %v3913
        %v4298 = vunpack.c.l.b16 %v3914
        %v4299 = vunpack.c.h.b16 %v3914
        %v4300 = vunpack.c.l.b16 %v3915
        %v4301 = vunpack.c.h.b16 %v3915
        %v4302 = vunpack.c.l.b16 %v3916
        %v4303 = vunpack.c.h.b16 %v3916
        %v4304 = vunpack.c.l.b16 %v3917
        %v4305 = vunpack.c.h.b16 %v3917
        %v4306 = vunpack.c.l.b16 %v3918
        %v4307 = vunpack.c.h.b16 %v3918
        %v4308 = vunpack.c.l.b16 %v3919
        %v4309 = vunpack.c.h.b16 %v3919
        %v4310 = vunpack.c.l.b16 %v3920
        %v4311 = vunpack.c.h.b16 %v3920
        %v4312 = vunpack.c.l.b16 %v3921
        %v4313 = vunpack.c.h.b16 %v3921
        %v4314 = vunpack.c.l.b16 %v3922
        %v4315 = vunpack.c.h.b16 %v3922
        %v4316 = vunpack.c.l.b16 %v3923
        %v4317 = vunpack.c.h.b16 %v3923
        %v4318 = vunpack.c.l.b16 %v3924
        %v4319 = vunpack.c.h.b16 %v3924
        %v4320 = vunpack.c.l.b16 %v3925
        %v4321 = vunpack.c.h.b16 %v3925
        %v4322 = vunpack.c.l.b16 %v3926
        %v4323 = vunpack.c.h.b16 %v3926
        %v4324 = vunpack.c.l.b16 %v3927
        %v4325 = vunpack.c.h.b16 %v3927
        %v4326 = vunpack.c.l.b16 %v3928
        %v4327 = vunpack.c.h.b16 %v3928
        %v4328 = vunpack.c.l.b16 %v3929
        %v4329 = vunpack.c.h.b16 %v3929
        %v4330 = vunpack.c.l.b16 %v3930
        %v4331 = vunpack.c.h.b16 %v3930
        %v4332 = vunpack.c.l.b16 %v3931
        %v4333 = vunpack.c.h.b16 %v3931
        %v4334 = vunpack.c.l.b16 %v3932
        %v4335 = vunpack.c.h.b16 %v3932
        %v4336 = vunpack.c.l.b16 %v3933
        %v4337 = vunpack.c.h.b16 %v3933
        %v4338 = vunpack.c.l.b16 %v3934
        %v4339 = vunpack.c.h.b16 %v3934
        %v4340 = vunpack.c.l.b16 %v3935
        %v4341 = vunpack.c.h.b16 %v3935
        %v4342 = vunpack.c.l.b16 %v3936
        %v4343 = vunpack.c.h.b16 %v3936
        %v4344 = vunpack.c.l.b16 %v3937
        %v4345 = vunpack.c.h.b16 %v3937
        %v4346 = vunpack.c.l.b16 %v3938
        %v4347 = vunpack.c.h.b16 %v3938
        %v4348 = vunpack.c.l.b16 %v3939
        %v4349 = vunpack.c.h.b16 %v3939
        %v4350 = vunpack.c.l.b16 %v3940
        %v4351 = vunpack.c.h.b16 %v3940
        %v4352 = vunpack.c.l.b16 %v3941
        %v4353 = vunpack.c.h.b16 %v3941
        %v4354 = vunpack.c.l.b16 %v3942
        %v4355 = vunpack.c.h.b16 %v3942
        %v4356 = vunpack.c.l.b16 %v3943
        %v4357 = vunpack.c.h.b16 %v3943
        %v4358 = vunpack.c.l.b16 %v3944
        %v4359 = vunpack.c.h.b16 %v3944
        %v4360 = vunpack.c.l.b16 %v3945
        %v4361 = vunpack.c.h.b16 %v3945
        %v4362 = vunpack.c.l.b16 %v3946
        %v4363 = vunpack.c.h.b16 %v3946
        %v4364 = vunpack.c.l.b16 %v3947
        %v4365 = vunpack.c.h.b16 %v3947
        %v4366 = vunpack.c.l.b16 %v3948
        %v4367 = vunpack.c.h.b16 %v3948
        %v4368 = vunpack.c.l.b16 %v3949
        %v4369 = vunpack.c.h.b16 %v3949
        %v4370 = vunpack.c.l.b16 %v3950
        %v4371 = vunpack.c.h.b16 %v3950
        %v4372 = vunpack.c.l.b16 %v3951
        %v4373 = vunpack.c.h.b16 %v3951
        %v4374 = vunpack.c.l.b16 %v3952
        %v4375 = vunpack.c.h.b16 %v3952
        %v4376 = vunpack.c.l.b16 %v3953
        %v4377 = vunpack.c.h.b16 %v3953
        %v4378 = vunpack.c.l.b16 %v3954
        %v4379 = vunpack.c.h.b16 %v3954
        %v4380 = vunpack.c.l.b16 %v3955
        %v4381 = vunpack.c.h.b16 %v3955
        %v4382 = vunpack.c.l.b16 %v3956
        %v4383 = vunpack.c.h.b16 %v3956
        %v4384 = vunpack.c.l.b16 %v3957
        %v4385 = vunpack.c.h.b16 %v3957
        %v4386 = vunpack.c.l.b16 %v3958
        %v4387 = vunpack.c.h.b16 %v3958
        %v4388 = vunpack.c.l.b16 %v3959
        %v4389 = vunpack.c.h.b16 %v3959
        %v4390 = vunpack.c.l.b16 %v3960
        %v4391 = vunpack.c.h.b16 %v3960
        %v4392 = vunpack.c.l.b16 %v3961
        %v4393 = vunpack.c.h.b16 %v3961
        %v4394 = vunpack.c.l.b16 %v3962
        %v4395 = vunpack.c.h.b16 %v3962
        %v4396 = vunpack.c.l.b16 %v3963
        %v4397 = vunpack.c.h.b16 %v3963
        %v4398 = vunpack.c.l.b16 %v3964
        %v4399 = vunpack.c.h.b16 %v3964
        %v4400 = vunpack.c.l.b16 %v3965
        %v4401 = vunpack.c.h.b16 %v3965
        %v4402 = vunpack.c.l.b16 %v3966
        %v4403 = vunpack.c.h.b16 %v3966
        %v4404 = vunpack.c.l.b16 %v3967
        %v4405 = vunpack.c.h.b16 %v3967
        %v4406 = vunpack.c.l.b16 %v3968
        %v4407 = vunpack.c.h.b16 %v3968
        %v4408 = vunpack.c.l.b16 %v3969
        %v4409 = vunpack.c.h.b16 %v3969
        %v4410 = vunpack.c.l.b16 %v3970
        %v4411 = vunpack.c.h.b16 %v3970
        %v4412 = vunpack.c.l.b16 %v3971
        %v4413 = vunpack.c.h.b16 %v3971
        %v4414 = vunpack.c.l.b16 %v3972
        %v4415 = vunpack.c.h.b16 %v3972
        %v4416 = vunpack.c.l.b16 %v3973
        %v4417 = vunpack.c.h.b16 %v3973
        %v4418 = vunpack.c.l.b16 %v3974
        %v4419 = vunpack.c.h.b16 %v3974
        %v4420 = vunpack.c.l.b16 %v3975
        %v4421 = vunpack.c.h.b16 %v3975
        %v4422 = vunpack.c.l.b16 %v3976
        %v4423 = vunpack.c.h.b16 %v3976
        %v4424 = vunpack.c.l.b16 %v3977
        %v4425 = vunpack.c.h.b16 %v3977
        %v4426 = vunpack.c.l.b16 %v3978
        %v4427 = vunpack.c.h.b16 %v3978
        %v4428 = vunpack.c.l.b16 %v3979
        %v4429 = vunpack.c.h.b16 %v3979
        %v4430 = vunpack.c.l.b16 %v3980
        %v4431 = vunpack.c.h.b16 %v3980
        %v4432 = vunpack.c.l.b16 %v3981
        %v4433 = vunpack.c.h.b16 %v3981
        %v4434 = vunpack.c.l.b16 %v3982
        %v4435 = vunpack.c.h.b16 %v3982
        %v4436 = vunpack.c.l.b16 %v3983
        %v4437 = vunpack.c.h.b16 %v3983
        %v4438 = vunpack.c.l.b16 %v3984
        %v4439 = vunpack.c.h.b16 %v3984
        %v4440 = vunpack.c.l.b16 %v3985
        %v4441 = vunpack.c.h.b16 %v3985
        %v4442 = vunpack.c.l.b16 %v3986
        %v4443 = vunpack.c.h.b16 %v3986
        %v4444 = vunpack.c.l.b16 %v3987
        %v4445 = vunpack.c.h.b16 %v3987
        %v4446 = vunpack.c.l.b16 %v3988
        %v4447 = vunpack.c.h.b16 %v3988
        %v4448 = vunpack.c.l.b16 %v3989
        %v4449 = vunpack.c.h.b16 %v3989
        %v4450 = vunpack.c.l.b16 %v3990
        %v4451 = vunpack.c.h.b16 %v3990
        %v4452 = vunpack.c.l.b16 %v3991
        %v4453 = vunpack.c.h.b16 %v3991
        %v4454 = vunpack.c.l.b16 %v3992
        %v4455 = vunpack.c.h.b16 %v3992
        %v4456 = vunpack.c.l.b16 %v3993
        %v4457 = vunpack.c.h.b16 %v3993
        %v4458 = vunpack.c.l.b16 %v3994
        %v4459 = vunpack.c.h.b16 %v3994
        %v4460 = vunpack.c.l.b16 %v3995
        %v4461 = vunpack.c.h.b16 %v3995
        %v4462 = vunpack.c.l.b16 %v3996
        %v4463 = vunpack.c.h.b16 %v3996
        %v4464 = vunpack.c.l.b16 %v3997
        %v4465 = vunpack.c.h.b16 %v3997
        %v4466 = vunpack.c.l.b16 %v3998
        %v4467 = vunpack.c.h.b16 %v3998
        %v4468 = vunpack.c.l.b16 %v3999
        %v4469 = vunpack.c.h.b16 %v3999
        %v4470 = vunpack.c.l.b16 %v4000
        %v4471 = vunpack.c.h.b16 %v4000
        %v4472 = vunpack.c.l.b16 %v4001
        %v4473 = vunpack.c.h.b16 %v4001
        %v4474 = vunpack.c.l.b16 %v4002
        %v4475 = vunpack.c.h.b16 %v4002
        %v4476 = vunpack.c.l.b16 %v4003
        %v4477 = vunpack.c.h.b16 %v4003
        %v4478 = vunpack.c.l.b16 %v4004
        %v4479 = vunpack.c.h.b16 %v4004
        %v4480 = vunpack.c.l.b16 %v4005
        %v4481 = vunpack.c.h.b16 %v4005
        %v4482 = vunpack.c.l.b16 %v4006
        %v4483 = vunpack.c.h.b16 %v4006
        %v4484 = vunpack.c.l.b16 %v4007
        %v4485 = vunpack.c.h.b16 %v4007
        %v4486 = vunpack.c.l.b16 %v4008
        %v4487 = vunpack.c.h.b16 %v4008
        %v4488 = vunpack.c.l.b16 %v4009
        %v4489 = vunpack.c.h.b16 %v4009
        %v4490 = vunpack.c.l.b16 %v4010
        %v4491 = vunpack.c.h.b16 %v4010
        %v4492 = vunpack.c.l.b16 %v4011
        %v4493 = vunpack.c.h.b16 %v4011
        %v4494 = vunpack.c.l.b16 %v4012
        %v4495 = vunpack.c.h.b16 %v4012
        %v4496 = vunpack.c.l.b16 %v4013
        %v4497 = vunpack.c.h.b16 %v4013
        %v4498 = vunpack.c.l.b16 %v4014
        %v4499 = vunpack.c.h.b16 %v4014
        %v4500 = vunpack.c.l.b16 %v4015
        %v4501 = vunpack.c.h.b16 %v4015
        %v4502 = vunpack.c.l.b16 %v4016
        %v4503 = vunpack.c.h.b16 %v4016
        %v4504 = vunpack.c.l.b16 %v4017
        %v4505 = vunpack.c.h.b16 %v4017
        %v4506 = vunpack.c.l.b16 %v4018
        %v4507 = vunpack.c.h.b16 %v4018
        %v4508 = vunpack.c.l.b16 %v4019
        %v4509 = vunpack.c.h.b16 %v4019
        %v4510 = vunpack.c.l.b16 %v4020
        %v4511 = vunpack.c.h.b16 %v4020
        %v4512 = vunpack.c.l.b16 %v4021
        %v4513 = vunpack.c.h.b16 %v4021
        %v4514 = vpack.c.b16 %v4194, %v4186
        %v4515 = vpack.c.b16 %v4195, %v4187
        %v4516 = vpack.c.b16 %v4196, %v4188
        %v4517 = vpack.c.b16 %v4197, %v4189
        %v4518 = vpack.c.b16 %v4198, %v4190
        %v4519 = vpack.c.b16 %v4199, %v4191
        %v4520 = vpack.c.b16 %v4200, %v4192
        %v4521 = vpack.c.b16 %v4201, %v4193
        %v4522 = vpack.c.b16 %v4210, %v4202
        %v4523 = vpack.c.b16 %v4211, %v4203
        %v4524 = vpack.c.b16 %v4212, %v4204
        %v4525 = vpack.c.b16 %v4213, %v4205
        %v4526 = vpack.c.b16 %v4214, %v4206
        %v4527 = vpack.c.b16 %v4215, %v4207
        %v4528 = vpack.c.b16 %v4216, %v4208
        %v4529 = vpack.c.b16 %v4217, %v4209
        %v4530 = vpack.c.b16 %v4226, %v4218
        %v4531 = vpack.c.b16 %v4227, %v4219
        %v4532 = vpack.c.b16 %v4228, %v4220
        %v4533 = vpack.c.b16 %v4229, %v4221
        %v4534 = vpack.c.b16 %v4230, %v4222
        %v4535 = vpack.c.b16 %v4231, %v4223
        %v4536 = vpack.c.b16 %v4232, %v4224
        %v4537 = vpack.c.b16 %v4233, %v4225
        %v4538 = vpack.c.b16 %v4242, %v4234
        %v4539 = vpack.c.b16 %v4243, %v4235
        %v4540 = vpack.c.b16 %v4244, %v4236
        %v4541 = vpack.c.b16 %v4245, %v4237
        %v4542 = vpack.c.b16 %v4246, %v4238
        %v4543 = vpack.c.b16 %v4247, %v4239
        %v4544 = vpack.c.b16 %v4248, %v4240
        %v4545 = vpack.c.b16 %v4249, %v4241
        %v4546 = vpack.c.b16 %v4258, %v4250
        %v4547 = vpack.c.b16 %v4259, %v4251
        %v4548 = vpack.c.b16 %v4260, %v4252
        %v4549 = vpack.c.b16 %v4261, %v4253
        %v4550 = vpack.c.b16 %v4262, %v4254
        %v4551 = vpack.c.b16 %v4263, %v4255
        %v4552 = vpack.c.b16 %v4264, %v4256
        %v4553 = vpack.c.b16 %v4265, %v4257
        %v4554 = vpack.c.b16 %v4274, %v4266
        %v4555 = vpack.c.b16 %v4275, %v4267
        %v4556 = vpack.c.b16 %v4276, %v4268
        %v4557 = vpack.c.b16 %v4277, %v4269
        %v4558 = vpack.c.b16 %v4278, %v4270
        %v4559 = vpack.c.b16 %v4279, %v4271
        %v4560 = vpack.c.b16 %v4280, %v4272
        %v4561 = vpack.c.b16 %v4281, %v4273
        %v4562 = vpack.c.b16 %v4290, %v4282
        %v4563 = vpack.c.b16 %v4291, %v4283
        %v4564 = vpack.c.b16 %v4292, %v4284
        %v4565 = vpack.c.b16 %v4293, %v4285
        %v4566 = vpack.c.b16 %v4294, %v4286
        %v4567 = vpack.c.b16 %v4295, %v4287
        %v4568 = vpack.c.b16 %v4296, %v4288
        %v4569 = vpack.c.b16 %v4297, %v4289
        %v4570 = vpack.c.b16 %v4306, %v4298
        %v4571 = vpack.c.b16 %v4307, %v4299
        %v4572 = vpack.c.b16 %v4308, %v4300
        %v4573 = vpack.c.b16 %v4309, %v4301
        %v4574 = vpack.c.b16 %v4310, %v4302
        %v4575 = vpack.c.b16 %v4311, %v4303
        %v4576 = vpack.c.b16 %v4312, %v4304
        %v4577 = vpack.c.b16 %v4313, %v4305
        %v4578 = vpack.c.b16 %v4322, %v4314
        %v4579 = vpack.c.b16 %v4323, %v4315
        %v4580 = vpack.c.b16 %v4324, %v4316
        %v4581 = vpack.c.b16 %v4325, %v4317
        %v4582 = vpack.c.b16 %v4326, %v4318
        %v4583 = vpack.c.b16 %v4327, %v4319
        %v4584 = vpack.c.b16 %v4328, %v4320
        %v4585 = vpack.c.b16 %v4329, %v4321
        %v4586 = vpack.c.b16 %v4338, %v4330
        %v4587 = vpack.c.b16 %v4339, %v4331
        %v4588 = vpack.c.b16 %v4340, %v4332
        %v4589 = vpack.c.b16 %v4341, %v4333
        %v4590 = vpack.c.b16 %v4342, %v4334
        %v4591 = vpack.c.b16 %v4343, %v4335
        %v4592 = vpack.c.b16 %v4344, %v4336
        %v4593 = vpack.c.b16 %v4345, %v4337
        %v4594 = vpack.c.b16 %v4354, %v4346
        %v4595 = vpack.c.b16 %v4355, %v4347
        %v4596 = vpack.c.b16 %v4356, %v4348
        %v4597 = vpack.c.b16 %v4357, %v4349
        %v4598 = vpack.c.b16 %v4358, %v4350
        %v4599 = vpack.c.b16 %v4359, %v4351
        %v4600 = vpack.c.b16 %v4360, %v4352
        %v4601 = vpack.c.b16 %v4361, %v4353
        %v4602 = vpack.c.b16 %v4370, %v4362
        %v4603 = vpack.c.b16 %v4371, %v4363
        %v4604 = vpack.c.b16 %v4372, %v4364
        %v4605 = vpack.c.b16 %v4373, %v4365
        %v4606 = vpack.c.b16 %v4374, %v4366
        %v4607 = vpack.c.b16 %v4375, %v4367
        %v4608 = vpack.c.b16 %v4376, %v4368
        %v4609 = vpack.c.b16 %v4377, %v4369
        %v4610 = vpack.c.b16 %v4386, %v4378
        %v4611 = vpack.c.b16 %v4387, %v4379
        %v4612 = vpack.c.b16 %v4388, %v4380
        %v4613 = vpack.c.b16 %v4389, %v4381
        %v4614 = vpack.c.b16 %v4390, %v4382
        %v4615 = vpack.c.b16 %v4391, %v4383
        %v4616 = vpack.c.b16 %v4392, %v4384
        %v4617 = vpack.c.b16 %v4393, %v4385
        %v4618 = vpack.c.b16 %v4402, %v4394
        %v4619 = vpack.c.b16 %v4403, %v4395
        %v4620 = vpack.c.b16 %v4404, %v4396
        %v4621 = vpack.c.b16 %v4405, %v4397
        %v4622 = vpack.c.b16 %v4406, %v4398
        %v4623 = vpack.c.b16 %v4407, %v4399
        %v4624 = vpack.c.b16 %v4408, %v4400
        %v4625 = vpack.c.b16 %v4409, %v4401
        %v4626 = vpack.c.b16 %v4418, %v4410
        %v4627 = vpack.c.b16 %v4419, %v4411
        %v4628 = vpack.c.b16 %v4420, %v4412
        %v4629 = vpack.c.b16 %v4421, %v4413
        %v4630 = vpack.c.b16 %v4422, %v4414
        %v4631 = vpack.c.b16 %v4423, %v4415
        %v4632 = vpack.c.b16 %v4424, %v4416
        %v4633 = vpack.c.b16 %v4425, %v4417
        %v4634 = vpack.c.b16 %v4434, %v4426
        %v4635 = vpack.c.b16 %v4435, %v4427
        %v4636 = vpack.c.b16 %v4436, %v4428
        %v4637 = vpack.c.b16 %v4437, %v4429
        %v4638 = vpack.c.b16 %v4438, %v4430
        %v4639 = vpack.c.b16 %v4439, %v4431
        %v4640 = vpack.c.b16 %v4440, %v4432
        %v4641 = vpack.c.b16 %v4441, %v4433
        %v4642 = vpack.c.b16 %v4450, %v4442
        %v4643 = vpack.c.b16 %v4451, %v4443
        %v4644 = vpack.c.b16 %v4452, %v4444
        %v4645 = vpack.c.b16 %v4453, %v4445
        %v4646 = vpack.c.b16 %v4454, %v4446
        %v4647 = vpack.c.b16 %v4455, %v4447
        %v4648 = vpack.c.b16 %v4456, %v4448
        %v4649 = vpack.c.b16 %v4457, %v4449
        %v4650 = vpack.c.b16 %v4466, %v4458
        %v4651 = vpack.c.b16 %v4467, %v4459
        %v4652 = vpack.c.b16 %v4468, %v4460
        %v4653 = vpack.c.b16 %v4469, %v4461
        %v4654 = vpack.c.b16 %v4470, %v4462
        %v4655 = vpack.c.b16 %v4471, %v4463
        %v4656 = vpack.c.b16 %v4472, %v4464
        %v4657 = vpack.c.b16 %v4473, %v4465
        %v4658 = vpack.c.b16 %v4482, %v4474
        %v4659 = vpack.c.b16 %v4483, %v4475
        %v4660 = vpack.c.b16 %v4484, %v4476
        %v4661 = vpack.c.b16 %v4485, %v4477
        %v4662 = vpack.c.b16 %v4486, %v4478
        %v4663 = vpack.c.b16 %v4487, %v4479
        %v4664 = vpack.c.b16 %v4488, %v4480
        %v4665 = vpack.c.b16 %v4489, %v4481
        %v4666 = vpack.c.b16 %v4498, %v4490
        %v4667 = vpack.c.b16 %v4499, %v4491
        %v4668 = vpack.c.b16 %v4500, %v4492
        %v4669 = vpack.c.b16 %v4501, %v4493
        %v4670 = vpack.c.b16 %v4502, %v4494
        %v4671 = vpack.c.b16 %v4503, %v4495
        %v4672 = vpack.c.b16 %v4504, %v4496
        %v4673 = vpack.c.b16 %v4505, %v4497
        %v4674 = vpack.c.b16 %v4506, %v4506
        %v4675 = vpack.c.b16 %v4507, %v4507
        %v4676 = vpack.c.b16 %v4508, %v4508
        %v4677 = vpack.c.b16 %v4509, %v4509
        %v4678 = vpack.c.b16 %v4510, %v4510
        %v4679 = vpack.c.b16 %v4511, %v4511
        %v4680 = vpack.c.b16 %v4512, %v4512
        %v4681 = vpack.c.b16 %v4513, %v4513
        %vm4842 = vcmask 556032
        %v4844 = vsel %vm4842, %v3856, 0
        %v4847 = vsel %vm1345, %v4674, 0
        %v4850 = vsel %vm1345, %v4675, 0
        %v4853 = vsel %vm1345, %v4676, 0
        %v4856 = vsel %vm1345, %v4677, 0
        %v4859 = vsel %vm1345, %v4678, 0
        %v4862 = vsel %vm1345, %v4679, 0
        %v4865 = vsel %vm1345, %v4680, 0
        %v4868 = vsel %vm1345, %v4681, 0
        %4870 = vmatpush.bf16.msra.mxu0 %v4570
        %4871 = vmatpush.bf16.msra.mxu0 %v4562
        %4872 = vmatpush.bf16.msra.mxu0 %v4554
        %4873 = vmatpush.bf16.msra.mxu0 %v4546
        %4874 = vmatpush.bf16.msra.mxu0 %v4538
        %4875 = vmatpush.bf16.msra.mxu0 %v4530
        %4876 = vmatpush.bf16.msra.mxu0 %v4522
        %4877 = vmatpush.bf16.msra.mxu0 %v4514
        %4878 = vmatmul.bf16.gmra.mxu0 %v3854
        %v4879 = vpop.f32.mrf.mxu0
        %v4880 = vadd.f32 0.0, %v4879
        %v4881 = vpop.f32.mrf.mxu0
        %4882 = vdwg.mxu0
        %4883 = vmatpush.bf16.msra.mxu0 %v4634
        %4884 = vmatpush.bf16.msra.mxu0 %v4626
        %4885 = vmatpush.bf16.msra.mxu0 %v4618
        %4886 = vmatpush.bf16.msra.mxu0 %v4610
        %4887 = vmatpush.bf16.msra.mxu0 %v4602
        %4888 = vmatpush.bf16.msra.mxu0 %v4594
        %4889 = vmatpush.bf16.msra.mxu0 %v4586
        %4890 = vmatpush.bf16.msra.mxu0 %v4578
        %4891 = vmatmul.bf16.gmra.mxu0 %v3855
        %v4892 = vpop.f32.mrf.mxu0
        %v4893 = vadd.f32 %v4880, %v4892
        %v4894 = vpop.f32.mrf.mxu0
        %4895 = vdwg.mxu0
        %4896 = vmatpush.bf16.msra.mxu0 0
        %4897 = vmatpush.bf16.msra.mxu0 0
        %4898 = vmatpush.bf16.msra.mxu0 0
        %4899 = vmatpush.bf16.msra.mxu0 %v4847
        %4900 = vmatpush.bf16.msra.mxu0 %v4666
        %4901 = vmatpush.bf16.msra.mxu0 %v4658
        %4902 = vmatpush.bf16.msra.mxu0 %v4650
        %4903 = vmatpush.bf16.msra.mxu0 %v4642
        %4904 = vmatmul.bf16.gmra.mxu0 %v4844
        %v4905 = vpop.f32.mrf.mxu0
        %v4906 = vadd.f32 %v4893, %v4905
        %v4907 = vpop.f32.mrf.mxu0
        %4908 = vdwg.mxu0
        %4909 = vmatpush.bf16.msra.mxu0 %v4571
        %4910 = vmatpush.bf16.msra.mxu0 %v4563
        %4911 = vmatpush.bf16.msra.mxu0 %v4555
        %4912 = vmatpush.bf16.msra.mxu0 %v4547
        %4913 = vmatpush.bf16.msra.mxu0 %v4539
        %4914 = vmatpush.bf16.msra.mxu0 %v4531
        %4915 = vmatpush.bf16.msra.mxu0 %v4523
        %4916 = vmatpush.bf16.msra.mxu0 %v4515
        %4917 = vmatmul.bf16.gmra.mxu0 %v3854
        %v4918 = vpop.f32.mrf.mxu0
        %v4919 = vadd.f32 0.0, %v4918
        %v4920 = vpop.f32.mrf.mxu0
        %4921 = vdwg.mxu0
        %4922 = vmatpush.bf16.msra.mxu0 %v4635
        %4923 = vmatpush.bf16.msra.mxu0 %v4627
        %4924 = vmatpush.bf16.msra.mxu0 %v4619
        %4925 = vmatpush.bf16.msra.mxu0 %v4611
        %4926 = vmatpush.bf16.msra.mxu0 %v4603
        %4927 = vmatpush.bf16.msra.mxu0 %v4595
        %4928 = vmatpush.bf16.msra.mxu0 %v4587
        %4929 = vmatpush.bf16.msra.mxu0 %v4579
        %4930 = vmatmul.bf16.gmra.mxu0 %v3855
        %v4931 = vpop.f32.mrf.mxu0
        %v4932 = vadd.f32 %v4919, %v4931
        %v4933 = vpop.f32.mrf.mxu0
        %4934 = vdwg.mxu0
        %4935 = vmatpush.bf16.msra.mxu0 0
        %4936 = vmatpush.bf16.msra.mxu0 0
        %4937 = vmatpush.bf16.msra.mxu0 0
        %4938 = vmatpush.bf16.msra.mxu0 %v4850
        %4939 = vmatpush.bf16.msra.mxu0 %v4667
        %4940 = vmatpush.bf16.msra.mxu0 %v4659
        %4941 = vmatpush.bf16.msra.mxu0 %v4651
        %4942 = vmatpush.bf16.msra.mxu0 %v4643
        %4943 = vmatmul.bf16.gmra.mxu0 %v4844
        %v4944 = vpop.f32.mrf.mxu0
        %v4945 = vadd.f32 %v4932, %v4944
        %v4946 = vpop.f32.mrf.mxu0
        %4947 = vdwg.mxu0
        %4948 = vmatpush.bf16.msra.mxu0 %v4572
        %4949 = vmatpush.bf16.msra.mxu0 %v4564
        %4950 = vmatpush.bf16.msra.mxu0 %v4556
        %4951 = vmatpush.bf16.msra.mxu0 %v4548
        %4952 = vmatpush.bf16.msra.mxu0 %v4540
        %4953 = vmatpush.bf16.msra.mxu0 %v4532
        %4954 = vmatpush.bf16.msra.mxu0 %v4524
        %4955 = vmatpush.bf16.msra.mxu0 %v4516
        %4956 = vmatmul.bf16.gmra.mxu0 %v3854
        %v4957 = vpop.f32.mrf.mxu0
        %v4958 = vadd.f32 0.0, %v4957
        %v4959 = vpop.f32.mrf.mxu0
        %4960 = vdwg.mxu0
        %4961 = vmatpush.bf16.msra.mxu0 %v4636
        %4962 = vmatpush.bf16.msra.mxu0 %v4628
        %4963 = vmatpush.bf16.msra.mxu0 %v4620
        %4964 = vmatpush.bf16.msra.mxu0 %v4612
        %4965 = vmatpush.bf16.msra.mxu0 %v4604
        %4966 = vmatpush.bf16.msra.mxu0 %v4596
        %4967 = vmatpush.bf16.msra.mxu0 %v4588
        %4968 = vmatpush.bf16.msra.mxu0 %v4580
        %4969 = vmatmul.bf16.gmra.mxu0 %v3855
        %v4970 = vpop.f32.mrf.mxu0
        %v4971 = vadd.f32 %v4958, %v4970
        %v4972 = vpop.f32.mrf.mxu0
        %4973 = vdwg.mxu0
        %4974 = vmatpush.bf16.msra.mxu0 0
        %4975 = vmatpush.bf16.msra.mxu0 0
        %4976 = vmatpush.bf16.msra.mxu0 0
        %4977 = vmatpush.bf16.msra.mxu0 %v4853
        %4978 = vmatpush.bf16.msra.mxu0 %v4668
        %4979 = vmatpush.bf16.msra.mxu0 %v4660
        %4980 = vmatpush.bf16.msra.mxu0 %v4652
        %4981 = vmatpush.bf16.msra.mxu0 %v4644
        %4982 = vmatmul.bf16.gmra.mxu0 %v4844
        %v4983 = vpop.f32.mrf.mxu0
        %v4984 = vadd.f32 %v4971, %v4983
        %v4985 = vpop.f32.mrf.mxu0
        %4986 = vdwg.mxu0
        %4987 = vmatpush.bf16.msra.mxu0 %v4573
        %4988 = vmatpush.bf16.msra.mxu0 %v4565
        %4989 = vmatpush.bf16.msra.mxu0 %v4557
        %4990 = vmatpush.bf16.msra.mxu0 %v4549
        %4991 = vmatpush.bf16.msra.mxu0 %v4541
        %4992 = vmatpush.bf16.msra.mxu0 %v4533
        %4993 = vmatpush.bf16.msra.mxu0 %v4525
        %4994 = vmatpush.bf16.msra.mxu0 %v4517
        %4995 = vmatmul.bf16.gmra.mxu0 %v3854
        %v4996 = vpop.f32.mrf.mxu0
        %v4997 = vadd.f32 0.0, %v4996
        %v4998 = vpop.f32.mrf.mxu0
        %4999 = vdwg.mxu0
        %5000 = vmatpush.bf16.msra.mxu0 %v4637
        %5001 = vmatpush.bf16.msra.mxu0 %v4629
        %5002 = vmatpush.bf16.msra.mxu0 %v4621
        %5003 = vmatpush.bf16.msra.mxu0 %v4613
        %5004 = vmatpush.bf16.msra.mxu0 %v4605
        %5005 = vmatpush.bf16.msra.mxu0 %v4597
        %5006 = vmatpush.bf16.msra.mxu0 %v4589
        %5007 = vmatpush.bf16.msra.mxu0 %v4581
        %5008 = vmatmul.bf16.gmra.mxu0 %v3855
        %v5009 = vpop.f32.mrf.mxu0
        %v5010 = vadd.f32 %v4997, %v5009
        %v5011 = vpop.f32.mrf.mxu0
        %5012 = vdwg.mxu0
        %5013 = vmatpush.bf16.msra.mxu0 0
        %5014 = vmatpush.bf16.msra.mxu0 0
        %5015 = vmatpush.bf16.msra.mxu0 0
        %5016 = vmatpush.bf16.msra.mxu0 %v4856
        %5017 = vmatpush.bf16.msra.mxu0 %v4669
        %5018 = vmatpush.bf16.msra.mxu0 %v4661
        %5019 = vmatpush.bf16.msra.mxu0 %v4653
        %5020 = vmatpush.bf16.msra.mxu0 %v4645
        %5021 = vmatmul.bf16.gmra.mxu0 %v4844
        %v5022 = vpop.f32.mrf.mxu0
        %v5023 = vadd.f32 %v5010, %v5022
        %v5024 = vpop.f32.mrf.mxu0
        %5025 = vdwg.mxu0
        %5026 = vmatpush.bf16.msra.mxu0 %v4574
        %5027 = vmatpush.bf16.msra.mxu0 %v4566
        %5028 = vmatpush.bf16.msra.mxu0 %v4558
        %5029 = vmatpush.bf16.msra.mxu0 %v4550
        %5030 = vmatpush.bf16.msra.mxu0 %v4542
        %5031 = vmatpush.bf16.msra.mxu0 %v4534
        %5032 = vmatpush.bf16.msra.mxu0 %v4526
        %5033 = vmatpush.bf16.msra.mxu0 %v4518
        %5034 = vmatmul.bf16.gmra.mxu0 %v3854
        %v5035 = vpop.f32.mrf.mxu0
        %v5036 = vadd.f32 0.0, %v5035
        %v5037 = vpop.f32.mrf.mxu0
        %5038 = vdwg.mxu0
        %5039 = vmatpush.bf16.msra.mxu0 %v4638
        %5040 = vmatpush.bf16.msra.mxu0 %v4630
        %5041 = vmatpush.bf16.msra.mxu0 %v4622
        %5042 = vmatpush.bf16.msra.mxu0 %v4614
        %5043 = vmatpush.bf16.msra.mxu0 %v4606
        %5044 = vmatpush.bf16.msra.mxu0 %v4598
        %5045 = vmatpush.bf16.msra.mxu0 %v4590
        %5046 = vmatpush.bf16.msra.mxu0 %v4582
        %5047 = vmatmul.bf16.gmra.mxu0 %v3855
        %v5048 = vpop.f32.mrf.mxu0
        %v5049 = vadd.f32 %v5036, %v5048
        %v5050 = vpop.f32.mrf.mxu0
        %5051 = vdwg.mxu0
        %5052 = vmatpush.bf16.msra.mxu0 0
        %5053 = vmatpush.bf16.msra.mxu0 0
        %5054 = vmatpush.bf16.msra.mxu0 0
        %5055 = vmatpush.bf16.msra.mxu0 %v4859
        %5056 = vmatpush.bf16.msra.mxu0 %v4670
        %5057 = vmatpush.bf16.msra.mxu0 %v4662
        %5058 = vmatpush.bf16.msra.mxu0 %v4654
        %5059 = vmatpush.bf16.msra.mxu0 %v4646
        %5060 = vmatmul.bf16.gmra.mxu0 %v4844
        %v5061 = vpop.f32.mrf.mxu0
        %v5062 = vadd.f32 %v5049, %v5061
        %v5063 = vpop.f32.mrf.mxu0
        %5064 = vdwg.mxu0
        %5065 = vmatpush.bf16.msra.mxu0 %v4575
        %5066 = vmatpush.bf16.msra.mxu0 %v4567
        %5067 = vmatpush.bf16.msra.mxu0 %v4559
        %5068 = vmatpush.bf16.msra.mxu0 %v4551
        %5069 = vmatpush.bf16.msra.mxu0 %v4543
        %5070 = vmatpush.bf16.msra.mxu0 %v4535
        %5071 = vmatpush.bf16.msra.mxu0 %v4527
        %5072 = vmatpush.bf16.msra.mxu0 %v4519
        %5073 = vmatmul.bf16.gmra.mxu0 %v3854
        %v5074 = vpop.f32.mrf.mxu0
        %v5075 = vadd.f32 0.0, %v5074
        %v5076 = vpop.f32.mrf.mxu0
        %5077 = vdwg.mxu0
        %5078 = vmatpush.bf16.msra.mxu0 %v4639
        %5079 = vmatpush.bf16.msra.mxu0 %v4631
        %5080 = vmatpush.bf16.msra.mxu0 %v4623
        %5081 = vmatpush.bf16.msra.mxu0 %v4615
        %5082 = vmatpush.bf16.msra.mxu0 %v4607
        %5083 = vmatpush.bf16.msra.mxu0 %v4599
        %5084 = vmatpush.bf16.msra.mxu0 %v4591
        %5085 = vmatpush.bf16.msra.mxu0 %v4583
        %5086 = vmatmul.bf16.gmra.mxu0 %v3855
        %v5087 = vpop.f32.mrf.mxu0
        %v5088 = vadd.f32 %v5075, %v5087
        %v5089 = vpop.f32.mrf.mxu0
        %5090 = vdwg.mxu0
        %5091 = vmatpush.bf16.msra.mxu0 0
        %5092 = vmatpush.bf16.msra.mxu0 0
        %5093 = vmatpush.bf16.msra.mxu0 0
        %5094 = vmatpush.bf16.msra.mxu0 %v4862
        %5095 = vmatpush.bf16.msra.mxu0 %v4671
        %5096 = vmatpush.bf16.msra.mxu0 %v4663
        %5097 = vmatpush.bf16.msra.mxu0 %v4655
        %5098 = vmatpush.bf16.msra.mxu0 %v4647
        %5099 = vmatmul.bf16.gmra.mxu0 %v4844
        %v5100 = vpop.f32.mrf.mxu0
        %v5101 = vadd.f32 %v5088, %v5100
        %v5102 = vpop.f32.mrf.mxu0
        %5103 = vdwg.mxu0
        %5104 = vmatpush.bf16.msra.mxu0 %v4576
        %5105 = vmatpush.bf16.msra.mxu0 %v4568
        %5106 = vmatpush.bf16.msra.mxu0 %v4560
        %5107 = vmatpush.bf16.msra.mxu0 %v4552
        %5108 = vmatpush.bf16.msra.mxu0 %v4544
        %5109 = vmatpush.bf16.msra.mxu0 %v4536
        %5110 = vmatpush.bf16.msra.mxu0 %v4528
        %5111 = vmatpush.bf16.msra.mxu0 %v4520
        %5112 = vmatmul.bf16.gmra.mxu0 %v3854
        %v5113 = vpop.f32.mrf.mxu0
        %v5114 = vadd.f32 0.0, %v5113
        %v5115 = vpop.f32.mrf.mxu0
        %5116 = vdwg.mxu0
        %5117 = vmatpush.bf16.msra.mxu0 %v4640
        %5118 = vmatpush.bf16.msra.mxu0 %v4632
        %5119 = vmatpush.bf16.msra.mxu0 %v4624
        %5120 = vmatpush.bf16.msra.mxu0 %v4616
        %5121 = vmatpush.bf16.msra.mxu0 %v4608
        %5122 = vmatpush.bf16.msra.mxu0 %v4600
        %5123 = vmatpush.bf16.msra.mxu0 %v4592
        %5124 = vmatpush.bf16.msra.mxu0 %v4584
        %5125 = vmatmul.bf16.gmra.mxu0 %v3855
        %v5126 = vpop.f32.mrf.mxu0
        %v5127 = vadd.f32 %v5114, %v5126
        %v5128 = vpop.f32.mrf.mxu0
        %5129 = vdwg.mxu0
        %5130 = vmatpush.bf16.msra.mxu0 0
        %5131 = vmatpush.bf16.msra.mxu0 0
        %5132 = vmatpush.bf16.msra.mxu0 0
        %5133 = vmatpush.bf16.msra.mxu0 %v4865
        %5134 = vmatpush.bf16.msra.mxu0 %v4672
        %5135 = vmatpush.bf16.msra.mxu0 %v4664
        %5136 = vmatpush.bf16.msra.mxu0 %v4656
        %5137 = vmatpush.bf16.msra.mxu0 %v4648
        %5138 = vmatmul.bf16.gmra.mxu0 %v4844
        %v5139 = vpop.f32.mrf.mxu0
        %v5140 = vadd.f32 %v5127, %v5139
        %v5141 = vpop.f32.mrf.mxu0
        %5142 = vdwg.mxu0
        %5143 = vmatpush.bf16.msra.mxu0 %v4577
        %5144 = vmatpush.bf16.msra.mxu0 %v4569
        %5145 = vmatpush.bf16.msra.mxu0 %v4561
        %5146 = vmatpush.bf16.msra.mxu0 %v4553
        %5147 = vmatpush.bf16.msra.mxu0 %v4545
        %5148 = vmatpush.bf16.msra.mxu0 %v4537
        %5149 = vmatpush.bf16.msra.mxu0 %v4529
        %5150 = vmatpush.bf16.msra.mxu0 %v4521
        %5151 = vmatmul.bf16.gmra.mxu0 %v3854
        %v5152 = vpop.f32.mrf.mxu0
        %v5153 = vadd.f32 0.0, %v5152
        %v5154 = vpop.f32.mrf.mxu0
        %5155 = vdwg.mxu0
        %5156 = vmatpush.bf16.msra.mxu0 %v4641
        %5157 = vmatpush.bf16.msra.mxu0 %v4633
        %5158 = vmatpush.bf16.msra.mxu0 %v4625
        %5159 = vmatpush.bf16.msra.mxu0 %v4617
        %5160 = vmatpush.bf16.msra.mxu0 %v4609
        %5161 = vmatpush.bf16.msra.mxu0 %v4601
        %5162 = vmatpush.bf16.msra.mxu0 %v4593
        %5163 = vmatpush.bf16.msra.mxu0 %v4585
        %5164 = vmatmul.bf16.gmra.mxu0 %v3855
        %v5165 = vpop.f32.mrf.mxu0
        %v5166 = vadd.f32 %v5153, %v5165
        %v5167 = vpop.f32.mrf.mxu0
        %5168 = vdwg.mxu0
        %5169 = vmatpush.bf16.msra.mxu0 0
        %5170 = vmatpush.bf16.msra.mxu0 0
        %5171 = vmatpush.bf16.msra.mxu0 0
        %5172 = vmatpush.bf16.msra.mxu0 %v4868
        %5173 = vmatpush.bf16.msra.mxu0 %v4673
        %5174 = vmatpush.bf16.msra.mxu0 %v4665
        %5175 = vmatpush.bf16.msra.mxu0 %v4657
        %5176 = vmatpush.bf16.msra.mxu0 %v4649
        %5177 = vmatmul.bf16.gmra.mxu0 %v4844
        %v5178 = vpop.f32.mrf.mxu0
        %v5179 = vadd.f32 %v5166, %v5178
        %v5180 = vpop.f32.mrf.mxu0
        %5181 = vdwg.mxu0
        %v5346 = vunpack.c.l.b16 %v3646
        %v5347 = vunpack.c.h.b16 %v3646
        %v5348 = vunpack.c.l.b16 %v3647
        %v5349 = vunpack.c.h.b16 %v3647
        %v5350 = vunpack.c.l.b16 %v3648
        %v5351 = vunpack.c.h.b16 %v3648
        %v5352 = vunpack.c.l.b16 %v3649
        %v5353 = vunpack.c.h.b16 %v3649
        %v5354 = vunpack.c.l.b16 %v3650
        %v5355 = vunpack.c.h.b16 %v3650
        %v5356 = vunpack.c.l.b16 %v3651
        %v5357 = vunpack.c.h.b16 %v3651
        %v5358 = vunpack.c.l.b16 %v3652
        %v5359 = vunpack.c.h.b16 %v3652
        %v5360 = vunpack.c.l.b16 %v3653
        %v5361 = vunpack.c.h.b16 %v3653
        %v5362 = vunpack.c.l.b16 %v3654
        %v5363 = vunpack.c.h.b16 %v3654
        %v5364 = vunpack.c.l.b16 %v3655
        %v5365 = vunpack.c.h.b16 %v3655
        %v5366 = vunpack.c.l.b16 %v3656
        %v5367 = vunpack.c.h.b16 %v3656
        %v5368 = vunpack.c.l.b16 %v3657
        %v5369 = vunpack.c.h.b16 %v3657
        %v5370 = vunpack.c.l.b16 %v3658
        %v5371 = vunpack.c.h.b16 %v3658
        %v5372 = vunpack.c.l.b16 %v3659
        %v5373 = vunpack.c.h.b16 %v3659
        %v5374 = vunpack.c.l.b16 %v3660
        %v5375 = vunpack.c.h.b16 %v3660
        %v5376 = vunpack.c.l.b16 %v3661
        %v5377 = vunpack.c.h.b16 %v3661
        %v5378 = vunpack.c.l.b16 %v3662
        %v5379 = vunpack.c.h.b16 %v3662
        %v5380 = vunpack.c.l.b16 %v3663
        %v5381 = vunpack.c.h.b16 %v3663
        %v5382 = vunpack.c.l.b16 %v3664
        %v5383 = vunpack.c.h.b16 %v3664
        %v5384 = vunpack.c.l.b16 %v3665
        %v5385 = vunpack.c.h.b16 %v3665
        %v5386 = vunpack.c.l.b16 %v3666
        %v5387 = vunpack.c.h.b16 %v3666
        %v5388 = vunpack.c.l.b16 %v3667
        %v5389 = vunpack.c.h.b16 %v3667
        %v5390 = vunpack.c.l.b16 %v3668
        %v5391 = vunpack.c.h.b16 %v3668
        %v5392 = vunpack.c.l.b16 %v3669
        %v5393 = vunpack.c.h.b16 %v3669
        %v5394 = vunpack.c.l.b16 %v3670
        %v5395 = vunpack.c.h.b16 %v3670
        %v5396 = vunpack.c.l.b16 %v3671
        %v5397 = vunpack.c.h.b16 %v3671
        %v5398 = vunpack.c.l.b16 %v3672
        %v5399 = vunpack.c.h.b16 %v3672
        %v5400 = vunpack.c.l.b16 %v3673
        %v5401 = vunpack.c.h.b16 %v3673
        %v5402 = vunpack.c.l.b16 %v3674
        %v5403 = vunpack.c.h.b16 %v3674
        %v5404 = vunpack.c.l.b16 %v3675
        %v5405 = vunpack.c.h.b16 %v3675
        %v5406 = vunpack.c.l.b16 %v3676
        %v5407 = vunpack.c.h.b16 %v3676
        %v5408 = vunpack.c.l.b16 %v3677
        %v5409 = vunpack.c.h.b16 %v3677
        %v5410 = vunpack.c.l.b16 %v3678
        %v5411 = vunpack.c.h.b16 %v3678
        %v5412 = vunpack.c.l.b16 %v3679
        %v5413 = vunpack.c.h.b16 %v3679
        %v5414 = vunpack.c.l.b16 %v3680
        %v5415 = vunpack.c.h.b16 %v3680
        %v5416 = vunpack.c.l.b16 %v3681
        %v5417 = vunpack.c.h.b16 %v3681
        %v5418 = vunpack.c.l.b16 %v3682
        %v5419 = vunpack.c.h.b16 %v3682
        %v5420 = vunpack.c.l.b16 %v3683
        %v5421 = vunpack.c.h.b16 %v3683
        %v5422 = vunpack.c.l.b16 %v3684
        %v5423 = vunpack.c.h.b16 %v3684
        %v5424 = vunpack.c.l.b16 %v3685
        %v5425 = vunpack.c.h.b16 %v3685
        %v5426 = vunpack.c.l.b16 %v3686
        %v5427 = vunpack.c.h.b16 %v3686
        %v5428 = vunpack.c.l.b16 %v3687
        %v5429 = vunpack.c.h.b16 %v3687
        %v5430 = vunpack.c.l.b16 %v3688
        %v5431 = vunpack.c.h.b16 %v3688
        %v5432 = vunpack.c.l.b16 %v3689
        %v5433 = vunpack.c.h.b16 %v3689
        %v5434 = vunpack.c.l.b16 %v3690
        %v5435 = vunpack.c.h.b16 %v3690
        %v5436 = vunpack.c.l.b16 %v3691
        %v5437 = vunpack.c.h.b16 %v3691
        %v5438 = vunpack.c.l.b16 %v3692
        %v5439 = vunpack.c.h.b16 %v3692
        %v5440 = vunpack.c.l.b16 %v3693
        %v5441 = vunpack.c.h.b16 %v3693
        %v5442 = vunpack.c.l.b16 %v3694
        %v5443 = vunpack.c.h.b16 %v3694
        %v5444 = vunpack.c.l.b16 %v3695
        %v5445 = vunpack.c.h.b16 %v3695
        %v5446 = vunpack.c.l.b16 %v3696
        %v5447 = vunpack.c.h.b16 %v3696
        %v5448 = vunpack.c.l.b16 %v3697
        %v5449 = vunpack.c.h.b16 %v3697
        %v5450 = vunpack.c.l.b16 %v3698
        %v5451 = vunpack.c.h.b16 %v3698
        %v5452 = vunpack.c.l.b16 %v3699
        %v5453 = vunpack.c.h.b16 %v3699
        %v5454 = vunpack.c.l.b16 %v3700
        %v5455 = vunpack.c.h.b16 %v3700
        %v5456 = vunpack.c.l.b16 %v3701
        %v5457 = vunpack.c.h.b16 %v3701
        %v5458 = vunpack.c.l.b16 %v3702
        %v5459 = vunpack.c.h.b16 %v3702
        %v5460 = vunpack.c.l.b16 %v3703
        %v5461 = vunpack.c.h.b16 %v3703
        %v5462 = vunpack.c.l.b16 %v3704
        %v5463 = vunpack.c.h.b16 %v3704
        %v5464 = vunpack.c.l.b16 %v3705
        %v5465 = vunpack.c.h.b16 %v3705
        %v5466 = vunpack.c.l.b16 %v3706
        %v5467 = vunpack.c.h.b16 %v3706
        %v5468 = vunpack.c.l.b16 %v3707
        %v5469 = vunpack.c.h.b16 %v3707
        %v5470 = vunpack.c.l.b16 %v3708
        %v5471 = vunpack.c.h.b16 %v3708
        %v5472 = vunpack.c.l.b16 %v3709
        %v5473 = vunpack.c.h.b16 %v3709
        %v5474 = vunpack.c.l.b16 %v3710
        %v5475 = vunpack.c.h.b16 %v3710
        %v5476 = vunpack.c.l.b16 %v3711
        %v5477 = vunpack.c.h.b16 %v3711
        %v5478 = vunpack.c.l.b16 %v3712
        %v5479 = vunpack.c.h.b16 %v3712
        %v5480 = vunpack.c.l.b16 %v3713
        %v5481 = vunpack.c.h.b16 %v3713
        %v5482 = vunpack.c.l.b16 %v3714
        %v5483 = vunpack.c.h.b16 %v3714
        %v5484 = vunpack.c.l.b16 %v3715
        %v5485 = vunpack.c.h.b16 %v3715
        %v5486 = vunpack.c.l.b16 %v3716
        %v5487 = vunpack.c.h.b16 %v3716
        %v5488 = vunpack.c.l.b16 %v3717
        %v5489 = vunpack.c.h.b16 %v3717
        %v5490 = vunpack.c.l.b16 %v3718
        %v5491 = vunpack.c.h.b16 %v3718
        %v5492 = vunpack.c.l.b16 %v3719
        %v5493 = vunpack.c.h.b16 %v3719
        %v5494 = vunpack.c.l.b16 %v3720
        %v5495 = vunpack.c.h.b16 %v3720
        %v5496 = vunpack.c.l.b16 %v3721
        %v5497 = vunpack.c.h.b16 %v3721
        %v5498 = vunpack.c.l.b16 %v3722
        %v5499 = vunpack.c.h.b16 %v3722
        %v5500 = vunpack.c.l.b16 %v3723
        %v5501 = vunpack.c.h.b16 %v3723
        %v5502 = vunpack.c.l.b16 %v3724
        %v5503 = vunpack.c.h.b16 %v3724
        %v5504 = vunpack.c.l.b16 %v3725
        %v5505 = vunpack.c.h.b16 %v3725
        %v5506 = vunpack.c.l.b16 %v3726
        %v5507 = vunpack.c.h.b16 %v3726
        %v5508 = vunpack.c.l.b16 %v3727
        %v5509 = vunpack.c.h.b16 %v3727
        %v5510 = vunpack.c.l.b16 %v3728
        %v5511 = vunpack.c.h.b16 %v3728
        %v5512 = vunpack.c.l.b16 %v3729
        %v5513 = vunpack.c.h.b16 %v3729
        %v5514 = vunpack.c.l.b16 %v3730
        %v5515 = vunpack.c.h.b16 %v3730
        %v5516 = vunpack.c.l.b16 %v3731
        %v5517 = vunpack.c.h.b16 %v3731
        %v5518 = vunpack.c.l.b16 %v3732
        %v5519 = vunpack.c.h.b16 %v3732
        %v5520 = vunpack.c.l.b16 %v3733
        %v5521 = vunpack.c.h.b16 %v3733
        %v5522 = vunpack.c.l.b16 %v3734
        %v5523 = vunpack.c.h.b16 %v3734
        %v5524 = vunpack.c.l.b16 %v3735
        %v5525 = vunpack.c.h.b16 %v3735
        %v5526 = vunpack.c.l.b16 %v3736
        %v5527 = vunpack.c.h.b16 %v3736
        %v5528 = vunpack.c.l.b16 %v3737
        %v5529 = vunpack.c.h.b16 %v3737
        %v5530 = vunpack.c.l.b16 %v3738
        %v5531 = vunpack.c.h.b16 %v3738
        %v5532 = vunpack.c.l.b16 %v3739
        %v5533 = vunpack.c.h.b16 %v3739
        %v5534 = vunpack.c.l.b16 %v3740
        %v5535 = vunpack.c.h.b16 %v3740
        %v5536 = vunpack.c.l.b16 %v3741
        %v5537 = vunpack.c.h.b16 %v3741
        %v5538 = vunpack.c.l.b16 %v3742
        %v5539 = vunpack.c.h.b16 %v3742
        %v5540 = vunpack.c.l.b16 %v3743
        %v5541 = vunpack.c.h.b16 %v3743
        %v5542 = vunpack.c.l.b16 %v3744
        %v5543 = vunpack.c.h.b16 %v3744
        %v5544 = vunpack.c.l.b16 %v3745
        %v5545 = vunpack.c.h.b16 %v3745
        %v5546 = vunpack.c.l.b16 %v3746
        %v5547 = vunpack.c.h.b16 %v3746
        %v5548 = vunpack.c.l.b16 %v3747
        %v5549 = vunpack.c.h.b16 %v3747
        %v5550 = vunpack.c.l.b16 %v3748
        %v5551 = vunpack.c.h.b16 %v3748
        %v5552 = vunpack.c.l.b16 %v3749
        %v5553 = vunpack.c.h.b16 %v3749
        %v5554 = vunpack.c.l.b16 %v3750
        %v5555 = vunpack.c.h.b16 %v3750
        %v5556 = vunpack.c.l.b16 %v3751
        %v5557 = vunpack.c.h.b16 %v3751
        %v5558 = vunpack.c.l.b16 %v3752
        %v5559 = vunpack.c.h.b16 %v3752
        %v5560 = vunpack.c.l.b16 %v3753
        %v5561 = vunpack.c.h.b16 %v3753
        %v5562 = vunpack.c.l.b16 %v3754
        %v5563 = vunpack.c.h.b16 %v3754
        %v5564 = vunpack.c.l.b16 %v3755
        %v5565 = vunpack.c.h.b16 %v3755
        %v5566 = vunpack.c.l.b16 %v3756
        %v5567 = vunpack.c.h.b16 %v3756
        %v5568 = vunpack.c.l.b16 %v3757
        %v5569 = vunpack.c.h.b16 %v3757
        %v5570 = vunpack.c.l.b16 %v3758
        %v5571 = vunpack.c.h.b16 %v3758
        %v5572 = vunpack.c.l.b16 %v3759
        %v5573 = vunpack.c.h.b16 %v3759
        %v5574 = vunpack.c.l.b16 %v3760
        %v5575 = vunpack.c.h.b16 %v3760
        %v5576 = vunpack.c.l.b16 %v3761
        %v5577 = vunpack.c.h.b16 %v3761
        %v5578 = vunpack.c.l.b16 %v3762
        %v5579 = vunpack.c.h.b16 %v3762
        %v5580 = vunpack.c.l.b16 %v3763
        %v5581 = vunpack.c.h.b16 %v3763
        %v5582 = vunpack.c.l.b16 %v3764
        %v5583 = vunpack.c.h.b16 %v3764
        %v5584 = vunpack.c.l.b16 %v3765
        %v5585 = vunpack.c.h.b16 %v3765
        %v5586 = vunpack.c.l.b16 %v3766
        %v5587 = vunpack.c.h.b16 %v3766
        %v5588 = vunpack.c.l.b16 %v3767
        %v5589 = vunpack.c.h.b16 %v3767
        %v5590 = vunpack.c.l.b16 %v3768
        %v5591 = vunpack.c.h.b16 %v3768
        %v5592 = vunpack.c.l.b16 %v3769
        %v5593 = vunpack.c.h.b16 %v3769
        %v5594 = vunpack.c.l.b16 %v3770
        %v5595 = vunpack.c.h.b16 %v3770
        %v5596 = vunpack.c.l.b16 %v3771
        %v5597 = vunpack.c.h.b16 %v3771
        %v5598 = vunpack.c.l.b16 %v3772
        %v5599 = vunpack.c.h.b16 %v3772
        %v5600 = vunpack.c.l.b16 %v3773
        %v5601 = vunpack.c.h.b16 %v3773
        %v5602 = vunpack.c.l.b16 %v3774
        %v5603 = vunpack.c.h.b16 %v3774
        %v5604 = vunpack.c.l.b16 %v3775
        %v5605 = vunpack.c.h.b16 %v3775
        %v5606 = vunpack.c.l.b16 %v3776
        %v5607 = vunpack.c.h.b16 %v3776
        %v5608 = vunpack.c.l.b16 %v3777
        %v5609 = vunpack.c.h.b16 %v3777
        %v5610 = vunpack.c.l.b16 %v3778
        %v5611 = vunpack.c.h.b16 %v3778
        %v5612 = vunpack.c.l.b16 %v3779
        %v5613 = vunpack.c.h.b16 %v3779
        %v5614 = vunpack.c.l.b16 %v3780
        %v5615 = vunpack.c.h.b16 %v3780
        %v5616 = vunpack.c.l.b16 %v3781
        %v5617 = vunpack.c.h.b16 %v3781
        %v5618 = vunpack.c.l.b16 %v3782
        %v5619 = vunpack.c.h.b16 %v3782
        %v5620 = vunpack.c.l.b16 %v3783
        %v5621 = vunpack.c.h.b16 %v3783
        %v5622 = vunpack.c.l.b16 %v3784
        %v5623 = vunpack.c.h.b16 %v3784
        %v5624 = vunpack.c.l.b16 %v3785
        %v5625 = vunpack.c.h.b16 %v3785
        %v5626 = vunpack.c.l.b16 %v3786
        %v5627 = vunpack.c.h.b16 %v3786
        %v5628 = vunpack.c.l.b16 %v3787
        %v5629 = vunpack.c.h.b16 %v3787
        %v5630 = vunpack.c.l.b16 %v3788
        %v5631 = vunpack.c.h.b16 %v3788
        %v5632 = vunpack.c.l.b16 %v3789
        %v5633 = vunpack.c.h.b16 %v3789
        %v5634 = vunpack.c.l.b16 %v3790
        %v5635 = vunpack.c.h.b16 %v3790
        %v5636 = vunpack.c.l.b16 %v3791
        %v5637 = vunpack.c.h.b16 %v3791
        %v5638 = vunpack.c.l.b16 %v3792
        %v5639 = vunpack.c.h.b16 %v3792
        %v5640 = vunpack.c.l.b16 %v3793
        %v5641 = vunpack.c.h.b16 %v3793
        %v5642 = vunpack.c.l.b16 %v3794
        %v5643 = vunpack.c.h.b16 %v3794
        %v5644 = vunpack.c.l.b16 %v3795
        %v5645 = vunpack.c.h.b16 %v3795
        %v5646 = vunpack.c.l.b16 %v3796
        %v5647 = vunpack.c.h.b16 %v3796
        %v5648 = vunpack.c.l.b16 %v3797
        %v5649 = vunpack.c.h.b16 %v3797
        %v5650 = vunpack.c.l.b16 %v3798
        %v5651 = vunpack.c.h.b16 %v3798
        %v5652 = vunpack.c.l.b16 %v3799
        %v5653 = vunpack.c.h.b16 %v3799
        %v5654 = vunpack.c.l.b16 %v3800
        %v5655 = vunpack.c.h.b16 %v3800
        %v5656 = vunpack.c.l.b16 %v3801
        %v5657 = vunpack.c.h.b16 %v3801
        %v5658 = vunpack.c.l.b16 %v3802
        %v5659 = vunpack.c.h.b16 %v3802
        %v5660 = vunpack.c.l.b16 %v3803
        %v5661 = vunpack.c.h.b16 %v3803
        %v5662 = vunpack.c.l.b16 %v3804
        %v5663 = vunpack.c.h.b16 %v3804
        %v5664 = vunpack.c.l.b16 %v3805
        %v5665 = vunpack.c.h.b16 %v3805
        %v5666 = vunpack.c.l.b16 %v3806
        %v5667 = vunpack.c.h.b16 %v3806
        %v5668 = vunpack.c.l.b16 %v3807
        %v5669 = vunpack.c.h.b16 %v3807
        %v5670 = vunpack.c.l.b16 %v3808
        %v5671 = vunpack.c.h.b16 %v3808
        %v5672 = vunpack.c.l.b16 %v3809
        %v5673 = vunpack.c.h.b16 %v3809
        %v5674 = vpack.c.b16 %v5354, %v5346
        %v5675 = vpack.c.b16 %v5355, %v5347
        %v5676 = vpack.c.b16 %v5356, %v5348
        %v5677 = vpack.c.b16 %v5357, %v5349
        %v5678 = vpack.c.b16 %v5358, %v5350
        %v5679 = vpack.c.b16 %v5359, %v5351
        %v5680 = vpack.c.b16 %v5360, %v5352
        %v5681 = vpack.c.b16 %v5361, %v5353
        %v5682 = vpack.c.b16 %v5370, %v5362
        %v5683 = vpack.c.b16 %v5371, %v5363
        %v5684 = vpack.c.b16 %v5372, %v5364
        %v5685 = vpack.c.b16 %v5373, %v5365
        %v5686 = vpack.c.b16 %v5374, %v5366
        %v5687 = vpack.c.b16 %v5375, %v5367
        %v5688 = vpack.c.b16 %v5376, %v5368
        %v5689 = vpack.c.b16 %v5377, %v5369
        %v5690 = vpack.c.b16 %v5386, %v5378
        %v5691 = vpack.c.b16 %v5387, %v5379
        %v5692 = vpack.c.b16 %v5388, %v5380
        %v5693 = vpack.c.b16 %v5389, %v5381
        %v5694 = vpack.c.b16 %v5390, %v5382
        %v5695 = vpack.c.b16 %v5391, %v5383
        %v5696 = vpack.c.b16 %v5392, %v5384
        %v5697 = vpack.c.b16 %v5393, %v5385
        %v5698 = vpack.c.b16 %v5402, %v5394
        %v5699 = vpack.c.b16 %v5403, %v5395
        %v5700 = vpack.c.b16 %v5404, %v5396
        %v5701 = vpack.c.b16 %v5405, %v5397
        %v5702 = vpack.c.b16 %v5406, %v5398
        %v5703 = vpack.c.b16 %v5407, %v5399
        %v5704 = vpack.c.b16 %v5408, %v5400
        %v5705 = vpack.c.b16 %v5409, %v5401
        %v5706 = vpack.c.b16 %v5418, %v5410
        %v5707 = vpack.c.b16 %v5419, %v5411
        %v5708 = vpack.c.b16 %v5420, %v5412
        %v5709 = vpack.c.b16 %v5421, %v5413
        %v5710 = vpack.c.b16 %v5422, %v5414
        %v5711 = vpack.c.b16 %v5423, %v5415
        %v5712 = vpack.c.b16 %v5424, %v5416
        %v5713 = vpack.c.b16 %v5425, %v5417
        %v5714 = vpack.c.b16 %v5434, %v5426
        %v5715 = vpack.c.b16 %v5435, %v5427
        %v5716 = vpack.c.b16 %v5436, %v5428
        %v5717 = vpack.c.b16 %v5437, %v5429
        %v5718 = vpack.c.b16 %v5438, %v5430
        %v5719 = vpack.c.b16 %v5439, %v5431
        %v5720 = vpack.c.b16 %v5440, %v5432
        %v5721 = vpack.c.b16 %v5441, %v5433
        %v5722 = vpack.c.b16 %v5450, %v5442
        %v5723 = vpack.c.b16 %v5451, %v5443
        %v5724 = vpack.c.b16 %v5452, %v5444
        %v5725 = vpack.c.b16 %v5453, %v5445
        %v5726 = vpack.c.b16 %v5454, %v5446
        %v5727 = vpack.c.b16 %v5455, %v5447
        %v5728 = vpack.c.b16 %v5456, %v5448
        %v5729 = vpack.c.b16 %v5457, %v5449
        %v5730 = vpack.c.b16 %v5466, %v5458
        %v5731 = vpack.c.b16 %v5467, %v5459
        %v5732 = vpack.c.b16 %v5468, %v5460
        %v5733 = vpack.c.b16 %v5469, %v5461
        %v5734 = vpack.c.b16 %v5470, %v5462
        %v5735 = vpack.c.b16 %v5471, %v5463
        %v5736 = vpack.c.b16 %v5472, %v5464
        %v5737 = vpack.c.b16 %v5473, %v5465
        %v5738 = vpack.c.b16 %v5482, %v5474
        %v5739 = vpack.c.b16 %v5483, %v5475
        %v5740 = vpack.c.b16 %v5484, %v5476
        %v5741 = vpack.c.b16 %v5485, %v5477
        %v5742 = vpack.c.b16 %v5486, %v5478
        %v5743 = vpack.c.b16 %v5487, %v5479
        %v5744 = vpack.c.b16 %v5488, %v5480
        %v5745 = vpack.c.b16 %v5489, %v5481
        %v5746 = vpack.c.b16 %v5498, %v5490
        %v5747 = vpack.c.b16 %v5499, %v5491
        %v5748 = vpack.c.b16 %v5500, %v5492
        %v5749 = vpack.c.b16 %v5501, %v5493
        %v5750 = vpack.c.b16 %v5502, %v5494
        %v5751 = vpack.c.b16 %v5503, %v5495
        %v5752 = vpack.c.b16 %v5504, %v5496
        %v5753 = vpack.c.b16 %v5505, %v5497
        %v5754 = vpack.c.b16 %v5514, %v5506
        %v5755 = vpack.c.b16 %v5515, %v5507
        %v5756 = vpack.c.b16 %v5516, %v5508
        %v5757 = vpack.c.b16 %v5517, %v5509
        %v5758 = vpack.c.b16 %v5518, %v5510
        %v5759 = vpack.c.b16 %v5519, %v5511
        %v5760 = vpack.c.b16 %v5520, %v5512
        %v5761 = vpack.c.b16 %v5521, %v5513
        %v5762 = vpack.c.b16 %v5530, %v5522
        %v5763 = vpack.c.b16 %v5531, %v5523
        %v5764 = vpack.c.b16 %v5532, %v5524
        %v5765 = vpack.c.b16 %v5533, %v5525
        %v5766 = vpack.c.b16 %v5534, %v5526
        %v5767 = vpack.c.b16 %v5535, %v5527
        %v5768 = vpack.c.b16 %v5536, %v5528
        %v5769 = vpack.c.b16 %v5537, %v5529
        %v5770 = vpack.c.b16 %v5546, %v5538
        %v5771 = vpack.c.b16 %v5547, %v5539
        %v5772 = vpack.c.b16 %v5548, %v5540
        %v5773 = vpack.c.b16 %v5549, %v5541
        %v5774 = vpack.c.b16 %v5550, %v5542
        %v5775 = vpack.c.b16 %v5551, %v5543
        %v5776 = vpack.c.b16 %v5552, %v5544
        %v5777 = vpack.c.b16 %v5553, %v5545
        %v5778 = vpack.c.b16 %v5562, %v5554
        %v5779 = vpack.c.b16 %v5563, %v5555
        %v5780 = vpack.c.b16 %v5564, %v5556
        %v5781 = vpack.c.b16 %v5565, %v5557
        %v5782 = vpack.c.b16 %v5566, %v5558
        %v5783 = vpack.c.b16 %v5567, %v5559
        %v5784 = vpack.c.b16 %v5568, %v5560
        %v5785 = vpack.c.b16 %v5569, %v5561
        %v5786 = vpack.c.b16 %v5578, %v5570
        %v5787 = vpack.c.b16 %v5579, %v5571
        %v5788 = vpack.c.b16 %v5580, %v5572
        %v5789 = vpack.c.b16 %v5581, %v5573
        %v5790 = vpack.c.b16 %v5582, %v5574
        %v5791 = vpack.c.b16 %v5583, %v5575
        %v5792 = vpack.c.b16 %v5584, %v5576
        %v5793 = vpack.c.b16 %v5585, %v5577
        %v5794 = vpack.c.b16 %v5594, %v5586
        %v5795 = vpack.c.b16 %v5595, %v5587
        %v5796 = vpack.c.b16 %v5596, %v5588
        %v5797 = vpack.c.b16 %v5597, %v5589
        %v5798 = vpack.c.b16 %v5598, %v5590
        %v5799 = vpack.c.b16 %v5599, %v5591
        %v5800 = vpack.c.b16 %v5600, %v5592
        %v5801 = vpack.c.b16 %v5601, %v5593
        %v5802 = vpack.c.b16 %v5610, %v5602
        %v5803 = vpack.c.b16 %v5611, %v5603
        %v5804 = vpack.c.b16 %v5612, %v5604
        %v5805 = vpack.c.b16 %v5613, %v5605
        %v5806 = vpack.c.b16 %v5614, %v5606
        %v5807 = vpack.c.b16 %v5615, %v5607
        %v5808 = vpack.c.b16 %v5616, %v5608
        %v5809 = vpack.c.b16 %v5617, %v5609
        %v5810 = vpack.c.b16 %v5626, %v5618
        %v5811 = vpack.c.b16 %v5627, %v5619
        %v5812 = vpack.c.b16 %v5628, %v5620
        %v5813 = vpack.c.b16 %v5629, %v5621
        %v5814 = vpack.c.b16 %v5630, %v5622
        %v5815 = vpack.c.b16 %v5631, %v5623
        %v5816 = vpack.c.b16 %v5632, %v5624
        %v5817 = vpack.c.b16 %v5633, %v5625
        %v5818 = vpack.c.b16 %v5642, %v5634
        %v5819 = vpack.c.b16 %v5643, %v5635
        %v5820 = vpack.c.b16 %v5644, %v5636
        %v5821 = vpack.c.b16 %v5645, %v5637
        %v5822 = vpack.c.b16 %v5646, %v5638
        %v5823 = vpack.c.b16 %v5647, %v5639
        %v5824 = vpack.c.b16 %v5648, %v5640
        %v5825 = vpack.c.b16 %v5649, %v5641
        %v5826 = vpack.c.b16 %v5658, %v5650
        %v5827 = vpack.c.b16 %v5659, %v5651
        %v5828 = vpack.c.b16 %v5660, %v5652
        %v5829 = vpack.c.b16 %v5661, %v5653
        %v5830 = vpack.c.b16 %v5662, %v5654
        %v5831 = vpack.c.b16 %v5663, %v5655
        %v5832 = vpack.c.b16 %v5664, %v5656
        %v5833 = vpack.c.b16 %v5665, %v5657
        %v5834 = vpack.c.b16 %v5666, %v5666
        %v5835 = vpack.c.b16 %v5667, %v5667
        %v5836 = vpack.c.b16 %v5668, %v5668
        %v5837 = vpack.c.b16 %v5669, %v5669
        %v5838 = vpack.c.b16 %v5670, %v5670
        %v5839 = vpack.c.b16 %v5671, %v5671
        %v5840 = vpack.c.b16 %v5672, %v5672
        %v5841 = vpack.c.b16 %v5673, %v5673
        %v6003 = vsel %vm4842, %v3645, 0
        %v6006 = vsel %vm1345, %v5834, 0
        %v6009 = vsel %vm1345, %v5835, 0
        %v6012 = vsel %vm1345, %v5836, 0
        %v6015 = vsel %vm1345, %v5837, 0
        %v6018 = vsel %vm1345, %v5838, 0
        %v6021 = vsel %vm1345, %v5839, 0
        %v6024 = vsel %vm1345, %v5840, 0
        %v6027 = vsel %vm1345, %v5841, 0
        %6029 = vmatpush.bf16.msra.mxu0 %v5730
        %6030 = vmatpush.bf16.msra.mxu0 %v5722
        %6031 = vmatpush.bf16.msra.mxu0 %v5714
        %6032 = vmatpush.bf16.msra.mxu0 %v5706
        %6033 = vmatpush.bf16.msra.mxu0 %v5698
        %6034 = vmatpush.bf16.msra.mxu0 %v5690
        %6035 = vmatpush.bf16.msra.mxu0 %v5682
        %6036 = vmatpush.bf16.msra.mxu0 %v5674
        %6037 = vmatmul.bf16.gmra.mxu0 %v3643
        %v6038 = vpop.f32.mrf.mxu0
        %v6039 = vadd.f32 %v4906, %v6038
        %v6040 = vpop.f32.mrf.mxu0
        %6041 = vdwg.mxu0
        %6042 = vmatpush.bf16.msra.mxu0 %v5794
        %6043 = vmatpush.bf16.msra.mxu0 %v5786
        %6044 = vmatpush.bf16.msra.mxu0 %v5778
        %6045 = vmatpush.bf16.msra.mxu0 %v5770
        %6046 = vmatpush.bf16.msra.mxu0 %v5762
        %6047 = vmatpush.bf16.msra.mxu0 %v5754
        %6048 = vmatpush.bf16.msra.mxu0 %v5746
        %6049 = vmatpush.bf16.msra.mxu0 %v5738
        %6050 = vmatmul.bf16.gmra.mxu0 %v3644
        %v6051 = vpop.f32.mrf.mxu0
        %v6052 = vadd.f32 %v6039, %v6051
        %v6053 = vpop.f32.mrf.mxu0
        %6054 = vdwg.mxu0
        %6055 = vmatpush.bf16.msra.mxu0 0
        %6056 = vmatpush.bf16.msra.mxu0 0
        %6057 = vmatpush.bf16.msra.mxu0 0
        %6058 = vmatpush.bf16.msra.mxu0 %v6006
        %6059 = vmatpush.bf16.msra.mxu0 %v5826
        %6060 = vmatpush.bf16.msra.mxu0 %v5818
        %6061 = vmatpush.bf16.msra.mxu0 %v5810
        %6062 = vmatpush.bf16.msra.mxu0 %v5802
        %6063 = vmatmul.bf16.gmra.mxu0 %v6003
        %v6064 = vpop.f32.mrf.mxu0
        %v6065 = vadd.f32 %v6052, %v6064
        %v6066 = vpop.f32.mrf.mxu0
        %6067 = vdwg.mxu0
        %6068 = vmatpush.bf16.msra.mxu0 %v5731
        %6069 = vmatpush.bf16.msra.mxu0 %v5723
        %6070 = vmatpush.bf16.msra.mxu0 %v5715
        %6071 = vmatpush.bf16.msra.mxu0 %v5707
        %6072 = vmatpush.bf16.msra.mxu0 %v5699
        %6073 = vmatpush.bf16.msra.mxu0 %v5691
        %6074 = vmatpush.bf16.msra.mxu0 %v5683
        %6075 = vmatpush.bf16.msra.mxu0 %v5675
        %6076 = vmatmul.bf16.gmra.mxu0 %v3643
        %v6077 = vpop.f32.mrf.mxu0
        %v6078 = vadd.f32 %v4945, %v6077
        %v6079 = vpop.f32.mrf.mxu0
        %6080 = vdwg.mxu0
        %6081 = vmatpush.bf16.msra.mxu0 %v5795
        %6082 = vmatpush.bf16.msra.mxu0 %v5787
        %6083 = vmatpush.bf16.msra.mxu0 %v5779
        %6084 = vmatpush.bf16.msra.mxu0 %v5771
        %6085 = vmatpush.bf16.msra.mxu0 %v5763
        %6086 = vmatpush.bf16.msra.mxu0 %v5755
        %6087 = vmatpush.bf16.msra.mxu0 %v5747
        %6088 = vmatpush.bf16.msra.mxu0 %v5739
        %6089 = vmatmul.bf16.gmra.mxu0 %v3644
        %v6090 = vpop.f32.mrf.mxu0
        %v6091 = vadd.f32 %v6078, %v6090
        %v6092 = vpop.f32.mrf.mxu0
        %6093 = vdwg.mxu0
        %6094 = vmatpush.bf16.msra.mxu0 0
        %6095 = vmatpush.bf16.msra.mxu0 0
        %6096 = vmatpush.bf16.msra.mxu0 0
        %6097 = vmatpush.bf16.msra.mxu0 %v6009
        %6098 = vmatpush.bf16.msra.mxu0 %v5827
        %6099 = vmatpush.bf16.msra.mxu0 %v5819
        %6100 = vmatpush.bf16.msra.mxu0 %v5811
        %6101 = vmatpush.bf16.msra.mxu0 %v5803
        %6102 = vmatmul.bf16.gmra.mxu0 %v6003
        %v6103 = vpop.f32.mrf.mxu0
        %v6104 = vadd.f32 %v6091, %v6103
        %v6105 = vpop.f32.mrf.mxu0
        %6106 = vdwg.mxu0
        %6107 = vmatpush.bf16.msra.mxu0 %v5732
        %6108 = vmatpush.bf16.msra.mxu0 %v5724
        %6109 = vmatpush.bf16.msra.mxu0 %v5716
        %6110 = vmatpush.bf16.msra.mxu0 %v5708
        %6111 = vmatpush.bf16.msra.mxu0 %v5700
        %6112 = vmatpush.bf16.msra.mxu0 %v5692
        %6113 = vmatpush.bf16.msra.mxu0 %v5684
        %6114 = vmatpush.bf16.msra.mxu0 %v5676
        %6115 = vmatmul.bf16.gmra.mxu0 %v3643
        %v6116 = vpop.f32.mrf.mxu0
        %v6117 = vadd.f32 %v4984, %v6116
        %v6118 = vpop.f32.mrf.mxu0
        %6119 = vdwg.mxu0
        %6120 = vmatpush.bf16.msra.mxu0 %v5796
        %6121 = vmatpush.bf16.msra.mxu0 %v5788
        %6122 = vmatpush.bf16.msra.mxu0 %v5780
        %6123 = vmatpush.bf16.msra.mxu0 %v5772
        %6124 = vmatpush.bf16.msra.mxu0 %v5764
        %6125 = vmatpush.bf16.msra.mxu0 %v5756
        %6126 = vmatpush.bf16.msra.mxu0 %v5748
        %6127 = vmatpush.bf16.msra.mxu0 %v5740
        %6128 = vmatmul.bf16.gmra.mxu0 %v3644
        %v6129 = vpop.f32.mrf.mxu0
        %v6130 = vadd.f32 %v6117, %v6129
        %v6131 = vpop.f32.mrf.mxu0
        %6132 = vdwg.mxu0
        %6133 = vmatpush.bf16.msra.mxu0 0
        %6134 = vmatpush.bf16.msra.mxu0 0
        %6135 = vmatpush.bf16.msra.mxu0 0
        %6136 = vmatpush.bf16.msra.mxu0 %v6012
        %6137 = vmatpush.bf16.msra.mxu0 %v5828
        %6138 = vmatpush.bf16.msra.mxu0 %v5820
        %6139 = vmatpush.bf16.msra.mxu0 %v5812
        %6140 = vmatpush.bf16.msra.mxu0 %v5804
        %6141 = vmatmul.bf16.gmra.mxu0 %v6003
        %v6142 = vpop.f32.mrf.mxu0
        %v6143 = vadd.f32 %v6130, %v6142
        %v6144 = vpop.f32.mrf.mxu0
        %6145 = vdwg.mxu0
        %6146 = vmatpush.bf16.msra.mxu0 %v5733
        %6147 = vmatpush.bf16.msra.mxu0 %v5725
        %6148 = vmatpush.bf16.msra.mxu0 %v5717
        %6149 = vmatpush.bf16.msra.mxu0 %v5709
        %6150 = vmatpush.bf16.msra.mxu0 %v5701
        %6151 = vmatpush.bf16.msra.mxu0 %v5693
        %6152 = vmatpush.bf16.msra.mxu0 %v5685
        %6153 = vmatpush.bf16.msra.mxu0 %v5677
        %6154 = vmatmul.bf16.gmra.mxu0 %v3643
        %v6155 = vpop.f32.mrf.mxu0
        %v6156 = vadd.f32 %v5023, %v6155
        %v6157 = vpop.f32.mrf.mxu0
        %6158 = vdwg.mxu0
        %6159 = vmatpush.bf16.msra.mxu0 %v5797
        %6160 = vmatpush.bf16.msra.mxu0 %v5789
        %6161 = vmatpush.bf16.msra.mxu0 %v5781
        %6162 = vmatpush.bf16.msra.mxu0 %v5773
        %6163 = vmatpush.bf16.msra.mxu0 %v5765
        %6164 = vmatpush.bf16.msra.mxu0 %v5757
        %6165 = vmatpush.bf16.msra.mxu0 %v5749
        %6166 = vmatpush.bf16.msra.mxu0 %v5741
        %6167 = vmatmul.bf16.gmra.mxu0 %v3644
        %v6168 = vpop.f32.mrf.mxu0
        %v6169 = vadd.f32 %v6156, %v6168
        %v6170 = vpop.f32.mrf.mxu0
        %6171 = vdwg.mxu0
        %6172 = vmatpush.bf16.msra.mxu0 0
        %6173 = vmatpush.bf16.msra.mxu0 0
        %6174 = vmatpush.bf16.msra.mxu0 0
        %6175 = vmatpush.bf16.msra.mxu0 %v6015
        %6176 = vmatpush.bf16.msra.mxu0 %v5829
        %6177 = vmatpush.bf16.msra.mxu0 %v5821
        %6178 = vmatpush.bf16.msra.mxu0 %v5813
        %6179 = vmatpush.bf16.msra.mxu0 %v5805
        %6180 = vmatmul.bf16.gmra.mxu0 %v6003
        %v6181 = vpop.f32.mrf.mxu0
        %v6182 = vadd.f32 %v6169, %v6181
        %v6183 = vpop.f32.mrf.mxu0
        %6184 = vdwg.mxu0
        %6185 = vmatpush.bf16.msra.mxu0 %v5734
        %6186 = vmatpush.bf16.msra.mxu0 %v5726
        %6187 = vmatpush.bf16.msra.mxu0 %v5718
        %6188 = vmatpush.bf16.msra.mxu0 %v5710
        %6189 = vmatpush.bf16.msra.mxu0 %v5702
        %6190 = vmatpush.bf16.msra.mxu0 %v5694
        %6191 = vmatpush.bf16.msra.mxu0 %v5686
        %6192 = vmatpush.bf16.msra.mxu0 %v5678
        %6193 = vmatmul.bf16.gmra.mxu0 %v3643
        %v6194 = vpop.f32.mrf.mxu0
        %v6195 = vadd.f32 %v5062, %v6194
        %v6196 = vpop.f32.mrf.mxu0
        %6197 = vdwg.mxu0
        %6198 = vmatpush.bf16.msra.mxu0 %v5798
        %6199 = vmatpush.bf16.msra.mxu0 %v5790
        %6200 = vmatpush.bf16.msra.mxu0 %v5782
        %6201 = vmatpush.bf16.msra.mxu0 %v5774
        %6202 = vmatpush.bf16.msra.mxu0 %v5766
        %6203 = vmatpush.bf16.msra.mxu0 %v5758
        %6204 = vmatpush.bf16.msra.mxu0 %v5750
        %6205 = vmatpush.bf16.msra.mxu0 %v5742
        %6206 = vmatmul.bf16.gmra.mxu0 %v3644
        %v6207 = vpop.f32.mrf.mxu0
        %v6208 = vadd.f32 %v6195, %v6207
        %v6209 = vpop.f32.mrf.mxu0
        %6210 = vdwg.mxu0
        %6211 = vmatpush.bf16.msra.mxu0 0
        %6212 = vmatpush.bf16.msra.mxu0 0
        %6213 = vmatpush.bf16.msra.mxu0 0
        %6214 = vmatpush.bf16.msra.mxu0 %v6018
        %6215 = vmatpush.bf16.msra.mxu0 %v5830
        %6216 = vmatpush.bf16.msra.mxu0 %v5822
        %6217 = vmatpush.bf16.msra.mxu0 %v5814
        %6218 = vmatpush.bf16.msra.mxu0 %v5806
        %6219 = vmatmul.bf16.gmra.mxu0 %v6003
        %v6220 = vpop.f32.mrf.mxu0
        %v6221 = vadd.f32 %v6208, %v6220
        %v6222 = vpop.f32.mrf.mxu0
        %6223 = vdwg.mxu0
        %6224 = vmatpush.bf16.msra.mxu0 %v5735
        %6225 = vmatpush.bf16.msra.mxu0 %v5727
        %6226 = vmatpush.bf16.msra.mxu0 %v5719
        %6227 = vmatpush.bf16.msra.mxu0 %v5711
        %6228 = vmatpush.bf16.msra.mxu0 %v5703
        %6229 = vmatpush.bf16.msra.mxu0 %v5695
        %6230 = vmatpush.bf16.msra.mxu0 %v5687
        %6231 = vmatpush.bf16.msra.mxu0 %v5679
        %6232 = vmatmul.bf16.gmra.mxu0 %v3643
        %v6233 = vpop.f32.mrf.mxu0
        %v6234 = vadd.f32 %v5101, %v6233
        %v6235 = vpop.f32.mrf.mxu0
        %6236 = vdwg.mxu0
        %6237 = vmatpush.bf16.msra.mxu0 %v5799
        %6238 = vmatpush.bf16.msra.mxu0 %v5791
        %6239 = vmatpush.bf16.msra.mxu0 %v5783
        %6240 = vmatpush.bf16.msra.mxu0 %v5775
        %6241 = vmatpush.bf16.msra.mxu0 %v5767
        %6242 = vmatpush.bf16.msra.mxu0 %v5759
        %6243 = vmatpush.bf16.msra.mxu0 %v5751
        %6244 = vmatpush.bf16.msra.mxu0 %v5743
        %6245 = vmatmul.bf16.gmra.mxu0 %v3644
        %v6246 = vpop.f32.mrf.mxu0
        %v6247 = vadd.f32 %v6234, %v6246
        %v6248 = vpop.f32.mrf.mxu0
        %6249 = vdwg.mxu0
        %6250 = vmatpush.bf16.msra.mxu0 0
        %6251 = vmatpush.bf16.msra.mxu0 0
        %6252 = vmatpush.bf16.msra.mxu0 0
        %6253 = vmatpush.bf16.msra.mxu0 %v6021
        %6254 = vmatpush.bf16.msra.mxu0 %v5831
        %6255 = vmatpush.bf16.msra.mxu0 %v5823
        %6256 = vmatpush.bf16.msra.mxu0 %v5815
        %6257 = vmatpush.bf16.msra.mxu0 %v5807
        %6258 = vmatmul.bf16.gmra.mxu0 %v6003
        %v6259 = vpop.f32.mrf.mxu0
        %v6260 = vadd.f32 %v6247, %v6259
        %v6261 = vpop.f32.mrf.mxu0
        %6262 = vdwg.mxu0
        %6263 = vmatpush.bf16.msra.mxu0 %v5736
        %6264 = vmatpush.bf16.msra.mxu0 %v5728
        %6265 = vmatpush.bf16.msra.mxu0 %v5720
        %6266 = vmatpush.bf16.msra.mxu0 %v5712
        %6267 = vmatpush.bf16.msra.mxu0 %v5704
        %6268 = vmatpush.bf16.msra.mxu0 %v5696
        %6269 = vmatpush.bf16.msra.mxu0 %v5688
        %6270 = vmatpush.bf16.msra.mxu0 %v5680
        %6271 = vmatmul.bf16.gmra.mxu0 %v3643
        %v6272 = vpop.f32.mrf.mxu0
        %v6273 = vadd.f32 %v5140, %v6272
        %v6274 = vpop.f32.mrf.mxu0
        %6275 = vdwg.mxu0
        %6276 = vmatpush.bf16.msra.mxu0 %v5800
        %6277 = vmatpush.bf16.msra.mxu0 %v5792
        %6278 = vmatpush.bf16.msra.mxu0 %v5784
        %6279 = vmatpush.bf16.msra.mxu0 %v5776
        %6280 = vmatpush.bf16.msra.mxu0 %v5768
        %6281 = vmatpush.bf16.msra.mxu0 %v5760
        %6282 = vmatpush.bf16.msra.mxu0 %v5752
        %6283 = vmatpush.bf16.msra.mxu0 %v5744
        %6284 = vmatmul.bf16.gmra.mxu0 %v3644
        %v6285 = vpop.f32.mrf.mxu0
        %v6286 = vadd.f32 %v6273, %v6285
        %v6287 = vpop.f32.mrf.mxu0
        %6288 = vdwg.mxu0
        %6289 = vmatpush.bf16.msra.mxu0 0
        %6290 = vmatpush.bf16.msra.mxu0 0
        %6291 = vmatpush.bf16.msra.mxu0 0
        %6292 = vmatpush.bf16.msra.mxu0 %v6024
        %6293 = vmatpush.bf16.msra.mxu0 %v5832
        %6294 = vmatpush.bf16.msra.mxu0 %v5824
        %6295 = vmatpush.bf16.msra.mxu0 %v5816
        %6296 = vmatpush.bf16.msra.mxu0 %v5808
        %6297 = vmatmul.bf16.gmra.mxu0 %v6003
        %v6298 = vpop.f32.mrf.mxu0
        %v6299 = vadd.f32 %v6286, %v6298
        %v6300 = vpop.f32.mrf.mxu0
        %6301 = vdwg.mxu0
        %6302 = vmatpush.bf16.msra.mxu0 %v5737
        %6303 = vmatpush.bf16.msra.mxu0 %v5729
        %6304 = vmatpush.bf16.msra.mxu0 %v5721
        %6305 = vmatpush.bf16.msra.mxu0 %v5713
        %6306 = vmatpush.bf16.msra.mxu0 %v5705
        %6307 = vmatpush.bf16.msra.mxu0 %v5697
        %6308 = vmatpush.bf16.msra.mxu0 %v5689
        %6309 = vmatpush.bf16.msra.mxu0 %v5681
        %6310 = vmatmul.bf16.gmra.mxu0 %v3643
        %v6311 = vpop.f32.mrf.mxu0
        %v6312 = vadd.f32 %v5179, %v6311
        %v6313 = vpop.f32.mrf.mxu0
        %6314 = vdwg.mxu0
        %6315 = vmatpush.bf16.msra.mxu0 %v5801
        %6316 = vmatpush.bf16.msra.mxu0 %v5793
        %6317 = vmatpush.bf16.msra.mxu0 %v5785
        %6318 = vmatpush.bf16.msra.mxu0 %v5777
        %6319 = vmatpush.bf16.msra.mxu0 %v5769
        %6320 = vmatpush.bf16.msra.mxu0 %v5761
        %6321 = vmatpush.bf16.msra.mxu0 %v5753
        %6322 = vmatpush.bf16.msra.mxu0 %v5745
        %6323 = vmatmul.bf16.gmra.mxu0 %v3644
        %v6324 = vpop.f32.mrf.mxu0
        %v6325 = vadd.f32 %v6312, %v6324
        %v6326 = vpop.f32.mrf.mxu0
        %6327 = vdwg.mxu0
        %6328 = vmatpush.bf16.msra.mxu0 0
        %6329 = vmatpush.bf16.msra.mxu0 0
        %6330 = vmatpush.bf16.msra.mxu0 0
        %6331 = vmatpush.bf16.msra.mxu0 %v6027
        %6332 = vmatpush.bf16.msra.mxu0 %v5833
        %6333 = vmatpush.bf16.msra.mxu0 %v5825
        %6334 = vmatpush.bf16.msra.mxu0 %v5817
        %6335 = vmatpush.bf16.msra.mxu0 %v5809
        %6336 = vmatmul.bf16.gmra.mxu0 %v6003
        %v6337 = vpop.f32.mrf.mxu0
        %v6338 = vadd.f32 %v6325, %v6337
        %v6339 = vpop.f32.mrf.mxu0
        %6340 = vdwg.mxu0
        %s6341 = scalar_lea.vmem %s15, 4
        %v6342 = vld [vmem:[%s6341] sm:$0x3]
        %v6344 = vsel %vm3600, %v6342, 0
        %6346 = vmatpush.bf16.msra.mxu0 0
        %6347 = vmatpush.bf16.msra.mxu0 0
        %6348 = vmatpush.bf16.msra.mxu0 0
        %6349 = vmatpush.bf16.msra.mxu0 0
        %6350 = vmatpush.bf16.msra.mxu0 %v3586
        %6351 = vmatpush.bf16.msra.mxu0 %v3584
        %6352 = vmatpush.bf16.msra.mxu0 %v3582
        %6353 = vmatpush.bf16.msra.mxu0 %v3580
        %6354 = vmatmul.bf16.gmra.mxu0 %v6344
        %v6355 = vpop.f32.mrf.mxu0
        %v6356 = vadd.f32 0.0, %v6355
        %v6357 = vpop.f32.mrf.mxu0
        %6358 = vdwg.mxu0
        %6359 = vmatpush.bf16.msra.mxu0 0
        %6360 = vmatpush.bf16.msra.mxu0 0
        %6361 = vmatpush.bf16.msra.mxu0 0
        %6362 = vmatpush.bf16.msra.mxu0 0
        %6363 = vmatpush.bf16.msra.mxu0 %v3587
        %6364 = vmatpush.bf16.msra.mxu0 %v3585
        %6365 = vmatpush.bf16.msra.mxu0 %v3583
        %6366 = vmatpush.bf16.msra.mxu0 %v3581
        %6367 = vmatmul.bf16.gmra.mxu0 %v6344
        %v6368 = vpop.f32.mrf.mxu0
        %v6369 = vadd.f32 0.0, %v6368
        %v6370 = vpop.f32.mrf.mxu0
        %6371 = vdwg.mxu0
        %6372 = vmatpush.bf16.msra.mxu0 0
        %6373 = vmatpush.bf16.msra.mxu0 0
        %6374 = vmatpush.bf16.msra.mxu0 0
        %6375 = vmatpush.bf16.msra.mxu0 0
        %6376 = vmatpush.bf16.msra.mxu0 %v3578
        %6377 = vmatpush.bf16.msra.mxu0 %v3572
        %6378 = vmatpush.bf16.msra.mxu0 %v3566
        %6379 = vmatpush.bf16.msra.mxu0 %v3560
        %6380 = vmatmul.bf16.gmra.mxu0 %v6344
        %v6381 = vpop.f32.mrf.mxu0
        %v6382 = vadd.f32 0.0, %v6381
        %v6383 = vpop.f32.mrf.mxu0
        %6384 = vdwg.mxu0
        %v6385 = vpack.c.bf16 %v6356, %v6356
        %v6386 = vpack.c.bf16 %v6369, %v6369
        %v6387 = vpack.c.bf16 %v6382, %v6382
        %s6388 = scalar_lea.vmem %s16, 2624
        %v6389 = vld [vmem:[%s6388] sm:$0xff]
        %v6390 = vld [vmem:[%s6388 + $0x8] sm:$0xff]
        %v6391 = vld [vmem:[%s6388 + $0x10] sm:$0xff]
        %v6392 = vld [vmem:[%s6388 + $0x18] sm:$0xff]
        %v6393 = vld [vmem:[%s6388 + $0x20] sm:$0xff]
        %v6394 = vld [vmem:[%s6388 + $0x28] sm:$0xff]
        %v6395 = vld [vmem:[%s6388 + $0x30] sm:$0xff]
        %v6396 = vld [vmem:[%s6388 + $0x38] sm:$0xff]
        %v6397 = vld [vmem:[%s6388 + $0x40] sm:$0xff]
        %v6398 = vld [vmem:[%s6388 + $0x48] sm:$0xff]
        %v6399 = vld [vmem:[%s6388 + $0x50] sm:$0xff]
        %v6400 = vld [vmem:[%s6388 + $0x58] sm:$0xff]
        %v6401 = vld [vmem:[%s6388 + $0x60] sm:$0xff]
        %v6402 = vld [vmem:[%s6388 + $0x68] sm:$0xff]
        %v6403 = vld [vmem:[%s6388 + $0x70] sm:$0xff]
        %v6404 = vld [vmem:[%s6388 + $0x78] sm:$0xff]
        %v6405 = vld [vmem:[%s6388 + $0x80] sm:$0xff]
        %v6406 = vld [vmem:[%s6388 + $0x88] sm:$0xff]
        %v6407 = vld [vmem:[%s6388 + $0x90] sm:$0xff]
        %v6408 = vld [vmem:[%s6388 + $0x98] sm:$0xff]
        %v6409 = vld [vmem:[%s6388 + $0xa0] sm:$0xff]
        %v6410 = vld [vmem:[%s6388 + $0xa8] sm:$0xff]
        %v6411 = vld [vmem:[%s6388 + $0xb0] sm:$0xff]
        %v6412 = vld [vmem:[%s6388 + $0xb8] sm:$0xff]
        %v6413 = vld [vmem:[%s6388 + $0xc0] sm:$0xff]
        %v6414 = vld [vmem:[%s6388 + $0xc8] sm:$0xff]
        %v6415 = vld [vmem:[%s6388 + $0xd0] sm:$0xff]
        %v6416 = vld [vmem:[%s6388 + $0xd8] sm:$0xff]
        %v6417 = vld [vmem:[%s6388 + $0xe0] sm:$0xff]
        %v6418 = vld [vmem:[%s6388 + $0xe8] sm:$0xff]
        %v6419 = vld [vmem:[%s6388 + $0xf0] sm:$0xff]
        %v6420 = vld [vmem:[%s6388 + $0xf8] sm:$0xff]
        %v6421 = vld [vmem:[%s6388 + $0x100] sm:$0xff]
        %v6422 = vld [vmem:[%s6388 + $0x108] sm:$0xff]
        %v6423 = vld [vmem:[%s6388 + $0x110] sm:$0xff]
        %v6424 = vld [vmem:[%s6388 + $0x118] sm:$0xff]
        %v6425 = vld [vmem:[%s6388 + $0x120] sm:$0xff]
        %v6426 = vld [vmem:[%s6388 + $0x128] sm:$0xff]
        %v6427 = vld [vmem:[%s6388 + $0x130] sm:$0xff]
        %v6428 = vld [vmem:[%s6388 + $0x138] sm:$0xff]
        %v6429 = vld [vmem:[%s6388 + $0x140] sm:$0xff]
        %v6430 = vld [vmem:[%s6388 + $0x148] sm:$0xff]
        %v6431 = vld [vmem:[%s6388 + $0x150] sm:$0xff]
        %v6432 = vld [vmem:[%s6388 + $0x158] sm:$0xff]
        %v6433 = vld [vmem:[%s6388 + $0x160] sm:$0xff]
        %v6434 = vld [vmem:[%s6388 + $0x168] sm:$0xff]
        %v6435 = vld [vmem:[%s6388 + $0x170] sm:$0xff]
        %v6436 = vld [vmem:[%s6388 + $0x178] sm:$0xff]
        %v6437 = vld [vmem:[%s6388 + $0x180] sm:$0xff]
        %v6438 = vld [vmem:[%s6388 + $0x188] sm:$0xff]
        %v6439 = vld [vmem:[%s6388 + $0x190] sm:$0xff]
        %v6440 = vld [vmem:[%s6388 + $0x198] sm:$0xff]
        %v6441 = vld [vmem:[%s6388 + $0x1a0] sm:$0xff]
        %v6442 = vld [vmem:[%s6388 + $0x1a8] sm:$0xff]
        %v6443 = vld [vmem:[%s6388 + $0x1b0] sm:$0xff]
        %v6444 = vld [vmem:[%s6388 + $0x1b8] sm:$0xff]
        %v6445 = vld [vmem:[%s6388 + $0x1c0] sm:$0xff]
        %v6446 = vld [vmem:[%s6388 + $0x1c8] sm:$0xff]
        %v6447 = vld [vmem:[%s6388 + $0x1d0] sm:$0xff]
        %v6448 = vld [vmem:[%s6388 + $0x1d8] sm:$0xff]
        %v6449 = vld [vmem:[%s6388 + $0x1e0] sm:$0xff]
        %v6450 = vld [vmem:[%s6388 + $0x1e8] sm:$0xff]
        %v6451 = vld [vmem:[%s6388 + $0x1f0] sm:$0xff]
        %v6452 = vld [vmem:[%s6388 + $0x1f8] sm:$0xff]
        %v6453 = vld [vmem:[%s6388 + $0x200] sm:$0xff]
        %v6454 = vld [vmem:[%s6388 + $0x208] sm:$0xff]
        %v6455 = vld [vmem:[%s6388 + $0x210] sm:$0xff]
        %v6456 = vld [vmem:[%s6388 + $0x218] sm:$0xff]
        %v6457 = vld [vmem:[%s6388 + $0x220] sm:$0xff]
        %v6458 = vld [vmem:[%s6388 + $0x228] sm:$0xff]
        %v6459 = vld [vmem:[%s6388 + $0x230] sm:$0xff]
        %v6460 = vld [vmem:[%s6388 + $0x238] sm:$0xff]
        %v6461 = vld [vmem:[%s6388 + $0x240] sm:$0xff]
        %v6462 = vld [vmem:[%s6388 + $0x248] sm:$0xff]
        %v6463 = vld [vmem:[%s6388 + $0x250] sm:$0xff]
        %v6464 = vld [vmem:[%s6388 + $0x258] sm:$0xff]
        %v6465 = vld [vmem:[%s6388 + $0x260] sm:$0xff]
        %v6466 = vld [vmem:[%s6388 + $0x268] sm:$0xff]
        %v6467 = vld [vmem:[%s6388 + $0x270] sm:$0xff]
        %v6468 = vld [vmem:[%s6388 + $0x278] sm:$0xff]
        %v6469 = vld [vmem:[%s6388 + $0x280] sm:$0xff]
        %v6470 = vld [vmem:[%s6388 + $0x288] sm:$0xff]
        %v6471 = vld [vmem:[%s6388 + $0x290] sm:$0xff]
        %v6472 = vld [vmem:[%s6388 + $0x298] sm:$0xff]
        %v6473 = vld [vmem:[%s6388 + $0x2a0] sm:$0xff]
        %v6474 = vld [vmem:[%s6388 + $0x2a8] sm:$0xff]
        %v6475 = vld [vmem:[%s6388 + $0x2b0] sm:$0xff]
        %v6476 = vld [vmem:[%s6388 + $0x2b8] sm:$0xff]
        %v6477 = vld [vmem:[%s6388 + $0x2c0] sm:$0xff]
        %v6478 = vld [vmem:[%s6388 + $0x2c8] sm:$0xff]
        %v6479 = vld [vmem:[%s6388 + $0x2d0] sm:$0xff]
        %v6480 = vld [vmem:[%s6388 + $0x2d8] sm:$0xff]
        %v6481 = vld [vmem:[%s6388 + $0x2e0] sm:$0xff]
        %v6482 = vld [vmem:[%s6388 + $0x2e8] sm:$0xff]
        %v6483 = vld [vmem:[%s6388 + $0x2f0] sm:$0xff]
        %v6484 = vld [vmem:[%s6388 + $0x2f8] sm:$0xff]
        %v6485 = vld [vmem:[%s6388 + $0x300] sm:$0xff]
        %v6486 = vld [vmem:[%s6388 + $0x308] sm:$0xff]
        %v6487 = vld [vmem:[%s6388 + $0x310] sm:$0xff]
        %v6488 = vld [vmem:[%s6388 + $0x318] sm:$0xff]
        %v6489 = vld [vmem:[%s6388 + $0x320] sm:$0xff]
        %v6490 = vld [vmem:[%s6388 + $0x328] sm:$0xff]
        %v6491 = vld [vmem:[%s6388 + $0x330] sm:$0xff]
        %v6492 = vld [vmem:[%s6388 + $0x338] sm:$0xff]
        %v6493 = vld [vmem:[%s6388 + $0x340] sm:$0xff]
        %v6494 = vld [vmem:[%s6388 + $0x348] sm:$0xff]
        %v6495 = vld [vmem:[%s6388 + $0x350] sm:$0xff]
        %v6496 = vld [vmem:[%s6388 + $0x358] sm:$0xff]
        %v6497 = vld [vmem:[%s6388 + $0x360] sm:$0xff]
        %v6498 = vld [vmem:[%s6388 + $0x368] sm:$0xff]
        %v6499 = vld [vmem:[%s6388 + $0x370] sm:$0xff]
        %v6500 = vld [vmem:[%s6388 + $0x378] sm:$0xff]
        %v6501 = vld [vmem:[%s6388 + $0x380] sm:$0xff]
        %v6502 = vld [vmem:[%s6388 + $0x388] sm:$0xff]
        %v6503 = vld [vmem:[%s6388 + $0x390] sm:$0xff]
        %v6504 = vld [vmem:[%s6388 + $0x398] sm:$0xff]
        %v6505 = vld [vmem:[%s6388 + $0x3a0] sm:$0xff]
        %v6506 = vld [vmem:[%s6388 + $0x3a8] sm:$0xff]
        %v6507 = vld [vmem:[%s6388 + $0x3b0] sm:$0xff]
        %v6508 = vld [vmem:[%s6388 + $0x3b8] sm:$0xff]
        %v6509 = vld [vmem:[%s6388 + $0x3c0] sm:$0xff]
        %v6510 = vld [vmem:[%s6388 + $0x3c8] sm:$0xff]
        %v6511 = vld [vmem:[%s6388 + $0x3d0] sm:$0xff]
        %v6512 = vld [vmem:[%s6388 + $0x3d8] sm:$0xff]
        %v6513 = vld [vmem:[%s6388 + $0x3e0] sm:$0xff]
        %v6514 = vld [vmem:[%s6388 + $0x3e8] sm:$0xff]
        %v6515 = vld [vmem:[%s6388 + $0x3f0] sm:$0xff]
        %v6516 = vld [vmem:[%s6388 + $0x3f8] sm:$0xff]
        %v6517 = vld [vmem:[%s6388 + $0x400] sm:$0xff]
        %v6518 = vld [vmem:[%s6388 + $0x408] sm:$0xff]
        %v6519 = vld [vmem:[%s6388 + $0x410] sm:$0xff]
        %v6520 = vld [vmem:[%s6388 + $0x418] sm:$0xff]
        %v6521 = vld [vmem:[%s6388 + $0x420] sm:$0xff]
        %v6522 = vld [vmem:[%s6388 + $0x428] sm:$0xff]
        %v6523 = vld [vmem:[%s6388 + $0x430] sm:$0xff]
        %v6524 = vld [vmem:[%s6388 + $0x438] sm:$0xff]
        %v6525 = vld [vmem:[%s6388 + $0x440] sm:$0xff]
        %v6526 = vld [vmem:[%s6388 + $0x448] sm:$0xff]
        %v6527 = vld [vmem:[%s6388 + $0x450] sm:$0xff]
        %v6528 = vld [vmem:[%s6388 + $0x458] sm:$0xff]
        %v6529 = vld [vmem:[%s6388 + $0x460] sm:$0xff]
        %v6530 = vld [vmem:[%s6388 + $0x468] sm:$0xff]
        %v6531 = vld [vmem:[%s6388 + $0x470] sm:$0xff]
        %v6532 = vld [vmem:[%s6388 + $0x478] sm:$0xff]
        %v6533 = vld [vmem:[%s6388 + $0x480] sm:$0xff]
        %v6534 = vld [vmem:[%s6388 + $0x488] sm:$0xff]
        %v6535 = vld [vmem:[%s6388 + $0x490] sm:$0xff]
        %v6536 = vld [vmem:[%s6388 + $0x498] sm:$0xff]
        %v6537 = vld [vmem:[%s6388 + $0x4a0] sm:$0xff]
        %v6538 = vld [vmem:[%s6388 + $0x4a8] sm:$0xff]
        %v6539 = vld [vmem:[%s6388 + $0x4b0] sm:$0xff]
        %v6540 = vld [vmem:[%s6388 + $0x4b8] sm:$0xff]
        %v6541 = vld [vmem:[%s6388 + $0x4c0] sm:$0xff]
        %v6542 = vld [vmem:[%s6388 + $0x4c8] sm:$0xff]
        %v6543 = vld [vmem:[%s6388 + $0x4d0] sm:$0xff]
        %v6544 = vld [vmem:[%s6388 + $0x4d8] sm:$0xff]
        %v6545 = vld [vmem:[%s6388 + $0x4e0] sm:$0xff]
        %v6546 = vld [vmem:[%s6388 + $0x4e8] sm:$0xff]
        %v6547 = vld [vmem:[%s6388 + $0x4f0] sm:$0xff]
        %v6548 = vld [vmem:[%s6388 + $0x4f8] sm:$0xff]
        %v6549 = vld [vmem:[%s6388 + $0x500] sm:$0x33]
        %v6550 = vld [vmem:[%s6388 + $0x508] sm:$0x33]
        %v6551 = vld [vmem:[%s6388 + $0x510] sm:$0x33]
        %v6552 = vld [vmem:[%s6388 + $0x518] sm:$0x33]
        %v6717 = vunpack.c.l.b16 %v6389
        %v6718 = vunpack.c.h.b16 %v6389
        %v6719 = vunpack.c.l.b16 %v6390
        %v6720 = vunpack.c.h.b16 %v6390
        %v6721 = vunpack.c.l.b16 %v6391
        %v6722 = vunpack.c.h.b16 %v6391
        %v6723 = vunpack.c.l.b16 %v6392
        %v6724 = vunpack.c.h.b16 %v6392
        %v6725 = vunpack.c.l.b16 %v6393
        %v6726 = vunpack.c.h.b16 %v6393
        %v6727 = vunpack.c.l.b16 %v6394
        %v6728 = vunpack.c.h.b16 %v6394
        %v6729 = vunpack.c.l.b16 %v6395
        %v6730 = vunpack.c.h.b16 %v6395
        %v6731 = vunpack.c.l.b16 %v6396
        %v6732 = vunpack.c.h.b16 %v6396
        %v6733 = vunpack.c.l.b16 %v6397
        %v6734 = vunpack.c.h.b16 %v6397
        %v6735 = vunpack.c.l.b16 %v6398
        %v6736 = vunpack.c.h.b16 %v6398
        %v6737 = vunpack.c.l.b16 %v6399
        %v6738 = vunpack.c.h.b16 %v6399
        %v6739 = vunpack.c.l.b16 %v6400
        %v6740 = vunpack.c.h.b16 %v6400
        %v6741 = vunpack.c.l.b16 %v6401
        %v6742 = vunpack.c.h.b16 %v6401
        %v6743 = vunpack.c.l.b16 %v6402
        %v6744 = vunpack.c.h.b16 %v6402
        %v6745 = vunpack.c.l.b16 %v6403
        %v6746 = vunpack.c.h.b16 %v6403
        %v6747 = vunpack.c.l.b16 %v6404
        %v6748 = vunpack.c.h.b16 %v6404
        %v6749 = vunpack.c.l.b16 %v6405
        %v6750 = vunpack.c.h.b16 %v6405
        %v6751 = vunpack.c.l.b16 %v6406
        %v6752 = vunpack.c.h.b16 %v6406
        %v6753 = vunpack.c.l.b16 %v6407
        %v6754 = vunpack.c.h.b16 %v6407
        %v6755 = vunpack.c.l.b16 %v6408
        %v6756 = vunpack.c.h.b16 %v6408
        %v6757 = vunpack.c.l.b16 %v6409
        %v6758 = vunpack.c.h.b16 %v6409
        %v6759 = vunpack.c.l.b16 %v6410
        %v6760 = vunpack.c.h.b16 %v6410
        %v6761 = vunpack.c.l.b16 %v6411
        %v6762 = vunpack.c.h.b16 %v6411
        %v6763 = vunpack.c.l.b16 %v6412
        %v6764 = vunpack.c.h.b16 %v6412
        %v6765 = vunpack.c.l.b16 %v6413
        %v6766 = vunpack.c.h.b16 %v6413
        %v6767 = vunpack.c.l.b16 %v6414
        %v6768 = vunpack.c.h.b16 %v6414
        %v6769 = vunpack.c.l.b16 %v6415
        %v6770 = vunpack.c.h.b16 %v6415
        %v6771 = vunpack.c.l.b16 %v6416
        %v6772 = vunpack.c.h.b16 %v6416
        %v6773 = vunpack.c.l.b16 %v6417
        %v6774 = vunpack.c.h.b16 %v6417
        %v6775 = vunpack.c.l.b16 %v6418
        %v6776 = vunpack.c.h.b16 %v6418
        %v6777 = vunpack.c.l.b16 %v6419
        %v6778 = vunpack.c.h.b16 %v6419
        %v6779 = vunpack.c.l.b16 %v6420
        %v6780 = vunpack.c.h.b16 %v6420
        %v6781 = vunpack.c.l.b16 %v6421
        %v6782 = vunpack.c.h.b16 %v6421
        %v6783 = vunpack.c.l.b16 %v6422
        %v6784 = vunpack.c.h.b16 %v6422
        %v6785 = vunpack.c.l.b16 %v6423
        %v6786 = vunpack.c.h.b16 %v6423
        %v6787 = vunpack.c.l.b16 %v6424
        %v6788 = vunpack.c.h.b16 %v6424
        %v6789 = vunpack.c.l.b16 %v6425
        %v6790 = vunpack.c.h.b16 %v6425
        %v6791 = vunpack.c.l.b16 %v6426
        %v6792 = vunpack.c.h.b16 %v6426
        %v6793 = vunpack.c.l.b16 %v6427
        %v6794 = vunpack.c.h.b16 %v6427
        %v6795 = vunpack.c.l.b16 %v6428
        %v6796 = vunpack.c.h.b16 %v6428
        %v6797 = vunpack.c.l.b16 %v6429
        %v6798 = vunpack.c.h.b16 %v6429
        %v6799 = vunpack.c.l.b16 %v6430
        %v6800 = vunpack.c.h.b16 %v6430
        %v6801 = vunpack.c.l.b16 %v6431
        %v6802 = vunpack.c.h.b16 %v6431
        %v6803 = vunpack.c.l.b16 %v6432
        %v6804 = vunpack.c.h.b16 %v6432
        %v6805 = vunpack.c.l.b16 %v6433
        %v6806 = vunpack.c.h.b16 %v6433
        %v6807 = vunpack.c.l.b16 %v6434
        %v6808 = vunpack.c.h.b16 %v6434
        %v6809 = vunpack.c.l.b16 %v6435
        %v6810 = vunpack.c.h.b16 %v6435
        %v6811 = vunpack.c.l.b16 %v6436
        %v6812 = vunpack.c.h.b16 %v6436
        %v6813 = vunpack.c.l.b16 %v6437
        %v6814 = vunpack.c.h.b16 %v6437
        %v6815 = vunpack.c.l.b16 %v6438
        %v6816 = vunpack.c.h.b16 %v6438
        %v6817 = vunpack.c.l.b16 %v6439
        %v6818 = vunpack.c.h.b16 %v6439
        %v6819 = vunpack.c.l.b16 %v6440
        %v6820 = vunpack.c.h.b16 %v6440
        %v6821 = vunpack.c.l.b16 %v6441
        %v6822 = vunpack.c.h.b16 %v6441
        %v6823 = vunpack.c.l.b16 %v6442
        %v6824 = vunpack.c.h.b16 %v6442
        %v6825 = vunpack.c.l.b16 %v6443
        %v6826 = vunpack.c.h.b16 %v6443
        %v6827 = vunpack.c.l.b16 %v6444
        %v6828 = vunpack.c.h.b16 %v6444
        %v6829 = vunpack.c.l.b16 %v6445
        %v6830 = vunpack.c.h.b16 %v6445
        %v6831 = vunpack.c.l.b16 %v6446
        %v6832 = vunpack.c.h.b16 %v6446
        %v6833 = vunpack.c.l.b16 %v6447
        %v6834 = vunpack.c.h.b16 %v6447
        %v6835 = vunpack.c.l.b16 %v6448
        %v6836 = vunpack.c.h.b16 %v6448
        %v6837 = vunpack.c.l.b16 %v6449
        %v6838 = vunpack.c.h.b16 %v6449
        %v6839 = vunpack.c.l.b16 %v6450
        %v6840 = vunpack.c.h.b16 %v6450
        %v6841 = vunpack.c.l.b16 %v6451
        %v6842 = vunpack.c.h.b16 %v6451
        %v6843 = vunpack.c.l.b16 %v6452
        %v6844 = vunpack.c.h.b16 %v6452
        %v6845 = vunpack.c.l.b16 %v6453
        %v6846 = vunpack.c.h.b16 %v6453
        %v6847 = vunpack.c.l.b16 %v6454
        %v6848 = vunpack.c.h.b16 %v6454
        %v6849 = vunpack.c.l.b16 %v6455
        %v6850 = vunpack.c.h.b16 %v6455
        %v6851 = vunpack.c.l.b16 %v6456
        %v6852 = vunpack.c.h.b16 %v6456
        %v6853 = vunpack.c.l.b16 %v6457
        %v6854 = vunpack.c.h.b16 %v6457
        %v6855 = vunpack.c.l.b16 %v6458
        %v6856 = vunpack.c.h.b16 %v6458
        %v6857 = vunpack.c.l.b16 %v6459
        %v6858 = vunpack.c.h.b16 %v6459
        %v6859 = vunpack.c.l.b16 %v6460
        %v6860 = vunpack.c.h.b16 %v6460
        %v6861 = vunpack.c.l.b16 %v6461
        %v6862 = vunpack.c.h.b16 %v6461
        %v6863 = vunpack.c.l.b16 %v6462
        %v6864 = vunpack.c.h.b16 %v6462
        %v6865 = vunpack.c.l.b16 %v6463
        %v6866 = vunpack.c.h.b16 %v6463
        %v6867 = vunpack.c.l.b16 %v6464
        %v6868 = vunpack.c.h.b16 %v6464
        %v6869 = vunpack.c.l.b16 %v6465
        %v6870 = vunpack.c.h.b16 %v6465
        %v6871 = vunpack.c.l.b16 %v6466
        %v6872 = vunpack.c.h.b16 %v6466
        %v6873 = vunpack.c.l.b16 %v6467
        %v6874 = vunpack.c.h.b16 %v6467
        %v6875 = vunpack.c.l.b16 %v6468
        %v6876 = vunpack.c.h.b16 %v6468
        %v6877 = vunpack.c.l.b16 %v6469
        %v6878 = vunpack.c.h.b16 %v6469
        %v6879 = vunpack.c.l.b16 %v6470
        %v6880 = vunpack.c.h.b16 %v6470
        %v6881 = vunpack.c.l.b16 %v6471
        %v6882 = vunpack.c.h.b16 %v6471
        %v6883 = vunpack.c.l.b16 %v6472
        %v6884 = vunpack.c.h.b16 %v6472
        %v6885 = vunpack.c.l.b16 %v6473
        %v6886 = vunpack.c.h.b16 %v6473
        %v6887 = vunpack.c.l.b16 %v6474
        %v6888 = vunpack.c.h.b16 %v6474
        %v6889 = vunpack.c.l.b16 %v6475
        %v6890 = vunpack.c.h.b16 %v6475
        %v6891 = vunpack.c.l.b16 %v6476
        %v6892 = vunpack.c.h.b16 %v6476
        %v6893 = vunpack.c.l.b16 %v6477
        %v6894 = vunpack.c.h.b16 %v6477
        %v6895 = vunpack.c.l.b16 %v6478
        %v6896 = vunpack.c.h.b16 %v6478
        %v6897 = vunpack.c.l.b16 %v6479
        %v6898 = vunpack.c.h.b16 %v6479
        %v6899 = vunpack.c.l.b16 %v6480
        %v6900 = vunpack.c.h.b16 %v6480
        %v6901 = vunpack.c.l.b16 %v6481
        %v6902 = vunpack.c.h.b16 %v6481
        %v6903 = vunpack.c.l.b16 %v6482
        %v6904 = vunpack.c.h.b16 %v6482
        %v6905 = vunpack.c.l.b16 %v6483
        %v6906 = vunpack.c.h.b16 %v6483
        %v6907 = vunpack.c.l.b16 %v6484
        %v6908 = vunpack.c.h.b16 %v6484
        %v6909 = vunpack.c.l.b16 %v6485
        %v6910 = vunpack.c.h.b16 %v6485
        %v6911 = vunpack.c.l.b16 %v6486
        %v6912 = vunpack.c.h.b16 %v6486
        %v6913 = vunpack.c.l.b16 %v6487
        %v6914 = vunpack.c.h.b16 %v6487
        %v6915 = vunpack.c.l.b16 %v6488
        %v6916 = vunpack.c.h.b16 %v6488
        %v6917 = vunpack.c.l.b16 %v6489
        %v6918 = vunpack.c.h.b16 %v6489
        %v6919 = vunpack.c.l.b16 %v6490
        %v6920 = vunpack.c.h.b16 %v6490
        %v6921 = vunpack.c.l.b16 %v6491
        %v6922 = vunpack.c.h.b16 %v6491
        %v6923 = vunpack.c.l.b16 %v6492
        %v6924 = vunpack.c.h.b16 %v6492
        %v6925 = vunpack.c.l.b16 %v6493
        %v6926 = vunpack.c.h.b16 %v6493
        %v6927 = vunpack.c.l.b16 %v6494
        %v6928 = vunpack.c.h.b16 %v6494
        %v6929 = vunpack.c.l.b16 %v6495
        %v6930 = vunpack.c.h.b16 %v6495
        %v6931 = vunpack.c.l.b16 %v6496
        %v6932 = vunpack.c.h.b16 %v6496
        %v6933 = vunpack.c.l.b16 %v6497
        %v6934 = vunpack.c.h.b16 %v6497
        %v6935 = vunpack.c.l.b16 %v6498
        %v6936 = vunpack.c.h.b16 %v6498
        %v6937 = vunpack.c.l.b16 %v6499
        %v6938 = vunpack.c.h.b16 %v6499
        %v6939 = vunpack.c.l.b16 %v6500
        %v6940 = vunpack.c.h.b16 %v6500
        %v6941 = vunpack.c.l.b16 %v6501
        %v6942 = vunpack.c.h.b16 %v6501
        %v6943 = vunpack.c.l.b16 %v6502
        %v6944 = vunpack.c.h.b16 %v6502
        %v6945 = vunpack.c.l.b16 %v6503
        %v6946 = vunpack.c.h.b16 %v6503
        %v6947 = vunpack.c.l.b16 %v6504
        %v6948 = vunpack.c.h.b16 %v6504
        %v6949 = vunpack.c.l.b16 %v6505
        %v6950 = vunpack.c.h.b16 %v6505
        %v6951 = vunpack.c.l.b16 %v6506
        %v6952 = vunpack.c.h.b16 %v6506
        %v6953 = vunpack.c.l.b16 %v6507
        %v6954 = vunpack.c.h.b16 %v6507
        %v6955 = vunpack.c.l.b16 %v6508
        %v6956 = vunpack.c.h.b16 %v6508
        %v6957 = vunpack.c.l.b16 %v6509
        %v6958 = vunpack.c.h.b16 %v6509
        %v6959 = vunpack.c.l.b16 %v6510
        %v6960 = vunpack.c.h.b16 %v6510
        %v6961 = vunpack.c.l.b16 %v6511
        %v6962 = vunpack.c.h.b16 %v6511
        %v6963 = vunpack.c.l.b16 %v6512
        %v6964 = vunpack.c.h.b16 %v6512
        %v6965 = vunpack.c.l.b16 %v6513
        %v6966 = vunpack.c.h.b16 %v6513
        %v6967 = vunpack.c.l.b16 %v6514
        %v6968 = vunpack.c.h.b16 %v6514
        %v6969 = vunpack.c.l.b16 %v6515
        %v6970 = vunpack.c.h.b16 %v6515
        %v6971 = vunpack.c.l.b16 %v6516
        %v6972 = vunpack.c.h.b16 %v6516
        %v6973 = vunpack.c.l.b16 %v6517
        %v6974 = vunpack.c.h.b16 %v6517
        %v6975 = vunpack.c.l.b16 %v6518
        %v6976 = vunpack.c.h.b16 %v6518
        %v6977 = vunpack.c.l.b16 %v6519
        %v6978 = vunpack.c.h.b16 %v6519
        %v6979 = vunpack.c.l.b16 %v6520
        %v6980 = vunpack.c.h.b16 %v6520
        %v6981 = vunpack.c.l.b16 %v6521
        %v6982 = vunpack.c.h.b16 %v6521
        %v6983 = vunpack.c.l.b16 %v6522
        %v6984 = vunpack.c.h.b16 %v6522
        %v6985 = vunpack.c.l.b16 %v6523
        %v6986 = vunpack.c.h.b16 %v6523
        %v6987 = vunpack.c.l.b16 %v6524
        %v6988 = vunpack.c.h.b16 %v6524
        %v6989 = vunpack.c.l.b16 %v6525
        %v6990 = vunpack.c.h.b16 %v6525
        %v6991 = vunpack.c.l.b16 %v6526
        %v6992 = vunpack.c.h.b16 %v6526
        %v6993 = vunpack.c.l.b16 %v6527
        %v6994 = vunpack.c.h.b16 %v6527
        %v6995 = vunpack.c.l.b16 %v6528
        %v6996 = vunpack.c.h.b16 %v6528
        %v6997 = vunpack.c.l.b16 %v6529
        %v6998 = vunpack.c.h.b16 %v6529
        %v6999 = vunpack.c.l.b16 %v6530
        %v7000 = vunpack.c.h.b16 %v6530
        %v7001 = vunpack.c.l.b16 %v6531
        %v7002 = vunpack.c.h.b16 %v6531
        %v7003 = vunpack.c.l.b16 %v6532
        %v7004 = vunpack.c.h.b16 %v6532
        %v7005 = vunpack.c.l.b16 %v6533
        %v7006 = vunpack.c.h.b16 %v6533
        %v7007 = vunpack.c.l.b16 %v6534
        %v7008 = vunpack.c.h.b16 %v6534
        %v7009 = vunpack.c.l.b16 %v6535
        %v7010 = vunpack.c.h.b16 %v6535
        %v7011 = vunpack.c.l.b16 %v6536
        %v7012 = vunpack.c.h.b16 %v6536
        %v7013 = vunpack.c.l.b16 %v6537
        %v7014 = vunpack.c.h.b16 %v6537
        %v7015 = vunpack.c.l.b16 %v6538
        %v7016 = vunpack.c.h.b16 %v6538
        %v7017 = vunpack.c.l.b16 %v6539
        %v7018 = vunpack.c.h.b16 %v6539
        %v7019 = vunpack.c.l.b16 %v6540
        %v7020 = vunpack.c.h.b16 %v6540
        %v7021 = vunpack.c.l.b16 %v6541
        %v7022 = vunpack.c.h.b16 %v6541
        %v7023 = vunpack.c.l.b16 %v6542
        %v7024 = vunpack.c.h.b16 %v6542
        %v7025 = vunpack.c.l.b16 %v6543
        %v7026 = vunpack.c.h.b16 %v6543
        %v7027 = vunpack.c.l.b16 %v6544
        %v7028 = vunpack.c.h.b16 %v6544
        %v7029 = vunpack.c.l.b16 %v6545
        %v7030 = vunpack.c.h.b16 %v6545
        %v7031 = vunpack.c.l.b16 %v6546
        %v7032 = vunpack.c.h.b16 %v6546
        %v7033 = vunpack.c.l.b16 %v6547
        %v7034 = vunpack.c.h.b16 %v6547
        %v7035 = vunpack.c.l.b16 %v6548
        %v7036 = vunpack.c.h.b16 %v6548
        %v7037 = vunpack.c.l.b16 %v6549
        %v7038 = vunpack.c.h.b16 %v6549
        %v7039 = vunpack.c.l.b16 %v6550
        %v7040 = vunpack.c.h.b16 %v6550
        %v7041 = vunpack.c.l.b16 %v6551
        %v7042 = vunpack.c.h.b16 %v6551
        %v7043 = vunpack.c.l.b16 %v6552
        %v7044 = vunpack.c.h.b16 %v6552
        %v7045 = vpack.c.b16 %v6725, %v6717
        %v7046 = vpack.c.b16 %v6726, %v6718
        %v7047 = vpack.c.b16 %v6727, %v6719
        %v7048 = vpack.c.b16 %v6728, %v6720
        %v7049 = vpack.c.b16 %v6729, %v6721
        %v7050 = vpack.c.b16 %v6730, %v6722
        %v7051 = vpack.c.b16 %v6731, %v6723
        %v7052 = vpack.c.b16 %v6732, %v6724
        %v7053 = vpack.c.b16 %v6741, %v6733
        %v7054 = vpack.c.b16 %v6742, %v6734
        %v7055 = vpack.c.b16 %v6743, %v6735
        %v7056 = vpack.c.b16 %v6744, %v6736
        %v7057 = vpack.c.b16 %v6745, %v6737
        %v7058 = vpack.c.b16 %v6746, %v6738
        %v7059 = vpack.c.b16 %v6747, %v6739
        %v7060 = vpack.c.b16 %v6748, %v6740
        %v7061 = vpack.c.b16 %v6757, %v6749
        %v7062 = vpack.c.b16 %v6758, %v6750
        %v7063 = vpack.c.b16 %v6759, %v6751
        %v7064 = vpack.c.b16 %v6760, %v6752
        %v7065 = vpack.c.b16 %v6761, %v6753
        %v7066 = vpack.c.b16 %v6762, %v6754
        %v7067 = vpack.c.b16 %v6763, %v6755
        %v7068 = vpack.c.b16 %v6764, %v6756
        %v7069 = vpack.c.b16 %v6773, %v6765
        %v7070 = vpack.c.b16 %v6774, %v6766
        %v7071 = vpack.c.b16 %v6775, %v6767
        %v7072 = vpack.c.b16 %v6776, %v6768
        %v7073 = vpack.c.b16 %v6777, %v6769
        %v7074 = vpack.c.b16 %v6778, %v6770
        %v7075 = vpack.c.b16 %v6779, %v6771
        %v7076 = vpack.c.b16 %v6780, %v6772
        %v7077 = vpack.c.b16 %v6789, %v6781
        %v7078 = vpack.c.b16 %v6790, %v6782
        %v7079 = vpack.c.b16 %v6791, %v6783
        %v7080 = vpack.c.b16 %v6792, %v6784
        %v7081 = vpack.c.b16 %v6793, %v6785
        %v7082 = vpack.c.b16 %v6794, %v6786
        %v7083 = vpack.c.b16 %v6795, %v6787
        %v7084 = vpack.c.b16 %v6796, %v6788
        %v7085 = vpack.c.b16 %v6805, %v6797
        %v7086 = vpack.c.b16 %v6806, %v6798
        %v7087 = vpack.c.b16 %v6807, %v6799
        %v7088 = vpack.c.b16 %v6808, %v6800
        %v7089 = vpack.c.b16 %v6809, %v6801
        %v7090 = vpack.c.b16 %v6810, %v6802
        %v7091 = vpack.c.b16 %v6811, %v6803
        %v7092 = vpack.c.b16 %v6812, %v6804
        %v7093 = vpack.c.b16 %v6821, %v6813
        %v7094 = vpack.c.b16 %v6822, %v6814
        %v7095 = vpack.c.b16 %v6823, %v6815
        %v7096 = vpack.c.b16 %v6824, %v6816
        %v7097 = vpack.c.b16 %v6825, %v6817
        %v7098 = vpack.c.b16 %v6826, %v6818
        %v7099 = vpack.c.b16 %v6827, %v6819
        %v7100 = vpack.c.b16 %v6828, %v6820
        %v7101 = vpack.c.b16 %v6837, %v6829
        %v7102 = vpack.c.b16 %v6838, %v6830
        %v7103 = vpack.c.b16 %v6839, %v6831
        %v7104 = vpack.c.b16 %v6840, %v6832
        %v7105 = vpack.c.b16 %v6841, %v6833
        %v7106 = vpack.c.b16 %v6842, %v6834
        %v7107 = vpack.c.b16 %v6843, %v6835
        %v7108 = vpack.c.b16 %v6844, %v6836
        %v7109 = vpack.c.b16 %v6853, %v6845
        %v7110 = vpack.c.b16 %v6854, %v6846
        %v7111 = vpack.c.b16 %v6855, %v6847
        %v7112 = vpack.c.b16 %v6856, %v6848
        %v7113 = vpack.c.b16 %v6857, %v6849
        %v7114 = vpack.c.b16 %v6858, %v6850
        %v7115 = vpack.c.b16 %v6859, %v6851
        %v7116 = vpack.c.b16 %v6860, %v6852
        %v7117 = vpack.c.b16 %v6869, %v6861
        %v7118 = vpack.c.b16 %v6870, %v6862
        %v7119 = vpack.c.b16 %v6871, %v6863
        %v7120 = vpack.c.b16 %v6872, %v6864
        %v7121 = vpack.c.b16 %v6873, %v6865
        %v7122 = vpack.c.b16 %v6874, %v6866
        %v7123 = vpack.c.b16 %v6875, %v6867
        %v7124 = vpack.c.b16 %v6876, %v6868
        %v7125 = vpack.c.b16 %v6885, %v6877
        %v7126 = vpack.c.b16 %v6886, %v6878
        %v7127 = vpack.c.b16 %v6887, %v6879
        %v7128 = vpack.c.b16 %v6888, %v6880
        %v7129 = vpack.c.b16 %v6889, %v6881
        %v7130 = vpack.c.b16 %v6890, %v6882
        %v7131 = vpack.c.b16 %v6891, %v6883
        %v7132 = vpack.c.b16 %v6892, %v6884
        %v7133 = vpack.c.b16 %v6901, %v6893
        %v7134 = vpack.c.b16 %v6902, %v6894
        %v7135 = vpack.c.b16 %v6903, %v6895
        %v7136 = vpack.c.b16 %v6904, %v6896
        %v7137 = vpack.c.b16 %v6905, %v6897
        %v7138 = vpack.c.b16 %v6906, %v6898
        %v7139 = vpack.c.b16 %v6907, %v6899
        %v7140 = vpack.c.b16 %v6908, %v6900
        %v7141 = vpack.c.b16 %v6917, %v6909
        %v7142 = vpack.c.b16 %v6918, %v6910
        %v7143 = vpack.c.b16 %v6919, %v6911
        %v7144 = vpack.c.b16 %v6920, %v6912
        %v7145 = vpack.c.b16 %v6921, %v6913
        %v7146 = vpack.c.b16 %v6922, %v6914
        %v7147 = vpack.c.b16 %v6923, %v6915
        %v7148 = vpack.c.b16 %v6924, %v6916
        %v7149 = vpack.c.b16 %v6933, %v6925
        %v7150 = vpack.c.b16 %v6934, %v6926
        %v7151 = vpack.c.b16 %v6935, %v6927
        %v7152 = vpack.c.b16 %v6936, %v6928
        %v7153 = vpack.c.b16 %v6937, %v6929
        %v7154 = vpack.c.b16 %v6938, %v6930
        %v7155 = vpack.c.b16 %v6939, %v6931
        %v7156 = vpack.c.b16 %v6940, %v6932
        %v7157 = vpack.c.b16 %v6949, %v6941
        %v7158 = vpack.c.b16 %v6950, %v6942
        %v7159 = vpack.c.b16 %v6951, %v6943
        %v7160 = vpack.c.b16 %v6952, %v6944
        %v7161 = vpack.c.b16 %v6953, %v6945
        %v7162 = vpack.c.b16 %v6954, %v6946
        %v7163 = vpack.c.b16 %v6955, %v6947
        %v7164 = vpack.c.b16 %v6956, %v6948
        %v7165 = vpack.c.b16 %v6965, %v6957
        %v7166 = vpack.c.b16 %v6966, %v6958
        %v7167 = vpack.c.b16 %v6967, %v6959
        %v7168 = vpack.c.b16 %v6968, %v6960
        %v7169 = vpack.c.b16 %v6969, %v6961
        %v7170 = vpack.c.b16 %v6970, %v6962
        %v7171 = vpack.c.b16 %v6971, %v6963
        %v7172 = vpack.c.b16 %v6972, %v6964
        %v7173 = vpack.c.b16 %v6981, %v6973
        %v7174 = vpack.c.b16 %v6982, %v6974
        %v7175 = vpack.c.b16 %v6983, %v6975
        %v7176 = vpack.c.b16 %v6984, %v6976
        %v7177 = vpack.c.b16 %v6985, %v6977
        %v7178 = vpack.c.b16 %v6986, %v6978
        %v7179 = vpack.c.b16 %v6987, %v6979
        %v7180 = vpack.c.b16 %v6988, %v6980
        %v7181 = vpack.c.b16 %v6997, %v6989
        %v7182 = vpack.c.b16 %v6998, %v6990
        %v7183 = vpack.c.b16 %v6999, %v6991
        %v7184 = vpack.c.b16 %v7000, %v6992
        %v7185 = vpack.c.b16 %v7001, %v6993
        %v7186 = vpack.c.b16 %v7002, %v6994
        %v7187 = vpack.c.b16 %v7003, %v6995
        %v7188 = vpack.c.b16 %v7004, %v6996
        %v7189 = vpack.c.b16 %v7013, %v7005
        %v7190 = vpack.c.b16 %v7014, %v7006
        %v7191 = vpack.c.b16 %v7015, %v7007
        %v7192 = vpack.c.b16 %v7016, %v7008
        %v7193 = vpack.c.b16 %v7017, %v7009
        %v7194 = vpack.c.b16 %v7018, %v7010
        %v7195 = vpack.c.b16 %v7019, %v7011
        %v7196 = vpack.c.b16 %v7020, %v7012
        %v7197 = vpack.c.b16 %v7029, %v7021
        %v7198 = vpack.c.b16 %v7030, %v7022
        %v7199 = vpack.c.b16 %v7031, %v7023
        %v7200 = vpack.c.b16 %v7032, %v7024
        %v7201 = vpack.c.b16 %v7033, %v7025
        %v7202 = vpack.c.b16 %v7034, %v7026
        %v7203 = vpack.c.b16 %v7035, %v7027
        %v7204 = vpack.c.b16 %v7036, %v7028
        %v7205 = vpack.c.b16 %v7037, %v7037
        %v7206 = vpack.c.b16 %v7038, %v7038
        %v7207 = vpack.c.b16 %v7039, %v7039
        %v7208 = vpack.c.b16 %v7040, %v7040
        %v7209 = vpack.c.b16 %v7041, %v7041
        %v7210 = vpack.c.b16 %v7042, %v7042
        %v7211 = vpack.c.b16 %v7043, %v7043
        %v7212 = vpack.c.b16 %v7044, %v7044
        %v7374 = vsel %vm4842, %v6387, 0
        %v7377 = vsel %vm1345, %v7205, 0
        %v7380 = vsel %vm1345, %v7206, 0
        %v7383 = vsel %vm1345, %v7207, 0
        %v7386 = vsel %vm1345, %v7208, 0
        %v7389 = vsel %vm1345, %v7209, 0
        %v7392 = vsel %vm1345, %v7210, 0
        %v7395 = vsel %vm1345, %v7211, 0
        %v7398 = vsel %vm1345, %v7212, 0
        %7400 = vmatpush.bf16.msra.mxu0 %v7101
        %7401 = vmatpush.bf16.msra.mxu0 %v7093
        %7402 = vmatpush.bf16.msra.mxu0 %v7085
        %7403 = vmatpush.bf16.msra.mxu0 %v7077
        %7404 = vmatpush.bf16.msra.mxu0 %v7069
        %7405 = vmatpush.bf16.msra.mxu0 %v7061
        %7406 = vmatpush.bf16.msra.mxu0 %v7053
        %7407 = vmatpush.bf16.msra.mxu0 %v7045
        %7408 = vmatmul.bf16.gmra.mxu0 %v6385
        %v7409 = vpop.f32.mrf.mxu0
        %v7410 = vadd.f32 0.0, %v7409
        %v7411 = vpop.f32.mrf.mxu0
        %7412 = vdwg.mxu0
        %7413 = vmatpush.bf16.msra.mxu0 %v7165
        %7414 = vmatpush.bf16.msra.mxu0 %v7157
        %7415 = vmatpush.bf16.msra.mxu0 %v7149
        %7416 = vmatpush.bf16.msra.mxu0 %v7141
        %7417 = vmatpush.bf16.msra.mxu0 %v7133
        %7418 = vmatpush.bf16.msra.mxu0 %v7125
        %7419 = vmatpush.bf16.msra.mxu0 %v7117
        %7420 = vmatpush.bf16.msra.mxu0 %v7109
        %7421 = vmatmul.bf16.gmra.mxu0 %v6386
        %v7422 = vpop.f32.mrf.mxu0
        %v7423 = vadd.f32 %v7410, %v7422
        %v7424 = vpop.f32.mrf.mxu0
        %7425 = vdwg.mxu0
        %7426 = vmatpush.bf16.msra.mxu0 0
        %7427 = vmatpush.bf16.msra.mxu0 0
        %7428 = vmatpush.bf16.msra.mxu0 0
        %7429 = vmatpush.bf16.msra.mxu0 %v7377
        %7430 = vmatpush.bf16.msra.mxu0 %v7197
        %7431 = vmatpush.bf16.msra.mxu0 %v7189
        %7432 = vmatpush.bf16.msra.mxu0 %v7181
        %7433 = vmatpush.bf16.msra.mxu0 %v7173
        %7434 = vmatmul.bf16.gmra.mxu0 %v7374
        %v7435 = vpop.f32.mrf.mxu0
        %v7436 = vadd.f32 %v7423, %v7435
        %v7437 = vpop.f32.mrf.mxu0
        %7438 = vdwg.mxu0
        %7439 = vmatpush.bf16.msra.mxu0 %v7102
        %7440 = vmatpush.bf16.msra.mxu0 %v7094
        %7441 = vmatpush.bf16.msra.mxu0 %v7086
        %7442 = vmatpush.bf16.msra.mxu0 %v7078
        %7443 = vmatpush.bf16.msra.mxu0 %v7070
        %7444 = vmatpush.bf16.msra.mxu0 %v7062
        %7445 = vmatpush.bf16.msra.mxu0 %v7054
        %7446 = vmatpush.bf16.msra.mxu0 %v7046
        %7447 = vmatmul.bf16.gmra.mxu0 %v6385
        %v7448 = vpop.f32.mrf.mxu0
        %v7449 = vadd.f32 0.0, %v7448
        %v7450 = vpop.f32.mrf.mxu0
        %7451 = vdwg.mxu0
        %7452 = vmatpush.bf16.msra.mxu0 %v7166
        %7453 = vmatpush.bf16.msra.mxu0 %v7158
        %7454 = vmatpush.bf16.msra.mxu0 %v7150
        %7455 = vmatpush.bf16.msra.mxu0 %v7142
        %7456 = vmatpush.bf16.msra.mxu0 %v7134
        %7457 = vmatpush.bf16.msra.mxu0 %v7126
        %7458 = vmatpush.bf16.msra.mxu0 %v7118
        %7459 = vmatpush.bf16.msra.mxu0 %v7110
        %7460 = vmatmul.bf16.gmra.mxu0 %v6386
        %v7461 = vpop.f32.mrf.mxu0
        %v7462 = vadd.f32 %v7449, %v7461
        %v7463 = vpop.f32.mrf.mxu0
        %7464 = vdwg.mxu0
        %7465 = vmatpush.bf16.msra.mxu0 0
        %7466 = vmatpush.bf16.msra.mxu0 0
        %7467 = vmatpush.bf16.msra.mxu0 0
        %7468 = vmatpush.bf16.msra.mxu0 %v7380
        %7469 = vmatpush.bf16.msra.mxu0 %v7198
        %7470 = vmatpush.bf16.msra.mxu0 %v7190
        %7471 = vmatpush.bf16.msra.mxu0 %v7182
        %7472 = vmatpush.bf16.msra.mxu0 %v7174
        %7473 = vmatmul.bf16.gmra.mxu0 %v7374
        %v7474 = vpop.f32.mrf.mxu0
        %v7475 = vadd.f32 %v7462, %v7474
        %v7476 = vpop.f32.mrf.mxu0
        %7477 = vdwg.mxu0
        %7478 = vmatpush.bf16.msra.mxu0 %v7103
        %7479 = vmatpush.bf16.msra.mxu0 %v7095
        %7480 = vmatpush.bf16.msra.mxu0 %v7087
        %7481 = vmatpush.bf16.msra.mxu0 %v7079
        %7482 = vmatpush.bf16.msra.mxu0 %v7071
        %7483 = vmatpush.bf16.msra.mxu0 %v7063
        %7484 = vmatpush.bf16.msra.mxu0 %v7055
        %7485 = vmatpush.bf16.msra.mxu0 %v7047
        %7486 = vmatmul.bf16.gmra.mxu0 %v6385
        %v7487 = vpop.f32.mrf.mxu0
        %v7488 = vadd.f32 0.0, %v7487
        %v7489 = vpop.f32.mrf.mxu0
        %7490 = vdwg.mxu0
        %7491 = vmatpush.bf16.msra.mxu0 %v7167
        %7492 = vmatpush.bf16.msra.mxu0 %v7159
        %7493 = vmatpush.bf16.msra.mxu0 %v7151
        %7494 = vmatpush.bf16.msra.mxu0 %v7143
        %7495 = vmatpush.bf16.msra.mxu0 %v7135
        %7496 = vmatpush.bf16.msra.mxu0 %v7127
        %7497 = vmatpush.bf16.msra.mxu0 %v7119
        %7498 = vmatpush.bf16.msra.mxu0 %v7111
        %7499 = vmatmul.bf16.gmra.mxu0 %v6386
        %v7500 = vpop.f32.mrf.mxu0
        %v7501 = vadd.f32 %v7488, %v7500
        %v7502 = vpop.f32.mrf.mxu0
        %7503 = vdwg.mxu0
        %7504 = vmatpush.bf16.msra.mxu0 0
        %7505 = vmatpush.bf16.msra.mxu0 0
        %7506 = vmatpush.bf16.msra.mxu0 0
        %7507 = vmatpush.bf16.msra.mxu0 %v7383
        %7508 = vmatpush.bf16.msra.mxu0 %v7199
        %7509 = vmatpush.bf16.msra.mxu0 %v7191
        %7510 = vmatpush.bf16.msra.mxu0 %v7183
        %7511 = vmatpush.bf16.msra.mxu0 %v7175
        %7512 = vmatmul.bf16.gmra.mxu0 %v7374
        %v7513 = vpop.f32.mrf.mxu0
        %v7514 = vadd.f32 %v7501, %v7513
        %v7515 = vpop.f32.mrf.mxu0
        %7516 = vdwg.mxu0
        %7517 = vmatpush.bf16.msra.mxu0 %v7104
        %7518 = vmatpush.bf16.msra.mxu0 %v7096
        %7519 = vmatpush.bf16.msra.mxu0 %v7088
        %7520 = vmatpush.bf16.msra.mxu0 %v7080
        %7521 = vmatpush.bf16.msra.mxu0 %v7072
        %7522 = vmatpush.bf16.msra.mxu0 %v7064
        %7523 = vmatpush.bf16.msra.mxu0 %v7056
        %7524 = vmatpush.bf16.msra.mxu0 %v7048
        %7525 = vmatmul.bf16.gmra.mxu0 %v6385
        %v7526 = vpop.f32.mrf.mxu0
        %v7527 = vadd.f32 0.0, %v7526
        %v7528 = vpop.f32.mrf.mxu0
        %7529 = vdwg.mxu0
        %7530 = vmatpush.bf16.msra.mxu0 %v7168
        %7531 = vmatpush.bf16.msra.mxu0 %v7160
        %7532 = vmatpush.bf16.msra.mxu0 %v7152
        %7533 = vmatpush.bf16.msra.mxu0 %v7144
        %7534 = vmatpush.bf16.msra.mxu0 %v7136
        %7535 = vmatpush.bf16.msra.mxu0 %v7128
        %7536 = vmatpush.bf16.msra.mxu0 %v7120
        %7537 = vmatpush.bf16.msra.mxu0 %v7112
        %7538 = vmatmul.bf16.gmra.mxu0 %v6386
        %v7539 = vpop.f32.mrf.mxu0
        %v7540 = vadd.f32 %v7527, %v7539
        %v7541 = vpop.f32.mrf.mxu0
        %7542 = vdwg.mxu0
        %7543 = vmatpush.bf16.msra.mxu0 0
        %7544 = vmatpush.bf16.msra.mxu0 0
        %7545 = vmatpush.bf16.msra.mxu0 0
        %7546 = vmatpush.bf16.msra.mxu0 %v7386
        %7547 = vmatpush.bf16.msra.mxu0 %v7200
        %7548 = vmatpush.bf16.msra.mxu0 %v7192
        %7549 = vmatpush.bf16.msra.mxu0 %v7184
        %7550 = vmatpush.bf16.msra.mxu0 %v7176
        %7551 = vmatmul.bf16.gmra.mxu0 %v7374
        %v7552 = vpop.f32.mrf.mxu0
        %v7553 = vadd.f32 %v7540, %v7552
        %v7554 = vpop.f32.mrf.mxu0
        %7555 = vdwg.mxu0
        %7556 = vmatpush.bf16.msra.mxu0 %v7105
        %7557 = vmatpush.bf16.msra.mxu0 %v7097
        %7558 = vmatpush.bf16.msra.mxu0 %v7089
        %7559 = vmatpush.bf16.msra.mxu0 %v7081
        %7560 = vmatpush.bf16.msra.mxu0 %v7073
        %7561 = vmatpush.bf16.msra.mxu0 %v7065
        %7562 = vmatpush.bf16.msra.mxu0 %v7057
        %7563 = vmatpush.bf16.msra.mxu0 %v7049
        %7564 = vmatmul.bf16.gmra.mxu0 %v6385
        %v7565 = vpop.f32.mrf.mxu0
        %v7566 = vadd.f32 0.0, %v7565
        %v7567 = vpop.f32.mrf.mxu0
        %7568 = vdwg.mxu0
        %7569 = vmatpush.bf16.msra.mxu0 %v7169
        %7570 = vmatpush.bf16.msra.mxu0 %v7161
        %7571 = vmatpush.bf16.msra.mxu0 %v7153
        %7572 = vmatpush.bf16.msra.mxu0 %v7145
        %7573 = vmatpush.bf16.msra.mxu0 %v7137
        %7574 = vmatpush.bf16.msra.mxu0 %v7129
        %7575 = vmatpush.bf16.msra.mxu0 %v7121
        %7576 = vmatpush.bf16.msra.mxu0 %v7113
        %7577 = vmatmul.bf16.gmra.mxu0 %v6386
        %v7578 = vpop.f32.mrf.mxu0
        %v7579 = vadd.f32 %v7566, %v7578
        %v7580 = vpop.f32.mrf.mxu0
        %7581 = vdwg.mxu0
        %7582 = vmatpush.bf16.msra.mxu0 0
        %7583 = vmatpush.bf16.msra.mxu0 0
        %7584 = vmatpush.bf16.msra.mxu0 0
        %7585 = vmatpush.bf16.msra.mxu0 %v7389
        %7586 = vmatpush.bf16.msra.mxu0 %v7201
        %7587 = vmatpush.bf16.msra.mxu0 %v7193
        %7588 = vmatpush.bf16.msra.mxu0 %v7185
        %7589 = vmatpush.bf16.msra.mxu0 %v7177
        %7590 = vmatmul.bf16.gmra.mxu0 %v7374
        %v7591 = vpop.f32.mrf.mxu0
        %v7592 = vadd.f32 %v7579, %v7591
        %v7593 = vpop.f32.mrf.mxu0
        %7594 = vdwg.mxu0
        %7595 = vmatpush.bf16.msra.mxu0 %v7106
        %7596 = vmatpush.bf16.msra.mxu0 %v7098
        %7597 = vmatpush.bf16.msra.mxu0 %v7090
        %7598 = vmatpush.bf16.msra.mxu0 %v7082
        %7599 = vmatpush.bf16.msra.mxu0 %v7074
        %7600 = vmatpush.bf16.msra.mxu0 %v7066
        %7601 = vmatpush.bf16.msra.mxu0 %v7058
        %7602 = vmatpush.bf16.msra.mxu0 %v7050
        %7603 = vmatmul.bf16.gmra.mxu0 %v6385
        %v7604 = vpop.f32.mrf.mxu0
        %v7605 = vadd.f32 0.0, %v7604
        %v7606 = vpop.f32.mrf.mxu0
        %7607 = vdwg.mxu0
        %7608 = vmatpush.bf16.msra.mxu0 %v7170
        %7609 = vmatpush.bf16.msra.mxu0 %v7162
        %7610 = vmatpush.bf16.msra.mxu0 %v7154
        %7611 = vmatpush.bf16.msra.mxu0 %v7146
        %7612 = vmatpush.bf16.msra.mxu0 %v7138
        %7613 = vmatpush.bf16.msra.mxu0 %v7130
        %7614 = vmatpush.bf16.msra.mxu0 %v7122
        %7615 = vmatpush.bf16.msra.mxu0 %v7114
        %7616 = vmatmul.bf16.gmra.mxu0 %v6386
        %v7617 = vpop.f32.mrf.mxu0
        %v7618 = vadd.f32 %v7605, %v7617
        %v7619 = vpop.f32.mrf.mxu0
        %7620 = vdwg.mxu0
        %7621 = vmatpush.bf16.msra.mxu0 0
        %7622 = vmatpush.bf16.msra.mxu0 0
        %7623 = vmatpush.bf16.msra.mxu0 0
        %7624 = vmatpush.bf16.msra.mxu0 %v7392
        %7625 = vmatpush.bf16.msra.mxu0 %v7202
        %7626 = vmatpush.bf16.msra.mxu0 %v7194
        %7627 = vmatpush.bf16.msra.mxu0 %v7186
        %7628 = vmatpush.bf16.msra.mxu0 %v7178
        %7629 = vmatmul.bf16.gmra.mxu0 %v7374
        %v7630 = vpop.f32.mrf.mxu0
        %v7631 = vadd.f32 %v7618, %v7630
        %v7632 = vpop.f32.mrf.mxu0
        %7633 = vdwg.mxu0
        %7634 = vmatpush.bf16.msra.mxu0 %v7107
        %7635 = vmatpush.bf16.msra.mxu0 %v7099
        %7636 = vmatpush.bf16.msra.mxu0 %v7091
        %7637 = vmatpush.bf16.msra.mxu0 %v7083
        %7638 = vmatpush.bf16.msra.mxu0 %v7075
        %7639 = vmatpush.bf16.msra.mxu0 %v7067
        %7640 = vmatpush.bf16.msra.mxu0 %v7059
        %7641 = vmatpush.bf16.msra.mxu0 %v7051
        %7642 = vmatmul.bf16.gmra.mxu0 %v6385
        %v7643 = vpop.f32.mrf.mxu0
        %v7644 = vadd.f32 0.0, %v7643
        %v7645 = vpop.f32.mrf.mxu0
        %7646 = vdwg.mxu0
        %7647 = vmatpush.bf16.msra.mxu0 %v7171
        %7648 = vmatpush.bf16.msra.mxu0 %v7163
        %7649 = vmatpush.bf16.msra.mxu0 %v7155
        %7650 = vmatpush.bf16.msra.mxu0 %v7147
        %7651 = vmatpush.bf16.msra.mxu0 %v7139
        %7652 = vmatpush.bf16.msra.mxu0 %v7131
        %7653 = vmatpush.bf16.msra.mxu0 %v7123
        %7654 = vmatpush.bf16.msra.mxu0 %v7115
        %7655 = vmatmul.bf16.gmra.mxu0 %v6386
        %v7656 = vpop.f32.mrf.mxu0
        %v7657 = vadd.f32 %v7644, %v7656
        %v7658 = vpop.f32.mrf.mxu0
        %7659 = vdwg.mxu0
        %7660 = vmatpush.bf16.msra.mxu0 0
        %7661 = vmatpush.bf16.msra.mxu0 0
        %7662 = vmatpush.bf16.msra.mxu0 0
        %7663 = vmatpush.bf16.msra.mxu0 %v7395
        %7664 = vmatpush.bf16.msra.mxu0 %v7203
        %7665 = vmatpush.bf16.msra.mxu0 %v7195
        %7666 = vmatpush.bf16.msra.mxu0 %v7187
        %7667 = vmatpush.bf16.msra.mxu0 %v7179
        %7668 = vmatmul.bf16.gmra.mxu0 %v7374
        %v7669 = vpop.f32.mrf.mxu0
        %v7670 = vadd.f32 %v7657, %v7669
        %v7671 = vpop.f32.mrf.mxu0
        %7672 = vdwg.mxu0
        %7673 = vmatpush.bf16.msra.mxu0 %v7108
        %7674 = vmatpush.bf16.msra.mxu0 %v7100
        %7675 = vmatpush.bf16.msra.mxu0 %v7092
        %7676 = vmatpush.bf16.msra.mxu0 %v7084
        %7677 = vmatpush.bf16.msra.mxu0 %v7076
        %7678 = vmatpush.bf16.msra.mxu0 %v7068
        %7679 = vmatpush.bf16.msra.mxu0 %v7060
        %7680 = vmatpush.bf16.msra.mxu0 %v7052
        %7681 = vmatmul.bf16.gmra.mxu0 %v6385
        %v7682 = vpop.f32.mrf.mxu0
        %v7683 = vadd.f32 0.0, %v7682
        %v7684 = vpop.f32.mrf.mxu0
        %7685 = vdwg.mxu0
        %7686 = vmatpush.bf16.msra.mxu0 %v7172
        %7687 = vmatpush.bf16.msra.mxu0 %v7164
        %7688 = vmatpush.bf16.msra.mxu0 %v7156
        %7689 = vmatpush.bf16.msra.mxu0 %v7148
        %7690 = vmatpush.bf16.msra.mxu0 %v7140
        %7691 = vmatpush.bf16.msra.mxu0 %v7132
        %7692 = vmatpush.bf16.msra.mxu0 %v7124
        %7693 = vmatpush.bf16.msra.mxu0 %v7116
        %7694 = vmatmul.bf16.gmra.mxu0 %v6386
        %v7695 = vpop.f32.mrf.mxu0
        %v7696 = vadd.f32 %v7683, %v7695
        %v7697 = vpop.f32.mrf.mxu0
        %7698 = vdwg.mxu0
        %7699 = vmatpush.bf16.msra.mxu0 0
        %7700 = vmatpush.bf16.msra.mxu0 0
        %7701 = vmatpush.bf16.msra.mxu0 0
        %7702 = vmatpush.bf16.msra.mxu0 %v7398
        %7703 = vmatpush.bf16.msra.mxu0 %v7204
        %7704 = vmatpush.bf16.msra.mxu0 %v7196
        %7705 = vmatpush.bf16.msra.mxu0 %v7188
        %7706 = vmatpush.bf16.msra.mxu0 %v7180
        %7707 = vmatmul.bf16.gmra.mxu0 %v7374
        %v7708 = vpop.f32.mrf.mxu0
        %v7709 = vadd.f32 %v7696, %v7708
        %v7710 = vpop.f32.mrf.mxu0
        %7711 = vdwg.mxu0
        %v7712 = vadd.f32 %v6065, %v7436
        %v7713 = vadd.f32 %v6104, %v7475
        %v7714 = vadd.f32 %v6143, %v7514
        %v7715 = vadd.f32 %v6182, %v7553
        %v7716 = vadd.f32 %v6221, %v7592
        %v7717 = vadd.f32 %v6260, %v7631
        %v7718 = vadd.f32 %v6299, %v7670
        %v7719 = vadd.f32 %v6338, %v7709
        %s7720 = scalar_lea.vmem %s15, 6
        %v7721 = vld [vmem:[%s7720] sm:$0x3]
        %v7723 = vsel %vm3600, %v7721, 0
        %7725 = vmatpush.bf16.msra.mxu0 0
        %7726 = vmatpush.bf16.msra.mxu0 0
        %7727 = vmatpush.bf16.msra.mxu0 0
        %7728 = vmatpush.bf16.msra.mxu0 0
        %7729 = vmatpush.bf16.msra.mxu0 %v3586
        %7730 = vmatpush.bf16.msra.mxu0 %v3584
        %7731 = vmatpush.bf16.msra.mxu0 %v3582
        %7732 = vmatpush.bf16.msra.mxu0 %v3580
        %7733 = vmatmul.bf16.gmra.mxu0 %v7723
        %v7734 = vpop.f32.mrf.mxu0
        %v7735 = vadd.f32 0.0, %v7734
        %v7736 = vpop.f32.mrf.mxu0
        %7737 = vdwg.mxu0
        %7738 = vmatpush.bf16.msra.mxu0 0
        %7739 = vmatpush.bf16.msra.mxu0 0
        %7740 = vmatpush.bf16.msra.mxu0 0
        %7741 = vmatpush.bf16.msra.mxu0 0
        %7742 = vmatpush.bf16.msra.mxu0 %v3587
        %7743 = vmatpush.bf16.msra.mxu0 %v3585
        %7744 = vmatpush.bf16.msra.mxu0 %v3583
        %7745 = vmatpush.bf16.msra.mxu0 %v3581
        %7746 = vmatmul.bf16.gmra.mxu0 %v7723
        %v7747 = vpop.f32.mrf.mxu0
        %v7748 = vadd.f32 0.0, %v7747
        %v7749 = vpop.f32.mrf.mxu0
        %7750 = vdwg.mxu0
        %7751 = vmatpush.bf16.msra.mxu0 0
        %7752 = vmatpush.bf16.msra.mxu0 0
        %7753 = vmatpush.bf16.msra.mxu0 0
        %7754 = vmatpush.bf16.msra.mxu0 0
        %7755 = vmatpush.bf16.msra.mxu0 %v3578
        %7756 = vmatpush.bf16.msra.mxu0 %v3572
        %7757 = vmatpush.bf16.msra.mxu0 %v3566
        %7758 = vmatpush.bf16.msra.mxu0 %v3560
        %7759 = vmatmul.bf16.gmra.mxu0 %v7723
        %v7760 = vpop.f32.mrf.mxu0
        %v7761 = vadd.f32 0.0, %v7760
        %v7762 = vpop.f32.mrf.mxu0
        %7763 = vdwg.mxu0
        %v7764 = vpack.c.bf16 %v7735, %v7735
        %v7765 = vpack.c.bf16 %v7748, %v7748
        %v7766 = vpack.c.bf16 %v7761, %v7761
        %s7767 = scalar_lea.vmem %s16, 3936
        %v7768 = vld [vmem:[%s7767] sm:$0xff]
        %v7769 = vld [vmem:[%s7767 + $0x8] sm:$0xff]
        %v7770 = vld [vmem:[%s7767 + $0x10] sm:$0xff]
        %v7771 = vld [vmem:[%s7767 + $0x18] sm:$0xff]
        %v7772 = vld [vmem:[%s7767 + $0x20] sm:$0xff]
        %v7773 = vld [vmem:[%s7767 + $0x28] sm:$0xff]
        %v7774 = vld [vmem:[%s7767 + $0x30] sm:$0xff]
        %v7775 = vld [vmem:[%s7767 + $0x38] sm:$0xff]
        %v7776 = vld [vmem:[%s7767 + $0x40] sm:$0xff]
        %v7777 = vld [vmem:[%s7767 + $0x48] sm:$0xff]
        %v7778 = vld [vmem:[%s7767 + $0x50] sm:$0xff]
        %v7779 = vld [vmem:[%s7767 + $0x58] sm:$0xff]
        %v7780 = vld [vmem:[%s7767 + $0x60] sm:$0xff]
        %v7781 = vld [vmem:[%s7767 + $0x68] sm:$0xff]
        %v7782 = vld [vmem:[%s7767 + $0x70] sm:$0xff]
        %v7783 = vld [vmem:[%s7767 + $0x78] sm:$0xff]
        %v7784 = vld [vmem:[%s7767 + $0x80] sm:$0xff]
        %v7785 = vld [vmem:[%s7767 + $0x88] sm:$0xff]
        %v7786 = vld [vmem:[%s7767 + $0x90] sm:$0xff]
        %v7787 = vld [vmem:[%s7767 + $0x98] sm:$0xff]
        %v7788 = vld [vmem:[%s7767 + $0xa0] sm:$0xff]
        %v7789 = vld [vmem:[%s7767 + $0xa8] sm:$0xff]
        %v7790 = vld [vmem:[%s7767 + $0xb0] sm:$0xff]
        %v7791 = vld [vmem:[%s7767 + $0xb8] sm:$0xff]
        %v7792 = vld [vmem:[%s7767 + $0xc0] sm:$0xff]
        %v7793 = vld [vmem:[%s7767 + $0xc8] sm:$0xff]
        %v7794 = vld [vmem:[%s7767 + $0xd0] sm:$0xff]
        %v7795 = vld [vmem:[%s7767 + $0xd8] sm:$0xff]
        %v7796 = vld [vmem:[%s7767 + $0xe0] sm:$0xff]
        %v7797 = vld [vmem:[%s7767 + $0xe8] sm:$0xff]
        %v7798 = vld [vmem:[%s7767 + $0xf0] sm:$0xff]
        %v7799 = vld [vmem:[%s7767 + $0xf8] sm:$0xff]
        %v7800 = vld [vmem:[%s7767 + $0x100] sm:$0xff]
        %v7801 = vld [vmem:[%s7767 + $0x108] sm:$0xff]
        %v7802 = vld [vmem:[%s7767 + $0x110] sm:$0xff]
        %v7803 = vld [vmem:[%s7767 + $0x118] sm:$0xff]
        %v7804 = vld [vmem:[%s7767 + $0x120] sm:$0xff]
        %v7805 = vld [vmem:[%s7767 + $0x128] sm:$0xff]
        %v7806 = vld [vmem:[%s7767 + $0x130] sm:$0xff]
        %v7807 = vld [vmem:[%s7767 + $0x138] sm:$0xff]
        %v7808 = vld [vmem:[%s7767 + $0x140] sm:$0xff]
        %v7809 = vld [vmem:[%s7767 + $0x148] sm:$0xff]
        %v7810 = vld [vmem:[%s7767 + $0x150] sm:$0xff]
        %v7811 = vld [vmem:[%s7767 + $0x158] sm:$0xff]
        %v7812 = vld [vmem:[%s7767 + $0x160] sm:$0xff]
        %v7813 = vld [vmem:[%s7767 + $0x168] sm:$0xff]
        %v7814 = vld [vmem:[%s7767 + $0x170] sm:$0xff]
        %v7815 = vld [vmem:[%s7767 + $0x178] sm:$0xff]
        %v7816 = vld [vmem:[%s7767 + $0x180] sm:$0xff]
        %v7817 = vld [vmem:[%s7767 + $0x188] sm:$0xff]
        %v7818 = vld [vmem:[%s7767 + $0x190] sm:$0xff]
        %v7819 = vld [vmem:[%s7767 + $0x198] sm:$0xff]
        %v7820 = vld [vmem:[%s7767 + $0x1a0] sm:$0xff]
        %v7821 = vld [vmem:[%s7767 + $0x1a8] sm:$0xff]
        %v7822 = vld [vmem:[%s7767 + $0x1b0] sm:$0xff]
        %v7823 = vld [vmem:[%s7767 + $0x1b8] sm:$0xff]
        %v7824 = vld [vmem:[%s7767 + $0x1c0] sm:$0xff]
        %v7825 = vld [vmem:[%s7767 + $0x1c8] sm:$0xff]
        %v7826 = vld [vmem:[%s7767 + $0x1d0] sm:$0xff]
        %v7827 = vld [vmem:[%s7767 + $0x1d8] sm:$0xff]
        %v7828 = vld [vmem:[%s7767 + $0x1e0] sm:$0xff]
        %v7829 = vld [vmem:[%s7767 + $0x1e8] sm:$0xff]
        %v7830 = vld [vmem:[%s7767 + $0x1f0] sm:$0xff]
        %v7831 = vld [vmem:[%s7767 + $0x1f8] sm:$0xff]
        %v7832 = vld [vmem:[%s7767 + $0x200] sm:$0xff]
        %v7833 = vld [vmem:[%s7767 + $0x208] sm:$0xff]
        %v7834 = vld [vmem:[%s7767 + $0x210] sm:$0xff]
        %v7835 = vld [vmem:[%s7767 + $0x218] sm:$0xff]
        %v7836 = vld [vmem:[%s7767 + $0x220] sm:$0xff]
        %v7837 = vld [vmem:[%s7767 + $0x228] sm:$0xff]
        %v7838 = vld [vmem:[%s7767 + $0x230] sm:$0xff]
        %v7839 = vld [vmem:[%s7767 + $0x238] sm:$0xff]
        %v7840 = vld [vmem:[%s7767 + $0x240] sm:$0xff]
        %v7841 = vld [vmem:[%s7767 + $0x248] sm:$0xff]
        %v7842 = vld [vmem:[%s7767 + $0x250] sm:$0xff]
        %v7843 = vld [vmem:[%s7767 + $0x258] sm:$0xff]
        %v7844 = vld [vmem:[%s7767 + $0x260] sm:$0xff]
        %v7845 = vld [vmem:[%s7767 + $0x268] sm:$0xff]
        %v7846 = vld [vmem:[%s7767 + $0x270] sm:$0xff]
        %v7847 = vld [vmem:[%s7767 + $0x278] sm:$0xff]
        %v7848 = vld [vmem:[%s7767 + $0x280] sm:$0xff]
        %v7849 = vld [vmem:[%s7767 + $0x288] sm:$0xff]
        %v7850 = vld [vmem:[%s7767 + $0x290] sm:$0xff]
        %v7851 = vld [vmem:[%s7767 + $0x298] sm:$0xff]
        %v7852 = vld [vmem:[%s7767 + $0x2a0] sm:$0xff]
        %v7853 = vld [vmem:[%s7767 + $0x2a8] sm:$0xff]
        %v7854 = vld [vmem:[%s7767 + $0x2b0] sm:$0xff]
        %v7855 = vld [vmem:[%s7767 + $0x2b8] sm:$0xff]
        %v7856 = vld [vmem:[%s7767 + $0x2c0] sm:$0xff]
        %v7857 = vld [vmem:[%s7767 + $0x2c8] sm:$0xff]
        %v7858 = vld [vmem:[%s7767 + $0x2d0] sm:$0xff]
        %v7859 = vld [vmem:[%s7767 + $0x2d8] sm:$0xff]
        %v7860 = vld [vmem:[%s7767 + $0x2e0] sm:$0xff]
        %v7861 = vld [vmem:[%s7767 + $0x2e8] sm:$0xff]
        %v7862 = vld [vmem:[%s7767 + $0x2f0] sm:$0xff]
        %v7863 = vld [vmem:[%s7767 + $0x2f8] sm:$0xff]
        %v7864 = vld [vmem:[%s7767 + $0x300] sm:$0xff]
        %v7865 = vld [vmem:[%s7767 + $0x308] sm:$0xff]
        %v7866 = vld [vmem:[%s7767 + $0x310] sm:$0xff]
        %v7867 = vld [vmem:[%s7767 + $0x318] sm:$0xff]
        %v7868 = vld [vmem:[%s7767 + $0x320] sm:$0xff]
        %v7869 = vld [vmem:[%s7767 + $0x328] sm:$0xff]
        %v7870 = vld [vmem:[%s7767 + $0x330] sm:$0xff]
        %v7871 = vld [vmem:[%s7767 + $0x338] sm:$0xff]
        %v7872 = vld [vmem:[%s7767 + $0x340] sm:$0xff]
        %v7873 = vld [vmem:[%s7767 + $0x348] sm:$0xff]
        %v7874 = vld [vmem:[%s7767 + $0x350] sm:$0xff]
        %v7875 = vld [vmem:[%s7767 + $0x358] sm:$0xff]
        %v7876 = vld [vmem:[%s7767 + $0x360] sm:$0xff]
        %v7877 = vld [vmem:[%s7767 + $0x368] sm:$0xff]
        %v7878 = vld [vmem:[%s7767 + $0x370] sm:$0xff]
        %v7879 = vld [vmem:[%s7767 + $0x378] sm:$0xff]
        %v7880 = vld [vmem:[%s7767 + $0x380] sm:$0xff]
        %v7881 = vld [vmem:[%s7767 + $0x388] sm:$0xff]
        %v7882 = vld [vmem:[%s7767 + $0x390] sm:$0xff]
        %v7883 = vld [vmem:[%s7767 + $0x398] sm:$0xff]
        %v7884 = vld [vmem:[%s7767 + $0x3a0] sm:$0xff]
        %v7885 = vld [vmem:[%s7767 + $0x3a8] sm:$0xff]
        %v7886 = vld [vmem:[%s7767 + $0x3b0] sm:$0xff]
        %v7887 = vld [vmem:[%s7767 + $0x3b8] sm:$0xff]
        %v7888 = vld [vmem:[%s7767 + $0x3c0] sm:$0xff]
        %v7889 = vld [vmem:[%s7767 + $0x3c8] sm:$0xff]
        %v7890 = vld [vmem:[%s7767 + $0x3d0] sm:$0xff]
        %v7891 = vld [vmem:[%s7767 + $0x3d8] sm:$0xff]
        %v7892 = vld [vmem:[%s7767 + $0x3e0] sm:$0xff]
        %v7893 = vld [vmem:[%s7767 + $0x3e8] sm:$0xff]
        %v7894 = vld [vmem:[%s7767 + $0x3f0] sm:$0xff]
        %v7895 = vld [vmem:[%s7767 + $0x3f8] sm:$0xff]
        %v7896 = vld [vmem:[%s7767 + $0x400] sm:$0xff]
        %v7897 = vld [vmem:[%s7767 + $0x408] sm:$0xff]
        %v7898 = vld [vmem:[%s7767 + $0x410] sm:$0xff]
        %v7899 = vld [vmem:[%s7767 + $0x418] sm:$0xff]
        %v7900 = vld [vmem:[%s7767 + $0x420] sm:$0xff]
        %v7901 = vld [vmem:[%s7767 + $0x428] sm:$0xff]
        %v7902 = vld [vmem:[%s7767 + $0x430] sm:$0xff]
        %v7903 = vld [vmem:[%s7767 + $0x438] sm:$0xff]
        %v7904 = vld [vmem:[%s7767 + $0x440] sm:$0xff]
        %v7905 = vld [vmem:[%s7767 + $0x448] sm:$0xff]
        %v7906 = vld [vmem:[%s7767 + $0x450] sm:$0xff]
        %v7907 = vld [vmem:[%s7767 + $0x458] sm:$0xff]
        %v7908 = vld [vmem:[%s7767 + $0x460] sm:$0xff]
        %v7909 = vld [vmem:[%s7767 + $0x468] sm:$0xff]
        %v7910 = vld [vmem:[%s7767 + $0x470] sm:$0xff]
        %v7911 = vld [vmem:[%s7767 + $0x478] sm:$0xff]
        %v7912 = vld [vmem:[%s7767 + $0x480] sm:$0xff]
        %v7913 = vld [vmem:[%s7767 + $0x488] sm:$0xff]
        %v7914 = vld [vmem:[%s7767 + $0x490] sm:$0xff]
        %v7915 = vld [vmem:[%s7767 + $0x498] sm:$0xff]
        %v7916 = vld [vmem:[%s7767 + $0x4a0] sm:$0xff]
        %v7917 = vld [vmem:[%s7767 + $0x4a8] sm:$0xff]
        %v7918 = vld [vmem:[%s7767 + $0x4b0] sm:$0xff]
        %v7919 = vld [vmem:[%s7767 + $0x4b8] sm:$0xff]
        %v7920 = vld [vmem:[%s7767 + $0x4c0] sm:$0xff]
        %v7921 = vld [vmem:[%s7767 + $0x4c8] sm:$0xff]
        %v7922 = vld [vmem:[%s7767 + $0x4d0] sm:$0xff]
        %v7923 = vld [vmem:[%s7767 + $0x4d8] sm:$0xff]
        %v7924 = vld [vmem:[%s7767 + $0x4e0] sm:$0xff]
        %v7925 = vld [vmem:[%s7767 + $0x4e8] sm:$0xff]
        %v7926 = vld [vmem:[%s7767 + $0x4f0] sm:$0xff]
        %v7927 = vld [vmem:[%s7767 + $0x4f8] sm:$0xff]
        %v7928 = vld [vmem:[%s7767 + $0x500] sm:$0x33]
        %v7929 = vld [vmem:[%s7767 + $0x508] sm:$0x33]
        %v7930 = vld [vmem:[%s7767 + $0x510] sm:$0x33]
        %v7931 = vld [vmem:[%s7767 + $0x518] sm:$0x33]
        %v8096 = vunpack.c.l.b16 %v7768
        %v8097 = vunpack.c.h.b16 %v7768
        %v8098 = vunpack.c.l.b16 %v7769
        %v8099 = vunpack.c.h.b16 %v7769
        %v8100 = vunpack.c.l.b16 %v7770
        %v8101 = vunpack.c.h.b16 %v7770
        %v8102 = vunpack.c.l.b16 %v7771
        %v8103 = vunpack.c.h.b16 %v7771
        %v8104 = vunpack.c.l.b16 %v7772
        %v8105 = vunpack.c.h.b16 %v7772
        %v8106 = vunpack.c.l.b16 %v7773
        %v8107 = vunpack.c.h.b16 %v7773
        %v8108 = vunpack.c.l.b16 %v7774
        %v8109 = vunpack.c.h.b16 %v7774
        %v8110 = vunpack.c.l.b16 %v7775
        %v8111 = vunpack.c.h.b16 %v7775
        %v8112 = vunpack.c.l.b16 %v7776
        %v8113 = vunpack.c.h.b16 %v7776
        %v8114 = vunpack.c.l.b16 %v7777
        %v8115 = vunpack.c.h.b16 %v7777
        %v8116 = vunpack.c.l.b16 %v7778
        %v8117 = vunpack.c.h.b16 %v7778
        %v8118 = vunpack.c.l.b16 %v7779
        %v8119 = vunpack.c.h.b16 %v7779
        %v8120 = vunpack.c.l.b16 %v7780
        %v8121 = vunpack.c.h.b16 %v7780
        %v8122 = vunpack.c.l.b16 %v7781
        %v8123 = vunpack.c.h.b16 %v7781
        %v8124 = vunpack.c.l.b16 %v7782
        %v8125 = vunpack.c.h.b16 %v7782
        %v8126 = vunpack.c.l.b16 %v7783
        %v8127 = vunpack.c.h.b16 %v7783
        %v8128 = vunpack.c.l.b16 %v7784
        %v8129 = vunpack.c.h.b16 %v7784
        %v8130 = vunpack.c.l.b16 %v7785
        %v8131 = vunpack.c.h.b16 %v7785
        %v8132 = vunpack.c.l.b16 %v7786
        %v8133 = vunpack.c.h.b16 %v7786
        %v8134 = vunpack.c.l.b16 %v7787
        %v8135 = vunpack.c.h.b16 %v7787
        %v8136 = vunpack.c.l.b16 %v7788
        %v8137 = vunpack.c.h.b16 %v7788
        %v8138 = vunpack.c.l.b16 %v7789
        %v8139 = vunpack.c.h.b16 %v7789
        %v8140 = vunpack.c.l.b16 %v7790
        %v8141 = vunpack.c.h.b16 %v7790
        %v8142 = vunpack.c.l.b16 %v7791
        %v8143 = vunpack.c.h.b16 %v7791
        %v8144 = vunpack.c.l.b16 %v7792
        %v8145 = vunpack.c.h.b16 %v7792
        %v8146 = vunpack.c.l.b16 %v7793
        %v8147 = vunpack.c.h.b16 %v7793
        %v8148 = vunpack.c.l.b16 %v7794
        %v8149 = vunpack.c.h.b16 %v7794
        %v8150 = vunpack.c.l.b16 %v7795
        %v8151 = vunpack.c.h.b16 %v7795
        %v8152 = vunpack.c.l.b16 %v7796
        %v8153 = vunpack.c.h.b16 %v7796
        %v8154 = vunpack.c.l.b16 %v7797
        %v8155 = vunpack.c.h.b16 %v7797
        %v8156 = vunpack.c.l.b16 %v7798
        %v8157 = vunpack.c.h.b16 %v7798
        %v8158 = vunpack.c.l.b16 %v7799
        %v8159 = vunpack.c.h.b16 %v7799
        %v8160 = vunpack.c.l.b16 %v7800
        %v8161 = vunpack.c.h.b16 %v7800
        %v8162 = vunpack.c.l.b16 %v7801
        %v8163 = vunpack.c.h.b16 %v7801
        %v8164 = vunpack.c.l.b16 %v7802
        %v8165 = vunpack.c.h.b16 %v7802
        %v8166 = vunpack.c.l.b16 %v7803
        %v8167 = vunpack.c.h.b16 %v7803
        %v8168 = vunpack.c.l.b16 %v7804
        %v8169 = vunpack.c.h.b16 %v7804
        %v8170 = vunpack.c.l.b16 %v7805
        %v8171 = vunpack.c.h.b16 %v7805
        %v8172 = vunpack.c.l.b16 %v7806
        %v8173 = vunpack.c.h.b16 %v7806
        %v8174 = vunpack.c.l.b16 %v7807
        %v8175 = vunpack.c.h.b16 %v7807
        %v8176 = vunpack.c.l.b16 %v7808
        %v8177 = vunpack.c.h.b16 %v7808
        %v8178 = vunpack.c.l.b16 %v7809
        %v8179 = vunpack.c.h.b16 %v7809
        %v8180 = vunpack.c.l.b16 %v7810
        %v8181 = vunpack.c.h.b16 %v7810
        %v8182 = vunpack.c.l.b16 %v7811
        %v8183 = vunpack.c.h.b16 %v7811
        %v8184 = vunpack.c.l.b16 %v7812
        %v8185 = vunpack.c.h.b16 %v7812
        %v8186 = vunpack.c.l.b16 %v7813
        %v8187 = vunpack.c.h.b16 %v7813
        %v8188 = vunpack.c.l.b16 %v7814
        %v8189 = vunpack.c.h.b16 %v7814
        %v8190 = vunpack.c.l.b16 %v7815
        %v8191 = vunpack.c.h.b16 %v7815
        %v8192 = vunpack.c.l.b16 %v7816
        %v8193 = vunpack.c.h.b16 %v7816
        %v8194 = vunpack.c.l.b16 %v7817
        %v8195 = vunpack.c.h.b16 %v7817
        %v8196 = vunpack.c.l.b16 %v7818
        %v8197 = vunpack.c.h.b16 %v7818
        %v8198 = vunpack.c.l.b16 %v7819
        %v8199 = vunpack.c.h.b16 %v7819
        %v8200 = vunpack.c.l.b16 %v7820
        %v8201 = vunpack.c.h.b16 %v7820
        %v8202 = vunpack.c.l.b16 %v7821
        %v8203 = vunpack.c.h.b16 %v7821
        %v8204 = vunpack.c.l.b16 %v7822
        %v8205 = vunpack.c.h.b16 %v7822
        %v8206 = vunpack.c.l.b16 %v7823
        %v8207 = vunpack.c.h.b16 %v7823
        %v8208 = vunpack.c.l.b16 %v7824
        %v8209 = vunpack.c.h.b16 %v7824
        %v8210 = vunpack.c.l.b16 %v7825
        %v8211 = vunpack.c.h.b16 %v7825
        %v8212 = vunpack.c.l.b16 %v7826
        %v8213 = vunpack.c.h.b16 %v7826
        %v8214 = vunpack.c.l.b16 %v7827
        %v8215 = vunpack.c.h.b16 %v7827
        %v8216 = vunpack.c.l.b16 %v7828
        %v8217 = vunpack.c.h.b16 %v7828
        %v8218 = vunpack.c.l.b16 %v7829
        %v8219 = vunpack.c.h.b16 %v7829
        %v8220 = vunpack.c.l.b16 %v7830
        %v8221 = vunpack.c.h.b16 %v7830
        %v8222 = vunpack.c.l.b16 %v7831
        %v8223 = vunpack.c.h.b16 %v7831
        %v8224 = vunpack.c.l.b16 %v7832
        %v8225 = vunpack.c.h.b16 %v7832
        %v8226 = vunpack.c.l.b16 %v7833
        %v8227 = vunpack.c.h.b16 %v7833
        %v8228 = vunpack.c.l.b16 %v7834
        %v8229 = vunpack.c.h.b16 %v7834
        %v8230 = vunpack.c.l.b16 %v7835
        %v8231 = vunpack.c.h.b16 %v7835
        %v8232 = vunpack.c.l.b16 %v7836
        %v8233 = vunpack.c.h.b16 %v7836
        %v8234 = vunpack.c.l.b16 %v7837
        %v8235 = vunpack.c.h.b16 %v7837
        %v8236 = vunpack.c.l.b16 %v7838
        %v8237 = vunpack.c.h.b16 %v7838
        %v8238 = vunpack.c.l.b16 %v7839
        %v8239 = vunpack.c.h.b16 %v7839
        %v8240 = vunpack.c.l.b16 %v7840
        %v8241 = vunpack.c.h.b16 %v7840
        %v8242 = vunpack.c.l.b16 %v7841
        %v8243 = vunpack.c.h.b16 %v7841
        %v8244 = vunpack.c.l.b16 %v7842
        %v8245 = vunpack.c.h.b16 %v7842
        %v8246 = vunpack.c.l.b16 %v7843
        %v8247 = vunpack.c.h.b16 %v7843
        %v8248 = vunpack.c.l.b16 %v7844
        %v8249 = vunpack.c.h.b16 %v7844
        %v8250 = vunpack.c.l.b16 %v7845
        %v8251 = vunpack.c.h.b16 %v7845
        %v8252 = vunpack.c.l.b16 %v7846
        %v8253 = vunpack.c.h.b16 %v7846
        %v8254 = vunpack.c.l.b16 %v7847
        %v8255 = vunpack.c.h.b16 %v7847
        %v8256 = vunpack.c.l.b16 %v7848
        %v8257 = vunpack.c.h.b16 %v7848
        %v8258 = vunpack.c.l.b16 %v7849
        %v8259 = vunpack.c.h.b16 %v7849
        %v8260 = vunpack.c.l.b16 %v7850
        %v8261 = vunpack.c.h.b16 %v7850
        %v8262 = vunpack.c.l.b16 %v7851
        %v8263 = vunpack.c.h.b16 %v7851
        %v8264 = vunpack.c.l.b16 %v7852
        %v8265 = vunpack.c.h.b16 %v7852
        %v8266 = vunpack.c.l.b16 %v7853
        %v8267 = vunpack.c.h.b16 %v7853
        %v8268 = vunpack.c.l.b16 %v7854
        %v8269 = vunpack.c.h.b16 %v7854
        %v8270 = vunpack.c.l.b16 %v7855
        %v8271 = vunpack.c.h.b16 %v7855
        %v8272 = vunpack.c.l.b16 %v7856
        %v8273 = vunpack.c.h.b16 %v7856
        %v8274 = vunpack.c.l.b16 %v7857
        %v8275 = vunpack.c.h.b16 %v7857
        %v8276 = vunpack.c.l.b16 %v7858
        %v8277 = vunpack.c.h.b16 %v7858
        %v8278 = vunpack.c.l.b16 %v7859
        %v8279 = vunpack.c.h.b16 %v7859
        %v8280 = vunpack.c.l.b16 %v7860
        %v8281 = vunpack.c.h.b16 %v7860
        %v8282 = vunpack.c.l.b16 %v7861
        %v8283 = vunpack.c.h.b16 %v7861
        %v8284 = vunpack.c.l.b16 %v7862
        %v8285 = vunpack.c.h.b16 %v7862
        %v8286 = vunpack.c.l.b16 %v7863
        %v8287 = vunpack.c.h.b16 %v7863
        %v8288 = vunpack.c.l.b16 %v7864
        %v8289 = vunpack.c.h.b16 %v7864
        %v8290 = vunpack.c.l.b16 %v7865
        %v8291 = vunpack.c.h.b16 %v7865
        %v8292 = vunpack.c.l.b16 %v7866
        %v8293 = vunpack.c.h.b16 %v7866
        %v8294 = vunpack.c.l.b16 %v7867
        %v8295 = vunpack.c.h.b16 %v7867
        %v8296 = vunpack.c.l.b16 %v7868
        %v8297 = vunpack.c.h.b16 %v7868
        %v8298 = vunpack.c.l.b16 %v7869
        %v8299 = vunpack.c.h.b16 %v7869
        %v8300 = vunpack.c.l.b16 %v7870
        %v8301 = vunpack.c.h.b16 %v7870
        %v8302 = vunpack.c.l.b16 %v7871
        %v8303 = vunpack.c.h.b16 %v7871
        %v8304 = vunpack.c.l.b16 %v7872
        %v8305 = vunpack.c.h.b16 %v7872
        %v8306 = vunpack.c.l.b16 %v7873
        %v8307 = vunpack.c.h.b16 %v7873
        %v8308 = vunpack.c.l.b16 %v7874
        %v8309 = vunpack.c.h.b16 %v7874
        %v8310 = vunpack.c.l.b16 %v7875
        %v8311 = vunpack.c.h.b16 %v7875
        %v8312 = vunpack.c.l.b16 %v7876
        %v8313 = vunpack.c.h.b16 %v7876
        %v8314 = vunpack.c.l.b16 %v7877
        %v8315 = vunpack.c.h.b16 %v7877
        %v8316 = vunpack.c.l.b16 %v7878
        %v8317 = vunpack.c.h.b16 %v7878
        %v8318 = vunpack.c.l.b16 %v7879
        %v8319 = vunpack.c.h.b16 %v7879
        %v8320 = vunpack.c.l.b16 %v7880
        %v8321 = vunpack.c.h.b16 %v7880
        %v8322 = vunpack.c.l.b16 %v7881
        %v8323 = vunpack.c.h.b16 %v7881
        %v8324 = vunpack.c.l.b16 %v7882
        %v8325 = vunpack.c.h.b16 %v7882
        %v8326 = vunpack.c.l.b16 %v7883
        %v8327 = vunpack.c.h.b16 %v7883
        %v8328 = vunpack.c.l.b16 %v7884
        %v8329 = vunpack.c.h.b16 %v7884
        %v8330 = vunpack.c.l.b16 %v7885
        %v8331 = vunpack.c.h.b16 %v7885
        %v8332 = vunpack.c.l.b16 %v7886
        %v8333 = vunpack.c.h.b16 %v7886
        %v8334 = vunpack.c.l.b16 %v7887
        %v8335 = vunpack.c.h.b16 %v7887
        %v8336 = vunpack.c.l.b16 %v7888
        %v8337 = vunpack.c.h.b16 %v7888
        %v8338 = vunpack.c.l.b16 %v7889
        %v8339 = vunpack.c.h.b16 %v7889
        %v8340 = vunpack.c.l.b16 %v7890
        %v8341 = vunpack.c.h.b16 %v7890
        %v8342 = vunpack.c.l.b16 %v7891
        %v8343 = vunpack.c.h.b16 %v7891
        %v8344 = vunpack.c.l.b16 %v7892
        %v8345 = vunpack.c.h.b16 %v7892
        %v8346 = vunpack.c.l.b16 %v7893
        %v8347 = vunpack.c.h.b16 %v7893
        %v8348 = vunpack.c.l.b16 %v7894
        %v8349 = vunpack.c.h.b16 %v7894
        %v8350 = vunpack.c.l.b16 %v7895
        %v8351 = vunpack.c.h.b16 %v7895
        %v8352 = vunpack.c.l.b16 %v7896
        %v8353 = vunpack.c.h.b16 %v7896
        %v8354 = vunpack.c.l.b16 %v7897
        %v8355 = vunpack.c.h.b16 %v7897
        %v8356 = vunpack.c.l.b16 %v7898
        %v8357 = vunpack.c.h.b16 %v7898
        %v8358 = vunpack.c.l.b16 %v7899
        %v8359 = vunpack.c.h.b16 %v7899
        %v8360 = vunpack.c.l.b16 %v7900
        %v8361 = vunpack.c.h.b16 %v7900
        %v8362 = vunpack.c.l.b16 %v7901
        %v8363 = vunpack.c.h.b16 %v7901
        %v8364 = vunpack.c.l.b16 %v7902
        %v8365 = vunpack.c.h.b16 %v7902
        %v8366 = vunpack.c.l.b16 %v7903
        %v8367 = vunpack.c.h.b16 %v7903
        %v8368 = vunpack.c.l.b16 %v7904
        %v8369 = vunpack.c.h.b16 %v7904
        %v8370 = vunpack.c.l.b16 %v7905
        %v8371 = vunpack.c.h.b16 %v7905
        %v8372 = vunpack.c.l.b16 %v7906
        %v8373 = vunpack.c.h.b16 %v7906
        %v8374 = vunpack.c.l.b16 %v7907
        %v8375 = vunpack.c.h.b16 %v7907
        %v8376 = vunpack.c.l.b16 %v7908
        %v8377 = vunpack.c.h.b16 %v7908
        %v8378 = vunpack.c.l.b16 %v7909
        %v8379 = vunpack.c.h.b16 %v7909
        %v8380 = vunpack.c.l.b16 %v7910
        %v8381 = vunpack.c.h.b16 %v7910
        %v8382 = vunpack.c.l.b16 %v7911
        %v8383 = vunpack.c.h.b16 %v7911
        %v8384 = vunpack.c.l.b16 %v7912
        %v8385 = vunpack.c.h.b16 %v7912
        %v8386 = vunpack.c.l.b16 %v7913
        %v8387 = vunpack.c.h.b16 %v7913
        %v8388 = vunpack.c.l.b16 %v7914
        %v8389 = vunpack.c.h.b16 %v7914
        %v8390 = vunpack.c.l.b16 %v7915
        %v8391 = vunpack.c.h.b16 %v7915
        %v8392 = vunpack.c.l.b16 %v7916
        %v8393 = vunpack.c.h.b16 %v7916
        %v8394 = vunpack.c.l.b16 %v7917
        %v8395 = vunpack.c.h.b16 %v7917
        %v8396 = vunpack.c.l.b16 %v7918
        %v8397 = vunpack.c.h.b16 %v7918
        %v8398 = vunpack.c.l.b16 %v7919
        %v8399 = vunpack.c.h.b16 %v7919
        %v8400 = vunpack.c.l.b16 %v7920
        %v8401 = vunpack.c.h.b16 %v7920
        %v8402 = vunpack.c.l.b16 %v7921
        %v8403 = vunpack.c.h.b16 %v7921
        %v8404 = vunpack.c.l.b16 %v7922
        %v8405 = vunpack.c.h.b16 %v7922
        %v8406 = vunpack.c.l.b16 %v7923
        %v8407 = vunpack.c.h.b16 %v7923
        %v8408 = vunpack.c.l.b16 %v7924
        %v8409 = vunpack.c.h.b16 %v7924
        %v8410 = vunpack.c.l.b16 %v7925
        %v8411 = vunpack.c.h.b16 %v7925
        %v8412 = vunpack.c.l.b16 %v7926
        %v8413 = vunpack.c.h.b16 %v7926
        %v8414 = vunpack.c.l.b16 %v7927
        %v8415 = vunpack.c.h.b16 %v7927
        %v8416 = vunpack.c.l.b16 %v7928
        %v8417 = vunpack.c.h.b16 %v7928
        %v8418 = vunpack.c.l.b16 %v7929
        %v8419 = vunpack.c.h.b16 %v7929
        %v8420 = vunpack.c.l.b16 %v7930
        %v8421 = vunpack.c.h.b16 %v7930
        %v8422 = vunpack.c.l.b16 %v7931
        %v8423 = vunpack.c.h.b16 %v7931
        %v8424 = vpack.c.b16 %v8104, %v8096
        %v8425 = vpack.c.b16 %v8105, %v8097
        %v8426 = vpack.c.b16 %v8106, %v8098
        %v8427 = vpack.c.b16 %v8107, %v8099
        %v8428 = vpack.c.b16 %v8108, %v8100
        %v8429 = vpack.c.b16 %v8109, %v8101
        %v8430 = vpack.c.b16 %v8110, %v8102
        %v8431 = vpack.c.b16 %v8111, %v8103
        %v8432 = vpack.c.b16 %v8120, %v8112
        %v8433 = vpack.c.b16 %v8121, %v8113
        %v8434 = vpack.c.b16 %v8122, %v8114
        %v8435 = vpack.c.b16 %v8123, %v8115
        %v8436 = vpack.c.b16 %v8124, %v8116
        %v8437 = vpack.c.b16 %v8125, %v8117
        %v8438 = vpack.c.b16 %v8126, %v8118
        %v8439 = vpack.c.b16 %v8127, %v8119
        %v8440 = vpack.c.b16 %v8136, %v8128
        %v8441 = vpack.c.b16 %v8137, %v8129
        %v8442 = vpack.c.b16 %v8138, %v8130
        %v8443 = vpack.c.b16 %v8139, %v8131
        %v8444 = vpack.c.b16 %v8140, %v8132
        %v8445 = vpack.c.b16 %v8141, %v8133
        %v8446 = vpack.c.b16 %v8142, %v8134
        %v8447 = vpack.c.b16 %v8143, %v8135
        %v8448 = vpack.c.b16 %v8152, %v8144
        %v8449 = vpack.c.b16 %v8153, %v8145
        %v8450 = vpack.c.b16 %v8154, %v8146
        %v8451 = vpack.c.b16 %v8155, %v8147
        %v8452 = vpack.c.b16 %v8156, %v8148
        %v8453 = vpack.c.b16 %v8157, %v8149
        %v8454 = vpack.c.b16 %v8158, %v8150
        %v8455 = vpack.c.b16 %v8159, %v8151
        %v8456 = vpack.c.b16 %v8168, %v8160
        %v8457 = vpack.c.b16 %v8169, %v8161
        %v8458 = vpack.c.b16 %v8170, %v8162
        %v8459 = vpack.c.b16 %v8171, %v8163
        %v8460 = vpack.c.b16 %v8172, %v8164
        %v8461 = vpack.c.b16 %v8173, %v8165
        %v8462 = vpack.c.b16 %v8174, %v8166
        %v8463 = vpack.c.b16 %v8175, %v8167
        %v8464 = vpack.c.b16 %v8184, %v8176
        %v8465 = vpack.c.b16 %v8185, %v8177
        %v8466 = vpack.c.b16 %v8186, %v8178
        %v8467 = vpack.c.b16 %v8187, %v8179
        %v8468 = vpack.c.b16 %v8188, %v8180
        %v8469 = vpack.c.b16 %v8189, %v8181
        %v8470 = vpack.c.b16 %v8190, %v8182
        %v8471 = vpack.c.b16 %v8191, %v8183
        %v8472 = vpack.c.b16 %v8200, %v8192
        %v8473 = vpack.c.b16 %v8201, %v8193
        %v8474 = vpack.c.b16 %v8202, %v8194
        %v8475 = vpack.c.b16 %v8203, %v8195
        %v8476 = vpack.c.b16 %v8204, %v8196
        %v8477 = vpack.c.b16 %v8205, %v8197
        %v8478 = vpack.c.b16 %v8206, %v8198
        %v8479 = vpack.c.b16 %v8207, %v8199
        %v8480 = vpack.c.b16 %v8216, %v8208
        %v8481 = vpack.c.b16 %v8217, %v8209
        %v8482 = vpack.c.b16 %v8218, %v8210
        %v8483 = vpack.c.b16 %v8219, %v8211
        %v8484 = vpack.c.b16 %v8220, %v8212
        %v8485 = vpack.c.b16 %v8221, %v8213
        %v8486 = vpack.c.b16 %v8222, %v8214
        %v8487 = vpack.c.b16 %v8223, %v8215
        %v8488 = vpack.c.b16 %v8232, %v8224
        %v8489 = vpack.c.b16 %v8233, %v8225
        %v8490 = vpack.c.b16 %v8234, %v8226
        %v8491 = vpack.c.b16 %v8235, %v8227
        %v8492 = vpack.c.b16 %v8236, %v8228
        %v8493 = vpack.c.b16 %v8237, %v8229
        %v8494 = vpack.c.b16 %v8238, %v8230
        %v8495 = vpack.c.b16 %v8239, %v8231
        %v8496 = vpack.c.b16 %v8248, %v8240
        %v8497 = vpack.c.b16 %v8249, %v8241
        %v8498 = vpack.c.b16 %v8250, %v8242
        %v8499 = vpack.c.b16 %v8251, %v8243
        %v8500 = vpack.c.b16 %v8252, %v8244
        %v8501 = vpack.c.b16 %v8253, %v8245
        %v8502 = vpack.c.b16 %v8254, %v8246
        %v8503 = vpack.c.b16 %v8255, %v8247
        %v8504 = vpack.c.b16 %v8264, %v8256
        %v8505 = vpack.c.b16 %v8265, %v8257
        %v8506 = vpack.c.b16 %v8266, %v8258
        %v8507 = vpack.c.b16 %v8267, %v8259
        %v8508 = vpack.c.b16 %v8268, %v8260
        %v8509 = vpack.c.b16 %v8269, %v8261
        %v8510 = vpack.c.b16 %v8270, %v8262
        %v8511 = vpack.c.b16 %v8271, %v8263
        %v8512 = vpack.c.b16 %v8280, %v8272
        %v8513 = vpack.c.b16 %v8281, %v8273
        %v8514 = vpack.c.b16 %v8282, %v8274
        %v8515 = vpack.c.b16 %v8283, %v8275
        %v8516 = vpack.c.b16 %v8284, %v8276
        %v8517 = vpack.c.b16 %v8285, %v8277
        %v8518 = vpack.c.b16 %v8286, %v8278
        %v8519 = vpack.c.b16 %v8287, %v8279
        %v8520 = vpack.c.b16 %v8296, %v8288
        %v8521 = vpack.c.b16 %v8297, %v8289
        %v8522 = vpack.c.b16 %v8298, %v8290
        %v8523 = vpack.c.b16 %v8299, %v8291
        %v8524 = vpack.c.b16 %v8300, %v8292
        %v8525 = vpack.c.b16 %v8301, %v8293
        %v8526 = vpack.c.b16 %v8302, %v8294
        %v8527 = vpack.c.b16 %v8303, %v8295
        %v8528 = vpack.c.b16 %v8312, %v8304
        %v8529 = vpack.c.b16 %v8313, %v8305
        %v8530 = vpack.c.b16 %v8314, %v8306
        %v8531 = vpack.c.b16 %v8315, %v8307
        %v8532 = vpack.c.b16 %v8316, %v8308
        %v8533 = vpack.c.b16 %v8317, %v8309
        %v8534 = vpack.c.b16 %v8318, %v8310
        %v8535 = vpack.c.b16 %v8319, %v8311
        %v8536 = vpack.c.b16 %v8328, %v8320
        %v8537 = vpack.c.b16 %v8329, %v8321
        %v8538 = vpack.c.b16 %v8330, %v8322
        %v8539 = vpack.c.b16 %v8331, %v8323
        %v8540 = vpack.c.b16 %v8332, %v8324
        %v8541 = vpack.c.b16 %v8333, %v8325
        %v8542 = vpack.c.b16 %v8334, %v8326
        %v8543 = vpack.c.b16 %v8335, %v8327
        %v8544 = vpack.c.b16 %v8344, %v8336
        %v8545 = vpack.c.b16 %v8345, %v8337
        %v8546 = vpack.c.b16 %v8346, %v8338
        %v8547 = vpack.c.b16 %v8347, %v8339
        %v8548 = vpack.c.b16 %v8348, %v8340
        %v8549 = vpack.c.b16 %v8349, %v8341
        %v8550 = vpack.c.b16 %v8350, %v8342
        %v8551 = vpack.c.b16 %v8351, %v8343
        %v8552 = vpack.c.b16 %v8360, %v8352
        %v8553 = vpack.c.b16 %v8361, %v8353
        %v8554 = vpack.c.b16 %v8362, %v8354
        %v8555 = vpack.c.b16 %v8363, %v8355
        %v8556 = vpack.c.b16 %v8364, %v8356
        %v8557 = vpack.c.b16 %v8365, %v8357
        %v8558 = vpack.c.b16 %v8366, %v8358
        %v8559 = vpack.c.b16 %v8367, %v8359
        %v8560 = vpack.c.b16 %v8376, %v8368
        %v8561 = vpack.c.b16 %v8377, %v8369
        %v8562 = vpack.c.b16 %v8378, %v8370
        %v8563 = vpack.c.b16 %v8379, %v8371
        %v8564 = vpack.c.b16 %v8380, %v8372
        %v8565 = vpack.c.b16 %v8381, %v8373
        %v8566 = vpack.c.b16 %v8382, %v8374
        %v8567 = vpack.c.b16 %v8383, %v8375
        %v8568 = vpack.c.b16 %v8392, %v8384
        %v8569 = vpack.c.b16 %v8393, %v8385
        %v8570 = vpack.c.b16 %v8394, %v8386
        %v8571 = vpack.c.b16 %v8395, %v8387
        %v8572 = vpack.c.b16 %v8396, %v8388
        %v8573 = vpack.c.b16 %v8397, %v8389
        %v8574 = vpack.c.b16 %v8398, %v8390
        %v8575 = vpack.c.b16 %v8399, %v8391
        %v8576 = vpack.c.b16 %v8408, %v8400
        %v8577 = vpack.c.b16 %v8409, %v8401
        %v8578 = vpack.c.b16 %v8410, %v8402
        %v8579 = vpack.c.b16 %v8411, %v8403
        %v8580 = vpack.c.b16 %v8412, %v8404
        %v8581 = vpack.c.b16 %v8413, %v8405
        %v8582 = vpack.c.b16 %v8414, %v8406
        %v8583 = vpack.c.b16 %v8415, %v8407
        %v8584 = vpack.c.b16 %v8416, %v8416
        %v8585 = vpack.c.b16 %v8417, %v8417
        %v8586 = vpack.c.b16 %v8418, %v8418
        %v8587 = vpack.c.b16 %v8419, %v8419
        %v8588 = vpack.c.b16 %v8420, %v8420
        %v8589 = vpack.c.b16 %v8421, %v8421
        %v8590 = vpack.c.b16 %v8422, %v8422
        %v8591 = vpack.c.b16 %v8423, %v8423
        %v8753 = vsel %vm4842, %v7766, 0
        %v8756 = vsel %vm1345, %v8584, 0
        %v8759 = vsel %vm1345, %v8585, 0
        %v8762 = vsel %vm1345, %v8586, 0
        %v8765 = vsel %vm1345, %v8587, 0
        %v8768 = vsel %vm1345, %v8588, 0
        %v8771 = vsel %vm1345, %v8589, 0
        %v8774 = vsel %vm1345, %v8590, 0
        %v8777 = vsel %vm1345, %v8591, 0
        %8779 = vmatpush.bf16.msra.mxu0 %v8480
        %8780 = vmatpush.bf16.msra.mxu0 %v8472
        %8781 = vmatpush.bf16.msra.mxu0 %v8464
        %8782 = vmatpush.bf16.msra.mxu0 %v8456
        %8783 = vmatpush.bf16.msra.mxu0 %v8448
        %8784 = vmatpush.bf16.msra.mxu0 %v8440
        %8785 = vmatpush.bf16.msra.mxu0 %v8432
        %8786 = vmatpush.bf16.msra.mxu0 %v8424
        %8787 = vmatmul.bf16.gmra.mxu0 %v7764
        %v8788 = vpop.f32.mrf.mxu0
        %v8789 = vadd.f32 0.0, %v8788
        %v8790 = vpop.f32.mrf.mxu0
        %8791 = vdwg.mxu0
        %8792 = vmatpush.bf16.msra.mxu0 %v8544
        %8793 = vmatpush.bf16.msra.mxu0 %v8536
        %8794 = vmatpush.bf16.msra.mxu0 %v8528
        %8795 = vmatpush.bf16.msra.mxu0 %v8520
        %8796 = vmatpush.bf16.msra.mxu0 %v8512
        %8797 = vmatpush.bf16.msra.mxu0 %v8504
        %8798 = vmatpush.bf16.msra.mxu0 %v8496
        %8799 = vmatpush.bf16.msra.mxu0 %v8488
        %8800 = vmatmul.bf16.gmra.mxu0 %v7765
        %v8801 = vpop.f32.mrf.mxu0
        %v8802 = vadd.f32 %v8789, %v8801
        %v8803 = vpop.f32.mrf.mxu0
        %8804 = vdwg.mxu0
        %8805 = vmatpush.bf16.msra.mxu0 0
        %8806 = vmatpush.bf16.msra.mxu0 0
        %8807 = vmatpush.bf16.msra.mxu0 0
        %8808 = vmatpush.bf16.msra.mxu0 %v8756
        %8809 = vmatpush.bf16.msra.mxu0 %v8576
        %8810 = vmatpush.bf16.msra.mxu0 %v8568
        %8811 = vmatpush.bf16.msra.mxu0 %v8560
        %8812 = vmatpush.bf16.msra.mxu0 %v8552
        %8813 = vmatmul.bf16.gmra.mxu0 %v8753
        %v8814 = vpop.f32.mrf.mxu0
        %v8815 = vadd.f32 %v8802, %v8814
        %v8816 = vpop.f32.mrf.mxu0
        %8817 = vdwg.mxu0
        %8818 = vmatpush.bf16.msra.mxu0 %v8481
        %8819 = vmatpush.bf16.msra.mxu0 %v8473
        %8820 = vmatpush.bf16.msra.mxu0 %v8465
        %8821 = vmatpush.bf16.msra.mxu0 %v8457
        %8822 = vmatpush.bf16.msra.mxu0 %v8449
        %8823 = vmatpush.bf16.msra.mxu0 %v8441
        %8824 = vmatpush.bf16.msra.mxu0 %v8433
        %8825 = vmatpush.bf16.msra.mxu0 %v8425
        %8826 = vmatmul.bf16.gmra.mxu0 %v7764
        %v8827 = vpop.f32.mrf.mxu0
        %v8828 = vadd.f32 0.0, %v8827
        %v8829 = vpop.f32.mrf.mxu0
        %8830 = vdwg.mxu0
        %8831 = vmatpush.bf16.msra.mxu0 %v8545
        %8832 = vmatpush.bf16.msra.mxu0 %v8537
        %8833 = vmatpush.bf16.msra.mxu0 %v8529
        %8834 = vmatpush.bf16.msra.mxu0 %v8521
        %8835 = vmatpush.bf16.msra.mxu0 %v8513
        %8836 = vmatpush.bf16.msra.mxu0 %v8505
        %8837 = vmatpush.bf16.msra.mxu0 %v8497
        %8838 = vmatpush.bf16.msra.mxu0 %v8489
        %8839 = vmatmul.bf16.gmra.mxu0 %v7765
        %v8840 = vpop.f32.mrf.mxu0
        %v8841 = vadd.f32 %v8828, %v8840
        %v8842 = vpop.f32.mrf.mxu0
        %8843 = vdwg.mxu0
        %8844 = vmatpush.bf16.msra.mxu0 0
        %8845 = vmatpush.bf16.msra.mxu0 0
        %8846 = vmatpush.bf16.msra.mxu0 0
        %8847 = vmatpush.bf16.msra.mxu0 %v8759
        %8848 = vmatpush.bf16.msra.mxu0 %v8577
        %8849 = vmatpush.bf16.msra.mxu0 %v8569
        %8850 = vmatpush.bf16.msra.mxu0 %v8561
        %8851 = vmatpush.bf16.msra.mxu0 %v8553
        %8852 = vmatmul.bf16.gmra.mxu0 %v8753
        %v8853 = vpop.f32.mrf.mxu0
        %v8854 = vadd.f32 %v8841, %v8853
        %v8855 = vpop.f32.mrf.mxu0
        %8856 = vdwg.mxu0
        %8857 = vmatpush.bf16.msra.mxu0 %v8482
        %8858 = vmatpush.bf16.msra.mxu0 %v8474
        %8859 = vmatpush.bf16.msra.mxu0 %v8466
        %8860 = vmatpush.bf16.msra.mxu0 %v8458
        %8861 = vmatpush.bf16.msra.mxu0 %v8450
        %8862 = vmatpush.bf16.msra.mxu0 %v8442
        %8863 = vmatpush.bf16.msra.mxu0 %v8434
        %8864 = vmatpush.bf16.msra.mxu0 %v8426
        %8865 = vmatmul.bf16.gmra.mxu0 %v7764
        %v8866 = vpop.f32.mrf.mxu0
        %v8867 = vadd.f32 0.0, %v8866
        %v8868 = vpop.f32.mrf.mxu0
        %8869 = vdwg.mxu0
        %8870 = vmatpush.bf16.msra.mxu0 %v8546
        %8871 = vmatpush.bf16.msra.mxu0 %v8538
        %8872 = vmatpush.bf16.msra.mxu0 %v8530
        %8873 = vmatpush.bf16.msra.mxu0 %v8522
        %8874 = vmatpush.bf16.msra.mxu0 %v8514
        %8875 = vmatpush.bf16.msra.mxu0 %v8506
        %8876 = vmatpush.bf16.msra.mxu0 %v8498
        %8877 = vmatpush.bf16.msra.mxu0 %v8490
        %8878 = vmatmul.bf16.gmra.mxu0 %v7765
        %v8879 = vpop.f32.mrf.mxu0
        %v8880 = vadd.f32 %v8867, %v8879
        %v8881 = vpop.f32.mrf.mxu0
        %8882 = vdwg.mxu0
        %8883 = vmatpush.bf16.msra.mxu0 0
        %8884 = vmatpush.bf16.msra.mxu0 0
        %8885 = vmatpush.bf16.msra.mxu0 0
        %8886 = vmatpush.bf16.msra.mxu0 %v8762
        %8887 = vmatpush.bf16.msra.mxu0 %v8578
        %8888 = vmatpush.bf16.msra.mxu0 %v8570
        %8889 = vmatpush.bf16.msra.mxu0 %v8562
        %8890 = vmatpush.bf16.msra.mxu0 %v8554
        %8891 = vmatmul.bf16.gmra.mxu0 %v8753
        %v8892 = vpop.f32.mrf.mxu0
        %v8893 = vadd.f32 %v8880, %v8892
        %v8894 = vpop.f32.mrf.mxu0
        %8895 = vdwg.mxu0
        %8896 = vmatpush.bf16.msra.mxu0 %v8483
        %8897 = vmatpush.bf16.msra.mxu0 %v8475
        %8898 = vmatpush.bf16.msra.mxu0 %v8467
        %8899 = vmatpush.bf16.msra.mxu0 %v8459
        %8900 = vmatpush.bf16.msra.mxu0 %v8451
        %8901 = vmatpush.bf16.msra.mxu0 %v8443
        %8902 = vmatpush.bf16.msra.mxu0 %v8435
        %8903 = vmatpush.bf16.msra.mxu0 %v8427
        %8904 = vmatmul.bf16.gmra.mxu0 %v7764
        %v8905 = vpop.f32.mrf.mxu0
        %v8906 = vadd.f32 0.0, %v8905
        %v8907 = vpop.f32.mrf.mxu0
        %8908 = vdwg.mxu0
        %8909 = vmatpush.bf16.msra.mxu0 %v8547
        %8910 = vmatpush.bf16.msra.mxu0 %v8539
        %8911 = vmatpush.bf16.msra.mxu0 %v8531
        %8912 = vmatpush.bf16.msra.mxu0 %v8523
        %8913 = vmatpush.bf16.msra.mxu0 %v8515
        %8914 = vmatpush.bf16.msra.mxu0 %v8507
        %8915 = vmatpush.bf16.msra.mxu0 %v8499
        %8916 = vmatpush.bf16.msra.mxu0 %v8491
        %8917 = vmatmul.bf16.gmra.mxu0 %v7765
        %v8918 = vpop.f32.mrf.mxu0
        %v8919 = vadd.f32 %v8906, %v8918
        %v8920 = vpop.f32.mrf.mxu0
        %8921 = vdwg.mxu0
        %8922 = vmatpush.bf16.msra.mxu0 0
        %8923 = vmatpush.bf16.msra.mxu0 0
        %8924 = vmatpush.bf16.msra.mxu0 0
        %8925 = vmatpush.bf16.msra.mxu0 %v8765
        %8926 = vmatpush.bf16.msra.mxu0 %v8579
        %8927 = vmatpush.bf16.msra.mxu0 %v8571
        %8928 = vmatpush.bf16.msra.mxu0 %v8563
        %8929 = vmatpush.bf16.msra.mxu0 %v8555
        %8930 = vmatmul.bf16.gmra.mxu0 %v8753
        %v8931 = vpop.f32.mrf.mxu0
        %v8932 = vadd.f32 %v8919, %v8931
        %v8933 = vpop.f32.mrf.mxu0
        %8934 = vdwg.mxu0
        %8935 = vmatpush.bf16.msra.mxu0 %v8484
        %8936 = vmatpush.bf16.msra.mxu0 %v8476
        %8937 = vmatpush.bf16.msra.mxu0 %v8468
        %8938 = vmatpush.bf16.msra.mxu0 %v8460
        %8939 = vmatpush.bf16.msra.mxu0 %v8452
        %8940 = vmatpush.bf16.msra.mxu0 %v8444
        %8941 = vmatpush.bf16.msra.mxu0 %v8436
        %8942 = vmatpush.bf16.msra.mxu0 %v8428
        %8943 = vmatmul.bf16.gmra.mxu0 %v7764
        %v8944 = vpop.f32.mrf.mxu0
        %v8945 = vadd.f32 0.0, %v8944
        %v8946 = vpop.f32.mrf.mxu0
        %8947 = vdwg.mxu0
        %8948 = vmatpush.bf16.msra.mxu0 %v8548
        %8949 = vmatpush.bf16.msra.mxu0 %v8540
        %8950 = vmatpush.bf16.msra.mxu0 %v8532
        %8951 = vmatpush.bf16.msra.mxu0 %v8524
        %8952 = vmatpush.bf16.msra.mxu0 %v8516
        %8953 = vmatpush.bf16.msra.mxu0 %v8508
        %8954 = vmatpush.bf16.msra.mxu0 %v8500
        %8955 = vmatpush.bf16.msra.mxu0 %v8492
        %8956 = vmatmul.bf16.gmra.mxu0 %v7765
        %v8957 = vpop.f32.mrf.mxu0
        %v8958 = vadd.f32 %v8945, %v8957
        %v8959 = vpop.f32.mrf.mxu0
        %8960 = vdwg.mxu0
        %8961 = vmatpush.bf16.msra.mxu0 0
        %8962 = vmatpush.bf16.msra.mxu0 0
        %8963 = vmatpush.bf16.msra.mxu0 0
        %8964 = vmatpush.bf16.msra.mxu0 %v8768
        %8965 = vmatpush.bf16.msra.mxu0 %v8580
        %8966 = vmatpush.bf16.msra.mxu0 %v8572
        %8967 = vmatpush.bf16.msra.mxu0 %v8564
        %8968 = vmatpush.bf16.msra.mxu0 %v8556
        %8969 = vmatmul.bf16.gmra.mxu0 %v8753
        %v8970 = vpop.f32.mrf.mxu0
        %v8971 = vadd.f32 %v8958, %v8970
        %v8972 = vpop.f32.mrf.mxu0
        %8973 = vdwg.mxu0
        %8974 = vmatpush.bf16.msra.mxu0 %v8485
        %8975 = vmatpush.bf16.msra.mxu0 %v8477
        %8976 = vmatpush.bf16.msra.mxu0 %v8469
        %8977 = vmatpush.bf16.msra.mxu0 %v8461
        %8978 = vmatpush.bf16.msra.mxu0 %v8453
        %8979 = vmatpush.bf16.msra.mxu0 %v8445
        %8980 = vmatpush.bf16.msra.mxu0 %v8437
        %8981 = vmatpush.bf16.msra.mxu0 %v8429
        %8982 = vmatmul.bf16.gmra.mxu0 %v7764
        %v8983 = vpop.f32.mrf.mxu0
        %v8984 = vadd.f32 0.0, %v8983
        %v8985 = vpop.f32.mrf.mxu0
        %8986 = vdwg.mxu0
        %8987 = vmatpush.bf16.msra.mxu0 %v8549
        %8988 = vmatpush.bf16.msra.mxu0 %v8541
        %8989 = vmatpush.bf16.msra.mxu0 %v8533
        %8990 = vmatpush.bf16.msra.mxu0 %v8525
        %8991 = vmatpush.bf16.msra.mxu0 %v8517
        %8992 = vmatpush.bf16.msra.mxu0 %v8509
        %8993 = vmatpush.bf16.msra.mxu0 %v8501
        %8994 = vmatpush.bf16.msra.mxu0 %v8493
        %8995 = vmatmul.bf16.gmra.mxu0 %v7765
        %v8996 = vpop.f32.mrf.mxu0
        %v8997 = vadd.f32 %v8984, %v8996
        %v8998 = vpop.f32.mrf.mxu0
        %8999 = vdwg.mxu0
        %9000 = vmatpush.bf16.msra.mxu0 0
        %9001 = vmatpush.bf16.msra.mxu0 0
        %9002 = vmatpush.bf16.msra.mxu0 0
        %9003 = vmatpush.bf16.msra.mxu0 %v8771
        %9004 = vmatpush.bf16.msra.mxu0 %v8581
        %9005 = vmatpush.bf16.msra.mxu0 %v8573
        %9006 = vmatpush.bf16.msra.mxu0 %v8565
        %9007 = vmatpush.bf16.msra.mxu0 %v8557
        %9008 = vmatmul.bf16.gmra.mxu0 %v8753
        %v9009 = vpop.f32.mrf.mxu0
        %v9010 = vadd.f32 %v8997, %v9009
        %v9011 = vpop.f32.mrf.mxu0
        %9012 = vdwg.mxu0
        %9013 = vmatpush.bf16.msra.mxu0 %v8486
        %9014 = vmatpush.bf16.msra.mxu0 %v8478
        %9015 = vmatpush.bf16.msra.mxu0 %v8470
        %9016 = vmatpush.bf16.msra.mxu0 %v8462
        %9017 = vmatpush.bf16.msra.mxu0 %v8454
        %9018 = vmatpush.bf16.msra.mxu0 %v8446
        %9019 = vmatpush.bf16.msra.mxu0 %v8438
        %9020 = vmatpush.bf16.msra.mxu0 %v8430
        %9021 = vmatmul.bf16.gmra.mxu0 %v7764
        %v9022 = vpop.f32.mrf.mxu0
        %v9023 = vadd.f32 0.0, %v9022
        %v9024 = vpop.f32.mrf.mxu0
        %9025 = vdwg.mxu0
        %9026 = vmatpush.bf16.msra.mxu0 %v8550
        %9027 = vmatpush.bf16.msra.mxu0 %v8542
        %9028 = vmatpush.bf16.msra.mxu0 %v8534
        %9029 = vmatpush.bf16.msra.mxu0 %v8526
        %9030 = vmatpush.bf16.msra.mxu0 %v8518
        %9031 = vmatpush.bf16.msra.mxu0 %v8510
        %9032 = vmatpush.bf16.msra.mxu0 %v8502
        %9033 = vmatpush.bf16.msra.mxu0 %v8494
        %9034 = vmatmul.bf16.gmra.mxu0 %v7765
        %v9035 = vpop.f32.mrf.mxu0
        %v9036 = vadd.f32 %v9023, %v9035
        %v9037 = vpop.f32.mrf.mxu0
        %9038 = vdwg.mxu0
        %9039 = vmatpush.bf16.msra.mxu0 0
        %9040 = vmatpush.bf16.msra.mxu0 0
        %9041 = vmatpush.bf16.msra.mxu0 0
        %9042 = vmatpush.bf16.msra.mxu0 %v8774
        %9043 = vmatpush.bf16.msra.mxu0 %v8582
        %9044 = vmatpush.bf16.msra.mxu0 %v8574
        %9045 = vmatpush.bf16.msra.mxu0 %v8566
        %9046 = vmatpush.bf16.msra.mxu0 %v8558
        %9047 = vmatmul.bf16.gmra.mxu0 %v8753
        %v9048 = vpop.f32.mrf.mxu0
        %v9049 = vadd.f32 %v9036, %v9048
        %v9050 = vpop.f32.mrf.mxu0
        %9051 = vdwg.mxu0
        %9052 = vmatpush.bf16.msra.mxu0 %v8487
        %9053 = vmatpush.bf16.msra.mxu0 %v8479
        %9054 = vmatpush.bf16.msra.mxu0 %v8471
        %9055 = vmatpush.bf16.msra.mxu0 %v8463
        %9056 = vmatpush.bf16.msra.mxu0 %v8455
        %9057 = vmatpush.bf16.msra.mxu0 %v8447
        %9058 = vmatpush.bf16.msra.mxu0 %v8439
        %9059 = vmatpush.bf16.msra.mxu0 %v8431
        %9060 = vmatmul.bf16.gmra.mxu0 %v7764
        %v9061 = vpop.f32.mrf.mxu0
        %v9062 = vadd.f32 0.0, %v9061
        %v9063 = vpop.f32.mrf.mxu0
        %9064 = vdwg.mxu0
        %9065 = vmatpush.bf16.msra.mxu0 %v8551
        %9066 = vmatpush.bf16.msra.mxu0 %v8543
        %9067 = vmatpush.bf16.msra.mxu0 %v8535
        %9068 = vmatpush.bf16.msra.mxu0 %v8527
        %9069 = vmatpush.bf16.msra.mxu0 %v8519
        %9070 = vmatpush.bf16.msra.mxu0 %v8511
        %9071 = vmatpush.bf16.msra.mxu0 %v8503
        %9072 = vmatpush.bf16.msra.mxu0 %v8495
        %9073 = vmatmul.bf16.gmra.mxu0 %v7765
        %v9074 = vpop.f32.mrf.mxu0
        %v9075 = vadd.f32 %v9062, %v9074
        %v9076 = vpop.f32.mrf.mxu0
        %9077 = vdwg.mxu0
        %9078 = vmatpush.bf16.msra.mxu0 0
        %9079 = vmatpush.bf16.msra.mxu0 0
        %9080 = vmatpush.bf16.msra.mxu0 0
        %9081 = vmatpush.bf16.msra.mxu0 %v8777
        %9082 = vmatpush.bf16.msra.mxu0 %v8583
        %9083 = vmatpush.bf16.msra.mxu0 %v8575
        %9084 = vmatpush.bf16.msra.mxu0 %v8567
        %9085 = vmatpush.bf16.msra.mxu0 %v8559
        %9086 = vmatmul.bf16.gmra.mxu0 %v8753
        %v9087 = vpop.f32.mrf.mxu0
        %v9088 = vadd.f32 %v9075, %v9087
        %v9089 = vpop.f32.mrf.mxu0
        %9090 = vdwg.mxu0
        %v9091 = vadd.f32 %v7712, %v8815
        %v9092 = vadd.f32 %v7713, %v8854
        %v9093 = vadd.f32 %v7714, %v8893
        %v9094 = vadd.f32 %v7715, %v8932
        %v9095 = vadd.f32 %v7716, %v8971
        %v9096 = vadd.f32 %v7717, %v9010
        %v9097 = vadd.f32 %v7718, %v9049
        %v9098 = vadd.f32 %v7719, %v9088
        %9100 = vset.pattern.permute.xlu0 0
        %9101 = vperm.xlu0 %9100, %v3427
        %v9102 = vpop.permute.xlu0 %9101
        %v9104 = vadd.f32 %v9091, %v9102
        %v9105 = vadd.f32 %v9092, %v9102
        %v9106 = vadd.f32 %v9093, %v9102
        %v9107 = vadd.f32 %v9094, %v9102
        %v9108 = vadd.f32 %v9095, %v9102
        %v9109 = vadd.f32 %v9096, %v9102
        %v9110 = vadd.f32 %v9097, %v9102
        %v9111 = vadd.f32 %v9098, %v9102
        %v9112 = vtanh.pop %v9104
        %v9113 = vtanh.pop %v9105
        %v9114 = vtanh.pop %v9106
        %v9115 = vtanh.pop %v9107
        %v9116 = vtanh.pop %v9108
        %v9117 = vtanh.pop %v9109
        %v9118 = vtanh.pop %v9110
        %v9119 = vtanh.pop %v9111
        %v9128 = vrot.slane %v9113, 4
        %v9129 = vrot.slane %v9115, 4
        %v9130 = vrot.slane %v9117, 4
        %v9131 = vrot.slane %v9119, 4
        %vm9132 = vcmask 1043456
        %v9133 = vsel %vm9132, %v9112, %v9128
        %v9134 = vsel %vm9132, %v9114, %v9129
        %v9135 = vsel %vm9132, %v9116, %v9130
        %v9136 = vsel %vm9132, %v9118, %v9131
        %9141 = vst [vmem:[%s569] sm:$0x77] %v9133
        %9142 = vst [vmem:[%s569 + $0x8] sm:$0x77] %v9134
        %9143 = vst [vmem:[%s569 + $0x10] sm:$0x77] %v9135
        %9144 = vst [vmem:[%s569 + $0x18] sm:$0x77] %v9136
        %p9145 = scmp.lt.s32.totalorder %s30, 1
        %s9146 = scalar_select %p9145, %s30, 1
        %s9147 = smul.addr %s9146, 8
        %s9148 = smul.addr %s9147, 4
        %s9149 = scalar_lea.vmem %s18, %s9148
        // Predicated region
        $region97: #{decoder_forward.1} parent=91 // pred_check
          %p9150 = pneg %p426
        $region98: #{decoder_forward.1} parent=91 // pred_check_branch
          %9152 = sbr.rel (%p9150) target = $region100
        $region99: #{decoder_forward.1} parent=91 // pred_region
          _
        $region100: #{decoder_forward.1} parent=91 // pred_fallthru
          _
      $region92: #{decoder_forward.1} parent=5 // pred_fallthru
        _
      %p9153 = scmp.le.s32.totalorder 2, %s25
      // Predicated region
      $region101: #{decoder_forward.1} parent=5 // pred_check
        %p9154 = pneg %p9153
      $region102: #{decoder_forward.1} parent=5 // pred_check_branch
        %9156 = sbr.rel (%p9154) target = $region104
      $region103: #{decoder_forward.1} parent=5 // pred_region
        %s9157 = ssub.s32 %s25, 2
        // Predicated region
        $region105: #{decoder_forward.1} parent=103 // pred_check
          %p9158 = pneg %p432
        $region106: #{decoder_forward.1} parent=103 // pred_check_branch
          %9160 = sbr.rel (%p9158) target = $region108
        $region107: #{decoder_forward.1} parent=103 // pred_region
          %p9161 = scmp.lt.s32.totalorder %s31, 1
          %s9162 = scalar_select %p9161, %s31, 1
          %s9163 = smul.addr %s9162, 8
          %s9164 = smul.addr %s9163, 4
          %s9165 = scalar_lea.vmem %s18, %s9164
        $region108: #{decoder_forward.1} parent=103 // pred_fallthru
          _
      $region104: #{decoder_forward.1} parent=5 // pred_fallthru
        _
    $region6: #{decoder_forward.1} parent=1 // loop_footer
      %s29 = sadd.s32 1, %s25
    $region7: #{decoder_forward.1} parent=1 // loop_footer_branch
      %24 = sbr.rel target = $region3
    $region8: #{decoder_forward.1} parent=1 // loop_exit
      _
    %9166 = vsyncpa [#allocation3], 1
    %s9167 = scalar_lea.sflag [#allocation3], 1
    %9168 = vsyncpa %s9167, 1

</llo_original>
